<compile_context>
chip_gen: v7x
topology: tpu7x:2x2x1
jax: 0.10.0
libtpu: 0.0.40
codegen_flags: <defaults>
</compile_context>

<pallas_src>
import jax
import jax.numpy as jnp
import numpy as np
from jax.experimental import pallas as pl
from jax.experimental.pallas import tpu as pltpu

# ---------------------------------------------------------------------------
# Model dimensions (small, deterministic synthetic configuration)
# ---------------------------------------------------------------------------
ENC_VOCAB = 20
ENC_EMB = 16
ENC_HID = 16
DEC_VOCAB = 24
DEC_EMB = 16
DEC_HID = 32
PAD_IDX = 0
VOCAB_PAD = 128          # lane-dense padded fc_out width (sliced back to DEC_VOCAB outside)

BATCH = 2
SRC_LEN = 8
TRG_LEN = 6


# ---------------------------------------------------------------------------
# Fused Pallas kernel
# ---------------------------------------------------------------------------
def _gru_gates(gi, gh, h, H):
    """PyTorch GRU cell (gate order r, z, n); r/z fused into one sigmoid over 2H lanes."""
    rz = jax.nn.sigmoid(gi[:, :2 * H] + gh[:, :2 * H])
    r = rz[:, :H]
    z = rz[:, H:]
    n = jnp.tanh(gi[:, 2 * H:] + r * gh[:, 2 * H:])
    return (1.0 - z) * n + z * h


def _seq2seq_kernel(src_ref, trg_ref,
                    enc_emb_ref, dec_emb_ref,
                    wih_f_ref, whh_f_ref, bih_f_ref, bhh_f_ref,
                    wih_b_ref, whh_b_ref, bih_b_ref, bhh_b_ref,
                    fc_wf_ref, fc_wb_ref, fc_b_ref,
                    wa_h_ref, wa_e_ref, ba_ref, v_ref,
                    wih_e_ref, wih_c_ref, whh_d_ref, bih_d_ref, bhh_d_ref,
                    fc_wh_ref, fc_ww_ref, fc_we_ref, fco_b_ref,
                    out_ref):
    # src_ref: (S, B) int32 tokens     trg_ref: (T, B) int32 tokens
    # out_ref: (T, B, VOCAB_PAD) lane-dense prediction slab (row 0 zeroed)
    S, B = src_ref.shape
    T = trg_ref.shape[0]
    T1 = T - 1
    He = whh_f_ref.shape[0]          # ENC_HID
    Hd = whh_d_ref.shape[0]          # DEC_HID
    E2 = 2 * He

    # ---------------------------- encoder ----------------------------
    src = src_ref[...]                                                    # (S, B) int32
    iota_e = jax.lax.broadcasted_iota(jnp.int32, (S, B, ENC_VOCAB), 2)
    onehot_s = (src[:, :, None] == iota_e).astype(jnp.float32)            # (S, B, Ve)
    emb_src = jnp.dot(onehot_s.reshape(S * B, ENC_VOCAB), enc_emb_ref[...],
                      preferred_element_type=jnp.float32)                 # (S*B, Ee)

    # batched (hoisted) input-to-hidden projections, both directions
    gi_all_f = jnp.dot(emb_src, wih_f_ref[...],
                       preferred_element_type=jnp.float32) + bih_f_ref[...]   # (S*B, 3He)
    gi_all_b = jnp.dot(emb_src, wih_b_ref[...],
                       preferred_element_type=jnp.float32) + bih_b_ref[...]

    whh_f = whh_f_ref[...]; bhh_f = bhh_f_ref[...]
    whh_b = whh_b_ref[...]; bhh_b = bhh_b_ref[...]

    h_f = jnp.zeros((B, He), jnp.float32)
    h_b = jnp.zeros((B, He), jnp.float32)
    fwd = [None] * S
    bwd = [None] * S
    for t in range(S):                        # S = 8, fully unrolled at trace time
        gh_f = jnp.dot(h_f, whh_f, preferred_element_type=jnp.float32) + bhh_f
        h_f = _gru_gates(gi_all_f[t * B:(t + 1) * B], gh_f, h_f, He)
        tb = S - 1 - t
        gh_b = jnp.dot(h_b, whh_b, preferred_element_type=jnp.float32) + bhh_b
        h_b = _gru_gates(gi_all_b[tb * B:(tb + 1) * B], gh_b, h_b, He)
        fwd[t] = h_f
        bwd[tb] = h_b

    # seq-major bidirectional encoder states, kept resident as a value (no HBM round-trip)
    enc = jnp.concatenate([jnp.stack(fwd, axis=0), jnp.stack(bwd, axis=0)], axis=2)  # (S,B,2He)

    # decoder initial hidden = tanh(fc([h_f; h_b]))  (split weights: no activation concat)
    hidden = jnp.tanh(
        jnp.dot(h_f, fc_wf_ref[...], preferred_element_type=jnp.float32)
        + jnp.dot(h_b, fc_wb_ref[...], preferred_element_type=jnp.float32)
        + fc_b_ref[...])                                                  # (B, Hd)

    # ---------------------------- decoder ----------------------------
    trg = trg_ref[...][:T1]                                               # (T1, B) teacher forcing
    iota_d = jax.lax.broadcasted_iota(jnp.int32, (T1, B, DEC_VOCAB), 2)
    onehot_t = (trg[:, :, None] == iota_d).astype(jnp.float32)            # (T1, B, Vd)
    emb_trg = jnp.dot(onehot_t.reshape(T1 * B, DEC_VOCAB), dec_emb_ref[...],
                      preferred_element_type=jnp.float32)                 # (T1*B, Ed)

    # loop-invariant projections hoisted out of the decode loop
    gi_e_all = jnp.dot(emb_trg, wih_e_ref[...],
                       preferred_element_type=jnp.float32)                # (T1*B, 3Hd)
    e_e = (jnp.dot(enc.reshape(S * B, E2), wa_e_ref[...],
                   preferred_element_type=jnp.float32).reshape(S, B, Hd)
           + ba_ref[...])                                                 # (S, B, Hd)
    mask = (src != PAD_IDX).astype(jnp.float32)                           # (S, B)

    wa_h = wa_h_ref[...]; v = v_ref[...]
    wih_c = wih_c_ref[...]; whh_d = whh_d_ref[...]
    bih_d = bih_d_ref[...]; bhh_d = bhh_d_ref[...]

    hiddens = [None] * T1
    weighteds = [None] * T1
    for t in range(T1):                       # T-1 = 5, fully unrolled
        # ---- additive attention (softmax over source axis 0) + context ----
        e_h = jnp.dot(hidden, wa_h, preferred_element_type=jnp.float32)       # (B, Hd)
        energy = jnp.tanh(e_e + e_h[None, :, :])                               # (S, B, Hd)
        score = jnp.sum(energy * v, axis=-1)                                   # (S, B)
        score = jnp.where(mask > 0.0, score, -1e10)
        m = jnp.max(score, axis=0, keepdims=True)
        p = jnp.exp(score - m)
        a = p * pl.reciprocal(jnp.sum(p, axis=0, keepdims=True), approx=True)  # (S, B)
        weighted = jnp.sum(a[:, :, None] * enc, axis=0)                        # (B, 2He)

        # ---- decoder GRU cell (split input weights: no activation concat) ----
        gi = (gi_e_all[t * B:(t + 1) * B]
              + jnp.dot(weighted, wih_c, preferred_element_type=jnp.float32)
              + bih_d)
        gh = jnp.dot(hidden, whh_d, preferred_element_type=jnp.float32) + bhh_d
        hidden = _gru_gates(gi, gh, hidden, Hd)

        hiddens[t] = hidden
        weighteds[t] = weighted

    # ---- deferred fc_out: 3 batched matmuls over all steps + ONE lane-dense store ----
    hid_stack = jnp.concatenate(hiddens, axis=0)                          # (T1*B, Hd)
    w_stack = jnp.concatenate(weighteds, axis=0)                          # (T1*B, 2He)
    preds = (jnp.dot(hid_stack, fc_wh_ref[...], preferred_element_type=jnp.float32)
             + jnp.dot(w_stack, fc_ww_ref[...], preferred_element_type=jnp.float32)
             + jnp.dot(emb_trg, fc_we_ref[...], preferred_element_type=jnp.float32)
             + fco_b_ref[...])                                            # (T1*B, VOCAB_PAD)

    out_full = jnp.concatenate(
        [jnp.zeros((B, preds.shape[1]), jnp.float32), preds], axis=0)     # (T*B, VOCAB_PAD)
    out_ref[...] = out_full.reshape(T, B, preds.shape[1])


# ---------------------------------------------------------------------------
# pallas_call wrapper (tiny model: every operand is a single full-array VMEM block)
# ---------------------------------------------------------------------------
def _full_spec(shape):
    nd = len(shape)
    return pl.BlockSpec(tuple(int(s) for s in shape), lambda i, nd=nd: (0,) * nd)


def pallas_seq2seq(src, trg, pp):
    T, B = trg.shape
    out_shape = jax.ShapeDtypeStruct((T, B, VOCAB_PAD), jnp.float32)
    args = (src, trg,
            pp["enc_emb"], pp["dec_emb"],
            pp["enc_wih_f"], pp["enc_whh_f"], pp["enc_bih_f"], pp["enc_bhh_f"],
            pp["enc_wih_b"], pp["enc_whh_b"], pp["enc_bih_b"], pp["enc_bhh_b"],
            pp["fc_wf"], pp["fc_wb"], pp["enc_fc_b"],
            pp["wa_h"], pp["wa_e"], pp["ba"], pp["v"],
            pp["wih_e"], pp["wih_c"], pp["dec_whh"], pp["dec_bih"], pp["dec_bhh"],
            pp["fc_wh"], pp["fc_ww"], pp["fc_we"], pp["fc_out_b"])
    return pl.pallas_call(
        _seq2seq_kernel,
        grid=(1,),
        in_specs=[_full_spec(a.shape) for a in args],
        out_specs=_full_spec(out_shape.shape),
        out_shape=out_shape,
        compiler_params=pltpu.CompilerParams(dimension_semantics=("arbitrary",)),
    )(*args)


# ---------------------------------------------------------------------------
# Deterministic parameter initialization (shapes follow the nn.Module __init__)
# ---------------------------------------------------------------------------
def init_params(key):
    def nrm(key, shape, scale=0.15):
        return scale * jax.random.normal(key, shape, dtype=jnp.float32)

    ks = iter(jax.random.split(key, 32))
    p = {}
    p["enc_emb"] = nrm(next(ks), (ENC_VOCAB, ENC_EMB))
    p["dec_emb"] = nrm(next(ks), (DEC_VOCAB, DEC_EMB))
    for d in ("f", "b"):
        p[f"enc_wih_{d}"] = nrm(next(ks), (ENC_EMB, 3 * ENC_HID))
        p[f"enc_whh_{d}"] = nrm(next(ks), (ENC_HID, 3 * ENC_HID))
        p[f"enc_bih_{d}"] = nrm(next(ks), (1, 3 * ENC_HID))
        p[f"enc_bhh_{d}"] = nrm(next(ks), (1, 3 * ENC_HID))
    p["enc_fc_w"] = nrm(next(ks), (2 * ENC_HID, DEC_HID))
    p["enc_fc_b"] = nrm(next(ks), (1, DEC_HID))
    p["wa_h"] = nrm(next(ks), (DEC_HID, DEC_HID))
    p["wa_e"] = nrm(next(ks), (2 * ENC_HID, DEC_HID))
    p["ba"] = nrm(next(ks), (1, DEC_HID))
    p["v"] = nrm(next(ks), (1, DEC_HID))
    p["dec_wih"] = nrm(next(ks), (DEC_EMB + 2 * ENC_HID, 3 * DEC_HID))
    p["dec_whh"] = nrm(next(ks), (DEC_HID, 3 * DEC_HID))
    p["dec_bih"] = nrm(next(ks), (1, 3 * DEC_HID))
    p["dec_bhh"] = nrm(next(ks), (1, 3 * DEC_HID))
    p["fc_out_w"] = nrm(next(ks), (DEC_HID + 2 * ENC_HID + DEC_EMB, DEC_VOCAB))
    p["fc_out_b"] = nrm(next(ks), (1, DEC_VOCAB))
    return p


def prepare_params(params):
    """One-time host-side weight splits / lane padding (done OUTSIDE the jitted forward)."""
    colpad = ((0, 0), (0, VOCAB_PAD - DEC_VOCAB))
    pp = {
        "enc_emb": params["enc_emb"], "dec_emb": params["dec_emb"],
        "enc_wih_f": params["enc_wih_f"], "enc_whh_f": params["enc_whh_f"],
        "enc_bih_f": params["enc_bih_f"], "enc_bhh_f": params["enc_bhh_f"],
        "enc_wih_b": params["enc_wih_b"], "enc_whh_b": params["enc_whh_b"],
        "enc_bih_b": params["enc_bih_b"], "enc_bhh_b": params["enc_bhh_b"],
        "fc_wf": params["enc_fc_w"][:ENC_HID],
        "fc_wb": params["enc_fc_w"][ENC_HID:],
        "enc_fc_b": params["enc_fc_b"],
        "wa_h": params["wa_h"], "wa_e": params["wa_e"],
        "ba": params["ba"], "v": params["v"],
        "wih_e": params["dec_wih"][:DEC_EMB],
        "wih_c": params["dec_wih"][DEC_EMB:],
        "dec_whh": params["dec_whh"],
        "dec_bih": params["dec_bih"], "dec_bhh": params["dec_bhh"],
        "fc_wh": jnp.pad(params["fc_out_w"][:DEC_HID], colpad),
        "fc_ww": jnp.pad(params["fc_out_w"][DEC_HID:DEC_HID + 2 * ENC_HID], colpad),
        "fc_we": jnp.pad(params["fc_out_w"][DEC_HID + 2 * ENC_HID:], colpad),
        "fc_out_b": jnp.pad(params["fc_out_b"], colpad),
    }
    return {k: jax.device_put(v) for k, v in pp.items()}


# ---------------------------------------------------------------------------
# Full forward pass: ONE fused Pallas kernel (+ a slice back to DEC_VOCAB)
# ---------------------------------------------------------------------------
def seq2seq_forward(pp, src, trg):
    out_pad = pallas_seq2seq(src, trg, pp)        # (T, B, VOCAB_PAD); row 0 zeroed in-kernel
    return out_pad[:, :, :DEC_VOCAB]              # (T, B, DEC_VOCAB)


# ---------------------------------------------------------------------------
# Pure-JAX reference (same math, no Pallas) for a correctness check
# ---------------------------------------------------------------------------
def _ref_gru(x, h, wih, whh, bih, bhh):
    H = h.shape[1]
    gi = x @ wih + bih
    gh = h @ whh + bhh
    r = jax.nn.sigmoid(gi[:, :H] + gh[:, :H])
    z = jax.nn.sigmoid(gi[:, H:2 * H] + gh[:, H:2 * H])
    n = jnp.tanh(gi[:, 2 * H:] + r * gh[:, 2 * H:])
    return (1.0 - z) * n + z * h


def _ref_attention(hidden, enc_out, mask, p):
    energy = jnp.tanh(enc_out @ p["wa_e"] + (hidden @ p["wa_h"])[:, None, :] + p["ba"][None])
    score = jnp.sum(energy * p["v"][None], axis=-1)
    score = jnp.where(mask > 0.0, score, -1e10)
    a = jax.nn.softmax(score, axis=1)
    return jnp.sum(a[:, :, None] * enc_out, axis=1)


def ref_forward(params, src, trg):
    S, B = src.shape
    T = trg.shape[0]
    emb = params["enc_emb"][src]
    h_f = jnp.zeros((B, ENC_HID)); h_b = jnp.zeros((B, ENC_HID))
    fwd, bwd = [], [None] * S
    for t in range(S):
        h_f = _ref_gru(emb[t], h_f, params["enc_wih_f"], params["enc_whh_f"],
                       params["enc_bih_f"], params["enc_bhh_f"])
        fwd.append(h_f)
    for t in reversed(range(S)):
        h_b = _ref_gru(emb[t], h_b, params["enc_wih_b"], params["enc_whh_b"],
                       params["enc_bih_b"], params["enc_bhh_b"])
        bwd[t] = h_b
    enc_out = jnp.concatenate([jnp.stack(fwd, 1), jnp.stack(bwd, 1)], axis=2)
    hidden = jnp.tanh(jnp.concatenate([h_f, h_b], 1) @ params["enc_fc_w"] + params["enc_fc_b"])
    mask = (src != PAD_IDX).astype(jnp.float32).T
    outs = [jnp.zeros((B, DEC_VOCAB))]
    inp = trg[0]
    for t in range(1, T):
        embedded = params["dec_emb"][inp]
        weighted = _ref_attention(hidden, enc_out, mask, params)
        hidden = _ref_gru(jnp.concatenate([embedded, weighted], 1), hidden,
                          params["dec_wih"], params["dec_whh"],
                          params["dec_bih"], params["dec_bhh"])
        pred = jnp.concatenate([hidden, weighted, embedded], 1) @ params["fc_out_w"] + params["fc_out_b"]
        outs.append(pred)
        inp = trg[t]
    return jnp.stack(outs, 0)


# ---------------------------------------------------------------------------
if __name__ == "__main__":
    key = jax.random.PRNGKey(0)
    kp, ks, kt = jax.random.split(key, 3)
    params = init_params(kp)
    prepped = prepare_params(params)   # weight splits / pads done once, outside jit

    # full-length (no-pad) sequences; tokens in [1, vocab)
    src = jax.random.randint(ks, (SRC_LEN, BATCH), 1, ENC_VOCAB, dtype=jnp.int32)
    trg = jax.random.randint(kt, (TRG_LEN, BATCH), 1, DEC_VOCAB, dtype=jnp.int32)

    forward = jax.jit(seq2seq_forward)
    out = jax.block_until_ready(forward(prepped, src, trg))

    ref = jax.block_until_ready(ref_forward(params, src, trg))
    assert out.shape == (TRG_LEN, BATCH, DEC_VOCAB)
    np.testing.assert_allclose(np.asarray(out), np.asarray(ref), rtol=2e-3, atol=2e-3)

    print("KERNEL_OK")
</pallas_src>

<mosaic_0001>
module attributes {stable_mosaic.version = 11 : i64} {
  func.func @_seq2seq_kernel(%arg0: i32, %arg1: memref<8x2xi32, #tpu.memory_space<vmem>>, %arg2: memref<6x2xi32, #tpu.memory_space<vmem>>, %arg3: memref<20x16xf32, #tpu.memory_space<vmem>>, %arg4: memref<24x16xf32, #tpu.memory_space<vmem>>, %arg5: memref<16x48xf32, #tpu.memory_space<vmem>>, %arg6: memref<16x48xf32, #tpu.memory_space<vmem>>, %arg7: memref<1x48xf32, #tpu.memory_space<vmem>>, %arg8: memref<1x48xf32, #tpu.memory_space<vmem>>, %arg9: memref<16x48xf32, #tpu.memory_space<vmem>>, %arg10: memref<16x48xf32, #tpu.memory_space<vmem>>, %arg11: memref<1x48xf32, #tpu.memory_space<vmem>>, %arg12: memref<1x48xf32, #tpu.memory_space<vmem>>, %arg13: memref<16x32xf32, #tpu.memory_space<vmem>>, %arg14: memref<16x32xf32, #tpu.memory_space<vmem>>, %arg15: memref<1x32xf32, #tpu.memory_space<vmem>>, %arg16: memref<32x32xf32, #tpu.memory_space<vmem>>, %arg17: memref<32x32xf32, #tpu.memory_space<vmem>>, %arg18: memref<1x32xf32, #tpu.memory_space<vmem>>, %arg19: memref<1x32xf32, #tpu.memory_space<vmem>>, %arg20: memref<16x96xf32, #tpu.memory_space<vmem>>, %arg21: memref<32x96xf32, #tpu.memory_space<vmem>>, %arg22: memref<32x96xf32, #tpu.memory_space<vmem>>, %arg23: memref<1x96xf32, #tpu.memory_space<vmem>>, %arg24: memref<1x96xf32, #tpu.memory_space<vmem>>, %arg25: memref<32x128xf32, #tpu.memory_space<vmem>>, %arg26: memref<32x128xf32, #tpu.memory_space<vmem>>, %arg27: memref<16x128xf32, #tpu.memory_space<vmem>>, %arg28: memref<1x128xf32, #tpu.memory_space<vmem>>, %arg29: memref<6x2x128xf32, #tpu.memory_space<vmem>>) attributes {dimension_semantics = [#tpu.dimension_semantics<arbitrary>], iteration_bounds = array<i64: 1>, scalar_prefetch = 0 : i64, scratch_operands = 0 : i64, tpu.core_type = #tpu.core_type<tc>, window_params = [{pipeline_mode = #tpu.pipeline_mode<synchronous>, transform_indices = @transform_0, window_bounds = array<i64: 8, 2>}, {pipeline_mode = #tpu.pipeline_mode<synchronous>, transform_indices = @transform_1, window_bounds = array<i64: 6, 2>}, {pipeline_mode = #tpu.pipeline_mode<synchronous>, transform_indices = @transform_2, window_bounds = array<i64: 20, 16>}, {pipeline_mode = #tpu.pipeline_mode<synchronous>, transform_indices = @transform_3, window_bounds = array<i64: 24, 16>}, {pipeline_mode = #tpu.pipeline_mode<synchronous>, transform_indices = @transform_4, window_bounds = array<i64: 16, 48>}, {pipeline_mode = #tpu.pipeline_mode<synchronous>, transform_indices = @transform_5, window_bounds = array<i64: 16, 48>}, {pipeline_mode = #tpu.pipeline_mode<synchronous>, transform_indices = @transform_6, window_bounds = array<i64: 1, 48>}, {pipeline_mode = #tpu.pipeline_mode<synchronous>, transform_indices = @transform_7, window_bounds = array<i64: 1, 48>}, {pipeline_mode = #tpu.pipeline_mode<synchronous>, transform_indices = @transform_8, window_bounds = array<i64: 16, 48>}, {pipeline_mode = #tpu.pipeline_mode<synchronous>, transform_indices = @transform_9, window_bounds = array<i64: 16, 48>}, {pipeline_mode = #tpu.pipeline_mode<synchronous>, transform_indices = @transform_10, window_bounds = array<i64: 1, 48>}, {pipeline_mode = #tpu.pipeline_mode<synchronous>, transform_indices = @transform_11, window_bounds = array<i64: 1, 48>}, {pipeline_mode = #tpu.pipeline_mode<synchronous>, transform_indices = @transform_12, window_bounds = array<i64: 16, 32>}, {pipeline_mode = #tpu.pipeline_mode<synchronous>, transform_indices = @transform_13, window_bounds = array<i64: 16, 32>}, {pipeline_mode = #tpu.pipeline_mode<synchronous>, transform_indices = @transform_14, window_bounds = array<i64: 1, 32>}, {pipeline_mode = #tpu.pipeline_mode<synchronous>, transform_indices = @transform_15, window_bounds = array<i64: 32, 32>}, {pipeline_mode = #tpu.pipeline_mode<synchronous>, transform_indices = @transform_16, window_bounds = array<i64: 32, 32>}, {pipeline_mode = #tpu.pipeline_mode<synchronous>, transform_indices = @transform_17, window_bounds = array<i64: 1, 32>}, {pipeline_mode = #tpu.pipeline_mode<synchronous>, transform_indices = @transform_18, window_bounds = array<i64: 1, 32>}, {pipeline_mode = #tpu.pipeline_mode<synchronous>, transform_indices = @transform_19, window_bounds = array<i64: 16, 96>}, {pipeline_mode = #tpu.pipeline_mode<synchronous>, transform_indices = @transform_20, window_bounds = array<i64: 32, 96>}, {pipeline_mode = #tpu.pipeline_mode<synchronous>, transform_indices = @transform_21, window_bounds = array<i64: 32, 96>}, {pipeline_mode = #tpu.pipeline_mode<synchronous>, transform_indices = @transform_22, window_bounds = array<i64: 1, 96>}, {pipeline_mode = #tpu.pipeline_mode<synchronous>, transform_indices = @transform_23, window_bounds = array<i64: 1, 96>}, {pipeline_mode = #tpu.pipeline_mode<synchronous>, transform_indices = @transform_24, window_bounds = array<i64: 32, 128>}, {pipeline_mode = #tpu.pipeline_mode<synchronous>, transform_indices = @transform_25, window_bounds = array<i64: 32, 128>}, {pipeline_mode = #tpu.pipeline_mode<synchronous>, transform_indices = @transform_26, window_bounds = array<i64: 16, 128>}, {pipeline_mode = #tpu.pipeline_mode<synchronous>, transform_indices = @transform_27, window_bounds = array<i64: 1, 128>}, {pipeline_mode = #tpu.pipeline_mode<synchronous>, transform_indices = @transform_28, window_bounds = array<i64: 6, 2, 128>}]} {
    %c0 = arith.constant 0 : index
    %c0_0 = arith.constant 0 : index
    %0 = vector.load %arg1[%c0, %c0_0] : memref<8x2xi32, #tpu.memory_space<vmem>>, vector<8x2xi32>
    %1 = tpu.iota {dimensions = array<i32: 2>} : vector<8x2x20xi32>
    %2 = vector.shape_cast %0 : vector<8x2xi32> to vector<8x2x1xi32>
    %3 = vector.broadcast %2 : vector<8x2x1xi32> to vector<8x2x20xi32>
    %4 = arith.cmpi eq, %3, %1 : vector<8x2x20xi32>
    %5 = arith.extui %4 : vector<8x2x20xi1> to vector<8x2x20xi32>
    %6 = arith.sitofp %5 : vector<8x2x20xi32> to vector<8x2x20xf32>
    %7 = vector.shape_cast %6 : vector<8x2x20xf32> to vector<16x20xf32>
    %c0_1 = arith.constant 0 : index
    %c0_2 = arith.constant 0 : index
    %8 = vector.load %arg3[%c0_1, %c0_2] : memref<20x16xf32, #tpu.memory_space<vmem>>, vector<20x16xf32>
    %cst = arith.constant dense<0.000000e+00> : vector<16x16xf32>
    %9 = tpu.matmul %7, %8, %cst {dimension_numbers = #tpu.dot_dimension_numbers<[1], [0], [0], [1], [0, 0, 1, 1], [], []>} : vector<16x20xf32>, vector<20x16xf32>, vector<16x16xf32> -> vector<16x16xf32>
    %c0_3 = arith.constant 0 : index
    %c0_4 = arith.constant 0 : index
    %10 = vector.load %arg5[%c0_3, %c0_4] : memref<16x48xf32, #tpu.memory_space<vmem>>, vector<16x48xf32>
    %cst_5 = arith.constant dense<0.000000e+00> : vector<16x48xf32>
    %11 = tpu.matmul %9, %10, %cst_5 {dimension_numbers = #tpu.dot_dimension_numbers<[1], [0], [0], [1], [0, 0, 1, 1], [], []>} : vector<16x16xf32>, vector<16x48xf32>, vector<16x48xf32> -> vector<16x48xf32>
    %c0_6 = arith.constant 0 : index
    %c0_7 = arith.constant 0 : index
    %12 = vector.load %arg7[%c0_6, %c0_7] : memref<1x48xf32, #tpu.memory_space<vmem>>, vector<1x48xf32>
    %13 = vector.broadcast %12 : vector<1x48xf32> to vector<16x48xf32>
    %14 = arith.addf %11, %13 : vector<16x48xf32>
    %c0_8 = arith.constant 0 : index
    %c0_9 = arith.constant 0 : index
    %15 = vector.load %arg9[%c0_8, %c0_9] : memref<16x48xf32, #tpu.memory_space<vmem>>, vector<16x48xf32>
    %cst_10 = arith.constant dense<0.000000e+00> : vector<16x48xf32>
    %16 = tpu.matmul %9, %15, %cst_10 {dimension_numbers = #tpu.dot_dimension_numbers<[1], [0], [0], [1], [0, 0, 1, 1], [], []>} : vector<16x16xf32>, vector<16x48xf32>, vector<16x48xf32> -> vector<16x48xf32>
    %c0_11 = arith.constant 0 : index
    %c0_12 = arith.constant 0 : index
    %17 = vector.load %arg11[%c0_11, %c0_12] : memref<1x48xf32, #tpu.memory_space<vmem>>, vector<1x48xf32>
    %18 = vector.broadcast %17 : vector<1x48xf32> to vector<16x48xf32>
    %19 = arith.addf %16, %18 : vector<16x48xf32>
    %c0_13 = arith.constant 0 : index
    %c0_14 = arith.constant 0 : index
    %20 = vector.load %arg6[%c0_13, %c0_14] : memref<16x48xf32, #tpu.memory_space<vmem>>, vector<16x48xf32>
    %c0_15 = arith.constant 0 : index
    %c0_16 = arith.constant 0 : index
    %21 = vector.load %arg8[%c0_15, %c0_16] : memref<1x48xf32, #tpu.memory_space<vmem>>, vector<1x48xf32>
    %c0_17 = arith.constant 0 : index
    %c0_18 = arith.constant 0 : index
    %22 = vector.load %arg10[%c0_17, %c0_18] : memref<16x48xf32, #tpu.memory_space<vmem>>, vector<16x48xf32>
    %c0_19 = arith.constant 0 : index
    %c0_20 = arith.constant 0 : index
    %23 = vector.load %arg12[%c0_19, %c0_20] : memref<1x48xf32, #tpu.memory_space<vmem>>, vector<1x48xf32>
    %cst_21 = arith.constant 0.000000e+00 : f32
    %24 = vector.broadcast %cst_21 : f32 to vector<2x16xf32>
    %cst_22 = arith.constant 0.000000e+00 : f32
    %25 = vector.broadcast %cst_22 : f32 to vector<2x16xf32>
    %cst_23 = arith.constant dense<0.000000e+00> : vector<2x48xf32>
    %26 = tpu.matmul %24, %20, %cst_23 {dimension_numbers = #tpu.dot_dimension_numbers<[1], [0], [0], [1], [0, 0, 1, 1], [], []>} : vector<2x16xf32>, vector<16x48xf32>, vector<2x48xf32> -> vector<2x48xf32>
    %27 = vector.broadcast %21 : vector<1x48xf32> to vector<2x48xf32>
    %28 = arith.addf %26, %27 : vector<2x48xf32>
    %29 = vector.extract_strided_slice %14 {offsets = [0, 0], sizes = [2, 48], strides = [1, 1]} : vector<16x48xf32> to vector<2x48xf32>
    %30 = vector.extract_strided_slice %29 {offsets = [0, 0], sizes = [2, 32], strides = [1, 1]} : vector<2x48xf32> to vector<2x32xf32>
    %31 = vector.extract_strided_slice %28 {offsets = [0, 0], sizes = [2, 32], strides = [1, 1]} : vector<2x48xf32> to vector<2x32xf32>
    %32 = arith.addf %30, %31 : vector<2x32xf32>
    %33 = arith.negf %32 : vector<2x32xf32>
    %34 = math.exp %33 : vector<2x32xf32>
    %cst_24 = arith.constant 1.000000e+00 : f32
    %35 = vector.broadcast %cst_24 : f32 to vector<2x32xf32>
    %36 = arith.addf %35, %34 : vector<2x32xf32>
    %37 = arith.divf %35, %36 : vector<2x32xf32>
    %38 = vector.extract_strided_slice %37 {offsets = [0, 0], sizes = [2, 16], strides = [1, 1]} : vector<2x32xf32> to vector<2x16xf32>
    %39 = vector.extract_strided_slice %37 {offsets = [0, 16], sizes = [2, 16], strides = [1, 1]} : vector<2x32xf32> to vector<2x16xf32>
    %40 = vector.extract_strided_slice %29 {offsets = [0, 32], sizes = [2, 16], strides = [1, 1]} : vector<2x48xf32> to vector<2x16xf32>
    %41 = vector.extract_strided_slice %28 {offsets = [0, 32], sizes = [2, 16], strides = [1, 1]} : vector<2x48xf32> to vector<2x16xf32>
    %42 = arith.mulf %38, %41 : vector<2x16xf32>
    %43 = arith.addf %40, %42 : vector<2x16xf32>
    %44 = math.tanh %43 : vector<2x16xf32>
    %cst_25 = arith.constant 1.000000e+00 : f32
    %45 = vector.broadcast %cst_25 : f32 to vector<2x16xf32>
    %46 = arith.subf %45, %39 : vector<2x16xf32>
    %47 = arith.mulf %46, %44 : vector<2x16xf32>
    %48 = arith.mulf %39, %24 : vector<2x16xf32>
    %49 = arith.addf %47, %48 : vector<2x16xf32>
    %cst_26 = arith.constant dense<0.000000e+00> : vector<2x48xf32>
    %50 = tpu.matmul %25, %22, %cst_26 {dimension_numbers = #tpu.dot_dimension_numbers<[1], [0], [0], [1], [0, 0, 1, 1], [], []>} : vector<2x16xf32>, vector<16x48xf32>, vector<2x48xf32> -> vector<2x48xf32>
    %51 = vector.broadcast %23 : vector<1x48xf32> to vector<2x48xf32>
    %52 = arith.addf %50, %51 : vector<2x48xf32>
    %53 = vector.extract_strided_slice %19 {offsets = [14, 0], sizes = [2, 48], strides = [1, 1]} : vector<16x48xf32> to vector<2x48xf32>
    %54 = vector.extract_strided_slice %53 {offsets = [0, 0], sizes = [2, 32], strides = [1, 1]} : vector<2x48xf32> to vector<2x32xf32>
    %55 = vector.extract_strided_slice %52 {offsets = [0, 0], sizes = [2, 32], strides = [1, 1]} : vector<2x48xf32> to vector<2x32xf32>
    %56 = arith.addf %54, %55 : vector<2x32xf32>
    %57 = arith.negf %56 : vector<2x32xf32>
    %58 = math.exp %57 : vector<2x32xf32>
    %cst_27 = arith.constant 1.000000e+00 : f32
    %59 = vector.broadcast %cst_27 : f32 to vector<2x32xf32>
    %60 = arith.addf %59, %58 : vector<2x32xf32>
    %61 = arith.divf %59, %60 : vector<2x32xf32>
    %62 = vector.extract_strided_slice %61 {offsets = [0, 0], sizes = [2, 16], strides = [1, 1]} : vector<2x32xf32> to vector<2x16xf32>
    %63 = vector.extract_strided_slice %61 {offsets = [0, 16], sizes = [2, 16], strides = [1, 1]} : vector<2x32xf32> to vector<2x16xf32>
    %64 = vector.extract_strided_slice %53 {offsets = [0, 32], sizes = [2, 16], strides = [1, 1]} : vector<2x48xf32> to vector<2x16xf32>
    %65 = vector.extract_strided_slice %52 {offsets = [0, 32], sizes = [2, 16], strides = [1, 1]} : vector<2x48xf32> to vector<2x16xf32>
    %66 = arith.mulf %62, %65 : vector<2x16xf32>
    %67 = arith.addf %64, %66 : vector<2x16xf32>
    %68 = math.tanh %67 : vector<2x16xf32>
    %cst_28 = arith.constant 1.000000e+00 : f32
    %69 = vector.broadcast %cst_28 : f32 to vector<2x16xf32>
    %70 = arith.subf %69, %63 : vector<2x16xf32>
    %71 = arith.mulf %70, %68 : vector<2x16xf32>
    %72 = arith.mulf %63, %25 : vector<2x16xf32>
    %73 = arith.addf %71, %72 : vector<2x16xf32>
    %cst_29 = arith.constant dense<0.000000e+00> : vector<2x48xf32>
    %74 = tpu.matmul %49, %20, %cst_29 {dimension_numbers = #tpu.dot_dimension_numbers<[1], [0], [0], [1], [0, 0, 1, 1], [], []>} : vector<2x16xf32>, vector<16x48xf32>, vector<2x48xf32> -> vector<2x48xf32>
    %75 = vector.broadcast %21 : vector<1x48xf32> to vector<2x48xf32>
    %76 = arith.addf %74, %75 : vector<2x48xf32>
    %77 = vector.extract_strided_slice %14 {offsets = [2, 0], sizes = [2, 48], strides = [1, 1]} : vector<16x48xf32> to vector<2x48xf32>
    %78 = vector.extract_strided_slice %77 {offsets = [0, 0], sizes = [2, 32], strides = [1, 1]} : vector<2x48xf32> to vector<2x32xf32>
    %79 = vector.extract_strided_slice %76 {offsets = [0, 0], sizes = [2, 32], strides = [1, 1]} : vector<2x48xf32> to vector<2x32xf32>
    %80 = arith.addf %78, %79 : vector<2x32xf32>
    %81 = arith.negf %80 : vector<2x32xf32>
    %82 = math.exp %81 : vector<2x32xf32>
    %cst_30 = arith.constant 1.000000e+00 : f32
    %83 = vector.broadcast %cst_30 : f32 to vector<2x32xf32>
    %84 = arith.addf %83, %82 : vector<2x32xf32>
    %85 = arith.divf %83, %84 : vector<2x32xf32>
    %86 = vector.extract_strided_slice %85 {offsets = [0, 0], sizes = [2, 16], strides = [1, 1]} : vector<2x32xf32> to vector<2x16xf32>
    %87 = vector.extract_strided_slice %85 {offsets = [0, 16], sizes = [2, 16], strides = [1, 1]} : vector<2x32xf32> to vector<2x16xf32>
    %88 = vector.extract_strided_slice %77 {offsets = [0, 32], sizes = [2, 16], strides = [1, 1]} : vector<2x48xf32> to vector<2x16xf32>
    %89 = vector.extract_strided_slice %76 {offsets = [0, 32], sizes = [2, 16], strides = [1, 1]} : vector<2x48xf32> to vector<2x16xf32>
    %90 = arith.mulf %86, %89 : vector<2x16xf32>
    %91 = arith.addf %88, %90 : vector<2x16xf32>
    %92 = math.tanh %91 : vector<2x16xf32>
    %cst_31 = arith.constant 1.000000e+00 : f32
    %93 = vector.broadcast %cst_31 : f32 to vector<2x16xf32>
    %94 = arith.subf %93, %87 : vector<2x16xf32>
    %95 = arith.mulf %94, %92 : vector<2x16xf32>
    %96 = arith.mulf %87, %49 : vector<2x16xf32>
    %97 = arith.addf %95, %96 : vector<2x16xf32>
    %cst_32 = arith.constant dense<0.000000e+00> : vector<2x48xf32>
    %98 = tpu.matmul %73, %22, %cst_32 {dimension_numbers = #tpu.dot_dimension_numbers<[1], [0], [0], [1], [0, 0, 1, 1], [], []>} : vector<2x16xf32>, vector<16x48xf32>, vector<2x48xf32> -> vector<2x48xf32>
    %99 = vector.broadcast %23 : vector<1x48xf32> to vector<2x48xf32>
    %100 = arith.addf %98, %99 : vector<2x48xf32>
    %101 = vector.extract_strided_slice %19 {offsets = [12, 0], sizes = [2, 48], strides = [1, 1]} : vector<16x48xf32> to vector<2x48xf32>
    %102 = vector.extract_strided_slice %101 {offsets = [0, 0], sizes = [2, 32], strides = [1, 1]} : vector<2x48xf32> to vector<2x32xf32>
    %103 = vector.extract_strided_slice %100 {offsets = [0, 0], sizes = [2, 32], strides = [1, 1]} : vector<2x48xf32> to vector<2x32xf32>
    %104 = arith.addf %102, %103 : vector<2x32xf32>
    %105 = arith.negf %104 : vector<2x32xf32>
    %106 = math.exp %105 : vector<2x32xf32>
    %cst_33 = arith.constant 1.000000e+00 : f32
    %107 = vector.broadcast %cst_33 : f32 to vector<2x32xf32>
    %108 = arith.addf %107, %106 : vector<2x32xf32>
    %109 = arith.divf %107, %108 : vector<2x32xf32>
    %110 = vector.extract_strided_slice %109 {offsets = [0, 0], sizes = [2, 16], strides = [1, 1]} : vector<2x32xf32> to vector<2x16xf32>
    %111 = vector.extract_strided_slice %109 {offsets = [0, 16], sizes = [2, 16], strides = [1, 1]} : vector<2x32xf32> to vector<2x16xf32>
    %112 = vector.extract_strided_slice %101 {offsets = [0, 32], sizes = [2, 16], strides = [1, 1]} : vector<2x48xf32> to vector<2x16xf32>
    %113 = vector.extract_strided_slice %100 {offsets = [0, 32], sizes = [2, 16], strides = [1, 1]} : vector<2x48xf32> to vector<2x16xf32>
    %114 = arith.mulf %110, %113 : vector<2x16xf32>
    %115 = arith.addf %112, %114 : vector<2x16xf32>
    %116 = math.tanh %115 : vector<2x16xf32>
    %cst_34 = arith.constant 1.000000e+00 : f32
    %117 = vector.broadcast %cst_34 : f32 to vector<2x16xf32>
    %118 = arith.subf %117, %111 : vector<2x16xf32>
    %119 = arith.mulf %118, %116 : vector<2x16xf32>
    %120 = arith.mulf %111, %73 : vector<2x16xf32>
    %121 = arith.addf %119, %120 : vector<2x16xf32>
    %cst_35 = arith.constant dense<0.000000e+00> : vector<2x48xf32>
    %122 = tpu.matmul %97, %20, %cst_35 {dimension_numbers = #tpu.dot_dimension_numbers<[1], [0], [0], [1], [0, 0, 1, 1], [], []>} : vector<2x16xf32>, vector<16x48xf32>, vector<2x48xf32> -> vector<2x48xf32>
    %123 = vector.broadcast %21 : vector<1x48xf32> to vector<2x48xf32>
    %124 = arith.addf %122, %123 : vector<2x48xf32>
    %125 = vector.extract_strided_slice %14 {offsets = [4, 0], sizes = [2, 48], strides = [1, 1]} : vector<16x48xf32> to vector<2x48xf32>
    %126 = vector.extract_strided_slice %125 {offsets = [0, 0], sizes = [2, 32], strides = [1, 1]} : vector<2x48xf32> to vector<2x32xf32>
    %127 = vector.extract_strided_slice %124 {offsets = [0, 0], sizes = [2, 32], strides = [1, 1]} : vector<2x48xf32> to vector<2x32xf32>
    %128 = arith.addf %126, %127 : vector<2x32xf32>
    %129 = arith.negf %128 : vector<2x32xf32>
    %130 = math.exp %129 : vector<2x32xf32>
    %cst_36 = arith.constant 1.000000e+00 : f32
    %131 = vector.broadcast %cst_36 : f32 to vector<2x32xf32>
    %132 = arith.addf %131, %130 : vector<2x32xf32>
    %133 = arith.divf %131, %132 : vector<2x32xf32>
    %134 = vector.extract_strided_slice %133 {offsets = [0, 0], sizes = [2, 16], strides = [1, 1]} : vector<2x32xf32> to vector<2x16xf32>
    %135 = vector.extract_strided_slice %133 {offsets = [0, 16], sizes = [2, 16], strides = [1, 1]} : vector<2x32xf32> to vector<2x16xf32>
    %136 = vector.extract_strided_slice %125 {offsets = [0, 32], sizes = [2, 16], strides = [1, 1]} : vector<2x48xf32> to vector<2x16xf32>
    %137 = vector.extract_strided_slice %124 {offsets = [0, 32], sizes = [2, 16], strides = [1, 1]} : vector<2x48xf32> to vector<2x16xf32>
    %138 = arith.mulf %134, %137 : vector<2x16xf32>
    %139 = arith.addf %136, %138 : vector<2x16xf32>
    %140 = math.tanh %139 : vector<2x16xf32>
    %cst_37 = arith.constant 1.000000e+00 : f32
    %141 = vector.broadcast %cst_37 : f32 to vector<2x16xf32>
    %142 = arith.subf %141, %135 : vector<2x16xf32>
    %143 = arith.mulf %142, %140 : vector<2x16xf32>
    %144 = arith.mulf %135, %97 : vector<2x16xf32>
    %145 = arith.addf %143, %144 : vector<2x16xf32>
    %cst_38 = arith.constant dense<0.000000e+00> : vector<2x48xf32>
    %146 = tpu.matmul %121, %22, %cst_38 {dimension_numbers = #tpu.dot_dimension_numbers<[1], [0], [0], [1], [0, 0, 1, 1], [], []>} : vector<2x16xf32>, vector<16x48xf32>, vector<2x48xf32> -> vector<2x48xf32>
    %147 = vector.broadcast %23 : vector<1x48xf32> to vector<2x48xf32>
    %148 = arith.addf %146, %147 : vector<2x48xf32>
    %149 = vector.extract_strided_slice %19 {offsets = [10, 0], sizes = [2, 48], strides = [1, 1]} : vector<16x48xf32> to vector<2x48xf32>
    %150 = vector.extract_strided_slice %149 {offsets = [0, 0], sizes = [2, 32], strides = [1, 1]} : vector<2x48xf32> to vector<2x32xf32>
    %151 = vector.extract_strided_slice %148 {offsets = [0, 0], sizes = [2, 32], strides = [1, 1]} : vector<2x48xf32> to vector<2x32xf32>
    %152 = arith.addf %150, %151 : vector<2x32xf32>
    %153 = arith.negf %152 : vector<2x32xf32>
    %154 = math.exp %153 : vector<2x32xf32>
    %cst_39 = arith.constant 1.000000e+00 : f32
    %155 = vector.broadcast %cst_39 : f32 to vector<2x32xf32>
    %156 = arith.addf %155, %154 : vector<2x32xf32>
    %157 = arith.divf %155, %156 : vector<2x32xf32>
    %158 = vector.extract_strided_slice %157 {offsets = [0, 0], sizes = [2, 16], strides = [1, 1]} : vector<2x32xf32> to vector<2x16xf32>
    %159 = vector.extract_strided_slice %157 {offsets = [0, 16], sizes = [2, 16], strides = [1, 1]} : vector<2x32xf32> to vector<2x16xf32>
    %160 = vector.extract_strided_slice %149 {offsets = [0, 32], sizes = [2, 16], strides = [1, 1]} : vector<2x48xf32> to vector<2x16xf32>
    %161 = vector.extract_strided_slice %148 {offsets = [0, 32], sizes = [2, 16], strides = [1, 1]} : vector<2x48xf32> to vector<2x16xf32>
    %162 = arith.mulf %158, %161 : vector<2x16xf32>
    %163 = arith.addf %160, %162 : vector<2x16xf32>
    %164 = math.tanh %163 : vector<2x16xf32>
    %cst_40 = arith.constant 1.000000e+00 : f32
    %165 = vector.broadcast %cst_40 : f32 to vector<2x16xf32>
    %166 = arith.subf %165, %159 : vector<2x16xf32>
    %167 = arith.mulf %166, %164 : vector<2x16xf32>
    %168 = arith.mulf %159, %121 : vector<2x16xf32>
    %169 = arith.addf %167, %168 : vector<2x16xf32>
    %cst_41 = arith.constant dense<0.000000e+00> : vector<2x48xf32>
    %170 = tpu.matmul %145, %20, %cst_41 {dimension_numbers = #tpu.dot_dimension_numbers<[1], [0], [0], [1], [0, 0, 1, 1], [], []>} : vector<2x16xf32>, vector<16x48xf32>, vector<2x48xf32> -> vector<2x48xf32>
    %171 = vector.broadcast %21 : vector<1x48xf32> to vector<2x48xf32>
    %172 = arith.addf %170, %171 : vector<2x48xf32>
    %173 = vector.extract_strided_slice %14 {offsets = [6, 0], sizes = [2, 48], strides = [1, 1]} : vector<16x48xf32> to vector<2x48xf32>
    %174 = vector.extract_strided_slice %173 {offsets = [0, 0], sizes = [2, 32], strides = [1, 1]} : vector<2x48xf32> to vector<2x32xf32>
    %175 = vector.extract_strided_slice %172 {offsets = [0, 0], sizes = [2, 32], strides = [1, 1]} : vector<2x48xf32> to vector<2x32xf32>
    %176 = arith.addf %174, %175 : vector<2x32xf32>
    %177 = arith.negf %176 : vector<2x32xf32>
    %178 = math.exp %177 : vector<2x32xf32>
    %cst_42 = arith.constant 1.000000e+00 : f32
    %179 = vector.broadcast %cst_42 : f32 to vector<2x32xf32>
    %180 = arith.addf %179, %178 : vector<2x32xf32>
    %181 = arith.divf %179, %180 : vector<2x32xf32>
    %182 = vector.extract_strided_slice %181 {offsets = [0, 0], sizes = [2, 16], strides = [1, 1]} : vector<2x32xf32> to vector<2x16xf32>
    %183 = vector.extract_strided_slice %181 {offsets = [0, 16], sizes = [2, 16], strides = [1, 1]} : vector<2x32xf32> to vector<2x16xf32>
    %184 = vector.extract_strided_slice %173 {offsets = [0, 32], sizes = [2, 16], strides = [1, 1]} : vector<2x48xf32> to vector<2x16xf32>
    %185 = vector.extract_strided_slice %172 {offsets = [0, 32], sizes = [2, 16], strides = [1, 1]} : vector<2x48xf32> to vector<2x16xf32>
    %186 = arith.mulf %182, %185 : vector<2x16xf32>
    %187 = arith.addf %184, %186 : vector<2x16xf32>
    %188 = math.tanh %187 : vector<2x16xf32>
    %cst_43 = arith.constant 1.000000e+00 : f32
    %189 = vector.broadcast %cst_43 : f32 to vector<2x16xf32>
    %190 = arith.subf %189, %183 : vector<2x16xf32>
    %191 = arith.mulf %190, %188 : vector<2x16xf32>
    %192 = arith.mulf %183, %145 : vector<2x16xf32>
    %193 = arith.addf %191, %192 : vector<2x16xf32>
    %cst_44 = arith.constant dense<0.000000e+00> : vector<2x48xf32>
    %194 = tpu.matmul %169, %22, %cst_44 {dimension_numbers = #tpu.dot_dimension_numbers<[1], [0], [0], [1], [0, 0, 1, 1], [], []>} : vector<2x16xf32>, vector<16x48xf32>, vector<2x48xf32> -> vector<2x48xf32>
    %195 = vector.broadcast %23 : vector<1x48xf32> to vector<2x48xf32>
    %196 = arith.addf %194, %195 : vector<2x48xf32>
    %197 = vector.extract_strided_slice %19 {offsets = [8, 0], sizes = [2, 48], strides = [1, 1]} : vector<16x48xf32> to vector<2x48xf32>
    %198 = vector.extract_strided_slice %197 {offsets = [0, 0], sizes = [2, 32], strides = [1, 1]} : vector<2x48xf32> to vector<2x32xf32>
    %199 = vector.extract_strided_slice %196 {offsets = [0, 0], sizes = [2, 32], strides = [1, 1]} : vector<2x48xf32> to vector<2x32xf32>
    %200 = arith.addf %198, %199 : vector<2x32xf32>
    %201 = arith.negf %200 : vector<2x32xf32>
    %202 = math.exp %201 : vector<2x32xf32>
    %cst_45 = arith.constant 1.000000e+00 : f32
    %203 = vector.broadcast %cst_45 : f32 to vector<2x32xf32>
    %204 = arith.addf %203, %202 : vector<2x32xf32>
    %205 = arith.divf %203, %204 : vector<2x32xf32>
    %206 = vector.extract_strided_slice %205 {offsets = [0, 0], sizes = [2, 16], strides = [1, 1]} : vector<2x32xf32> to vector<2x16xf32>
    %207 = vector.extract_strided_slice %205 {offsets = [0, 16], sizes = [2, 16], strides = [1, 1]} : vector<2x32xf32> to vector<2x16xf32>
    %208 = vector.extract_strided_slice %197 {offsets = [0, 32], sizes = [2, 16], strides = [1, 1]} : vector<2x48xf32> to vector<2x16xf32>
    %209 = vector.extract_strided_slice %196 {offsets = [0, 32], sizes = [2, 16], strides = [1, 1]} : vector<2x48xf32> to vector<2x16xf32>
    %210 = arith.mulf %206, %209 : vector<2x16xf32>
    %211 = arith.addf %208, %210 : vector<2x16xf32>
    %212 = math.tanh %211 : vector<2x16xf32>
    %cst_46 = arith.constant 1.000000e+00 : f32
    %213 = vector.broadcast %cst_46 : f32 to vector<2x16xf32>
    %214 = arith.subf %213, %207 : vector<2x16xf32>
    %215 = arith.mulf %214, %212 : vector<2x16xf32>
    %216 = arith.mulf %207, %169 : vector<2x16xf32>
    %217 = arith.addf %215, %216 : vector<2x16xf32>
    %cst_47 = arith.constant dense<0.000000e+00> : vector<2x48xf32>
    %218 = tpu.matmul %193, %20, %cst_47 {dimension_numbers = #tpu.dot_dimension_numbers<[1], [0], [0], [1], [0, 0, 1, 1], [], []>} : vector<2x16xf32>, vector<16x48xf32>, vector<2x48xf32> -> vector<2x48xf32>
    %219 = vector.broadcast %21 : vector<1x48xf32> to vector<2x48xf32>
    %220 = arith.addf %218, %219 : vector<2x48xf32>
    %221 = vector.extract_strided_slice %14 {offsets = [8, 0], sizes = [2, 48], strides = [1, 1]} : vector<16x48xf32> to vector<2x48xf32>
    %222 = vector.extract_strided_slice %221 {offsets = [0, 0], sizes = [2, 32], strides = [1, 1]} : vector<2x48xf32> to vector<2x32xf32>
    %223 = vector.extract_strided_slice %220 {offsets = [0, 0], sizes = [2, 32], strides = [1, 1]} : vector<2x48xf32> to vector<2x32xf32>
    %224 = arith.addf %222, %223 : vector<2x32xf32>
    %225 = arith.negf %224 : vector<2x32xf32>
    %226 = math.exp %225 : vector<2x32xf32>
    %cst_48 = arith.constant 1.000000e+00 : f32
    %227 = vector.broadcast %cst_48 : f32 to vector<2x32xf32>
    %228 = arith.addf %227, %226 : vector<2x32xf32>
    %229 = arith.divf %227, %228 : vector<2x32xf32>
    %230 = vector.extract_strided_slice %229 {offsets = [0, 0], sizes = [2, 16], strides = [1, 1]} : vector<2x32xf32> to vector<2x16xf32>
    %231 = vector.extract_strided_slice %229 {offsets = [0, 16], sizes = [2, 16], strides = [1, 1]} : vector<2x32xf32> to vector<2x16xf32>
    %232 = vector.extract_strided_slice %221 {offsets = [0, 32], sizes = [2, 16], strides = [1, 1]} : vector<2x48xf32> to vector<2x16xf32>
    %233 = vector.extract_strided_slice %220 {offsets = [0, 32], sizes = [2, 16], strides = [1, 1]} : vector<2x48xf32> to vector<2x16xf32>
    %234 = arith.mulf %230, %233 : vector<2x16xf32>
    %235 = arith.addf %232, %234 : vector<2x16xf32>
    %236 = math.tanh %235 : vector<2x16xf32>
    %cst_49 = arith.constant 1.000000e+00 : f32
    %237 = vector.broadcast %cst_49 : f32 to vector<2x16xf32>
    %238 = arith.subf %237, %231 : vector<2x16xf32>
    %239 = arith.mulf %238, %236 : vector<2x16xf32>
    %240 = arith.mulf %231, %193 : vector<2x16xf32>
    %241 = arith.addf %239, %240 : vector<2x16xf32>
    %cst_50 = arith.constant dense<0.000000e+00> : vector<2x48xf32>
    %242 = tpu.matmul %217, %22, %cst_50 {dimension_numbers = #tpu.dot_dimension_numbers<[1], [0], [0], [1], [0, 0, 1, 1], [], []>} : vector<2x16xf32>, vector<16x48xf32>, vector<2x48xf32> -> vector<2x48xf32>
    %243 = vector.broadcast %23 : vector<1x48xf32> to vector<2x48xf32>
    %244 = arith.addf %242, %243 : vector<2x48xf32>
    %245 = vector.extract_strided_slice %19 {offsets = [6, 0], sizes = [2, 48], strides = [1, 1]} : vector<16x48xf32> to vector<2x48xf32>
    %246 = vector.extract_strided_slice %245 {offsets = [0, 0], sizes = [2, 32], strides = [1, 1]} : vector<2x48xf32> to vector<2x32xf32>
    %247 = vector.extract_strided_slice %244 {offsets = [0, 0], sizes = [2, 32], strides = [1, 1]} : vector<2x48xf32> to vector<2x32xf32>
    %248 = arith.addf %246, %247 : vector<2x32xf32>
    %249 = arith.negf %248 : vector<2x32xf32>
    %250 = math.exp %249 : vector<2x32xf32>
    %cst_51 = arith.constant 1.000000e+00 : f32
    %251 = vector.broadcast %cst_51 : f32 to vector<2x32xf32>
    %252 = arith.addf %251, %250 : vector<2x32xf32>
    %253 = arith.divf %251, %252 : vector<2x32xf32>
    %254 = vector.extract_strided_slice %253 {offsets = [0, 0], sizes = [2, 16], strides = [1, 1]} : vector<2x32xf32> to vector<2x16xf32>
    %255 = vector.extract_strided_slice %253 {offsets = [0, 16], sizes = [2, 16], strides = [1, 1]} : vector<2x32xf32> to vector<2x16xf32>
    %256 = vector.extract_strided_slice %245 {offsets = [0, 32], sizes = [2, 16], strides = [1, 1]} : vector<2x48xf32> to vector<2x16xf32>
    %257 = vector.extract_strided_slice %244 {offsets = [0, 32], sizes = [2, 16], strides = [1, 1]} : vector<2x48xf32> to vector<2x16xf32>
    %258 = arith.mulf %254, %257 : vector<2x16xf32>
    %259 = arith.addf %256, %258 : vector<2x16xf32>
    %260 = math.tanh %259 : vector<2x16xf32>
    %cst_52 = arith.constant 1.000000e+00 : f32
    %261 = vector.broadcast %cst_52 : f32 to vector<2x16xf32>
    %262 = arith.subf %261, %255 : vector<2x16xf32>
    %263 = arith.mulf %262, %260 : vector<2x16xf32>
    %264 = arith.mulf %255, %217 : vector<2x16xf32>
    %265 = arith.addf %263, %264 : vector<2x16xf32>
    %cst_53 = arith.constant dense<0.000000e+00> : vector<2x48xf32>
    %266 = tpu.matmul %241, %20, %cst_53 {dimension_numbers = #tpu.dot_dimension_numbers<[1], [0], [0], [1], [0, 0, 1, 1], [], []>} : vector<2x16xf32>, vector<16x48xf32>, vector<2x48xf32> -> vector<2x48xf32>
    %267 = vector.broadcast %21 : vector<1x48xf32> to vector<2x48xf32>
    %268 = arith.addf %266, %267 : vector<2x48xf32>
    %269 = vector.extract_strided_slice %14 {offsets = [10, 0], sizes = [2, 48], strides = [1, 1]} : vector<16x48xf32> to vector<2x48xf32>
    %270 = vector.extract_strided_slice %269 {offsets = [0, 0], sizes = [2, 32], strides = [1, 1]} : vector<2x48xf32> to vector<2x32xf32>
    %271 = vector.extract_strided_slice %268 {offsets = [0, 0], sizes = [2, 32], strides = [1, 1]} : vector<2x48xf32> to vector<2x32xf32>
    %272 = arith.addf %270, %271 : vector<2x32xf32>
    %273 = arith.negf %272 : vector<2x32xf32>
    %274 = math.exp %273 : vector<2x32xf32>
    %cst_54 = arith.constant 1.000000e+00 : f32
    %275 = vector.broadcast %cst_54 : f32 to vector<2x32xf32>
    %276 = arith.addf %275, %274 : vector<2x32xf32>
    %277 = arith.divf %275, %276 : vector<2x32xf32>
    %278 = vector.extract_strided_slice %277 {offsets = [0, 0], sizes = [2, 16], strides = [1, 1]} : vector<2x32xf32> to vector<2x16xf32>
    %279 = vector.extract_strided_slice %277 {offsets = [0, 16], sizes = [2, 16], strides = [1, 1]} : vector<2x32xf32> to vector<2x16xf32>
    %280 = vector.extract_strided_slice %269 {offsets = [0, 32], sizes = [2, 16], strides = [1, 1]} : vector<2x48xf32> to vector<2x16xf32>
    %281 = vector.extract_strided_slice %268 {offsets = [0, 32], sizes = [2, 16], strides = [1, 1]} : vector<2x48xf32> to vector<2x16xf32>
    %282 = arith.mulf %278, %281 : vector<2x16xf32>
    %283 = arith.addf %280, %282 : vector<2x16xf32>
    %284 = math.tanh %283 : vector<2x16xf32>
    %cst_55 = arith.constant 1.000000e+00 : f32
    %285 = vector.broadcast %cst_55 : f32 to vector<2x16xf32>
    %286 = arith.subf %285, %279 : vector<2x16xf32>
    %287 = arith.mulf %286, %284 : vector<2x16xf32>
    %288 = arith.mulf %279, %241 : vector<2x16xf32>
    %289 = arith.addf %287, %288 : vector<2x16xf32>
    %cst_56 = arith.constant dense<0.000000e+00> : vector<2x48xf32>
    %290 = tpu.matmul %265, %22, %cst_56 {dimension_numbers = #tpu.dot_dimension_numbers<[1], [0], [0], [1], [0, 0, 1, 1], [], []>} : vector<2x16xf32>, vector<16x48xf32>, vector<2x48xf32> -> vector<2x48xf32>
    %291 = vector.broadcast %23 : vector<1x48xf32> to vector<2x48xf32>
    %292 = arith.addf %290, %291 : vector<2x48xf32>
    %293 = vector.extract_strided_slice %19 {offsets = [4, 0], sizes = [2, 48], strides = [1, 1]} : vector<16x48xf32> to vector<2x48xf32>
    %294 = vector.extract_strided_slice %293 {offsets = [0, 0], sizes = [2, 32], strides = [1, 1]} : vector<2x48xf32> to vector<2x32xf32>
    %295 = vector.extract_strided_slice %292 {offsets = [0, 0], sizes = [2, 32], strides = [1, 1]} : vector<2x48xf32> to vector<2x32xf32>
    %296 = arith.addf %294, %295 : vector<2x32xf32>
    %297 = arith.negf %296 : vector<2x32xf32>
    %298 = math.exp %297 : vector<2x32xf32>
    %cst_57 = arith.constant 1.000000e+00 : f32
    %299 = vector.broadcast %cst_57 : f32 to vector<2x32xf32>
    %300 = arith.addf %299, %298 : vector<2x32xf32>
    %301 = arith.divf %299, %300 : vector<2x32xf32>
    %302 = vector.extract_strided_slice %301 {offsets = [0, 0], sizes = [2, 16], strides = [1, 1]} : vector<2x32xf32> to vector<2x16xf32>
    %303 = vector.extract_strided_slice %301 {offsets = [0, 16], sizes = [2, 16], strides = [1, 1]} : vector<2x32xf32> to vector<2x16xf32>
    %304 = vector.extract_strided_slice %293 {offsets = [0, 32], sizes = [2, 16], strides = [1, 1]} : vector<2x48xf32> to vector<2x16xf32>
    %305 = vector.extract_strided_slice %292 {offsets = [0, 32], sizes = [2, 16], strides = [1, 1]} : vector<2x48xf32> to vector<2x16xf32>
    %306 = arith.mulf %302, %305 : vector<2x16xf32>
    %307 = arith.addf %304, %306 : vector<2x16xf32>
    %308 = math.tanh %307 : vector<2x16xf32>
    %cst_58 = arith.constant 1.000000e+00 : f32
    %309 = vector.broadcast %cst_58 : f32 to vector<2x16xf32>
    %310 = arith.subf %309, %303 : vector<2x16xf32>
    %311 = arith.mulf %310, %308 : vector<2x16xf32>
    %312 = arith.mulf %303, %265 : vector<2x16xf32>
    %313 = arith.addf %311, %312 : vector<2x16xf32>
    %cst_59 = arith.constant dense<0.000000e+00> : vector<2x48xf32>
    %314 = tpu.matmul %289, %20, %cst_59 {dimension_numbers = #tpu.dot_dimension_numbers<[1], [0], [0], [1], [0, 0, 1, 1], [], []>} : vector<2x16xf32>, vector<16x48xf32>, vector<2x48xf32> -> vector<2x48xf32>
    %315 = vector.broadcast %21 : vector<1x48xf32> to vector<2x48xf32>
    %316 = arith.addf %314, %315 : vector<2x48xf32>
    %317 = vector.extract_strided_slice %14 {offsets = [12, 0], sizes = [2, 48], strides = [1, 1]} : vector<16x48xf32> to vector<2x48xf32>
    %318 = vector.extract_strided_slice %317 {offsets = [0, 0], sizes = [2, 32], strides = [1, 1]} : vector<2x48xf32> to vector<2x32xf32>
    %319 = vector.extract_strided_slice %316 {offsets = [0, 0], sizes = [2, 32], strides = [1, 1]} : vector<2x48xf32> to vector<2x32xf32>
    %320 = arith.addf %318, %319 : vector<2x32xf32>
    %321 = arith.negf %320 : vector<2x32xf32>
    %322 = math.exp %321 : vector<2x32xf32>
    %cst_60 = arith.constant 1.000000e+00 : f32
    %323 = vector.broadcast %cst_60 : f32 to vector<2x32xf32>
    %324 = arith.addf %323, %322 : vector<2x32xf32>
    %325 = arith.divf %323, %324 : vector<2x32xf32>
    %326 = vector.extract_strided_slice %325 {offsets = [0, 0], sizes = [2, 16], strides = [1, 1]} : vector<2x32xf32> to vector<2x16xf32>
    %327 = vector.extract_strided_slice %325 {offsets = [0, 16], sizes = [2, 16], strides = [1, 1]} : vector<2x32xf32> to vector<2x16xf32>
    %328 = vector.extract_strided_slice %317 {offsets = [0, 32], sizes = [2, 16], strides = [1, 1]} : vector<2x48xf32> to vector<2x16xf32>
    %329 = vector.extract_strided_slice %316 {offsets = [0, 32], sizes = [2, 16], strides = [1, 1]} : vector<2x48xf32> to vector<2x16xf32>
    %330 = arith.mulf %326, %329 : vector<2x16xf32>
    %331 = arith.addf %328, %330 : vector<2x16xf32>
    %332 = math.tanh %331 : vector<2x16xf32>
    %cst_61 = arith.constant 1.000000e+00 : f32
    %333 = vector.broadcast %cst_61 : f32 to vector<2x16xf32>
    %334 = arith.subf %333, %327 : vector<2x16xf32>
    %335 = arith.mulf %334, %332 : vector<2x16xf32>
    %336 = arith.mulf %327, %289 : vector<2x16xf32>
    %337 = arith.addf %335, %336 : vector<2x16xf32>
    %cst_62 = arith.constant dense<0.000000e+00> : vector<2x48xf32>
    %338 = tpu.matmul %313, %22, %cst_62 {dimension_numbers = #tpu.dot_dimension_numbers<[1], [0], [0], [1], [0, 0, 1, 1], [], []>} : vector<2x16xf32>, vector<16x48xf32>, vector<2x48xf32> -> vector<2x48xf32>
    %339 = vector.broadcast %23 : vector<1x48xf32> to vector<2x48xf32>
    %340 = arith.addf %338, %339 : vector<2x48xf32>
    %341 = vector.extract_strided_slice %19 {offsets = [2, 0], sizes = [2, 48], strides = [1, 1]} : vector<16x48xf32> to vector<2x48xf32>
    %342 = vector.extract_strided_slice %341 {offsets = [0, 0], sizes = [2, 32], strides = [1, 1]} : vector<2x48xf32> to vector<2x32xf32>
    %343 = vector.extract_strided_slice %340 {offsets = [0, 0], sizes = [2, 32], strides = [1, 1]} : vector<2x48xf32> to vector<2x32xf32>
    %344 = arith.addf %342, %343 : vector<2x32xf32>
    %345 = arith.negf %344 : vector<2x32xf32>
    %346 = math.exp %345 : vector<2x32xf32>
    %cst_63 = arith.constant 1.000000e+00 : f32
    %347 = vector.broadcast %cst_63 : f32 to vector<2x32xf32>
    %348 = arith.addf %347, %346 : vector<2x32xf32>
    %349 = arith.divf %347, %348 : vector<2x32xf32>
    %350 = vector.extract_strided_slice %349 {offsets = [0, 0], sizes = [2, 16], strides = [1, 1]} : vector<2x32xf32> to vector<2x16xf32>
    %351 = vector.extract_strided_slice %349 {offsets = [0, 16], sizes = [2, 16], strides = [1, 1]} : vector<2x32xf32> to vector<2x16xf32>
    %352 = vector.extract_strided_slice %341 {offsets = [0, 32], sizes = [2, 16], strides = [1, 1]} : vector<2x48xf32> to vector<2x16xf32>
    %353 = vector.extract_strided_slice %340 {offsets = [0, 32], sizes = [2, 16], strides = [1, 1]} : vector<2x48xf32> to vector<2x16xf32>
    %354 = arith.mulf %350, %353 : vector<2x16xf32>
    %355 = arith.addf %352, %354 : vector<2x16xf32>
    %356 = math.tanh %355 : vector<2x16xf32>
    %cst_64 = arith.constant 1.000000e+00 : f32
    %357 = vector.broadcast %cst_64 : f32 to vector<2x16xf32>
    %358 = arith.subf %357, %351 : vector<2x16xf32>
    %359 = arith.mulf %358, %356 : vector<2x16xf32>
    %360 = arith.mulf %351, %313 : vector<2x16xf32>
    %361 = arith.addf %359, %360 : vector<2x16xf32>
    %cst_65 = arith.constant dense<0.000000e+00> : vector<2x48xf32>
    %362 = tpu.matmul %337, %20, %cst_65 {dimension_numbers = #tpu.dot_dimension_numbers<[1], [0], [0], [1], [0, 0, 1, 1], [], []>} : vector<2x16xf32>, vector<16x48xf32>, vector<2x48xf32> -> vector<2x48xf32>
    %363 = vector.broadcast %21 : vector<1x48xf32> to vector<2x48xf32>
    %364 = arith.addf %362, %363 : vector<2x48xf32>
    %365 = vector.extract_strided_slice %14 {offsets = [14, 0], sizes = [2, 48], strides = [1, 1]} : vector<16x48xf32> to vector<2x48xf32>
    %366 = vector.extract_strided_slice %365 {offsets = [0, 0], sizes = [2, 32], strides = [1, 1]} : vector<2x48xf32> to vector<2x32xf32>
    %367 = vector.extract_strided_slice %364 {offsets = [0, 0], sizes = [2, 32], strides = [1, 1]} : vector<2x48xf32> to vector<2x32xf32>
    %368 = arith.addf %366, %367 : vector<2x32xf32>
    %369 = arith.negf %368 : vector<2x32xf32>
    %370 = math.exp %369 : vector<2x32xf32>
    %cst_66 = arith.constant 1.000000e+00 : f32
    %371 = vector.broadcast %cst_66 : f32 to vector<2x32xf32>
    %372 = arith.addf %371, %370 : vector<2x32xf32>
    %373 = arith.divf %371, %372 : vector<2x32xf32>
    %374 = vector.extract_strided_slice %373 {offsets = [0, 0], sizes = [2, 16], strides = [1, 1]} : vector<2x32xf32> to vector<2x16xf32>
    %375 = vector.extract_strided_slice %373 {offsets = [0, 16], sizes = [2, 16], strides = [1, 1]} : vector<2x32xf32> to vector<2x16xf32>
    %376 = vector.extract_strided_slice %365 {offsets = [0, 32], sizes = [2, 16], strides = [1, 1]} : vector<2x48xf32> to vector<2x16xf32>
    %377 = vector.extract_strided_slice %364 {offsets = [0, 32], sizes = [2, 16], strides = [1, 1]} : vector<2x48xf32> to vector<2x16xf32>
    %378 = arith.mulf %374, %377 : vector<2x16xf32>
    %379 = arith.addf %376, %378 : vector<2x16xf32>
    %380 = math.tanh %379 : vector<2x16xf32>
    %cst_67 = arith.constant 1.000000e+00 : f32
    %381 = vector.broadcast %cst_67 : f32 to vector<2x16xf32>
    %382 = arith.subf %381, %375 : vector<2x16xf32>
    %383 = arith.mulf %382, %380 : vector<2x16xf32>
    %384 = arith.mulf %375, %337 : vector<2x16xf32>
    %385 = arith.addf %383, %384 : vector<2x16xf32>
    %cst_68 = arith.constant dense<0.000000e+00> : vector<2x48xf32>
    %386 = tpu.matmul %361, %22, %cst_68 {dimension_numbers = #tpu.dot_dimension_numbers<[1], [0], [0], [1], [0, 0, 1, 1], [], []>} : vector<2x16xf32>, vector<16x48xf32>, vector<2x48xf32> -> vector<2x48xf32>
    %387 = vector.broadcast %23 : vector<1x48xf32> to vector<2x48xf32>
    %388 = arith.addf %386, %387 : vector<2x48xf32>
    %389 = vector.extract_strided_slice %19 {offsets = [0, 0], sizes = [2, 48], strides = [1, 1]} : vector<16x48xf32> to vector<2x48xf32>
    %390 = vector.extract_strided_slice %389 {offsets = [0, 0], sizes = [2, 32], strides = [1, 1]} : vector<2x48xf32> to vector<2x32xf32>
    %391 = vector.extract_strided_slice %388 {offsets = [0, 0], sizes = [2, 32], strides = [1, 1]} : vector<2x48xf32> to vector<2x32xf32>
    %392 = arith.addf %390, %391 : vector<2x32xf32>
    %393 = arith.negf %392 : vector<2x32xf32>
    %394 = math.exp %393 : vector<2x32xf32>
    %cst_69 = arith.constant 1.000000e+00 : f32
    %395 = vector.broadcast %cst_69 : f32 to vector<2x32xf32>
    %396 = arith.addf %395, %394 : vector<2x32xf32>
    %397 = arith.divf %395, %396 : vector<2x32xf32>
    %398 = vector.extract_strided_slice %397 {offsets = [0, 0], sizes = [2, 16], strides = [1, 1]} : vector<2x32xf32> to vector<2x16xf32>
    %399 = vector.extract_strided_slice %397 {offsets = [0, 16], sizes = [2, 16], strides = [1, 1]} : vector<2x32xf32> to vector<2x16xf32>
    %400 = vector.extract_strided_slice %389 {offsets = [0, 32], sizes = [2, 16], strides = [1, 1]} : vector<2x48xf32> to vector<2x16xf32>
    %401 = vector.extract_strided_slice %388 {offsets = [0, 32], sizes = [2, 16], strides = [1, 1]} : vector<2x48xf32> to vector<2x16xf32>
    %402 = arith.mulf %398, %401 : vector<2x16xf32>
    %403 = arith.addf %400, %402 : vector<2x16xf32>
    %404 = math.tanh %403 : vector<2x16xf32>
    %cst_70 = arith.constant 1.000000e+00 : f32
    %405 = vector.broadcast %cst_70 : f32 to vector<2x16xf32>
    %406 = arith.subf %405, %399 : vector<2x16xf32>
    %407 = arith.mulf %406, %404 : vector<2x16xf32>
    %408 = arith.mulf %399, %361 : vector<2x16xf32>
    %409 = arith.addf %407, %408 : vector<2x16xf32>
    %410 = vector.shape_cast %49 : vector<2x16xf32> to vector<1x2x16xf32>
    %411 = vector.shape_cast %97 : vector<2x16xf32> to vector<1x2x16xf32>
    %412 = vector.shape_cast %145 : vector<2x16xf32> to vector<1x2x16xf32>
    %413 = vector.shape_cast %193 : vector<2x16xf32> to vector<1x2x16xf32>
    %414 = vector.shape_cast %241 : vector<2x16xf32> to vector<1x2x16xf32>
    %415 = vector.shape_cast %289 : vector<2x16xf32> to vector<1x2x16xf32>
    %416 = vector.shape_cast %337 : vector<2x16xf32> to vector<1x2x16xf32>
    %417 = vector.shape_cast %385 : vector<2x16xf32> to vector<1x2x16xf32>
    %418 = tpu.concatenate %410, %411, %412, %413, %414, %415, %416, %417 in 0 : vector<1x2x16xf32>, vector<1x2x16xf32>, vector<1x2x16xf32>, vector<1x2x16xf32>, vector<1x2x16xf32>, vector<1x2x16xf32>, vector<1x2x16xf32>, vector<1x2x16xf32> -> vector<8x2x16xf32>
    %419 = vector.shape_cast %409 : vector<2x16xf32> to vector<1x2x16xf32>
    %420 = vector.shape_cast %361 : vector<2x16xf32> to vector<1x2x16xf32>
    %421 = vector.shape_cast %313 : vector<2x16xf32> to vector<1x2x16xf32>
    %422 = vector.shape_cast %265 : vector<2x16xf32> to vector<1x2x16xf32>
    %423 = vector.shape_cast %217 : vector<2x16xf32> to vector<1x2x16xf32>
    %424 = vector.shape_cast %169 : vector<2x16xf32> to vector<1x2x16xf32>
    %425 = vector.shape_cast %121 : vector<2x16xf32> to vector<1x2x16xf32>
    %426 = vector.shape_cast %73 : vector<2x16xf32> to vector<1x2x16xf32>
    %427 = tpu.concatenate %419, %420, %421, %422, %423, %424, %425, %426 in 0 : vector<1x2x16xf32>, vector<1x2x16xf32>, vector<1x2x16xf32>, vector<1x2x16xf32>, vector<1x2x16xf32>, vector<1x2x16xf32>, vector<1x2x16xf32>, vector<1x2x16xf32> -> vector<8x2x16xf32>
    %428 = tpu.concatenate %418, %427 in 2 : vector<8x2x16xf32>, vector<8x2x16xf32> -> vector<8x2x32xf32>
    %c0_71 = arith.constant 0 : index
    %c0_72 = arith.constant 0 : index
    %429 = vector.load %arg13[%c0_71, %c0_72] : memref<16x32xf32, #tpu.memory_space<vmem>>, vector<16x32xf32>
    %cst_73 = arith.constant dense<0.000000e+00> : vector<2x32xf32>
    %430 = tpu.matmul %385, %429, %cst_73 {dimension_numbers = #tpu.dot_dimension_numbers<[1], [0], [0], [1], [0, 0, 1, 1], [], []>} : vector<2x16xf32>, vector<16x32xf32>, vector<2x32xf32> -> vector<2x32xf32>
    %c0_74 = arith.constant 0 : index
    %c0_75 = arith.constant 0 : index
    %431 = vector.load %arg14[%c0_74, %c0_75] : memref<16x32xf32, #tpu.memory_space<vmem>>, vector<16x32xf32>
    %cst_76 = arith.constant dense<0.000000e+00> : vector<2x32xf32>
    %432 = tpu.matmul %409, %431, %cst_76 {dimension_numbers = #tpu.dot_dimension_numbers<[1], [0], [0], [1], [0, 0, 1, 1], [], []>} : vector<2x16xf32>, vector<16x32xf32>, vector<2x32xf32> -> vector<2x32xf32>
    %433 = arith.addf %430, %432 : vector<2x32xf32>
    %c0_77 = arith.constant 0 : index
    %c0_78 = arith.constant 0 : index
    %434 = vector.load %arg15[%c0_77, %c0_78] : memref<1x32xf32, #tpu.memory_space<vmem>>, vector<1x32xf32>
    %435 = vector.broadcast %434 : vector<1x32xf32> to vector<2x32xf32>
    %436 = arith.addf %433, %435 : vector<2x32xf32>
    %437 = math.tanh %436 : vector<2x32xf32>
    %c0_79 = arith.constant 0 : index
    %c0_80 = arith.constant 0 : index
    %438 = vector.load %arg2[%c0_79, %c0_80] : memref<6x2xi32, #tpu.memory_space<vmem>>, vector<6x2xi32>
    %439 = vector.extract_strided_slice %438 {offsets = [0, 0], sizes = [5, 2], strides = [1, 1]} : vector<6x2xi32> to vector<5x2xi32>
    %440 = tpu.iota {dimensions = array<i32: 2>} : vector<5x2x24xi32>
    %441 = vector.shape_cast %439 : vector<5x2xi32> to vector<5x2x1xi32>
    %442 = vector.broadcast %441 : vector<5x2x1xi32> to vector<5x2x24xi32>
    %443 = arith.cmpi eq, %442, %440 : vector<5x2x24xi32>
    %444 = arith.extui %443 : vector<5x2x24xi1> to vector<5x2x24xi32>
    %445 = arith.sitofp %444 : vector<5x2x24xi32> to vector<5x2x24xf32>
    %446 = vector.shape_cast %445 : vector<5x2x24xf32> to vector<10x24xf32>
    %c0_81 = arith.constant 0 : index
    %c0_82 = arith.constant 0 : index
    %447 = vector.load %arg4[%c0_81, %c0_82] : memref<24x16xf32, #tpu.memory_space<vmem>>, vector<24x16xf32>
    %cst_83 = arith.constant dense<0.000000e+00> : vector<10x16xf32>
    %448 = tpu.matmul %446, %447, %cst_83 {dimension_numbers = #tpu.dot_dimension_numbers<[1], [0], [0], [1], [0, 0, 1, 1], [], []>} : vector<10x24xf32>, vector<24x16xf32>, vector<10x16xf32> -> vector<10x16xf32>
    %c0_84 = arith.constant 0 : index
    %c0_85 = arith.constant 0 : index
    %449 = vector.load %arg20[%c0_84, %c0_85] : memref<16x96xf32, #tpu.memory_space<vmem>>, vector<16x96xf32>
    %cst_86 = arith.constant dense<0.000000e+00> : vector<10x96xf32>
    %450 = tpu.matmul %448, %449, %cst_86 {dimension_numbers = #tpu.dot_dimension_numbers<[1], [0], [0], [1], [0, 0, 1, 1], [], []>} : vector<10x16xf32>, vector<16x96xf32>, vector<10x96xf32> -> vector<10x96xf32>
    %451 = vector.shape_cast %428 : vector<8x2x32xf32> to vector<16x32xf32>
    %c0_87 = arith.constant 0 : index
    %c0_88 = arith.constant 0 : index
    %452 = vector.load %arg17[%c0_87, %c0_88] : memref<32x32xf32, #tpu.memory_space<vmem>>, vector<32x32xf32>
    %cst_89 = arith.constant dense<0.000000e+00> : vector<16x32xf32>
    %453 = tpu.matmul %451, %452, %cst_89 {dimension_numbers = #tpu.dot_dimension_numbers<[1], [0], [0], [1], [0, 0, 1, 1], [], []>} : vector<16x32xf32>, vector<32x32xf32>, vector<16x32xf32> -> vector<16x32xf32>
    %454 = vector.shape_cast %453 : vector<16x32xf32> to vector<8x2x32xf32>
    %c0_90 = arith.constant 0 : index
    %c0_91 = arith.constant 0 : index
    %455 = vector.load %arg18[%c0_90, %c0_91] : memref<1x32xf32, #tpu.memory_space<vmem>>, vector<1x32xf32>
    %456 = vector.shape_cast %455 : vector<1x32xf32> to vector<1x1x32xf32>
    %457 = vector.broadcast %456 : vector<1x1x32xf32> to vector<8x2x32xf32>
    %458 = arith.addf %454, %457 : vector<8x2x32xf32>
    %c0_i32 = arith.constant 0 : i32
    %459 = vector.broadcast %c0_i32 : i32 to vector<8x2xi32>
    %460 = arith.cmpi ne, %0, %459 : vector<8x2xi32>
    %461 = arith.extui %460 : vector<8x2xi1> to vector<8x2xi32>
    %462 = arith.sitofp %461 : vector<8x2xi32> to vector<8x2xf32>
    %c0_92 = arith.constant 0 : index
    %c0_93 = arith.constant 0 : index
    %463 = vector.load %arg16[%c0_92, %c0_93] : memref<32x32xf32, #tpu.memory_space<vmem>>, vector<32x32xf32>
    %c0_94 = arith.constant 0 : index
    %c0_95 = arith.constant 0 : index
    %464 = vector.load %arg19[%c0_94, %c0_95] : memref<1x32xf32, #tpu.memory_space<vmem>>, vector<1x32xf32>
    %c0_96 = arith.constant 0 : index
    %c0_97 = arith.constant 0 : index
    %465 = vector.load %arg21[%c0_96, %c0_97] : memref<32x96xf32, #tpu.memory_space<vmem>>, vector<32x96xf32>
    %c0_98 = arith.constant 0 : index
    %c0_99 = arith.constant 0 : index
    %466 = vector.load %arg22[%c0_98, %c0_99] : memref<32x96xf32, #tpu.memory_space<vmem>>, vector<32x96xf32>
    %c0_100 = arith.constant 0 : index
    %c0_101 = arith.constant 0 : index
    %467 = vector.load %arg23[%c0_100, %c0_101] : memref<1x96xf32, #tpu.memory_space<vmem>>, vector<1x96xf32>
    %c0_102 = arith.constant 0 : index
    %c0_103 = arith.constant 0 : index
    %468 = vector.load %arg24[%c0_102, %c0_103] : memref<1x96xf32, #tpu.memory_space<vmem>>, vector<1x96xf32>
    %cst_104 = arith.constant dense<0.000000e+00> : vector<2x32xf32>
    %469 = tpu.matmul %437, %463, %cst_104 {dimension_numbers = #tpu.dot_dimension_numbers<[1], [0], [0], [1], [0, 0, 1, 1], [], []>} : vector<2x32xf32>, vector<32x32xf32>, vector<2x32xf32> -> vector<2x32xf32>
    %470 = vector.shape_cast %469 : vector<2x32xf32> to vector<1x2x32xf32>
    %471 = vector.broadcast %470 : vector<1x2x32xf32> to vector<8x2x32xf32>
    %472 = arith.addf %458, %471 : vector<8x2x32xf32>
    %473 = math.tanh %472 : vector<8x2x32xf32>
    %474 = vector.shape_cast %464 : vector<1x32xf32> to vector<1x1x32xf32>
    %475 = vector.broadcast %474 : vector<1x1x32xf32> to vector<8x2x32xf32>
    %476 = arith.mulf %473, %475 : vector<8x2x32xf32>
    %cst_105 = arith.constant dense<0.000000e+00> : vector<8x2xf32>
    %477 = vector.multi_reduction <add>, %476, %cst_105 [2] : vector<8x2x32xf32> to vector<8x2xf32>
    %cst_106 = arith.constant 0.000000e+00 : f32
    %478 = vector.broadcast %cst_106 : f32 to vector<8x2xf32>
    %479 = arith.cmpf ogt, %462, %478 : vector<8x2xf32>
    %cst_107 = arith.constant -1.000000e+10 : f32
    %480 = vector.broadcast %cst_107 : f32 to vector<8x2xf32>
    %481 = arith.select %479, %477, %480 : vector<8x2xi1>, vector<8x2xf32>
    %cst_108 = arith.constant dense<0xFF800000> : vector<2xf32>
    %482 = vector.multi_reduction <maximumf>, %481, %cst_108 [0] : vector<8x2xf32> to vector<2xf32>
    %483 = vector.shape_cast %482 : vector<2xf32> to vector<1x2xf32>
    %484 = vector.broadcast %483 : vector<1x2xf32> to vector<8x2xf32>
    %485 = arith.subf %481, %484 : vector<8x2xf32>
    %486 = math.exp %485 : vector<8x2xf32>
    %cst_109 = arith.constant dense<0.000000e+00> : vector<2xf32>
    %487 = vector.multi_reduction <add>, %486, %cst_109 [0] : vector<8x2xf32> to vector<2xf32>
    %488 = vector.shape_cast %487 : vector<2xf32> to vector<1x2xf32>
    %489 = tpu.reciprocal %488 {approx = true} : vector<1x2xf32> -> vector<1x2xf32>
    %490 = vector.broadcast %489 : vector<1x2xf32> to vector<8x2xf32>
    %491 = arith.mulf %486, %490 : vector<8x2xf32>
    %492 = vector.shape_cast %491 : vector<8x2xf32> to vector<8x2x1xf32>
    %493 = vector.broadcast %492 : vector<8x2x1xf32> to vector<8x2x32xf32>
    %494 = arith.mulf %493, %428 : vector<8x2x32xf32>
    %cst_110 = arith.constant dense<0.000000e+00> : vector<2x32xf32>
    %495 = vector.multi_reduction <add>, %494, %cst_110 [0] : vector<8x2x32xf32> to vector<2x32xf32>
    %496 = vector.extract_strided_slice %450 {offsets = [0, 0], sizes = [2, 96], strides = [1, 1]} : vector<10x96xf32> to vector<2x96xf32>
    %cst_111 = arith.constant dense<0.000000e+00> : vector<2x96xf32>
    %497 = tpu.matmul %495, %465, %cst_111 {dimension_numbers = #tpu.dot_dimension_numbers<[1], [0], [0], [1], [0, 0, 1, 1], [], []>} : vector<2x32xf32>, vector<32x96xf32>, vector<2x96xf32> -> vector<2x96xf32>
    %498 = arith.addf %496, %497 : vector<2x96xf32>
    %499 = vector.broadcast %467 : vector<1x96xf32> to vector<2x96xf32>
    %500 = arith.addf %498, %499 : vector<2x96xf32>
    %cst_112 = arith.constant dense<0.000000e+00> : vector<2x96xf32>
    %501 = tpu.matmul %437, %466, %cst_112 {dimension_numbers = #tpu.dot_dimension_numbers<[1], [0], [0], [1], [0, 0, 1, 1], [], []>} : vector<2x32xf32>, vector<32x96xf32>, vector<2x96xf32> -> vector<2x96xf32>
    %502 = vector.broadcast %468 : vector<1x96xf32> to vector<2x96xf32>
    %503 = arith.addf %501, %502 : vector<2x96xf32>
    %504 = vector.extract_strided_slice %500 {offsets = [0, 0], sizes = [2, 64], strides = [1, 1]} : vector<2x96xf32> to vector<2x64xf32>
    %505 = vector.extract_strided_slice %503 {offsets = [0, 0], sizes = [2, 64], strides = [1, 1]} : vector<2x96xf32> to vector<2x64xf32>
    %506 = arith.addf %504, %505 : vector<2x64xf32>
    %507 = arith.negf %506 : vector<2x64xf32>
    %508 = math.exp %507 : vector<2x64xf32>
    %cst_113 = arith.constant 1.000000e+00 : f32
    %509 = vector.broadcast %cst_113 : f32 to vector<2x64xf32>
    %510 = arith.addf %509, %508 : vector<2x64xf32>
    %511 = arith.divf %509, %510 : vector<2x64xf32>
    %512 = vector.extract_strided_slice %511 {offsets = [0, 0], sizes = [2, 32], strides = [1, 1]} : vector<2x64xf32> to vector<2x32xf32>
    %513 = vector.extract_strided_slice %511 {offsets = [0, 32], sizes = [2, 32], strides = [1, 1]} : vector<2x64xf32> to vector<2x32xf32>
    %514 = vector.extract_strided_slice %500 {offsets = [0, 64], sizes = [2, 32], strides = [1, 1]} : vector<2x96xf32> to vector<2x32xf32>
    %515 = vector.extract_strided_slice %503 {offsets = [0, 64], sizes = [2, 32], strides = [1, 1]} : vector<2x96xf32> to vector<2x32xf32>
    %516 = arith.mulf %512, %515 : vector<2x32xf32>
    %517 = arith.addf %514, %516 : vector<2x32xf32>
    %518 = math.tanh %517 : vector<2x32xf32>
    %cst_114 = arith.constant 1.000000e+00 : f32
    %519 = vector.broadcast %cst_114 : f32 to vector<2x32xf32>
    %520 = arith.subf %519, %513 : vector<2x32xf32>
    %521 = arith.mulf %520, %518 : vector<2x32xf32>
    %522 = arith.mulf %513, %437 : vector<2x32xf32>
    %523 = arith.addf %521, %522 : vector<2x32xf32>
    %cst_115 = arith.constant dense<0.000000e+00> : vector<2x32xf32>
    %524 = tpu.matmul %523, %463, %cst_115 {dimension_numbers = #tpu.dot_dimension_numbers<[1], [0], [0], [1], [0, 0, 1, 1], [], []>} : vector<2x32xf32>, vector<32x32xf32>, vector<2x32xf32> -> vector<2x32xf32>
    %525 = vector.shape_cast %524 : vector<2x32xf32> to vector<1x2x32xf32>
    %526 = vector.broadcast %525 : vector<1x2x32xf32> to vector<8x2x32xf32>
    %527 = arith.addf %458, %526 : vector<8x2x32xf32>
    %528 = math.tanh %527 : vector<8x2x32xf32>
    %529 = vector.shape_cast %464 : vector<1x32xf32> to vector<1x1x32xf32>
    %530 = vector.broadcast %529 : vector<1x1x32xf32> to vector<8x2x32xf32>
    %531 = arith.mulf %528, %530 : vector<8x2x32xf32>
    %cst_116 = arith.constant dense<0.000000e+00> : vector<8x2xf32>
    %532 = vector.multi_reduction <add>, %531, %cst_116 [2] : vector<8x2x32xf32> to vector<8x2xf32>
    %cst_117 = arith.constant 0.000000e+00 : f32
    %533 = vector.broadcast %cst_117 : f32 to vector<8x2xf32>
    %534 = arith.cmpf ogt, %462, %533 : vector<8x2xf32>
    %cst_118 = arith.constant -1.000000e+10 : f32
    %535 = vector.broadcast %cst_118 : f32 to vector<8x2xf32>
    %536 = arith.select %534, %532, %535 : vector<8x2xi1>, vector<8x2xf32>
    %cst_119 = arith.constant dense<0xFF800000> : vector<2xf32>
    %537 = vector.multi_reduction <maximumf>, %536, %cst_119 [0] : vector<8x2xf32> to vector<2xf32>
    %538 = vector.shape_cast %537 : vector<2xf32> to vector<1x2xf32>
    %539 = vector.broadcast %538 : vector<1x2xf32> to vector<8x2xf32>
    %540 = arith.subf %536, %539 : vector<8x2xf32>
    %541 = math.exp %540 : vector<8x2xf32>
    %cst_120 = arith.constant dense<0.000000e+00> : vector<2xf32>
    %542 = vector.multi_reduction <add>, %541, %cst_120 [0] : vector<8x2xf32> to vector<2xf32>
    %543 = vector.shape_cast %542 : vector<2xf32> to vector<1x2xf32>
    %544 = tpu.reciprocal %543 {approx = true} : vector<1x2xf32> -> vector<1x2xf32>
    %545 = vector.broadcast %544 : vector<1x2xf32> to vector<8x2xf32>
    %546 = arith.mulf %541, %545 : vector<8x2xf32>
    %547 = vector.shape_cast %546 : vector<8x2xf32> to vector<8x2x1xf32>
    %548 = vector.broadcast %547 : vector<8x2x1xf32> to vector<8x2x32xf32>
    %549 = arith.mulf %548, %428 : vector<8x2x32xf32>
    %cst_121 = arith.constant dense<0.000000e+00> : vector<2x32xf32>
    %550 = vector.multi_reduction <add>, %549, %cst_121 [0] : vector<8x2x32xf32> to vector<2x32xf32>
    %551 = vector.extract_strided_slice %450 {offsets = [2, 0], sizes = [2, 96], strides = [1, 1]} : vector<10x96xf32> to vector<2x96xf32>
    %cst_122 = arith.constant dense<0.000000e+00> : vector<2x96xf32>
    %552 = tpu.matmul %550, %465, %cst_122 {dimension_numbers = #tpu.dot_dimension_numbers<[1], [0], [0], [1], [0, 0, 1, 1], [], []>} : vector<2x32xf32>, vector<32x96xf32>, vector<2x96xf32> -> vector<2x96xf32>
    %553 = arith.addf %551, %552 : vector<2x96xf32>
    %554 = vector.broadcast %467 : vector<1x96xf32> to vector<2x96xf32>
    %555 = arith.addf %553, %554 : vector<2x96xf32>
    %cst_123 = arith.constant dense<0.000000e+00> : vector<2x96xf32>
    %556 = tpu.matmul %523, %466, %cst_123 {dimension_numbers = #tpu.dot_dimension_numbers<[1], [0], [0], [1], [0, 0, 1, 1], [], []>} : vector<2x32xf32>, vector<32x96xf32>, vector<2x96xf32> -> vector<2x96xf32>
    %557 = vector.broadcast %468 : vector<1x96xf32> to vector<2x96xf32>
    %558 = arith.addf %556, %557 : vector<2x96xf32>
    %559 = vector.extract_strided_slice %555 {offsets = [0, 0], sizes = [2, 64], strides = [1, 1]} : vector<2x96xf32> to vector<2x64xf32>
    %560 = vector.extract_strided_slice %558 {offsets = [0, 0], sizes = [2, 64], strides = [1, 1]} : vector<2x96xf32> to vector<2x64xf32>
    %561 = arith.addf %559, %560 : vector<2x64xf32>
    %562 = arith.negf %561 : vector<2x64xf32>
    %563 = math.exp %562 : vector<2x64xf32>
    %cst_124 = arith.constant 1.000000e+00 : f32
    %564 = vector.broadcast %cst_124 : f32 to vector<2x64xf32>
    %565 = arith.addf %564, %563 : vector<2x64xf32>
    %566 = arith.divf %564, %565 : vector<2x64xf32>
    %567 = vector.extract_strided_slice %566 {offsets = [0, 0], sizes = [2, 32], strides = [1, 1]} : vector<2x64xf32> to vector<2x32xf32>
    %568 = vector.extract_strided_slice %566 {offsets = [0, 32], sizes = [2, 32], strides = [1, 1]} : vector<2x64xf32> to vector<2x32xf32>
    %569 = vector.extract_strided_slice %555 {offsets = [0, 64], sizes = [2, 32], strides = [1, 1]} : vector<2x96xf32> to vector<2x32xf32>
    %570 = vector.extract_strided_slice %558 {offsets = [0, 64], sizes = [2, 32], strides = [1, 1]} : vector<2x96xf32> to vector<2x32xf32>
    %571 = arith.mulf %567, %570 : vector<2x32xf32>
    %572 = arith.addf %569, %571 : vector<2x32xf32>
    %573 = math.tanh %572 : vector<2x32xf32>
    %cst_125 = arith.constant 1.000000e+00 : f32
    %574 = vector.broadcast %cst_125 : f32 to vector<2x32xf32>
    %575 = arith.subf %574, %568 : vector<2x32xf32>
    %576 = arith.mulf %575, %573 : vector<2x32xf32>
    %577 = arith.mulf %568, %523 : vector<2x32xf32>
    %578 = arith.addf %576, %577 : vector<2x32xf32>
    %cst_126 = arith.constant dense<0.000000e+00> : vector<2x32xf32>
    %579 = tpu.matmul %578, %463, %cst_126 {dimension_numbers = #tpu.dot_dimension_numbers<[1], [0], [0], [1], [0, 0, 1, 1], [], []>} : vector<2x32xf32>, vector<32x32xf32>, vector<2x32xf32> -> vector<2x32xf32>
    %580 = vector.shape_cast %579 : vector<2x32xf32> to vector<1x2x32xf32>
    %581 = vector.broadcast %580 : vector<1x2x32xf32> to vector<8x2x32xf32>
    %582 = arith.addf %458, %581 : vector<8x2x32xf32>
    %583 = math.tanh %582 : vector<8x2x32xf32>
    %584 = vector.shape_cast %464 : vector<1x32xf32> to vector<1x1x32xf32>
    %585 = vector.broadcast %584 : vector<1x1x32xf32> to vector<8x2x32xf32>
    %586 = arith.mulf %583, %585 : vector<8x2x32xf32>
    %cst_127 = arith.constant dense<0.000000e+00> : vector<8x2xf32>
    %587 = vector.multi_reduction <add>, %586, %cst_127 [2] : vector<8x2x32xf32> to vector<8x2xf32>
    %cst_128 = arith.constant 0.000000e+00 : f32
    %588 = vector.broadcast %cst_128 : f32 to vector<8x2xf32>
    %589 = arith.cmpf ogt, %462, %588 : vector<8x2xf32>
    %cst_129 = arith.constant -1.000000e+10 : f32
    %590 = vector.broadcast %cst_129 : f32 to vector<8x2xf32>
    %591 = arith.select %589, %587, %590 : vector<8x2xi1>, vector<8x2xf32>
    %cst_130 = arith.constant dense<0xFF800000> : vector<2xf32>
    %592 = vector.multi_reduction <maximumf>, %591, %cst_130 [0] : vector<8x2xf32> to vector<2xf32>
    %593 = vector.shape_cast %592 : vector<2xf32> to vector<1x2xf32>
    %594 = vector.broadcast %593 : vector<1x2xf32> to vector<8x2xf32>
    %595 = arith.subf %591, %594 : vector<8x2xf32>
    %596 = math.exp %595 : vector<8x2xf32>
    %cst_131 = arith.constant dense<0.000000e+00> : vector<2xf32>
    %597 = vector.multi_reduction <add>, %596, %cst_131 [0] : vector<8x2xf32> to vector<2xf32>
    %598 = vector.shape_cast %597 : vector<2xf32> to vector<1x2xf32>
    %599 = tpu.reciprocal %598 {approx = true} : vector<1x2xf32> -> vector<1x2xf32>
    %600 = vector.broadcast %599 : vector<1x2xf32> to vector<8x2xf32>
    %601 = arith.mulf %596, %600 : vector<8x2xf32>
    %602 = vector.shape_cast %601 : vector<8x2xf32> to vector<8x2x1xf32>
    %603 = vector.broadcast %602 : vector<8x2x1xf32> to vector<8x2x32xf32>
    %604 = arith.mulf %603, %428 : vector<8x2x32xf32>
    %cst_132 = arith.constant dense<0.000000e+00> : vector<2x32xf32>
    %605 = vector.multi_reduction <add>, %604, %cst_132 [0] : vector<8x2x32xf32> to vector<2x32xf32>
    %606 = vector.extract_strided_slice %450 {offsets = [4, 0], sizes = [2, 96], strides = [1, 1]} : vector<10x96xf32> to vector<2x96xf32>
    %cst_133 = arith.constant dense<0.000000e+00> : vector<2x96xf32>
    %607 = tpu.matmul %605, %465, %cst_133 {dimension_numbers = #tpu.dot_dimension_numbers<[1], [0], [0], [1], [0, 0, 1, 1], [], []>} : vector<2x32xf32>, vector<32x96xf32>, vector<2x96xf32> -> vector<2x96xf32>
    %608 = arith.addf %606, %607 : vector<2x96xf32>
    %609 = vector.broadcast %467 : vector<1x96xf32> to vector<2x96xf32>
    %610 = arith.addf %608, %609 : vector<2x96xf32>
    %cst_134 = arith.constant dense<0.000000e+00> : vector<2x96xf32>
    %611 = tpu.matmul %578, %466, %cst_134 {dimension_numbers = #tpu.dot_dimension_numbers<[1], [0], [0], [1], [0, 0, 1, 1], [], []>} : vector<2x32xf32>, vector<32x96xf32>, vector<2x96xf32> -> vector<2x96xf32>
    %612 = vector.broadcast %468 : vector<1x96xf32> to vector<2x96xf32>
    %613 = arith.addf %611, %612 : vector<2x96xf32>
    %614 = vector.extract_strided_slice %610 {offsets = [0, 0], sizes = [2, 64], strides = [1, 1]} : vector<2x96xf32> to vector<2x64xf32>
    %615 = vector.extract_strided_slice %613 {offsets = [0, 0], sizes = [2, 64], strides = [1, 1]} : vector<2x96xf32> to vector<2x64xf32>
    %616 = arith.addf %614, %615 : vector<2x64xf32>
    %617 = arith.negf %616 : vector<2x64xf32>
    %618 = math.exp %617 : vector<2x64xf32>
    %cst_135 = arith.constant 1.000000e+00 : f32
    %619 = vector.broadcast %cst_135 : f32 to vector<2x64xf32>
    %620 = arith.addf %619, %618 : vector<2x64xf32>
    %621 = arith.divf %619, %620 : vector<2x64xf32>
    %622 = vector.extract_strided_slice %621 {offsets = [0, 0], sizes = [2, 32], strides = [1, 1]} : vector<2x64xf32> to vector<2x32xf32>
    %623 = vector.extract_strided_slice %621 {offsets = [0, 32], sizes = [2, 32], strides = [1, 1]} : vector<2x64xf32> to vector<2x32xf32>
    %624 = vector.extract_strided_slice %610 {offsets = [0, 64], sizes = [2, 32], strides = [1, 1]} : vector<2x96xf32> to vector<2x32xf32>
    %625 = vector.extract_strided_slice %613 {offsets = [0, 64], sizes = [2, 32], strides = [1, 1]} : vector<2x96xf32> to vector<2x32xf32>
    %626 = arith.mulf %622, %625 : vector<2x32xf32>
    %627 = arith.addf %624, %626 : vector<2x32xf32>
    %628 = math.tanh %627 : vector<2x32xf32>
    %cst_136 = arith.constant 1.000000e+00 : f32
    %629 = vector.broadcast %cst_136 : f32 to vector<2x32xf32>
    %630 = arith.subf %629, %623 : vector<2x32xf32>
    %631 = arith.mulf %630, %628 : vector<2x32xf32>
    %632 = arith.mulf %623, %578 : vector<2x32xf32>
    %633 = arith.addf %631, %632 : vector<2x32xf32>
    %cst_137 = arith.constant dense<0.000000e+00> : vector<2x32xf32>
    %634 = tpu.matmul %633, %463, %cst_137 {dimension_numbers = #tpu.dot_dimension_numbers<[1], [0], [0], [1], [0, 0, 1, 1], [], []>} : vector<2x32xf32>, vector<32x32xf32>, vector<2x32xf32> -> vector<2x32xf32>
    %635 = vector.shape_cast %634 : vector<2x32xf32> to vector<1x2x32xf32>
    %636 = vector.broadcast %635 : vector<1x2x32xf32> to vector<8x2x32xf32>
    %637 = arith.addf %458, %636 : vector<8x2x32xf32>
    %638 = math.tanh %637 : vector<8x2x32xf32>
    %639 = vector.shape_cast %464 : vector<1x32xf32> to vector<1x1x32xf32>
    %640 = vector.broadcast %639 : vector<1x1x32xf32> to vector<8x2x32xf32>
    %641 = arith.mulf %638, %640 : vector<8x2x32xf32>
    %cst_138 = arith.constant dense<0.000000e+00> : vector<8x2xf32>
    %642 = vector.multi_reduction <add>, %641, %cst_138 [2] : vector<8x2x32xf32> to vector<8x2xf32>
    %cst_139 = arith.constant 0.000000e+00 : f32
    %643 = vector.broadcast %cst_139 : f32 to vector<8x2xf32>
    %644 = arith.cmpf ogt, %462, %643 : vector<8x2xf32>
    %cst_140 = arith.constant -1.000000e+10 : f32
    %645 = vector.broadcast %cst_140 : f32 to vector<8x2xf32>
    %646 = arith.select %644, %642, %645 : vector<8x2xi1>, vector<8x2xf32>
    %cst_141 = arith.constant dense<0xFF800000> : vector<2xf32>
    %647 = vector.multi_reduction <maximumf>, %646, %cst_141 [0] : vector<8x2xf32> to vector<2xf32>
    %648 = vector.shape_cast %647 : vector<2xf32> to vector<1x2xf32>
    %649 = vector.broadcast %648 : vector<1x2xf32> to vector<8x2xf32>
    %650 = arith.subf %646, %649 : vector<8x2xf32>
    %651 = math.exp %650 : vector<8x2xf32>
    %cst_142 = arith.constant dense<0.000000e+00> : vector<2xf32>
    %652 = vector.multi_reduction <add>, %651, %cst_142 [0] : vector<8x2xf32> to vector<2xf32>
    %653 = vector.shape_cast %652 : vector<2xf32> to vector<1x2xf32>
    %654 = tpu.reciprocal %653 {approx = true} : vector<1x2xf32> -> vector<1x2xf32>
    %655 = vector.broadcast %654 : vector<1x2xf32> to vector<8x2xf32>
    %656 = arith.mulf %651, %655 : vector<8x2xf32>
    %657 = vector.shape_cast %656 : vector<8x2xf32> to vector<8x2x1xf32>
    %658 = vector.broadcast %657 : vector<8x2x1xf32> to vector<8x2x32xf32>
    %659 = arith.mulf %658, %428 : vector<8x2x32xf32>
    %cst_143 = arith.constant dense<0.000000e+00> : vector<2x32xf32>
    %660 = vector.multi_reduction <add>, %659, %cst_143 [0] : vector<8x2x32xf32> to vector<2x32xf32>
    %661 = vector.extract_strided_slice %450 {offsets = [6, 0], sizes = [2, 96], strides = [1, 1]} : vector<10x96xf32> to vector<2x96xf32>
    %cst_144 = arith.constant dense<0.000000e+00> : vector<2x96xf32>
    %662 = tpu.matmul %660, %465, %cst_144 {dimension_numbers = #tpu.dot_dimension_numbers<[1], [0], [0], [1], [0, 0, 1, 1], [], []>} : vector<2x32xf32>, vector<32x96xf32>, vector<2x96xf32> -> vector<2x96xf32>
    %663 = arith.addf %661, %662 : vector<2x96xf32>
    %664 = vector.broadcast %467 : vector<1x96xf32> to vector<2x96xf32>
    %665 = arith.addf %663, %664 : vector<2x96xf32>
    %cst_145 = arith.constant dense<0.000000e+00> : vector<2x96xf32>
    %666 = tpu.matmul %633, %466, %cst_145 {dimension_numbers = #tpu.dot_dimension_numbers<[1], [0], [0], [1], [0, 0, 1, 1], [], []>} : vector<2x32xf32>, vector<32x96xf32>, vector<2x96xf32> -> vector<2x96xf32>
    %667 = vector.broadcast %468 : vector<1x96xf32> to vector<2x96xf32>
    %668 = arith.addf %666, %667 : vector<2x96xf32>
    %669 = vector.extract_strided_slice %665 {offsets = [0, 0], sizes = [2, 64], strides = [1, 1]} : vector<2x96xf32> to vector<2x64xf32>
    %670 = vector.extract_strided_slice %668 {offsets = [0, 0], sizes = [2, 64], strides = [1, 1]} : vector<2x96xf32> to vector<2x64xf32>
    %671 = arith.addf %669, %670 : vector<2x64xf32>
    %672 = arith.negf %671 : vector<2x64xf32>
    %673 = math.exp %672 : vector<2x64xf32>
    %cst_146 = arith.constant 1.000000e+00 : f32
    %674 = vector.broadcast %cst_146 : f32 to vector<2x64xf32>
    %675 = arith.addf %674, %673 : vector<2x64xf32>
    %676 = arith.divf %674, %675 : vector<2x64xf32>
    %677 = vector.extract_strided_slice %676 {offsets = [0, 0], sizes = [2, 32], strides = [1, 1]} : vector<2x64xf32> to vector<2x32xf32>
    %678 = vector.extract_strided_slice %676 {offsets = [0, 32], sizes = [2, 32], strides = [1, 1]} : vector<2x64xf32> to vector<2x32xf32>
    %679 = vector.extract_strided_slice %665 {offsets = [0, 64], sizes = [2, 32], strides = [1, 1]} : vector<2x96xf32> to vector<2x32xf32>
    %680 = vector.extract_strided_slice %668 {offsets = [0, 64], sizes = [2, 32], strides = [1, 1]} : vector<2x96xf32> to vector<2x32xf32>
    %681 = arith.mulf %677, %680 : vector<2x32xf32>
    %682 = arith.addf %679, %681 : vector<2x32xf32>
    %683 = math.tanh %682 : vector<2x32xf32>
    %cst_147 = arith.constant 1.000000e+00 : f32
    %684 = vector.broadcast %cst_147 : f32 to vector<2x32xf32>
    %685 = arith.subf %684, %678 : vector<2x32xf32>
    %686 = arith.mulf %685, %683 : vector<2x32xf32>
    %687 = arith.mulf %678, %633 : vector<2x32xf32>
    %688 = arith.addf %686, %687 : vector<2x32xf32>
    %cst_148 = arith.constant dense<0.000000e+00> : vector<2x32xf32>
    %689 = tpu.matmul %688, %463, %cst_148 {dimension_numbers = #tpu.dot_dimension_numbers<[1], [0], [0], [1], [0, 0, 1, 1], [], []>} : vector<2x32xf32>, vector<32x32xf32>, vector<2x32xf32> -> vector<2x32xf32>
    %690 = vector.shape_cast %689 : vector<2x32xf32> to vector<1x2x32xf32>
    %691 = vector.broadcast %690 : vector<1x2x32xf32> to vector<8x2x32xf32>
    %692 = arith.addf %458, %691 : vector<8x2x32xf32>
    %693 = math.tanh %692 : vector<8x2x32xf32>
    %694 = vector.shape_cast %464 : vector<1x32xf32> to vector<1x1x32xf32>
    %695 = vector.broadcast %694 : vector<1x1x32xf32> to vector<8x2x32xf32>
    %696 = arith.mulf %693, %695 : vector<8x2x32xf32>
    %cst_149 = arith.constant dense<0.000000e+00> : vector<8x2xf32>
    %697 = vector.multi_reduction <add>, %696, %cst_149 [2] : vector<8x2x32xf32> to vector<8x2xf32>
    %cst_150 = arith.constant 0.000000e+00 : f32
    %698 = vector.broadcast %cst_150 : f32 to vector<8x2xf32>
    %699 = arith.cmpf ogt, %462, %698 : vector<8x2xf32>
    %cst_151 = arith.constant -1.000000e+10 : f32
    %700 = vector.broadcast %cst_151 : f32 to vector<8x2xf32>
    %701 = arith.select %699, %697, %700 : vector<8x2xi1>, vector<8x2xf32>
    %cst_152 = arith.constant dense<0xFF800000> : vector<2xf32>
    %702 = vector.multi_reduction <maximumf>, %701, %cst_152 [0] : vector<8x2xf32> to vector<2xf32>
    %703 = vector.shape_cast %702 : vector<2xf32> to vector<1x2xf32>
    %704 = vector.broadcast %703 : vector<1x2xf32> to vector<8x2xf32>
    %705 = arith.subf %701, %704 : vector<8x2xf32>
    %706 = math.exp %705 : vector<8x2xf32>
    %cst_153 = arith.constant dense<0.000000e+00> : vector<2xf32>
    %707 = vector.multi_reduction <add>, %706, %cst_153 [0] : vector<8x2xf32> to vector<2xf32>
    %708 = vector.shape_cast %707 : vector<2xf32> to vector<1x2xf32>
    %709 = tpu.reciprocal %708 {approx = true} : vector<1x2xf32> -> vector<1x2xf32>
    %710 = vector.broadcast %709 : vector<1x2xf32> to vector<8x2xf32>
    %711 = arith.mulf %706, %710 : vector<8x2xf32>
    %712 = vector.shape_cast %711 : vector<8x2xf32> to vector<8x2x1xf32>
    %713 = vector.broadcast %712 : vector<8x2x1xf32> to vector<8x2x32xf32>
    %714 = arith.mulf %713, %428 : vector<8x2x32xf32>
    %cst_154 = arith.constant dense<0.000000e+00> : vector<2x32xf32>
    %715 = vector.multi_reduction <add>, %714, %cst_154 [0] : vector<8x2x32xf32> to vector<2x32xf32>
    %716 = vector.extract_strided_slice %450 {offsets = [8, 0], sizes = [2, 96], strides = [1, 1]} : vector<10x96xf32> to vector<2x96xf32>
    %cst_155 = arith.constant dense<0.000000e+00> : vector<2x96xf32>
    %717 = tpu.matmul %715, %465, %cst_155 {dimension_numbers = #tpu.dot_dimension_numbers<[1], [0], [0], [1], [0, 0, 1, 1], [], []>} : vector<2x32xf32>, vector<32x96xf32>, vector<2x96xf32> -> vector<2x96xf32>
    %718 = arith.addf %716, %717 : vector<2x96xf32>
    %719 = vector.broadcast %467 : vector<1x96xf32> to vector<2x96xf32>
    %720 = arith.addf %718, %719 : vector<2x96xf32>
    %cst_156 = arith.constant dense<0.000000e+00> : vector<2x96xf32>
    %721 = tpu.matmul %688, %466, %cst_156 {dimension_numbers = #tpu.dot_dimension_numbers<[1], [0], [0], [1], [0, 0, 1, 1], [], []>} : vector<2x32xf32>, vector<32x96xf32>, vector<2x96xf32> -> vector<2x96xf32>
    %722 = vector.broadcast %468 : vector<1x96xf32> to vector<2x96xf32>
    %723 = arith.addf %721, %722 : vector<2x96xf32>
    %724 = vector.extract_strided_slice %720 {offsets = [0, 0], sizes = [2, 64], strides = [1, 1]} : vector<2x96xf32> to vector<2x64xf32>
    %725 = vector.extract_strided_slice %723 {offsets = [0, 0], sizes = [2, 64], strides = [1, 1]} : vector<2x96xf32> to vector<2x64xf32>
    %726 = arith.addf %724, %725 : vector<2x64xf32>
    %727 = arith.negf %726 : vector<2x64xf32>
    %728 = math.exp %727 : vector<2x64xf32>
    %cst_157 = arith.constant 1.000000e+00 : f32
    %729 = vector.broadcast %cst_157 : f32 to vector<2x64xf32>
    %730 = arith.addf %729, %728 : vector<2x64xf32>
    %731 = arith.divf %729, %730 : vector<2x64xf32>
    %732 = vector.extract_strided_slice %731 {offsets = [0, 0], sizes = [2, 32], strides = [1, 1]} : vector<2x64xf32> to vector<2x32xf32>
    %733 = vector.extract_strided_slice %731 {offsets = [0, 32], sizes = [2, 32], strides = [1, 1]} : vector<2x64xf32> to vector<2x32xf32>
    %734 = vector.extract_strided_slice %720 {offsets = [0, 64], sizes = [2, 32], strides = [1, 1]} : vector<2x96xf32> to vector<2x32xf32>
    %735 = vector.extract_strided_slice %723 {offsets = [0, 64], sizes = [2, 32], strides = [1, 1]} : vector<2x96xf32> to vector<2x32xf32>
    %736 = arith.mulf %732, %735 : vector<2x32xf32>
    %737 = arith.addf %734, %736 : vector<2x32xf32>
    %738 = math.tanh %737 : vector<2x32xf32>
    %cst_158 = arith.constant 1.000000e+00 : f32
    %739 = vector.broadcast %cst_158 : f32 to vector<2x32xf32>
    %740 = arith.subf %739, %733 : vector<2x32xf32>
    %741 = arith.mulf %740, %738 : vector<2x32xf32>
    %742 = arith.mulf %733, %688 : vector<2x32xf32>
    %743 = arith.addf %741, %742 : vector<2x32xf32>
    %744 = tpu.concatenate %523, %578, %633, %688, %743 in 0 : vector<2x32xf32>, vector<2x32xf32>, vector<2x32xf32>, vector<2x32xf32>, vector<2x32xf32> -> vector<10x32xf32>
    %745 = tpu.concatenate %495, %550, %605, %660, %715 in 0 : vector<2x32xf32>, vector<2x32xf32>, vector<2x32xf32>, vector<2x32xf32>, vector<2x32xf32> -> vector<10x32xf32>
    %c0_159 = arith.constant 0 : index
    %c0_160 = arith.constant 0 : index
    %746 = vector.load %arg25[%c0_159, %c0_160] : memref<32x128xf32, #tpu.memory_space<vmem>>, vector<32x128xf32>
    %cst_161 = arith.constant dense<0.000000e+00> : vector<10x128xf32>
    %747 = tpu.matmul %744, %746, %cst_161 {dimension_numbers = #tpu.dot_dimension_numbers<[1], [0], [0], [1], [0, 0, 1, 1], [], []>} : vector<10x32xf32>, vector<32x128xf32>, vector<10x128xf32> -> vector<10x128xf32>
    %c0_162 = arith.constant 0 : index
    %c0_163 = arith.constant 0 : index
    %748 = vector.load %arg26[%c0_162, %c0_163] : memref<32x128xf32, #tpu.memory_space<vmem>>, vector<32x128xf32>
    %cst_164 = arith.constant dense<0.000000e+00> : vector<10x128xf32>
    %749 = tpu.matmul %745, %748, %cst_164 {dimension_numbers = #tpu.dot_dimension_numbers<[1], [0], [0], [1], [0, 0, 1, 1], [], []>} : vector<10x32xf32>, vector<32x128xf32>, vector<10x128xf32> -> vector<10x128xf32>
    %750 = arith.addf %747, %749 : vector<10x128xf32>
    %c0_165 = arith.constant 0 : index
    %c0_166 = arith.constant 0 : index
    %751 = vector.load %arg27[%c0_165, %c0_166] : memref<16x128xf32, #tpu.memory_space<vmem>>, vector<16x128xf32>
    %cst_167 = arith.constant dense<0.000000e+00> : vector<10x128xf32>
    %752 = tpu.matmul %448, %751, %cst_167 {dimension_numbers = #tpu.dot_dimension_numbers<[1], [0], [0], [1], [0, 0, 1, 1], [], []>} : vector<10x16xf32>, vector<16x128xf32>, vector<10x128xf32> -> vector<10x128xf32>
    %753 = arith.addf %750, %752 : vector<10x128xf32>
    %c0_168 = arith.constant 0 : index
    %c0_169 = arith.constant 0 : index
    %754 = vector.load %arg28[%c0_168, %c0_169] : memref<1x128xf32, #tpu.memory_space<vmem>>, vector<1x128xf32>
    %755 = vector.broadcast %754 : vector<1x128xf32> to vector<10x128xf32>
    %756 = arith.addf %753, %755 : vector<10x128xf32>
    %cst_170 = arith.constant 0.000000e+00 : f32
    %757 = vector.broadcast %cst_170 : f32 to vector<2x128xf32>
    %758 = tpu.concatenate %757, %756 in 0 : vector<2x128xf32>, vector<10x128xf32> -> vector<12x128xf32>
    %759 = vector.shape_cast %758 : vector<12x128xf32> to vector<6x2x128xf32>
    %c0_171 = arith.constant 0 : index
    %c0_172 = arith.constant 0 : index
    %c0_173 = arith.constant 0 : index
    %760 = vector.load %arg29[%c0_171, %c0_172, %c0_173] : memref<6x2x128xf32, #tpu.memory_space<vmem>>, vector<6x2x128xf32>
    tpu.vector_store %arg29[%c0_171, %c0_172, %c0_173], %759 {strides = array<i32>} : memref<6x2x128xf32, #tpu.memory_space<vmem>>, vector<6x2x128xf32>,
    return
  }
  func.func @transform_0(%arg0: i32) -> (i32, i32) {
    %c0_i32 = arith.constant 0 : i32
    %c0_i32_0 = arith.constant 0 : i32
    %c0_i32_1 = arith.constant 0 : i32
    return %c0_i32, %c0_i32_0 : i32, i32
  }
  func.func @transform_1(%arg0: i32) -> (i32, i32) {
    %c0_i32 = arith.constant 0 : i32
    %c0_i32_0 = arith.constant 0 : i32
    %c0_i32_1 = arith.constant 0 : i32
    return %c0_i32, %c0_i32_0 : i32, i32
  }
  func.func @transform_2(%arg0: i32) -> (i32, i32) {
    %c0_i32 = arith.constant 0 : i32
    %c0_i32_0 = arith.constant 0 : i32
    %c0_i32_1 = arith.constant 0 : i32
    return %c0_i32, %c0_i32_0 : i32, i32
  }
  func.func @transform_3(%arg0: i32) -> (i32, i32) {
    %c0_i32 = arith.constant 0 : i32
    %c0_i32_0 = arith.constant 0 : i32
    %c0_i32_1 = arith.constant 0 : i32
    return %c0_i32, %c0_i32_0 : i32, i32
  }
  func.func @transform_4(%arg0: i32) -> (i32, i32) {
    %c0_i32 = arith.constant 0 : i32
    %c0_i32_0 = arith.constant 0 : i32
    %c0_i32_1 = arith.constant 0 : i32
    return %c0_i32, %c0_i32_0 : i32, i32
  }
  func.func @transform_5(%arg0: i32) -> (i32, i32) {
    %c0_i32 = arith.constant 0 : i32
    %c0_i32_0 = arith.constant 0 : i32
    %c0_i32_1 = arith.constant 0 : i32
    return %c0_i32, %c0_i32_0 : i32, i32
  }
  func.func @transform_6(%arg0: i32) -> (i32, i32) {
    %c0_i32 = arith.constant 0 : i32
    %c0_i32_0 = arith.constant 0 : i32
    %c0_i32_1 = arith.constant 0 : i32
    return %c0_i32, %c0_i32_0 : i32, i32
  }
  func.func @transform_7(%arg0: i32) -> (i32, i32) {
    %c0_i32 = arith.constant 0 : i32
    %c0_i32_0 = arith.constant 0 : i32
    %c0_i32_1 = arith.constant 0 : i32
    return %c0_i32, %c0_i32_0 : i32, i32
  }
  func.func @transform_8(%arg0: i32) -> (i32, i32) {
    %c0_i32 = arith.constant 0 : i32
    %c0_i32_0 = arith.constant 0 : i32
    %c0_i32_1 = arith.constant 0 : i32
    return %c0_i32, %c0_i32_0 : i32, i32
  }
  func.func @transform_9(%arg0: i32) -> (i32, i32) {
    %c0_i32 = arith.constant 0 : i32
    %c0_i32_0 = arith.constant 0 : i32
    %c0_i32_1 = arith.constant 0 : i32
    return %c0_i32, %c0_i32_0 : i32, i32
  }
  func.func @transform_10(%arg0: i32) -> (i32, i32) {
    %c0_i32 = arith.constant 0 : i32
    %c0_i32_0 = arith.constant 0 : i32
    %c0_i32_1 = arith.constant 0 : i32
    return %c0_i32, %c0_i32_0 : i32, i32
  }
  func.func @transform_11(%arg0: i32) -> (i32, i32) {
    %c0_i32 = arith.constant 0 : i32
    %c0_i32_0 = arith.constant 0 : i32
    %c0_i32_1 = arith.constant 0 : i32
    return %c0_i32, %c0_i32_0 : i32, i32
  }
  func.func @transform_12(%arg0: i32) -> (i32, i32) {
    %c0_i32 = arith.constant 0 : i32
    %c0_i32_0 = arith.constant 0 : i32
    %c0_i32_1 = arith.constant 0 : i32
    return %c0_i32, %c0_i32_0 : i32, i32
  }
  func.func @transform_13(%arg0: i32) -> (i32, i32) {
    %c0_i32 = arith.constant 0 : i32
    %c0_i32_0 = arith.constant 0 : i32
    %c0_i32_1 = arith.constant 0 : i32
    return %c0_i32, %c0_i32_0 : i32, i32
  }
  func.func @transform_14(%arg0: i32) -> (i32, i32) {
    %c0_i32 = arith.constant 0 : i32
    %c0_i32_0 = arith.constant 0 : i32
    %c0_i32_1 = arith.constant 0 : i32
    return %c0_i32, %c0_i32_0 : i32, i32
  }
  func.func @transform_15(%arg0: i32) -> (i32, i32) {
    %c0_i32 = arith.constant 0 : i32
    %c0_i32_0 = arith.constant 0 : i32
    %c0_i32_1 = arith.constant 0 : i32
    return %c0_i32, %c0_i32_0 : i32, i32
  }
  func.func @transform_16(%arg0: i32) -> (i32, i32) {
    %c0_i32 = arith.constant 0 : i32
    %c0_i32_0 = arith.constant 0 : i32
    %c0_i32_1 = arith.constant 0 : i32
    return %c0_i32, %c0_i32_0 : i32, i32
  }
  func.func @transform_17(%arg0: i32) -> (i32, i32) {
    %c0_i32 = arith.constant 0 : i32
    %c0_i32_0 = arith.constant 0 : i32
    %c0_i32_1 = arith.constant 0 : i32
    return %c0_i32, %c0_i32_0 : i32, i32
  }
  func.func @transform_18(%arg0: i32) -> (i32, i32) {
    %c0_i32 = arith.constant 0 : i32
    %c0_i32_0 = arith.constant 0 : i32
    %c0_i32_1 = arith.constant 0 : i32
    return %c0_i32, %c0_i32_0 : i32, i32
  }
  func.func @transform_19(%arg0: i32) -> (i32, i32) {
    %c0_i32 = arith.constant 0 : i32
    %c0_i32_0 = arith.constant 0 : i32
    %c0_i32_1 = arith.constant 0 : i32
    return %c0_i32, %c0_i32_0 : i32, i32
  }
  func.func @transform_20(%arg0: i32) -> (i32, i32) {
    %c0_i32 = arith.constant 0 : i32
    %c0_i32_0 = arith.constant 0 : i32
    %c0_i32_1 = arith.constant 0 : i32
    return %c0_i32, %c0_i32_0 : i32, i32
  }
  func.func @transform_21(%arg0: i32) -> (i32, i32) {
    %c0_i32 = arith.constant 0 : i32
    %c0_i32_0 = arith.constant 0 : i32
    %c0_i32_1 = arith.constant 0 : i32
    return %c0_i32, %c0_i32_0 : i32, i32
  }
  func.func @transform_22(%arg0: i32) -> (i32, i32) {
    %c0_i32 = arith.constant 0 : i32
    %c0_i32_0 = arith.constant 0 : i32
    %c0_i32_1 = arith.constant 0 : i32
    return %c0_i32, %c0_i32_0 : i32, i32
  }
  func.func @transform_23(%arg0: i32) -> (i32, i32) {
    %c0_i32 = arith.constant 0 : i32
    %c0_i32_0 = arith.constant 0 : i32
    %c0_i32_1 = arith.constant 0 : i32
    return %c0_i32, %c0_i32_0 : i32, i32
  }
  func.func @transform_24(%arg0: i32) -> (i32, i32) {
    %c0_i32 = arith.constant 0 : i32
    %c0_i32_0 = arith.constant 0 : i32
    %c0_i32_1 = arith.constant 0 : i32
    return %c0_i32, %c0_i32_0 : i32, i32
  }
  func.func @transform_25(%arg0: i32) -> (i32, i32) {
    %c0_i32 = arith.constant 0 : i32
    %c0_i32_0 = arith.constant 0 : i32
    %c0_i32_1 = arith.constant 0 : i32
    return %c0_i32, %c0_i32_0 : i32, i32
  }
  func.func @transform_26(%arg0: i32) -> (i32, i32) {
    %c0_i32 = arith.constant 0 : i32
    %c0_i32_0 = arith.constant 0 : i32
    %c0_i32_1 = arith.constant 0 : i32
    return %c0_i32, %c0_i32_0 : i32, i32
  }
  func.func @transform_27(%arg0: i32) -> (i32, i32) {
    %c0_i32 = arith.constant 0 : i32
    %c0_i32_0 = arith.constant 0 : i32
    %c0_i32_1 = arith.constant 0 : i32
    return %c0_i32, %c0_i32_0 : i32, i32
  }
  func.func @transform_28(%arg0: i32) -> (i32, i32, i32) {
    %c0_i32 = arith.constant 0 : i32
    %c0_i32_0 = arith.constant 0 : i32
    %c0_i32_1 = arith.constant 0 : i32
    %c0_i32_2 = arith.constant 0 : i32
    return %c0_i32, %c0_i32_0, %c0_i32_1 : i32, i32, i32
  }
}

</mosaic_0001>

<llo_original>
// kernel: seq2seq_forward.1
$region0: #{seq2seq_forward.1}
  #allocation0 [shape = 'u32[]', space=smem, size = 0x4, offset = 0x4, fixed_abs, tag = 'smem constant byte address 0x4 - core index']
  #allocation1 [shape = 'u32[144,128]{1,0:T(1,128)}', space=vmem, size = 0x12000, scoped, tag = 'internal scratch']
  %s0 = inlined_call_operand.vmem [shape: s32[8,2], index: 0, kind: input, shape index: {}]
  %s1 = inlined_call_operand.vmem [shape: s32[6,2], index: 1, kind: input, shape index: {}]
  %s2 = inlined_call_operand.vmem [shape: f32[20,16], index: 2, kind: input, shape index: {}]
  %s3 = inlined_call_operand.vmem [shape: f32[24,16], index: 3, kind: input, shape index: {}]
  %s4 = inlined_call_operand.hbm [shape: f32[16,48], index: 4, kind: input, shape index: {}]
  %s5 = inlined_call_operand.hbm [shape: f32[16,48], index: 5, kind: input, shape index: {}]
  %s6 = inlined_call_operand.hbm [shape: f32[1,48], index: 6, kind: input, shape index: {}]
  %s7 = inlined_call_operand.hbm [shape: f32[1,48], index: 7, kind: input, shape index: {}]
  %s8 = inlined_call_operand.hbm [shape: f32[16,48], index: 8, kind: input, shape index: {}]
  %s9 = inlined_call_operand.hbm [shape: f32[16,48], index: 9, kind: input, shape index: {}]
  %s10 = inlined_call_operand.hbm [shape: f32[1,48], index: 10, kind: input, shape index: {}]
  %s11 = inlined_call_operand.hbm [shape: f32[1,48], index: 11, kind: input, shape index: {}]
  %s12 = inlined_call_operand.hbm [shape: f32[16,32], index: 12, kind: input, shape index: {}]
  %s13 = inlined_call_operand.hbm [shape: f32[16,32], index: 13, kind: input, shape index: {}]
  %s14 = inlined_call_operand.hbm [shape: f32[1,32], index: 14, kind: input, shape index: {}]
  %s15 = inlined_call_operand.vmem [shape: f32[32,32], index: 15, kind: input, shape index: {}]
  %s16 = inlined_call_operand.vmem [shape: f32[32,32], index: 16, kind: input, shape index: {}]
  %s17 = inlined_call_operand.hbm [shape: f32[1,32], index: 17, kind: input, shape index: {}]
  %s18 = inlined_call_operand.vmem [shape: f32[1,32], index: 18, kind: input, shape index: {}]
  %s19 = inlined_call_operand.vmem [shape: f32[16,96], index: 19, kind: input, shape index: {}]
  %s20 = inlined_call_operand.vmem [shape: f32[32,96], index: 20, kind: input, shape index: {}]
  %s21 = inlined_call_operand.hbm [shape: f32[32,96], index: 21, kind: input, shape index: {}]
  %s22 = inlined_call_operand.hbm [shape: f32[1,96], index: 22, kind: input, shape index: {}]
  %s23 = inlined_call_operand.hbm [shape: f32[1,96], index: 23, kind: input, shape index: {}]
  %s24 = inlined_call_operand.vmem [shape: f32[32,128], index: 24, kind: input, shape index: {}]
  %s25 = inlined_call_operand.vmem [shape: f32[32,128], index: 25, kind: input, shape index: {}]
  %s26 = inlined_call_operand.hbm [shape: f32[16,128], index: 26, kind: input, shape index: {}]
  %s27 = inlined_call_operand.hbm [shape: f32[1,128], index: 27, kind: input, shape index: {}]
  %s28 = inlined_call_operand.hbm [shape: f32[6,2,128], index: 28, kind: output, shape index: {}]
  %s29 = sld [smem:[#allocation0]]
  $region190: #{seq2seq_forward.1} parent=0
    _
  %s31 = ssub.s32 1, %s29
  %s32 = scalar_select 0, %s31, %s29
  $region1: #{seq2seq_forward.1} parent=0
    #allocation2 [shape = 'u8[8192]{0}', space=vmem, size = 0x2000, scoped, tag = 'input window, operand 4, single buffered']
    #allocation3 [shape = 's32[1]{0}', space=sflag, size = 0x4, scoped, tag = 'scoped memory for seq2seq_forward.1']
    #allocation4 [shape = 's32[1]{0}', space=sflag, size = 0x4, scoped, tag = 'scoped memory for seq2seq_forward.1']
    #allocation5 [shape = 'u8[8192]{0}', space=vmem, size = 0x2000, scoped, tag = 'input window, operand 5, single buffered']
    #allocation6 [shape = 's32[1]{0}', space=sflag, size = 0x4, scoped, tag = 'scoped memory for seq2seq_forward.1']
    #allocation7 [shape = 'u8[512]{0}', space=vmem, size = 0x400, scoped, tag = 'input window, operand 6, single buffered']
    #allocation8 [shape = 'u8[512]{0}', space=vmem, size = 0x400, scoped, tag = 'input window, operand 7, single buffered']
    #allocation9 [shape = 's32[1]{0}', space=sflag, size = 0x4, scoped, tag = 'scoped memory for seq2seq_forward.1']
    #allocation10 [shape = 'u8[8192]{0}', space=vmem, size = 0x2000, scoped, tag = 'input window, operand 8, single buffered']
    #allocation11 [shape = 'u8[8192]{0}', space=vmem, size = 0x2000, scoped, tag = 'input window, operand 9, single buffered']
    #allocation12 [shape = 's32[1]{0}', space=sflag, size = 0x4, scoped, tag = 'scoped memory for seq2seq_forward.1']
    #allocation13 [shape = 'u8[512]{0}', space=vmem, size = 0x400, scoped, tag = 'input window, operand 10, single buffered']
    #allocation14 [shape = 'u8[512]{0}', space=vmem, size = 0x400, scoped, tag = 'input window, operand 11, single buffered']
    #allocation15 [shape = 's32[1]{0}', space=sflag, size = 0x4, scoped, tag = 'scoped memory for seq2seq_forward.1']
    #allocation16 [shape = 'u8[8192]{0}', space=vmem, size = 0x2000, scoped, tag = 'input window, operand 12, single buffered']
    #allocation17 [shape = 'u8[8192]{0}', space=vmem, size = 0x2000, scoped, tag = 'input window, operand 13, single buffered']
    #allocation18 [shape = 's32[1]{0}', space=sflag, size = 0x4, scoped, tag = 'scoped memory for seq2seq_forward.1']
    #allocation19 [shape = 'u8[512]{0}', space=vmem, size = 0x400, scoped, tag = 'input window, operand 14, single buffered']
    #allocation20 [shape = 'u8[512]{0}', space=vmem, size = 0x400, scoped, tag = 'input window, operand 17, single buffered']
    #allocation21 [shape = 's32[1]{0}', space=sflag, size = 0x4, scoped, tag = 'scoped memory for seq2seq_forward.1']
    #allocation22 [shape = 'u8[16384]{0}', space=vmem, size = 0x4000, scoped, tag = 'input window, operand 21, single buffered']
    #allocation23 [shape = 'u8[512]{0}', space=vmem, size = 0x400, scoped, tag = 'input window, operand 22, single buffered']
    #allocation24 [shape = 's32[1]{0}', space=sflag, size = 0x4, scoped, tag = 'scoped memory for seq2seq_forward.1']
    #allocation25 [shape = 'u8[512]{0}', space=vmem, size = 0x400, scoped, tag = 'input window, operand 23, single buffered']
    #allocation26 [shape = 'u8[8192]{0}', space=vmem, size = 0x2000, scoped, tag = 'input window, operand 26, single buffered']
    #allocation27 [shape = 's32[1]{0}', space=sflag, size = 0x4, scoped, tag = 'scoped memory for seq2seq_forward.1']
    #allocation28 [shape = 'u8[512]{0}', space=vmem, size = 0x400, scoped, tag = 'input window, operand 27, single buffered']
    #allocation29 [shape = 'u8[6144]{0}', space=vmem, size = 0x1800, scoped, tag = 'output window, operand 0, single buffered']
    %33 = vsyncpa [#allocation3], 0
    %34 = vsyncpa [#allocation6], 0
    %35 = vsyncpa [#allocation9], 0
    %36 = vsyncpa [#allocation12], 0
    %37 = vsyncpa [#allocation15], 0
    %38 = vsyncpa [#allocation18], 0
    %39 = vsyncpa [#allocation21], 0
    %40 = vsyncpa [#allocation24], 0
    %41 = vsyncpa [#allocation27], 0
    %42 = vsyncpa [#allocation4], 0
    // Predicated region
    $region2: #{seq2seq_forward.1} parent=1 // pred_check
      _
    $region3: #{seq2seq_forward.1} parent=1 // pred_check_branch
      %44 = sbr.rel (0) target = $region5
    $region4: #{seq2seq_forward.1} parent=1 // pred_region
      _
    $region5: #{seq2seq_forward.1} parent=1 // pred_fallthru
      _
    // Predicated region
    $region6: #{seq2seq_forward.1} parent=1 // pred_check
      _
    $region7: #{seq2seq_forward.1} parent=1 // pred_check_branch
      %46 = sbr.rel (0) target = $region9
    $region8: #{seq2seq_forward.1} parent=1 // pred_region
      _
    $region9: #{seq2seq_forward.1} parent=1 // pred_fallthru
      _
    // Predicated region
    $region10: #{seq2seq_forward.1} parent=1 // pred_check
      _
    $region11: #{seq2seq_forward.1} parent=1 // pred_check_branch
      %48 = sbr.rel (0) target = $region13
    $region12: #{seq2seq_forward.1} parent=1 // pred_region
      _
    $region13: #{seq2seq_forward.1} parent=1 // pred_fallthru
      _
    // Predicated region
    $region14: #{seq2seq_forward.1} parent=1 // pred_check
      _
    $region15: #{seq2seq_forward.1} parent=1 // pred_check_branch
      %50 = sbr.rel (0) target = $region17
    $region16: #{seq2seq_forward.1} parent=1 // pred_region
      _
    $region17: #{seq2seq_forward.1} parent=1 // pred_fallthru
      _
    // Predicated region
    $region18: #{seq2seq_forward.1} parent=1 // pred_check
      _
    $region19: #{seq2seq_forward.1} parent=1 // pred_check_branch
      %52 = sbr.rel (0) target = $region21
    $region20: #{seq2seq_forward.1} parent=1 // pred_region
      %s54 = ssub.s32 256, 256
      %55 = vsyncadd [#allocation3], %s54
      %s56 = sshll.u32 [#allocation2], 4
      %s57 = int_to_ptr.vmem [resolvable:$true] %s56
      %62 = dma.hbm_to_vmem [thread:$0]  %s4, 256, %s57, [#allocation3], 128, 128, 8
    $region21: #{seq2seq_forward.1} parent=1 // pred_fallthru
      _
    // Predicated region
    $region22: #{seq2seq_forward.1} parent=1 // pred_check
      _
    $region23: #{seq2seq_forward.1} parent=1 // pred_check_branch
      %64 = sbr.rel (0) target = $region25
    $region24: #{seq2seq_forward.1} parent=1 // pred_region
      %s66 = ssub.s32 256, 256
      %67 = vsyncadd [#allocation6], %s66
      %s68 = sshll.u32 [#allocation5], 4
      %s69 = int_to_ptr.vmem [resolvable:$true] %s68
      %74 = dma.hbm_to_vmem [thread:$0]  %s5, 256, %s69, [#allocation6], 128, 128, 8
    $region25: #{seq2seq_forward.1} parent=1 // pred_fallthru
      _
    // Predicated region
    $region26: #{seq2seq_forward.1} parent=1 // pred_check
      _
    $region27: #{seq2seq_forward.1} parent=1 // pred_check_branch
      %76 = sbr.rel (0) target = $region29
    $region28: #{seq2seq_forward.1} parent=1 // pred_region
      %s78 = ssub.s32 16, 16
      %79 = vsyncadd [#allocation6], %s78
      %s81 = sshll.u32 [#allocation7], 4
      %s82 = int_to_ptr.vmem [resolvable:$true] %s81
      %84 = dma.hbm_to_vmem [thread:$0]  %s6, 16, %s82, [#allocation6]
    $region29: #{seq2seq_forward.1} parent=1 // pred_fallthru
      _
    // Predicated region
    $region30: #{seq2seq_forward.1} parent=1 // pred_check
      _
    $region31: #{seq2seq_forward.1} parent=1 // pred_check_branch
      %86 = sbr.rel (0) target = $region33
    $region32: #{seq2seq_forward.1} parent=1 // pred_region
      %s88 = ssub.s32 16, 16
      %89 = vsyncadd [#allocation9], %s88
      %s91 = sshll.u32 [#allocation8], 4
      %s92 = int_to_ptr.vmem [resolvable:$true] %s91
      %94 = dma.hbm_to_vmem [thread:$0]  %s7, 16, %s92, [#allocation9]
    $region33: #{seq2seq_forward.1} parent=1 // pred_fallthru
      _
    // Predicated region
    $region34: #{seq2seq_forward.1} parent=1 // pred_check
      _
    $region35: #{seq2seq_forward.1} parent=1 // pred_check_branch
      %96 = sbr.rel (0) target = $region37
    $region36: #{seq2seq_forward.1} parent=1 // pred_region
      %s98 = ssub.s32 256, 256
      %99 = vsyncadd [#allocation9], %s98
      %s100 = sshll.u32 [#allocation10], 4
      %s101 = int_to_ptr.vmem [resolvable:$true] %s100
      %106 = dma.hbm_to_vmem [thread:$0]  %s8, 256, %s101, [#allocation9], 128, 128, 8
    $region37: #{seq2seq_forward.1} parent=1 // pred_fallthru
      _
    // Predicated region
    $region38: #{seq2seq_forward.1} parent=1 // pred_check
      _
    $region39: #{seq2seq_forward.1} parent=1 // pred_check_branch
      %108 = sbr.rel (0) target = $region41
    $region40: #{seq2seq_forward.1} parent=1 // pred_region
      %s110 = ssub.s32 256, 256
      %111 = vsyncadd [#allocation12], %s110
      %s112 = sshll.u32 [#allocation11], 4
      %s113 = int_to_ptr.vmem [resolvable:$true] %s112
      %118 = dma.hbm_to_vmem [thread:$0]  %s9, 256, %s113, [#allocation12], 128, 128, 8
    $region41: #{seq2seq_forward.1} parent=1 // pred_fallthru
      _
    // Predicated region
    $region42: #{seq2seq_forward.1} parent=1 // pred_check
      _
    $region43: #{seq2seq_forward.1} parent=1 // pred_check_branch
      %120 = sbr.rel (0) target = $region45
    $region44: #{seq2seq_forward.1} parent=1 // pred_region
      %s122 = ssub.s32 16, 16
      %123 = vsyncadd [#allocation12], %s122
      %s125 = sshll.u32 [#allocation13], 4
      %s126 = int_to_ptr.vmem [resolvable:$true] %s125
      %128 = dma.hbm_to_vmem [thread:$0]  %s10, 16, %s126, [#allocation12]
    $region45: #{seq2seq_forward.1} parent=1 // pred_fallthru
      _
    // Predicated region
    $region46: #{seq2seq_forward.1} parent=1 // pred_check
      _
    $region47: #{seq2seq_forward.1} parent=1 // pred_check_branch
      %130 = sbr.rel (0) target = $region49
    $region48: #{seq2seq_forward.1} parent=1 // pred_region
      %s132 = ssub.s32 16, 16
      %133 = vsyncadd [#allocation15], %s132
      %s135 = sshll.u32 [#allocation14], 4
      %s136 = int_to_ptr.vmem [resolvable:$true] %s135
      %138 = dma.hbm_to_vmem [thread:$0]  %s11, 16, %s136, [#allocation15]
    $region49: #{seq2seq_forward.1} parent=1 // pred_fallthru
      _
    // Predicated region
    $region50: #{seq2seq_forward.1} parent=1 // pred_check
      _
    $region51: #{seq2seq_forward.1} parent=1 // pred_check_branch
      %140 = sbr.rel (0) target = $region53
    $region52: #{seq2seq_forward.1} parent=1 // pred_region
      %s142 = ssub.s32 256, 256
      %143 = vsyncadd [#allocation15], %s142
      %s144 = sshll.u32 [#allocation16], 4
      %s145 = int_to_ptr.vmem [resolvable:$true] %s144
      %150 = dma.hbm_to_vmem [thread:$0]  %s12, 256, %s145, [#allocation15], 128, 128, 8
    $region53: #{seq2seq_forward.1} parent=1 // pred_fallthru
      _
    // Predicated region
    $region54: #{seq2seq_forward.1} parent=1 // pred_check
      _
    $region55: #{seq2seq_forward.1} parent=1 // pred_check_branch
      %152 = sbr.rel (0) target = $region57
    $region56: #{seq2seq_forward.1} parent=1 // pred_region
      %s154 = ssub.s32 256, 256
      %155 = vsyncadd [#allocation18], %s154
      %s156 = sshll.u32 [#allocation17], 4
      %s157 = int_to_ptr.vmem [resolvable:$true] %s156
      %162 = dma.hbm_to_vmem [thread:$0]  %s13, 256, %s157, [#allocation18], 128, 128, 8
    $region57: #{seq2seq_forward.1} parent=1 // pred_fallthru
      _
    // Predicated region
    $region58: #{seq2seq_forward.1} parent=1 // pred_check
      _
    $region59: #{seq2seq_forward.1} parent=1 // pred_check_branch
      %164 = sbr.rel (0) target = $region61
    $region60: #{seq2seq_forward.1} parent=1 // pred_region
      %s166 = ssub.s32 16, 16
      %167 = vsyncadd [#allocation18], %s166
      %s169 = sshll.u32 [#allocation19], 4
      %s170 = int_to_ptr.vmem [resolvable:$true] %s169
      %172 = dma.hbm_to_vmem [thread:$0]  %s14, 16, %s170, [#allocation18]
    $region61: #{seq2seq_forward.1} parent=1 // pred_fallthru
      _
    // Predicated region
    $region62: #{seq2seq_forward.1} parent=1 // pred_check
      _
    $region63: #{seq2seq_forward.1} parent=1 // pred_check_branch
      %174 = sbr.rel (0) target = $region65
    $region64: #{seq2seq_forward.1} parent=1 // pred_region
      _
    $region65: #{seq2seq_forward.1} parent=1 // pred_fallthru
      _
    // Predicated region
    $region66: #{seq2seq_forward.1} parent=1 // pred_check
      _
    $region67: #{seq2seq_forward.1} parent=1 // pred_check_branch
      %176 = sbr.rel (0) target = $region69
    $region68: #{seq2seq_forward.1} parent=1 // pred_region
      _
    $region69: #{seq2seq_forward.1} parent=1 // pred_fallthru
      _
    // Predicated region
    $region70: #{seq2seq_forward.1} parent=1 // pred_check
      _
    $region71: #{seq2seq_forward.1} parent=1 // pred_check_branch
      %178 = sbr.rel (0) target = $region73
    $region72: #{seq2seq_forward.1} parent=1 // pred_region
      %s180 = ssub.s32 16, 16
      %181 = vsyncadd [#allocation21], %s180
      %s183 = sshll.u32 [#allocation20], 4
      %s184 = int_to_ptr.vmem [resolvable:$true] %s183
      %186 = dma.hbm_to_vmem [thread:$0]  %s17, 16, %s184, [#allocation21]
    $region73: #{seq2seq_forward.1} parent=1 // pred_fallthru
      _
    // Predicated region
    $region74: #{seq2seq_forward.1} parent=1 // pred_check
      _
    $region75: #{seq2seq_forward.1} parent=1 // pred_check_branch
      %188 = sbr.rel (0) target = $region77
    $region76: #{seq2seq_forward.1} parent=1 // pred_region
      _
    $region77: #{seq2seq_forward.1} parent=1 // pred_fallthru
      _
    // Predicated region
    $region78: #{seq2seq_forward.1} parent=1 // pred_check
      _
    $region79: #{seq2seq_forward.1} parent=1 // pred_check_branch
      %190 = sbr.rel (0) target = $region81
    $region80: #{seq2seq_forward.1} parent=1 // pred_region
      _
    $region81: #{seq2seq_forward.1} parent=1 // pred_fallthru
      _
    // Predicated region
    $region82: #{seq2seq_forward.1} parent=1 // pred_check
      _
    $region83: #{seq2seq_forward.1} parent=1 // pred_check_branch
      %192 = sbr.rel (0) target = $region85
    $region84: #{seq2seq_forward.1} parent=1 // pred_region
      _
    $region85: #{seq2seq_forward.1} parent=1 // pred_fallthru
      _
    // Predicated region
    $region86: #{seq2seq_forward.1} parent=1 // pred_check
      _
    $region87: #{seq2seq_forward.1} parent=1 // pred_check_branch
      %194 = sbr.rel (0) target = $region89
    $region88: #{seq2seq_forward.1} parent=1 // pred_region
      %s196 = ssub.s32 512, 512
      %197 = vsyncadd [#allocation21], %s196
      %s198 = sshll.u32 [#allocation22], 4
      %s199 = int_to_ptr.vmem [resolvable:$true] %s198
      %204 = dma.hbm_to_vmem [thread:$0]  %s21, 512, %s199, [#allocation21], 128, 128, 8
    $region89: #{seq2seq_forward.1} parent=1 // pred_fallthru
      _
    // Predicated region
    $region90: #{seq2seq_forward.1} parent=1 // pred_check
      _
    $region91: #{seq2seq_forward.1} parent=1 // pred_check_branch
      %206 = sbr.rel (0) target = $region93
    $region92: #{seq2seq_forward.1} parent=1 // pred_region
      %s208 = ssub.s32 16, 16
      %209 = vsyncadd [#allocation24], %s208
      %s211 = sshll.u32 [#allocation23], 4
      %s212 = int_to_ptr.vmem [resolvable:$true] %s211
      %214 = dma.hbm_to_vmem [thread:$0]  %s22, 16, %s212, [#allocation24]
    $region93: #{seq2seq_forward.1} parent=1 // pred_fallthru
      _
    // Predicated region
    $region94: #{seq2seq_forward.1} parent=1 // pred_check
      _
    $region95: #{seq2seq_forward.1} parent=1 // pred_check_branch
      %216 = sbr.rel (0) target = $region97
    $region96: #{seq2seq_forward.1} parent=1 // pred_region
      %s218 = ssub.s32 16, 16
      %219 = vsyncadd [#allocation24], %s218
      %s221 = sshll.u32 [#allocation25], 4
      %s222 = int_to_ptr.vmem [resolvable:$true] %s221
      %224 = dma.hbm_to_vmem [thread:$0]  %s23, 16, %s222, [#allocation24]
    $region97: #{seq2seq_forward.1} parent=1 // pred_fallthru
      _
    // Predicated region
    $region98: #{seq2seq_forward.1} parent=1 // pred_check
      _
    $region99: #{seq2seq_forward.1} parent=1 // pred_check_branch
      %226 = sbr.rel (0) target = $region101
    $region100: #{seq2seq_forward.1} parent=1 // pred_region
      _
    $region101: #{seq2seq_forward.1} parent=1 // pred_fallthru
      _
    // Predicated region
    $region102: #{seq2seq_forward.1} parent=1 // pred_check
      _
    $region103: #{seq2seq_forward.1} parent=1 // pred_check_branch
      %228 = sbr.rel (0) target = $region105
    $region104: #{seq2seq_forward.1} parent=1 // pred_region
      _
    $region105: #{seq2seq_forward.1} parent=1 // pred_fallthru
      _
    // Predicated region
    $region106: #{seq2seq_forward.1} parent=1 // pred_check
      _
    $region107: #{seq2seq_forward.1} parent=1 // pred_check_branch
      %230 = sbr.rel (0) target = $region109
    $region108: #{seq2seq_forward.1} parent=1 // pred_region
      %s232 = ssub.s32 256, 256
      %233 = vsyncadd [#allocation27], %s232
      %s234 = sshll.u32 [#allocation26], 4
      %s235 = int_to_ptr.vmem [resolvable:$true] %s234
      %240 = dma.hbm_to_vmem [thread:$0]  %s26, 256, %s235, [#allocation27], 128, 128, 8
    $region109: #{seq2seq_forward.1} parent=1 // pred_fallthru
      _
    // Predicated region
    $region110: #{seq2seq_forward.1} parent=1 // pred_check
      _
    $region111: #{seq2seq_forward.1} parent=1 // pred_check_branch
      %242 = sbr.rel (0) target = $region113
    $region112: #{seq2seq_forward.1} parent=1 // pred_region
      %s244 = ssub.s32 16, 16
      %245 = vsyncadd [#allocation27], %s244
      %s247 = sshll.u32 [#allocation28], 4
      %s248 = int_to_ptr.vmem [resolvable:$true] %s247
      %250 = dma.hbm_to_vmem [thread:$0]  %s27, 16, %s248, [#allocation27]
    $region113: #{seq2seq_forward.1} parent=1 // pred_fallthru
      _
    // Predicated region
    $region114: #{seq2seq_forward.1} parent=1 // pred_check
      _
    $region115: #{seq2seq_forward.1} parent=1 // pred_check_branch
      %252 = sbr.rel (0) target = $region117
    $region116: #{seq2seq_forward.1} parent=1 // pred_region
      %253 = dma.done [#allocation3], 256
    $region117: #{seq2seq_forward.1} parent=1 // pred_fallthru
      _
    // Predicated region
    $region118: #{seq2seq_forward.1} parent=1 // pred_check
      _
    $region119: #{seq2seq_forward.1} parent=1 // pred_check_branch
      %255 = sbr.rel (0) target = $region121
    $region120: #{seq2seq_forward.1} parent=1 // pred_region
      %256 = dma.done [#allocation6], 256
    $region121: #{seq2seq_forward.1} parent=1 // pred_fallthru
      _
    // Predicated region
    $region122: #{seq2seq_forward.1} parent=1 // pred_check
      _
    $region123: #{seq2seq_forward.1} parent=1 // pred_check_branch
      %258 = sbr.rel (0) target = $region125
    $region124: #{seq2seq_forward.1} parent=1 // pred_region
      %259 = dma.done [#allocation6], 16
    $region125: #{seq2seq_forward.1} parent=1 // pred_fallthru
      _
    // Predicated region
    $region126: #{seq2seq_forward.1} parent=1 // pred_check
      _
    $region127: #{seq2seq_forward.1} parent=1 // pred_check_branch
      %261 = sbr.rel (0) target = $region129
    $region128: #{seq2seq_forward.1} parent=1 // pred_region
      %262 = dma.done [#allocation9], 16
    $region129: #{seq2seq_forward.1} parent=1 // pred_fallthru
      _
    // Predicated region
    $region130: #{seq2seq_forward.1} parent=1 // pred_check
      _
    $region131: #{seq2seq_forward.1} parent=1 // pred_check_branch
      %264 = sbr.rel (0) target = $region133
    $region132: #{seq2seq_forward.1} parent=1 // pred_region
      %265 = dma.done [#allocation9], 256
    $region133: #{seq2seq_forward.1} parent=1 // pred_fallthru
      _
    // Predicated region
    $region134: #{seq2seq_forward.1} parent=1 // pred_check
      _
    $region135: #{seq2seq_forward.1} parent=1 // pred_check_branch
      %267 = sbr.rel (0) target = $region137
    $region136: #{seq2seq_forward.1} parent=1 // pred_region
      %268 = dma.done [#allocation12], 256
    $region137: #{seq2seq_forward.1} parent=1 // pred_fallthru
      _
    // Predicated region
    $region138: #{seq2seq_forward.1} parent=1 // pred_check
      _
    $region139: #{seq2seq_forward.1} parent=1 // pred_check_branch
      %270 = sbr.rel (0) target = $region141
    $region140: #{seq2seq_forward.1} parent=1 // pred_region
      %271 = dma.done [#allocation12], 16
    $region141: #{seq2seq_forward.1} parent=1 // pred_fallthru
      _
    // Predicated region
    $region142: #{seq2seq_forward.1} parent=1 // pred_check
      _
    $region143: #{seq2seq_forward.1} parent=1 // pred_check_branch
      %273 = sbr.rel (0) target = $region145
    $region144: #{seq2seq_forward.1} parent=1 // pred_region
      %274 = dma.done [#allocation15], 16
    $region145: #{seq2seq_forward.1} parent=1 // pred_fallthru
      _
    // Predicated region
    $region146: #{seq2seq_forward.1} parent=1 // pred_check
      _
    $region147: #{seq2seq_forward.1} parent=1 // pred_check_branch
      %276 = sbr.rel (0) target = $region149
    $region148: #{seq2seq_forward.1} parent=1 // pred_region
      %277 = dma.done [#allocation15], 256
    $region149: #{seq2seq_forward.1} parent=1 // pred_fallthru
      _
    // Predicated region
    $region150: #{seq2seq_forward.1} parent=1 // pred_check
      _
    $region151: #{seq2seq_forward.1} parent=1 // pred_check_branch
      %279 = sbr.rel (0) target = $region153
    $region152: #{seq2seq_forward.1} parent=1 // pred_region
      %280 = dma.done [#allocation18], 256
    $region153: #{seq2seq_forward.1} parent=1 // pred_fallthru
      _
    // Predicated region
    $region154: #{seq2seq_forward.1} parent=1 // pred_check
      _
    $region155: #{seq2seq_forward.1} parent=1 // pred_check_branch
      %282 = sbr.rel (0) target = $region157
    $region156: #{seq2seq_forward.1} parent=1 // pred_region
      %283 = dma.done [#allocation18], 16
    $region157: #{seq2seq_forward.1} parent=1 // pred_fallthru
      _
    // Predicated region
    $region158: #{seq2seq_forward.1} parent=1 // pred_check
      _
    $region159: #{seq2seq_forward.1} parent=1 // pred_check_branch
      %285 = sbr.rel (0) target = $region161
    $region160: #{seq2seq_forward.1} parent=1 // pred_region
      %286 = dma.done [#allocation21], 16
    $region161: #{seq2seq_forward.1} parent=1 // pred_fallthru
      _
    // Predicated region
    $region162: #{seq2seq_forward.1} parent=1 // pred_check
      _
    $region163: #{seq2seq_forward.1} parent=1 // pred_check_branch
      %288 = sbr.rel (0) target = $region165
    $region164: #{seq2seq_forward.1} parent=1 // pred_region
      %289 = dma.done [#allocation21], 512
    $region165: #{seq2seq_forward.1} parent=1 // pred_fallthru
      _
    // Predicated region
    $region166: #{seq2seq_forward.1} parent=1 // pred_check
      _
    $region167: #{seq2seq_forward.1} parent=1 // pred_check_branch
      %291 = sbr.rel (0) target = $region169
    $region168: #{seq2seq_forward.1} parent=1 // pred_region
      %292 = dma.done [#allocation24], 16
    $region169: #{seq2seq_forward.1} parent=1 // pred_fallthru
      _
    // Predicated region
    $region170: #{seq2seq_forward.1} parent=1 // pred_check
      _
    $region171: #{seq2seq_forward.1} parent=1 // pred_check_branch
      %294 = sbr.rel (0) target = $region173
    $region172: #{seq2seq_forward.1} parent=1 // pred_region
      %295 = dma.done [#allocation24], 16
    $region173: #{seq2seq_forward.1} parent=1 // pred_fallthru
      _
    // Predicated region
    $region174: #{seq2seq_forward.1} parent=1 // pred_check
      _
    $region175: #{seq2seq_forward.1} parent=1 // pred_check_branch
      %297 = sbr.rel (0) target = $region177
    $region176: #{seq2seq_forward.1} parent=1 // pred_region
      %298 = dma.done [#allocation27], 256
    $region177: #{seq2seq_forward.1} parent=1 // pred_fallthru
      _
    // Predicated region
    $region178: #{seq2seq_forward.1} parent=1 // pred_check
      _
    $region179: #{seq2seq_forward.1} parent=1 // pred_check_branch
      %300 = sbr.rel (0) target = $region181
    $region180: #{seq2seq_forward.1} parent=1 // pred_region
      %301 = dma.done [#allocation27], 16
    $region181: #{seq2seq_forward.1} parent=1 // pred_fallthru
      _
    %v302 = vld [vmem:[%s0] sm:$0xff]
    %v303 = vlaneseq
    %v304 = vand.u32 %v303, 127
    %v305 = vlaneseq
    %v306 = vshrl.u32 %v305, 7
    %v307 = vsub.s32 0, %v306
    %v308 = vrot.slane %v302, %v307
    %310 = vbcast.lane.b32.xlu0 %v308, 256
    %v311 = vpop.permute.xlu0 %310
    %v312 = vlaneseq
    %v313 = vshrl.u32 %v312, 7
    %v314 = vsub.s32 1, %v313
    %v315 = vrot.slane %v302, %v314
    %317 = vbcast.lane.b32.xlu0 %v315, 256
    %v318 = vpop.permute.xlu0 %317
    %v319 = vlaneseq
    %v320 = vshrl.u32 %v319, 7
    %v321 = vsub.s32 2, %v320
    %v322 = vrot.slane %v302, %v321
    %324 = vbcast.lane.b32.xlu0 %v322, 256
    %v325 = vpop.permute.xlu0 %324
    %v326 = vlaneseq
    %v327 = vshrl.u32 %v326, 7
    %v328 = vsub.s32 3, %v327
    %v329 = vrot.slane %v302, %v328
    %331 = vbcast.lane.b32.xlu0 %v329, 256
    %v332 = vpop.permute.xlu0 %331
    %v333 = vlaneseq
    %v334 = vshrl.u32 %v333, 7
    %v335 = vsub.s32 4, %v334
    %v336 = vrot.slane %v302, %v335
    %338 = vbcast.lane.b32.xlu0 %v336, 256
    %v339 = vpop.permute.xlu0 %338
    %v340 = vlaneseq
    %v341 = vshrl.u32 %v340, 7
    %v342 = vsub.s32 5, %v341
    %v343 = vrot.slane %v302, %v342
    %345 = vbcast.lane.b32.xlu0 %v343, 256
    %v346 = vpop.permute.xlu0 %345
    %v347 = vlaneseq
    %v348 = vshrl.u32 %v347, 7
    %v349 = vsub.s32 6, %v348
    %v350 = vrot.slane %v302, %v349
    %352 = vbcast.lane.b32.xlu0 %v350, 256
    %v353 = vpop.permute.xlu0 %352
    %v354 = vlaneseq
    %v355 = vshrl.u32 %v354, 7
    %v356 = vsub.s32 7, %v355
    %v357 = vrot.slane %v302, %v356
    %359 = vbcast.lane.b32.xlu0 %v357, 256
    %v360 = vpop.permute.xlu0 %359
    %vm361 = vcmp.eq.s32.totalorder %v311, %v304
    %vm362 = vcmp.eq.s32.totalorder %v318, %v304
    %vm363 = vcmp.eq.s32.totalorder %v325, %v304
    %vm364 = vcmp.eq.s32.totalorder %v332, %v304
    %vm365 = vcmp.eq.s32.totalorder %v339, %v304
    %vm366 = vcmp.eq.s32.totalorder %v346, %v304
    %vm367 = vcmp.eq.s32.totalorder %v353, %v304
    %vm368 = vcmp.eq.s32.totalorder %v360, %v304
    %v369 = vsel %vm361, 1, 0
    %v370 = vsel %vm362, 1, 0
    %v371 = vsel %vm363, 1, 0
    %v372 = vsel %vm364, 1, 0
    %v373 = vsel %vm365, 1, 0
    %v374 = vsel %vm366, 1, 0
    %v375 = vsel %vm367, 1, 0
    %v376 = vsel %vm368, 1, 0
    %v377 = vcvt.s32.f32 %v369
    %v378 = vcvt.s32.f32 %v370
    %v379 = vcvt.s32.f32 %v371
    %v380 = vcvt.s32.f32 %v372
    %v381 = vcvt.s32.f32 %v373
    %v382 = vcvt.s32.f32 %v374
    %v383 = vcvt.s32.f32 %v375
    %v384 = vcvt.s32.f32 %v376
    %v385 = vld [vmem:[%s2] sm:$0xff]
    %v386 = vld [vmem:[%s2 + $0x8] sm:$0xff]
    %v387 = vld [vmem:[%s2 + $0x10] sm:$0xf]
    %v396 = vcombine.low %v377, %v378
    %v397 = vcombine.low %v379, %v380
    %v399 = vunpack.c.l.s4 1983009808
    %v400 = vunpack.c.0.s8 %v399
    %v401 = vlaneseq
    %v402 = vshrl.u32 %v401, 7
    %v403 = vsub.s32 %v400, %v402
    %v404 = vrot.slane %v396, %v403
    %v406 = vunpack.c.l.s4 1983009808
    %v407 = vunpack.c.0.s8 %v406
    %v408 = vlaneseq
    %v409 = vshrl.u32 %v408, 7
    %v410 = vsub.s32 %v407, %v409
    %v411 = vrot.slane %v397, %v410
    %v412 = vcombine.low %v404, %v411
    %v413 = vcombine.low %v381, %v382
    %v414 = vcombine.low %v383, %v384
    %v416 = vunpack.c.l.s4 1983009808
    %v417 = vunpack.c.0.s8 %v416
    %v418 = vlaneseq
    %v419 = vshrl.u32 %v418, 7
    %v420 = vsub.s32 %v417, %v419
    %v421 = vrot.slane %v413, %v420
    %v423 = vunpack.c.l.s4 1983009808
    %v424 = vunpack.c.0.s8 %v423
    %v425 = vlaneseq
    %v426 = vshrl.u32 %v425, 7
    %v427 = vsub.s32 %v424, %v426
    %v428 = vrot.slane %v414, %v427
    %v429 = vcombine.low %v421, %v428
    %vm430 = vcmask 162816
    %v431 = vsel %vm430, %v412, 0
    %v433 = vsel %vm430, %v429, 0
    %vm435 = vcmask 1043456
    %v437 = vsel %vm435, %v387, 0
    %439 = vmatprep.subr.mxu0 0.0
    %440 = vmatpush1.msra.mxu0 %v385
    %441 = vmatprep.subr.mxu0 0.0
    %442 = vmatpush1.msra.mxu0 %v386
    %443 = vmatprep.subr.mxu0 0.0
    %444 = vmatpush1.msra.mxu0 %v437
    %445 = vmatprep.subr.mxu0 0.0
    %446 = vmatpush1.msra.mxu0 0.0
    %447 = vmatprep.subr.mxu0 0.0
    %448 = vmatpush1.msra.mxu0 0.0
    %449 = vmatprep.subr.mxu0 0.0
    %450 = vmatpush1.msra.mxu0 0.0
    %451 = vmatprep.subr.mxu0 0.0
    %452 = vmatpush1.msra.mxu0 0.0
    %453 = vmatprep.subr.mxu0 0.0
    %454 = vmatpush1.msra.mxu0 0.0
    %455 = vmatprep.subr.mxu0 0.0
    %456 = vmatpush1.msra.mxu0 0.0
    %457 = vmatprep.subr.mxu0 0.0
    %458 = vmatpush1.msra.mxu0 0.0
    %459 = vmatprep.subr.mxu0 0.0
    %460 = vmatpush1.msra.mxu0 0.0
    %461 = vmatprep.subr.mxu0 0.0
    %462 = vmatpush1.msra.mxu0 0.0
    %463 = vmatprep.subr.mxu0 0.0
    %464 = vmatpush1.msra.mxu0 0.0
    %465 = vmatprep.subr.mxu0 0.0
    %466 = vmatpush1.msra.mxu0 0.0
    %467 = vmatprep.subr.mxu0 0.0
    %468 = vmatpush1.msra.mxu0 0.0
    %469 = vmatprep.subr.mxu0 0.0
    %470 = vmatpush1.msra.mxu0 0.0
    %471 = vmatprep.subr.mxu0 0.0
    %472 = vmatpush1.msra.mxu0 0.0
    %473 = vmatprep.subr.mxu0 0.0
    %474 = vmatpush1.msra.mxu0 0.0
    %475 = vmatprep.subr.mxu0 0.0
    %476 = vmatpush1.msra.mxu0 0.0
    %477 = vmatprep.subr.mxu0 0.0
    %478 = vmatpush1.msra.mxu0 0.0
    %479 = vmatprep.subr.mxu0 0.0
    %480 = vmatpush1.msra.mxu0 0.0
    %481 = vmatprep.subr.mxu0 0.0
    %482 = vmatpush1.msra.mxu0 0.0
    %483 = vmatprep.subr.mxu0 0.0
    %484 = vmatpush1.msra.mxu0 0.0
    %485 = vmatprep.subr.mxu0 0.0
    %486 = vmatpush1.msra.mxu0 0.0
    %487 = vmatprep.subr.mxu0 0.0
    %488 = vmatpush1.msra.mxu0 0.0
    %489 = vmatprep.subr.mxu0 0.0
    %490 = vmatpush1.msra.mxu0 0.0
    %491 = vmatprep.subr.mxu0 0.0
    %492 = vmatpush1.msra.mxu0 0.0
    %493 = vmatprep.subr.mxu0 0.0
    %494 = vmatpush1.msra.mxu0 0.0
    %495 = vmatprep.subr.mxu0 0.0
    %496 = vmatpush1.msra.mxu0 0.0
    %497 = vmatprep.subr.mxu0 0.0
    %498 = vmatpush1.msra.mxu0 0.0
    %499 = vmatprep.subr.mxu0 0.0
    %500 = vmatpush1.msra.mxu0 0.0
    %501 = vmatprep.subr.mxu0 0.0
    %502 = vmatpush1.msra.mxu0 0.0
    %503 = vmatprep.mubr.f32.mxu0 0.0
    %504 = vmatmul.mubr.f32.gmra.mrb[0].mxu0 %v431
    %v505 = vpop.f32.mrb[0].mxu0
    %v506 = vadd.f32 0.0, %v505
    %v507 = vpop.f32.mrb[0].mxu0
    %508 = vmatprep.mubr.f32.mxu0 0.0
    %509 = vmatmul.mubr.f32.gmra.mrb[0].mxu0 %v433
    %v510 = vpop.f32.mrb[0].mxu0
    %v511 = vadd.f32 0.0, %v510
    %v512 = vpop.f32.mrb[0].mxu0
    %513 = vdwg.mxu0
    %v514 = vld [vmem:[#allocation2] sm:$0xff]
    %v515 = vld [vmem:[#allocation2 + $0x8] sm:$0xff]
    %v516 = vld [vmem:[#allocation7] sm:$0x1]
    %v518 = vlaneseq
    %v519 = vshrl.u32 %v518, 7
    %v520 = vsub.s32 0, %v519
    %v521 = vrot.slane %v516, %v520
    %vm523 = vcmask 130048
    %v525 = vsel %vm523, %v506, 0
    %v528 = vsel %vm523, %v511, 0
    %530 = vmatprep.subr.mxu0 0.0
    %531 = vmatpush1.msra.mxu0 %v514
    %532 = vmatprep.subr.mxu0 0.0
    %533 = vmatpush1.msra.mxu0 %v515
    %534 = vmatprep.subr.mxu0 0.0
    %535 = vmatpush1.msra.mxu0 0.0
    %536 = vmatprep.subr.mxu0 0.0
    %537 = vmatpush1.msra.mxu0 0.0
    %538 = vmatprep.subr.mxu0 0.0
    %539 = vmatpush1.msra.mxu0 0.0
    %540 = vmatprep.subr.mxu0 0.0
    %541 = vmatpush1.msra.mxu0 0.0
    %542 = vmatprep.subr.mxu0 0.0
    %543 = vmatpush1.msra.mxu0 0.0
    %544 = vmatprep.subr.mxu0 0.0
    %545 = vmatpush1.msra.mxu0 0.0
    %546 = vmatprep.subr.mxu0 0.0
    %547 = vmatpush1.msra.mxu0 0.0
    %548 = vmatprep.subr.mxu0 0.0
    %549 = vmatpush1.msra.mxu0 0.0
    %550 = vmatprep.subr.mxu0 0.0
    %551 = vmatpush1.msra.mxu0 0.0
    %552 = vmatprep.subr.mxu0 0.0
    %553 = vmatpush1.msra.mxu0 0.0
    %554 = vmatprep.subr.mxu0 0.0
    %555 = vmatpush1.msra.mxu0 0.0
    %556 = vmatprep.subr.mxu0 0.0
    %557 = vmatpush1.msra.mxu0 0.0
    %558 = vmatprep.subr.mxu0 0.0
    %559 = vmatpush1.msra.mxu0 0.0
    %560 = vmatprep.subr.mxu0 0.0
    %561 = vmatpush1.msra.mxu0 0.0
    %562 = vmatprep.subr.mxu0 0.0
    %563 = vmatpush1.msra.mxu0 0.0
    %564 = vmatprep.subr.mxu0 0.0
    %565 = vmatpush1.msra.mxu0 0.0
    %566 = vmatprep.subr.mxu0 0.0
    %567 = vmatpush1.msra.mxu0 0.0
    %568 = vmatprep.subr.mxu0 0.0
    %569 = vmatpush1.msra.mxu0 0.0
    %570 = vmatprep.subr.mxu0 0.0
    %571 = vmatpush1.msra.mxu0 0.0
    %572 = vmatprep.subr.mxu0 0.0
    %573 = vmatpush1.msra.mxu0 0.0
    %574 = vmatprep.subr.mxu0 0.0
    %575 = vmatpush1.msra.mxu0 0.0
    %576 = vmatprep.subr.mxu0 0.0
    %577 = vmatpush1.msra.mxu0 0.0
    %578 = vmatprep.subr.mxu0 0.0
    %579 = vmatpush1.msra.mxu0 0.0
    %580 = vmatprep.subr.mxu0 0.0
    %581 = vmatpush1.msra.mxu0 0.0
    %582 = vmatprep.subr.mxu0 0.0
    %583 = vmatpush1.msra.mxu0 0.0
    %584 = vmatprep.subr.mxu0 0.0
    %585 = vmatpush1.msra.mxu0 0.0
    %586 = vmatprep.subr.mxu0 0.0
    %587 = vmatpush1.msra.mxu0 0.0
    %588 = vmatprep.subr.mxu0 0.0
    %589 = vmatpush1.msra.mxu0 0.0
    %590 = vmatprep.subr.mxu0 0.0
    %591 = vmatpush1.msra.mxu0 0.0
    %592 = vmatprep.subr.mxu0 0.0
    %593 = vmatpush1.msra.mxu0 0.0
    %594 = vmatprep.mubr.f32.mxu0 0.0
    %595 = vmatmul.mubr.f32.gmra.mrb[0].mxu0 %v525
    %v596 = vpop.f32.mrb[0].mxu0
    %v597 = vadd.f32 %v521, %v596
    %v598 = vpop.f32.mrb[0].mxu0
    %599 = vmatprep.mubr.f32.mxu0 0.0
    %600 = vmatmul.mubr.f32.gmra.mrb[0].mxu0 %v528
    %v601 = vpop.f32.mrb[0].mxu0
    %v602 = vadd.f32 %v521, %v601
    %v603 = vpop.f32.mrb[0].mxu0
    %604 = vdwg.mxu0
    %v605 = vld [vmem:[#allocation10] sm:$0xff]
    %v606 = vld [vmem:[#allocation10 + $0x8] sm:$0xff]
    %v607 = vld [vmem:[#allocation13] sm:$0x1]
    %v609 = vlaneseq
    %v610 = vshrl.u32 %v609, 7
    %v611 = vsub.s32 0, %v610
    %v612 = vrot.slane %v607, %v611
    %614 = vmatprep.subr.mxu0 0.0
    %615 = vmatpush1.msra.mxu0 %v605
    %616 = vmatprep.subr.mxu0 0.0
    %617 = vmatpush1.msra.mxu0 %v606
    %618 = vmatprep.subr.mxu0 0.0
    %619 = vmatpush1.msra.mxu0 0.0
    %620 = vmatprep.subr.mxu0 0.0
    %621 = vmatpush1.msra.mxu0 0.0
    %622 = vmatprep.subr.mxu0 0.0
    %623 = vmatpush1.msra.mxu0 0.0
    %624 = vmatprep.subr.mxu0 0.0
    %625 = vmatpush1.msra.mxu0 0.0
    %626 = vmatprep.subr.mxu0 0.0
    %627 = vmatpush1.msra.mxu0 0.0
    %628 = vmatprep.subr.mxu0 0.0
    %629 = vmatpush1.msra.mxu0 0.0
    %630 = vmatprep.subr.mxu0 0.0
    %631 = vmatpush1.msra.mxu0 0.0
    %632 = vmatprep.subr.mxu0 0.0
    %633 = vmatpush1.msra.mxu0 0.0
    %634 = vmatprep.subr.mxu0 0.0
    %635 = vmatpush1.msra.mxu0 0.0
    %636 = vmatprep.subr.mxu0 0.0
    %637 = vmatpush1.msra.mxu0 0.0
    %638 = vmatprep.subr.mxu0 0.0
    %639 = vmatpush1.msra.mxu0 0.0
    %640 = vmatprep.subr.mxu0 0.0
    %641 = vmatpush1.msra.mxu0 0.0
    %642 = vmatprep.subr.mxu0 0.0
    %643 = vmatpush1.msra.mxu0 0.0
    %644 = vmatprep.subr.mxu0 0.0
    %645 = vmatpush1.msra.mxu0 0.0
    %646 = vmatprep.subr.mxu0 0.0
    %647 = vmatpush1.msra.mxu0 0.0
    %648 = vmatprep.subr.mxu0 0.0
    %649 = vmatpush1.msra.mxu0 0.0
    %650 = vmatprep.subr.mxu0 0.0
    %651 = vmatpush1.msra.mxu0 0.0
    %652 = vmatprep.subr.mxu0 0.0
    %653 = vmatpush1.msra.mxu0 0.0
    %654 = vmatprep.subr.mxu0 0.0
    %655 = vmatpush1.msra.mxu0 0.0
    %656 = vmatprep.subr.mxu0 0.0
    %657 = vmatpush1.msra.mxu0 0.0
    %658 = vmatprep.subr.mxu0 0.0
    %659 = vmatpush1.msra.mxu0 0.0
    %660 = vmatprep.subr.mxu0 0.0
    %661 = vmatpush1.msra.mxu0 0.0
    %662 = vmatprep.subr.mxu0 0.0
    %663 = vmatpush1.msra.mxu0 0.0
    %664 = vmatprep.subr.mxu0 0.0
    %665 = vmatpush1.msra.mxu0 0.0
    %666 = vmatprep.subr.mxu0 0.0
    %667 = vmatpush1.msra.mxu0 0.0
    %668 = vmatprep.subr.mxu0 0.0
    %669 = vmatpush1.msra.mxu0 0.0
    %670 = vmatprep.subr.mxu0 0.0
    %671 = vmatpush1.msra.mxu0 0.0
    %672 = vmatprep.subr.mxu0 0.0
    %673 = vmatpush1.msra.mxu0 0.0
    %674 = vmatprep.subr.mxu0 0.0
    %675 = vmatpush1.msra.mxu0 0.0
    %676 = vmatprep.subr.mxu0 0.0
    %677 = vmatpush1.msra.mxu0 0.0
    %678 = vmatprep.mubr.f32.mxu0 0.0
    %679 = vmatmul.mubr.f32.gmra.mrb[0].mxu0 %v525
    %v680 = vpop.f32.mrb[0].mxu0
    %v681 = vadd.f32 %v612, %v680
    %v682 = vpop.f32.mrb[0].mxu0
    %683 = vmatprep.mubr.f32.mxu0 0.0
    %684 = vmatmul.mubr.f32.gmra.mrb[0].mxu0 %v528
    %v685 = vpop.f32.mrb[0].mxu0
    %v686 = vadd.f32 %v612, %v685
    %v687 = vpop.f32.mrb[0].mxu0
    %688 = vdwg.mxu0
    %v689 = vld [vmem:[#allocation5] sm:$0xff]
    %v690 = vld [vmem:[#allocation5 + $0x8] sm:$0xff]
    %v691 = vld [vmem:[#allocation8] sm:$0x1]
    %v692 = vld [vmem:[#allocation11] sm:$0xff]
    %v693 = vld [vmem:[#allocation11 + $0x8] sm:$0xff]
    %v694 = vld [vmem:[#allocation14] sm:$0x1]
    %v696 = vlaneseq
    %v697 = vshrl.u32 %v696, 7
    %v698 = vsub.s32 0, %v697
    %v699 = vrot.slane %v691, %v698
    %v702 = vsel %vm523, 0.0, 0
    %704 = vmatprep.subr.mxu0 0.0
    %705 = vmatpush1.msra.mxu0 %v689
    %706 = vmatprep.subr.mxu0 0.0
    %707 = vmatpush1.msra.mxu0 %v690
    %708 = vmatprep.subr.mxu0 0.0
    %709 = vmatpush1.msra.mxu0 0.0
    %710 = vmatprep.subr.mxu0 0.0
    %711 = vmatpush1.msra.mxu0 0.0
    %712 = vmatprep.subr.mxu0 0.0
    %713 = vmatpush1.msra.mxu0 0.0
    %714 = vmatprep.subr.mxu0 0.0
    %715 = vmatpush1.msra.mxu0 0.0
    %716 = vmatprep.subr.mxu0 0.0
    %717 = vmatpush1.msra.mxu0 0.0
    %718 = vmatprep.subr.mxu0 0.0
    %719 = vmatpush1.msra.mxu0 0.0
    %720 = vmatprep.subr.mxu0 0.0
    %721 = vmatpush1.msra.mxu0 0.0
    %722 = vmatprep.subr.mxu0 0.0
    %723 = vmatpush1.msra.mxu0 0.0
    %724 = vmatprep.subr.mxu0 0.0
    %725 = vmatpush1.msra.mxu0 0.0
    %726 = vmatprep.subr.mxu0 0.0
    %727 = vmatpush1.msra.mxu0 0.0
    %728 = vmatprep.subr.mxu0 0.0
    %729 = vmatpush1.msra.mxu0 0.0
    %730 = vmatprep.subr.mxu0 0.0
    %731 = vmatpush1.msra.mxu0 0.0
    %732 = vmatprep.subr.mxu0 0.0
    %733 = vmatpush1.msra.mxu0 0.0
    %734 = vmatprep.subr.mxu0 0.0
    %735 = vmatpush1.msra.mxu0 0.0
    %736 = vmatprep.subr.mxu0 0.0
    %737 = vmatpush1.msra.mxu0 0.0
    %738 = vmatprep.subr.mxu0 0.0
    %739 = vmatpush1.msra.mxu0 0.0
    %740 = vmatprep.subr.mxu0 0.0
    %741 = vmatpush1.msra.mxu0 0.0
    %742 = vmatprep.subr.mxu0 0.0
    %743 = vmatpush1.msra.mxu0 0.0
    %744 = vmatprep.subr.mxu0 0.0
    %745 = vmatpush1.msra.mxu0 0.0
    %746 = vmatprep.subr.mxu0 0.0
    %747 = vmatpush1.msra.mxu0 0.0
    %748 = vmatprep.subr.mxu0 0.0
    %749 = vmatpush1.msra.mxu0 0.0
    %750 = vmatprep.subr.mxu0 0.0
    %751 = vmatpush1.msra.mxu0 0.0
    %752 = vmatprep.subr.mxu0 0.0
    %753 = vmatpush1.msra.mxu0 0.0
    %754 = vmatprep.subr.mxu0 0.0
    %755 = vmatpush1.msra.mxu0 0.0
    %756 = vmatprep.subr.mxu0 0.0
    %757 = vmatpush1.msra.mxu0 0.0
    %758 = vmatprep.subr.mxu0 0.0
    %759 = vmatpush1.msra.mxu0 0.0
    %760 = vmatprep.subr.mxu0 0.0
    %761 = vmatpush1.msra.mxu0 0.0
    %762 = vmatprep.subr.mxu0 0.0
    %763 = vmatpush1.msra.mxu0 0.0
    %764 = vmatprep.subr.mxu0 0.0
    %765 = vmatpush1.msra.mxu0 0.0
    %766 = vmatprep.subr.mxu0 0.0
    %767 = vmatpush1.msra.mxu0 0.0
    %768 = vmatprep.mubr.f32.mxu0 0.0
    %769 = vmatmul.mubr.f32.gmra.mrb[0].mxu0 %v702
    %v770 = vpop.f32.mrb[0].mxu0
    %v771 = vadd.f32 %v699, %v770
    %v772 = vpop.f32.mrb[0].mxu0
    %773 = vdwg.mxu0
    %v774 = vadd.f32 %v597, %v771
    %v775 = vxor.u32 %v774, 2147483648
    %v776 = vmul.f32 %v775, 1.442695
    %v777 = vpow.pop %v776
    %v778 = vadd.f32 %v777, 1.0
    %v779 = vrcp.pop %v778
    %v780 = vmul.f32 1.0, %v779
    %782 = vrot.lane.b32.xlu0 %v771, 96
    %v783 = vpop.permute.xlu0 %782
    %v785 = vmul.f32 %v780, %v783
    %787 = vrot.lane.b32.xlu0 %v785, 32
    %v788 = vpop.permute.xlu0 %787
    %v790 = vadd.f32 %v597, %v788
    %v791 = vtanh.pop %v790
    %v792 = vsub.f32 1.0, %v780
    %794 = vrot.lane.b32.xlu0 %v791, 112
    %v795 = vpop.permute.xlu0 %794
    %v797 = vmul.f32 %v792, %v795
    %v798 = vmul.f32 %v780, 0.0
    %v799 = vadd.f32 %v797, %v798
    %v801 = vlaneseq
    %v802 = vshrl.u32 %v801, 7
    %v803 = vsub.s32 0, %v802
    %v804 = vrot.slane %v694, %v803
    %806 = vmatprep.subr.mxu0 0.0
    %807 = vmatpush1.msra.mxu0 %v692
    %808 = vmatprep.subr.mxu0 0.0
    %809 = vmatpush1.msra.mxu0 %v693
    %810 = vmatprep.subr.mxu0 0.0
    %811 = vmatpush1.msra.mxu0 0.0
    %812 = vmatprep.subr.mxu0 0.0
    %813 = vmatpush1.msra.mxu0 0.0
    %814 = vmatprep.subr.mxu0 0.0
    %815 = vmatpush1.msra.mxu0 0.0
    %816 = vmatprep.subr.mxu0 0.0
    %817 = vmatpush1.msra.mxu0 0.0
    %818 = vmatprep.subr.mxu0 0.0
    %819 = vmatpush1.msra.mxu0 0.0
    %820 = vmatprep.subr.mxu0 0.0
    %821 = vmatpush1.msra.mxu0 0.0
    %822 = vmatprep.subr.mxu0 0.0
    %823 = vmatpush1.msra.mxu0 0.0
    %824 = vmatprep.subr.mxu0 0.0
    %825 = vmatpush1.msra.mxu0 0.0
    %826 = vmatprep.subr.mxu0 0.0
    %827 = vmatpush1.msra.mxu0 0.0
    %828 = vmatprep.subr.mxu0 0.0
    %829 = vmatpush1.msra.mxu0 0.0
    %830 = vmatprep.subr.mxu0 0.0
    %831 = vmatpush1.msra.mxu0 0.0
    %832 = vmatprep.subr.mxu0 0.0
    %833 = vmatpush1.msra.mxu0 0.0
    %834 = vmatprep.subr.mxu0 0.0
    %835 = vmatpush1.msra.mxu0 0.0
    %836 = vmatprep.subr.mxu0 0.0
    %837 = vmatpush1.msra.mxu0 0.0
    %838 = vmatprep.subr.mxu0 0.0
    %839 = vmatpush1.msra.mxu0 0.0
    %840 = vmatprep.subr.mxu0 0.0
    %841 = vmatpush1.msra.mxu0 0.0
    %842 = vmatprep.subr.mxu0 0.0
    %843 = vmatpush1.msra.mxu0 0.0
    %844 = vmatprep.subr.mxu0 0.0
    %845 = vmatpush1.msra.mxu0 0.0
    %846 = vmatprep.subr.mxu0 0.0
    %847 = vmatpush1.msra.mxu0 0.0
    %848 = vmatprep.subr.mxu0 0.0
    %849 = vmatpush1.msra.mxu0 0.0
    %850 = vmatprep.subr.mxu0 0.0
    %851 = vmatpush1.msra.mxu0 0.0
    %852 = vmatprep.subr.mxu0 0.0
    %853 = vmatpush1.msra.mxu0 0.0
    %854 = vmatprep.subr.mxu0 0.0
    %855 = vmatpush1.msra.mxu0 0.0
    %856 = vmatprep.subr.mxu0 0.0
    %857 = vmatpush1.msra.mxu0 0.0
    %858 = vmatprep.subr.mxu0 0.0
    %859 = vmatpush1.msra.mxu0 0.0
    %860 = vmatprep.subr.mxu0 0.0
    %861 = vmatpush1.msra.mxu0 0.0
    %862 = vmatprep.subr.mxu0 0.0
    %863 = vmatpush1.msra.mxu0 0.0
    %864 = vmatprep.subr.mxu0 0.0
    %865 = vmatpush1.msra.mxu0 0.0
    %866 = vmatprep.subr.mxu0 0.0
    %867 = vmatpush1.msra.mxu0 0.0
    %868 = vmatprep.subr.mxu0 0.0
    %869 = vmatpush1.msra.mxu0 0.0
    %870 = vmatprep.mubr.f32.mxu0 0.0
    %871 = vmatmul.mubr.f32.gmra.mrb[0].mxu0 %v702
    %v872 = vpop.f32.mrb[0].mxu0
    %v873 = vadd.f32 %v804, %v872
    %v874 = vpop.f32.mrb[0].mxu0
    %875 = vdwg.mxu0
    %v877 = vrot.slane %v873, 2
    %v879 = vadd.f32 %v686, %v877
    %v880 = vxor.u32 %v879, 2147483648
    %v881 = vmul.f32 %v880, 1.442695
    %v882 = vpow.pop %v881
    %v883 = vadd.f32 %v882, 1.0
    %v884 = vrcp.pop %v883
    %v885 = vmul.f32 1.0, %v884
    %886 = vrot.lane.b32.xlu0 %v877, 96
    %v887 = vpop.permute.xlu0 %886
    %v889 = vmul.f32 %v885, %v887
    %891 = vrot.lane.b32.xlu0 %v889, 32
    %v892 = vpop.permute.xlu0 %891
    %v894 = vadd.f32 %v686, %v892
    %v895 = vtanh.pop %v894
    %v896 = vsub.f32 1.0, %v885
    %898 = vrot.lane.b32.xlu0 %v895, 112
    %v899 = vpop.permute.xlu0 %898
    %v901 = vmul.f32 %v896, %v899
    %v902 = vmul.f32 %v885, 0.0
    %v903 = vadd.f32 %v901, %v902
    %905 = vrot.lane.b32.xlu0 %v799, 112
    %v906 = vpop.permute.xlu0 %905
    %v907 = vsel %vm523, %v906, 0
    %909 = vmatprep.subr.mxu0 0.0
    %910 = vmatpush1.msra.mxu0 %v689
    %911 = vmatprep.subr.mxu0 0.0
    %912 = vmatpush1.msra.mxu0 %v690
    %913 = vmatprep.subr.mxu0 0.0
    %914 = vmatpush1.msra.mxu0 0.0
    %915 = vmatprep.subr.mxu0 0.0
    %916 = vmatpush1.msra.mxu0 0.0
    %917 = vmatprep.subr.mxu0 0.0
    %918 = vmatpush1.msra.mxu0 0.0
    %919 = vmatprep.subr.mxu0 0.0
    %920 = vmatpush1.msra.mxu0 0.0
    %921 = vmatprep.subr.mxu0 0.0
    %922 = vmatpush1.msra.mxu0 0.0
    %923 = vmatprep.subr.mxu0 0.0
    %924 = vmatpush1.msra.mxu0 0.0
    %925 = vmatprep.subr.mxu0 0.0
    %926 = vmatpush1.msra.mxu0 0.0
    %927 = vmatprep.subr.mxu0 0.0
    %928 = vmatpush1.msra.mxu0 0.0
    %929 = vmatprep.subr.mxu0 0.0
    %930 = vmatpush1.msra.mxu0 0.0
    %931 = vmatprep.subr.mxu0 0.0
    %932 = vmatpush1.msra.mxu0 0.0
    %933 = vmatprep.subr.mxu0 0.0
    %934 = vmatpush1.msra.mxu0 0.0
    %935 = vmatprep.subr.mxu0 0.0
    %936 = vmatpush1.msra.mxu0 0.0
    %937 = vmatprep.subr.mxu0 0.0
    %938 = vmatpush1.msra.mxu0 0.0
    %939 = vmatprep.subr.mxu0 0.0
    %940 = vmatpush1.msra.mxu0 0.0
    %941 = vmatprep.subr.mxu0 0.0
    %942 = vmatpush1.msra.mxu0 0.0
    %943 = vmatprep.subr.mxu0 0.0
    %944 = vmatpush1.msra.mxu0 0.0
    %945 = vmatprep.subr.mxu0 0.0
    %946 = vmatpush1.msra.mxu0 0.0
    %947 = vmatprep.subr.mxu0 0.0
    %948 = vmatpush1.msra.mxu0 0.0
    %949 = vmatprep.subr.mxu0 0.0
    %950 = vmatpush1.msra.mxu0 0.0
    %951 = vmatprep.subr.mxu0 0.0
    %952 = vmatpush1.msra.mxu0 0.0
    %953 = vmatprep.subr.mxu0 0.0
    %954 = vmatpush1.msra.mxu0 0.0
    %955 = vmatprep.subr.mxu0 0.0
    %956 = vmatpush1.msra.mxu0 0.0
    %957 = vmatprep.subr.mxu0 0.0
    %958 = vmatpush1.msra.mxu0 0.0
    %959 = vmatprep.subr.mxu0 0.0
    %960 = vmatpush1.msra.mxu0 0.0
    %961 = vmatprep.subr.mxu0 0.0
    %962 = vmatpush1.msra.mxu0 0.0
    %963 = vmatprep.subr.mxu0 0.0
    %964 = vmatpush1.msra.mxu0 0.0
    %965 = vmatprep.subr.mxu0 0.0
    %966 = vmatpush1.msra.mxu0 0.0
    %967 = vmatprep.subr.mxu0 0.0
    %968 = vmatpush1.msra.mxu0 0.0
    %969 = vmatprep.subr.mxu0 0.0
    %970 = vmatpush1.msra.mxu0 0.0
    %971 = vmatprep.subr.mxu0 0.0
    %972 = vmatpush1.msra.mxu0 0.0
    %973 = vmatprep.mubr.f32.mxu0 0.0
    %974 = vmatmul.mubr.f32.gmra.mrb[0].mxu0 %v907
    %v975 = vpop.f32.mrb[0].mxu0
    %v976 = vadd.f32 %v699, %v975
    %v977 = vpop.f32.mrb[0].mxu0
    %978 = vdwg.mxu0
    %v980 = vrot.slane %v976, 6
    %v982 = vadd.f32 %v597, %v980
    %v983 = vxor.u32 %v982, 2147483648
    %v984 = vmul.f32 %v983, 1.442695
    %v985 = vpow.pop %v984
    %v986 = vadd.f32 %v985, 1.0
    %v987 = vrcp.pop %v986
    %v988 = vmul.f32 1.0, %v987
    %989 = vrot.lane.b32.xlu0 %v980, 96
    %v990 = vpop.permute.xlu0 %989
    %v992 = vmul.f32 %v988, %v990
    %994 = vrot.lane.b32.xlu0 %v992, 32
    %v995 = vpop.permute.xlu0 %994
    %v997 = vadd.f32 %v597, %v995
    %v998 = vtanh.pop %v997
    %v999 = vsub.f32 1.0, %v988
    %1001 = vrot.lane.b32.xlu0 %v998, 112
    %v1002 = vpop.permute.xlu0 %1001
    %v1004 = vmul.f32 %v999, %v1002
    %v1005 = vrot.slane %v799, 6
    %v1007 = vmul.f32 %v988, %v1005
    %v1008 = vadd.f32 %v1004, %v1007
    %v1010 = vrot.slane %v903, 6
    %1011 = vrot.lane.b32.xlu0 %v1010, 112
    %v1012 = vpop.permute.xlu0 %1011
    %v1013 = vsel %vm523, %v1012, 0
    %1015 = vmatprep.subr.mxu0 0.0
    %1016 = vmatpush1.msra.mxu0 %v692
    %1017 = vmatprep.subr.mxu0 0.0
    %1018 = vmatpush1.msra.mxu0 %v693
    %1019 = vmatprep.subr.mxu0 0.0
    %1020 = vmatpush1.msra.mxu0 0.0
    %1021 = vmatprep.subr.mxu0 0.0
    %1022 = vmatpush1.msra.mxu0 0.0
    %1023 = vmatprep.subr.mxu0 0.0
    %1024 = vmatpush1.msra.mxu0 0.0
    %1025 = vmatprep.subr.mxu0 0.0
    %1026 = vmatpush1.msra.mxu0 0.0
    %1027 = vmatprep.subr.mxu0 0.0
    %1028 = vmatpush1.msra.mxu0 0.0
    %1029 = vmatprep.subr.mxu0 0.0
    %1030 = vmatpush1.msra.mxu0 0.0
    %1031 = vmatprep.subr.mxu0 0.0
    %1032 = vmatpush1.msra.mxu0 0.0
    %1033 = vmatprep.subr.mxu0 0.0
    %1034 = vmatpush1.msra.mxu0 0.0
    %1035 = vmatprep.subr.mxu0 0.0
    %1036 = vmatpush1.msra.mxu0 0.0
    %1037 = vmatprep.subr.mxu0 0.0
    %1038 = vmatpush1.msra.mxu0 0.0
    %1039 = vmatprep.subr.mxu0 0.0
    %1040 = vmatpush1.msra.mxu0 0.0
    %1041 = vmatprep.subr.mxu0 0.0
    %1042 = vmatpush1.msra.mxu0 0.0
    %1043 = vmatprep.subr.mxu0 0.0
    %1044 = vmatpush1.msra.mxu0 0.0
    %1045 = vmatprep.subr.mxu0 0.0
    %1046 = vmatpush1.msra.mxu0 0.0
    %1047 = vmatprep.subr.mxu0 0.0
    %1048 = vmatpush1.msra.mxu0 0.0
    %1049 = vmatprep.subr.mxu0 0.0
    %1050 = vmatpush1.msra.mxu0 0.0
    %1051 = vmatprep.subr.mxu0 0.0
    %1052 = vmatpush1.msra.mxu0 0.0
    %1053 = vmatprep.subr.mxu0 0.0
    %1054 = vmatpush1.msra.mxu0 0.0
    %1055 = vmatprep.subr.mxu0 0.0
    %1056 = vmatpush1.msra.mxu0 0.0
    %1057 = vmatprep.subr.mxu0 0.0
    %1058 = vmatpush1.msra.mxu0 0.0
    %1059 = vmatprep.subr.mxu0 0.0
    %1060 = vmatpush1.msra.mxu0 0.0
    %1061 = vmatprep.subr.mxu0 0.0
    %1062 = vmatpush1.msra.mxu0 0.0
    %1063 = vmatprep.subr.mxu0 0.0
    %1064 = vmatpush1.msra.mxu0 0.0
    %1065 = vmatprep.subr.mxu0 0.0
    %1066 = vmatpush1.msra.mxu0 0.0
    %1067 = vmatprep.subr.mxu0 0.0
    %1068 = vmatpush1.msra.mxu0 0.0
    %1069 = vmatprep.subr.mxu0 0.0
    %1070 = vmatpush1.msra.mxu0 0.0
    %1071 = vmatprep.subr.mxu0 0.0
    %1072 = vmatpush1.msra.mxu0 0.0
    %1073 = vmatprep.subr.mxu0 0.0
    %1074 = vmatpush1.msra.mxu0 0.0
    %1075 = vmatprep.subr.mxu0 0.0
    %1076 = vmatpush1.msra.mxu0 0.0
    %1077 = vmatprep.subr.mxu0 0.0
    %1078 = vmatpush1.msra.mxu0 0.0
    %1079 = vmatprep.mubr.f32.mxu0 0.0
    %1080 = vmatmul.mubr.f32.gmra.mrb[0].mxu0 %v1013
    %v1081 = vpop.f32.mrb[0].mxu0
    %v1082 = vadd.f32 %v804, %v1081
    %v1083 = vpop.f32.mrb[0].mxu0
    %1084 = vdwg.mxu0
    %v1086 = vrot.slane %v1082, 4
    %v1088 = vadd.f32 %v686, %v1086
    %v1089 = vxor.u32 %v1088, 2147483648
    %v1090 = vmul.f32 %v1089, 1.442695
    %v1091 = vpow.pop %v1090
    %v1092 = vadd.f32 %v1091, 1.0
    %v1093 = vrcp.pop %v1092
    %v1094 = vmul.f32 1.0, %v1093
    %1095 = vrot.lane.b32.xlu0 %v1086, 96
    %v1096 = vpop.permute.xlu0 %1095
    %v1098 = vmul.f32 %v1094, %v1096
    %1100 = vrot.lane.b32.xlu0 %v1098, 32
    %v1101 = vpop.permute.xlu0 %1100
    %v1103 = vadd.f32 %v686, %v1101
    %v1104 = vtanh.pop %v1103
    %v1105 = vsub.f32 1.0, %v1094
    %1107 = vrot.lane.b32.xlu0 %v1104, 112
    %v1108 = vpop.permute.xlu0 %1107
    %v1110 = vmul.f32 %v1105, %v1108
    %v1111 = vrot.slane %v903, 2
    %v1113 = vmul.f32 %v1094, %v1111
    %v1114 = vadd.f32 %v1110, %v1113
    %v1116 = vrot.slane %v1008, 2
    %1117 = vrot.lane.b32.xlu0 %v1116, 112
    %v1118 = vpop.permute.xlu0 %1117
    %v1119 = vsel %vm523, %v1118, 0
    %1121 = vmatprep.subr.mxu0 0.0
    %1122 = vmatpush1.msra.mxu0 %v689
    %1123 = vmatprep.subr.mxu0 0.0
    %1124 = vmatpush1.msra.mxu0 %v690
    %1125 = vmatprep.subr.mxu0 0.0
    %1126 = vmatpush1.msra.mxu0 0.0
    %1127 = vmatprep.subr.mxu0 0.0
    %1128 = vmatpush1.msra.mxu0 0.0
    %1129 = vmatprep.subr.mxu0 0.0
    %1130 = vmatpush1.msra.mxu0 0.0
    %1131 = vmatprep.subr.mxu0 0.0
    %1132 = vmatpush1.msra.mxu0 0.0
    %1133 = vmatprep.subr.mxu0 0.0
    %1134 = vmatpush1.msra.mxu0 0.0
    %1135 = vmatprep.subr.mxu0 0.0
    %1136 = vmatpush1.msra.mxu0 0.0
    %1137 = vmatprep.subr.mxu0 0.0
    %1138 = vmatpush1.msra.mxu0 0.0
    %1139 = vmatprep.subr.mxu0 0.0
    %1140 = vmatpush1.msra.mxu0 0.0
    %1141 = vmatprep.subr.mxu0 0.0
    %1142 = vmatpush1.msra.mxu0 0.0
    %1143 = vmatprep.subr.mxu0 0.0
    %1144 = vmatpush1.msra.mxu0 0.0
    %1145 = vmatprep.subr.mxu0 0.0
    %1146 = vmatpush1.msra.mxu0 0.0
    %1147 = vmatprep.subr.mxu0 0.0
    %1148 = vmatpush1.msra.mxu0 0.0
    %1149 = vmatprep.subr.mxu0 0.0
    %1150 = vmatpush1.msra.mxu0 0.0
    %1151 = vmatprep.subr.mxu0 0.0
    %1152 = vmatpush1.msra.mxu0 0.0
    %1153 = vmatprep.subr.mxu0 0.0
    %1154 = vmatpush1.msra.mxu0 0.0
    %1155 = vmatprep.subr.mxu0 0.0
    %1156 = vmatpush1.msra.mxu0 0.0
    %1157 = vmatprep.subr.mxu0 0.0
    %1158 = vmatpush1.msra.mxu0 0.0
    %1159 = vmatprep.subr.mxu0 0.0
    %1160 = vmatpush1.msra.mxu0 0.0
    %1161 = vmatprep.subr.mxu0 0.0
    %1162 = vmatpush1.msra.mxu0 0.0
    %1163 = vmatprep.subr.mxu0 0.0
    %1164 = vmatpush1.msra.mxu0 0.0
    %1165 = vmatprep.subr.mxu0 0.0
    %1166 = vmatpush1.msra.mxu0 0.0
    %1167 = vmatprep.subr.mxu0 0.0
    %1168 = vmatpush1.msra.mxu0 0.0
    %1169 = vmatprep.subr.mxu0 0.0
    %1170 = vmatpush1.msra.mxu0 0.0
    %1171 = vmatprep.subr.mxu0 0.0
    %1172 = vmatpush1.msra.mxu0 0.0
    %1173 = vmatprep.subr.mxu0 0.0
    %1174 = vmatpush1.msra.mxu0 0.0
    %1175 = vmatprep.subr.mxu0 0.0
    %1176 = vmatpush1.msra.mxu0 0.0
    %1177 = vmatprep.subr.mxu0 0.0
    %1178 = vmatpush1.msra.mxu0 0.0
    %1179 = vmatprep.subr.mxu0 0.0
    %1180 = vmatpush1.msra.mxu0 0.0
    %1181 = vmatprep.subr.mxu0 0.0
    %1182 = vmatpush1.msra.mxu0 0.0
    %1183 = vmatprep.subr.mxu0 0.0
    %1184 = vmatpush1.msra.mxu0 0.0
    %1185 = vmatprep.mubr.f32.mxu0 0.0
    %1186 = vmatmul.mubr.f32.gmra.mrb[0].mxu0 %v1119
    %v1187 = vpop.f32.mrb[0].mxu0
    %v1188 = vadd.f32 %v699, %v1187
    %v1189 = vpop.f32.mrb[0].mxu0
    %1190 = vdwg.mxu0
    %v1192 = vrot.slane %v1188, 4
    %v1194 = vadd.f32 %v597, %v1192
    %v1195 = vxor.u32 %v1194, 2147483648
    %v1196 = vmul.f32 %v1195, 1.442695
    %v1197 = vpow.pop %v1196
    %v1198 = vadd.f32 %v1197, 1.0
    %v1199 = vrcp.pop %v1198
    %v1200 = vmul.f32 1.0, %v1199
    %1201 = vrot.lane.b32.xlu0 %v1192, 96
    %v1202 = vpop.permute.xlu0 %1201
    %v1204 = vmul.f32 %v1200, %v1202
    %1206 = vrot.lane.b32.xlu0 %v1204, 32
    %v1207 = vpop.permute.xlu0 %1206
    %v1209 = vadd.f32 %v597, %v1207
    %v1210 = vtanh.pop %v1209
    %v1211 = vsub.f32 1.0, %v1200
    %1213 = vrot.lane.b32.xlu0 %v1210, 112
    %v1214 = vpop.permute.xlu0 %1213
    %v1216 = vmul.f32 %v1211, %v1214
    %v1217 = vrot.slane %v1008, 6
    %v1219 = vmul.f32 %v1200, %v1217
    %v1220 = vadd.f32 %v1216, %v1219
    %v1222 = vrot.slane %v1114, 4
    %1223 = vrot.lane.b32.xlu0 %v1222, 112
    %v1224 = vpop.permute.xlu0 %1223
    %v1225 = vsel %vm523, %v1224, 0
    %1227 = vmatprep.subr.mxu0 0.0
    %1228 = vmatpush1.msra.mxu0 %v692
    %1229 = vmatprep.subr.mxu0 0.0
    %1230 = vmatpush1.msra.mxu0 %v693
    %1231 = vmatprep.subr.mxu0 0.0
    %1232 = vmatpush1.msra.mxu0 0.0
    %1233 = vmatprep.subr.mxu0 0.0
    %1234 = vmatpush1.msra.mxu0 0.0
    %1235 = vmatprep.subr.mxu0 0.0
    %1236 = vmatpush1.msra.mxu0 0.0
    %1237 = vmatprep.subr.mxu0 0.0
    %1238 = vmatpush1.msra.mxu0 0.0
    %1239 = vmatprep.subr.mxu0 0.0
    %1240 = vmatpush1.msra.mxu0 0.0
    %1241 = vmatprep.subr.mxu0 0.0
    %1242 = vmatpush1.msra.mxu0 0.0
    %1243 = vmatprep.subr.mxu0 0.0
    %1244 = vmatpush1.msra.mxu0 0.0
    %1245 = vmatprep.subr.mxu0 0.0
    %1246 = vmatpush1.msra.mxu0 0.0
    %1247 = vmatprep.subr.mxu0 0.0
    %1248 = vmatpush1.msra.mxu0 0.0
    %1249 = vmatprep.subr.mxu0 0.0
    %1250 = vmatpush1.msra.mxu0 0.0
    %1251 = vmatprep.subr.mxu0 0.0
    %1252 = vmatpush1.msra.mxu0 0.0
    %1253 = vmatprep.subr.mxu0 0.0
    %1254 = vmatpush1.msra.mxu0 0.0
    %1255 = vmatprep.subr.mxu0 0.0
    %1256 = vmatpush1.msra.mxu0 0.0
    %1257 = vmatprep.subr.mxu0 0.0
    %1258 = vmatpush1.msra.mxu0 0.0
    %1259 = vmatprep.subr.mxu0 0.0
    %1260 = vmatpush1.msra.mxu0 0.0
    %1261 = vmatprep.subr.mxu0 0.0
    %1262 = vmatpush1.msra.mxu0 0.0
    %1263 = vmatprep.subr.mxu0 0.0
    %1264 = vmatpush1.msra.mxu0 0.0
    %1265 = vmatprep.subr.mxu0 0.0
    %1266 = vmatpush1.msra.mxu0 0.0
    %1267 = vmatprep.subr.mxu0 0.0
    %1268 = vmatpush1.msra.mxu0 0.0
    %1269 = vmatprep.subr.mxu0 0.0
    %1270 = vmatpush1.msra.mxu0 0.0
    %1271 = vmatprep.subr.mxu0 0.0
    %1272 = vmatpush1.msra.mxu0 0.0
    %1273 = vmatprep.subr.mxu0 0.0
    %1274 = vmatpush1.msra.mxu0 0.0
    %1275 = vmatprep.subr.mxu0 0.0
    %1276 = vmatpush1.msra.mxu0 0.0
    %1277 = vmatprep.subr.mxu0 0.0
    %1278 = vmatpush1.msra.mxu0 0.0
    %1279 = vmatprep.subr.mxu0 0.0
    %1280 = vmatpush1.msra.mxu0 0.0
    %1281 = vmatprep.subr.mxu0 0.0
    %1282 = vmatpush1.msra.mxu0 0.0
    %1283 = vmatprep.subr.mxu0 0.0
    %1284 = vmatpush1.msra.mxu0 0.0
    %1285 = vmatprep.subr.mxu0 0.0
    %1286 = vmatpush1.msra.mxu0 0.0
    %1287 = vmatprep.subr.mxu0 0.0
    %1288 = vmatpush1.msra.mxu0 0.0
    %1289 = vmatprep.subr.mxu0 0.0
    %1290 = vmatpush1.msra.mxu0 0.0
    %1291 = vmatprep.mubr.f32.mxu0 0.0
    %1292 = vmatmul.mubr.f32.gmra.mrb[0].mxu0 %v1225
    %v1293 = vpop.f32.mrb[0].mxu0
    %v1294 = vadd.f32 %v804, %v1293
    %v1295 = vpop.f32.mrb[0].mxu0
    %1296 = vdwg.mxu0
    %v1298 = vrot.slane %v1294, 6
    %v1300 = vadd.f32 %v686, %v1298
    %v1301 = vxor.u32 %v1300, 2147483648
    %v1302 = vmul.f32 %v1301, 1.442695
    %v1303 = vpow.pop %v1302
    %v1304 = vadd.f32 %v1303, 1.0
    %v1305 = vrcp.pop %v1304
    %v1306 = vmul.f32 1.0, %v1305
    %1307 = vrot.lane.b32.xlu0 %v1298, 96
    %v1308 = vpop.permute.xlu0 %1307
    %v1310 = vmul.f32 %v1306, %v1308
    %1312 = vrot.lane.b32.xlu0 %v1310, 32
    %v1313 = vpop.permute.xlu0 %1312
    %v1315 = vadd.f32 %v686, %v1313
    %v1316 = vtanh.pop %v1315
    %v1317 = vsub.f32 1.0, %v1306
    %1319 = vrot.lane.b32.xlu0 %v1316, 112
    %v1320 = vpop.permute.xlu0 %1319
    %v1322 = vmul.f32 %v1317, %v1320
    %v1323 = vrot.slane %v1114, 2
    %v1325 = vmul.f32 %v1306, %v1323
    %v1326 = vadd.f32 %v1322, %v1325
    %v1328 = vrot.slane %v1220, 4
    %1329 = vrot.lane.b32.xlu0 %v1328, 112
    %v1330 = vpop.permute.xlu0 %1329
    %v1331 = vsel %vm523, %v1330, 0
    %1333 = vmatprep.subr.mxu0 0.0
    %1334 = vmatpush1.msra.mxu0 %v689
    %1335 = vmatprep.subr.mxu0 0.0
    %1336 = vmatpush1.msra.mxu0 %v690
    %1337 = vmatprep.subr.mxu0 0.0
    %1338 = vmatpush1.msra.mxu0 0.0
    %1339 = vmatprep.subr.mxu0 0.0
    %1340 = vmatpush1.msra.mxu0 0.0
    %1341 = vmatprep.subr.mxu0 0.0
    %1342 = vmatpush1.msra.mxu0 0.0
    %1343 = vmatprep.subr.mxu0 0.0
    %1344 = vmatpush1.msra.mxu0 0.0
    %1345 = vmatprep.subr.mxu0 0.0
    %1346 = vmatpush1.msra.mxu0 0.0
    %1347 = vmatprep.subr.mxu0 0.0
    %1348 = vmatpush1.msra.mxu0 0.0
    %1349 = vmatprep.subr.mxu0 0.0
    %1350 = vmatpush1.msra.mxu0 0.0
    %1351 = vmatprep.subr.mxu0 0.0
    %1352 = vmatpush1.msra.mxu0 0.0
    %1353 = vmatprep.subr.mxu0 0.0
    %1354 = vmatpush1.msra.mxu0 0.0
    %1355 = vmatprep.subr.mxu0 0.0
    %1356 = vmatpush1.msra.mxu0 0.0
    %1357 = vmatprep.subr.mxu0 0.0
    %1358 = vmatpush1.msra.mxu0 0.0
    %1359 = vmatprep.subr.mxu0 0.0
    %1360 = vmatpush1.msra.mxu0 0.0
    %1361 = vmatprep.subr.mxu0 0.0
    %1362 = vmatpush1.msra.mxu0 0.0
    %1363 = vmatprep.subr.mxu0 0.0
    %1364 = vmatpush1.msra.mxu0 0.0
    %1365 = vmatprep.subr.mxu0 0.0
    %1366 = vmatpush1.msra.mxu0 0.0
    %1367 = vmatprep.subr.mxu0 0.0
    %1368 = vmatpush1.msra.mxu0 0.0
    %1369 = vmatprep.subr.mxu0 0.0
    %1370 = vmatpush1.msra.mxu0 0.0
    %1371 = vmatprep.subr.mxu0 0.0
    %1372 = vmatpush1.msra.mxu0 0.0
    %1373 = vmatprep.subr.mxu0 0.0
    %1374 = vmatpush1.msra.mxu0 0.0
    %1375 = vmatprep.subr.mxu0 0.0
    %1376 = vmatpush1.msra.mxu0 0.0
    %1377 = vmatprep.subr.mxu0 0.0
    %1378 = vmatpush1.msra.mxu0 0.0
    %1379 = vmatprep.subr.mxu0 0.0
    %1380 = vmatpush1.msra.mxu0 0.0
    %1381 = vmatprep.subr.mxu0 0.0
    %1382 = vmatpush1.msra.mxu0 0.0
    %1383 = vmatprep.subr.mxu0 0.0
    %1384 = vmatpush1.msra.mxu0 0.0
    %1385 = vmatprep.subr.mxu0 0.0
    %1386 = vmatpush1.msra.mxu0 0.0
    %1387 = vmatprep.subr.mxu0 0.0
    %1388 = vmatpush1.msra.mxu0 0.0
    %1389 = vmatprep.subr.mxu0 0.0
    %1390 = vmatpush1.msra.mxu0 0.0
    %1391 = vmatprep.subr.mxu0 0.0
    %1392 = vmatpush1.msra.mxu0 0.0
    %1393 = vmatprep.subr.mxu0 0.0
    %1394 = vmatpush1.msra.mxu0 0.0
    %1395 = vmatprep.subr.mxu0 0.0
    %1396 = vmatpush1.msra.mxu0 0.0
    %1397 = vmatprep.mubr.f32.mxu0 0.0
    %1398 = vmatmul.mubr.f32.gmra.mrb[0].mxu0 %v1331
    %v1399 = vpop.f32.mrb[0].mxu0
    %v1400 = vadd.f32 %v699, %v1399
    %v1401 = vpop.f32.mrb[0].mxu0
    %1402 = vdwg.mxu0
    %v1404 = vrot.slane %v1400, 2
    %v1406 = vadd.f32 %v597, %v1404
    %v1407 = vxor.u32 %v1406, 2147483648
    %v1408 = vmul.f32 %v1407, 1.442695
    %v1409 = vpow.pop %v1408
    %v1410 = vadd.f32 %v1409, 1.0
    %v1411 = vrcp.pop %v1410
    %v1412 = vmul.f32 1.0, %v1411
    %1413 = vrot.lane.b32.xlu0 %v1404, 96
    %v1414 = vpop.permute.xlu0 %1413
    %v1416 = vmul.f32 %v1412, %v1414
    %1418 = vrot.lane.b32.xlu0 %v1416, 32
    %v1419 = vpop.permute.xlu0 %1418
    %v1421 = vadd.f32 %v597, %v1419
    %v1422 = vtanh.pop %v1421
    %v1423 = vsub.f32 1.0, %v1412
    %1425 = vrot.lane.b32.xlu0 %v1422, 112
    %v1426 = vpop.permute.xlu0 %1425
    %v1428 = vmul.f32 %v1423, %v1426
    %v1429 = vrot.slane %v1220, 6
    %v1431 = vmul.f32 %v1412, %v1429
    %v1432 = vadd.f32 %v1428, %v1431
    %v1434 = vrot.slane %v1326, 2
    %1435 = vrot.lane.b32.xlu0 %v1434, 112
    %v1436 = vpop.permute.xlu0 %1435
    %v1437 = vsel %vm523, %v1436, 0
    %1439 = vmatprep.subr.mxu0 0.0
    %1440 = vmatpush1.msra.mxu0 %v692
    %1441 = vmatprep.subr.mxu0 0.0
    %1442 = vmatpush1.msra.mxu0 %v693
    %1443 = vmatprep.subr.mxu0 0.0
    %1444 = vmatpush1.msra.mxu0 0.0
    %1445 = vmatprep.subr.mxu0 0.0
    %1446 = vmatpush1.msra.mxu0 0.0
    %1447 = vmatprep.subr.mxu0 0.0
    %1448 = vmatpush1.msra.mxu0 0.0
    %1449 = vmatprep.subr.mxu0 0.0
    %1450 = vmatpush1.msra.mxu0 0.0
    %1451 = vmatprep.subr.mxu0 0.0
    %1452 = vmatpush1.msra.mxu0 0.0
    %1453 = vmatprep.subr.mxu0 0.0
    %1454 = vmatpush1.msra.mxu0 0.0
    %1455 = vmatprep.subr.mxu0 0.0
    %1456 = vmatpush1.msra.mxu0 0.0
    %1457 = vmatprep.subr.mxu0 0.0
    %1458 = vmatpush1.msra.mxu0 0.0
    %1459 = vmatprep.subr.mxu0 0.0
    %1460 = vmatpush1.msra.mxu0 0.0
    %1461 = vmatprep.subr.mxu0 0.0
    %1462 = vmatpush1.msra.mxu0 0.0
    %1463 = vmatprep.subr.mxu0 0.0
    %1464 = vmatpush1.msra.mxu0 0.0
    %1465 = vmatprep.subr.mxu0 0.0
    %1466 = vmatpush1.msra.mxu0 0.0
    %1467 = vmatprep.subr.mxu0 0.0
    %1468 = vmatpush1.msra.mxu0 0.0
    %1469 = vmatprep.subr.mxu0 0.0
    %1470 = vmatpush1.msra.mxu0 0.0
    %1471 = vmatprep.subr.mxu0 0.0
    %1472 = vmatpush1.msra.mxu0 0.0
    %1473 = vmatprep.subr.mxu0 0.0
    %1474 = vmatpush1.msra.mxu0 0.0
    %1475 = vmatprep.subr.mxu0 0.0
    %1476 = vmatpush1.msra.mxu0 0.0
    %1477 = vmatprep.subr.mxu0 0.0
    %1478 = vmatpush1.msra.mxu0 0.0
    %1479 = vmatprep.subr.mxu0 0.0
    %1480 = vmatpush1.msra.mxu0 0.0
    %1481 = vmatprep.subr.mxu0 0.0
    %1482 = vmatpush1.msra.mxu0 0.0
    %1483 = vmatprep.subr.mxu0 0.0
    %1484 = vmatpush1.msra.mxu0 0.0
    %1485 = vmatprep.subr.mxu0 0.0
    %1486 = vmatpush1.msra.mxu0 0.0
    %1487 = vmatprep.subr.mxu0 0.0
    %1488 = vmatpush1.msra.mxu0 0.0
    %1489 = vmatprep.subr.mxu0 0.0
    %1490 = vmatpush1.msra.mxu0 0.0
    %1491 = vmatprep.subr.mxu0 0.0
    %1492 = vmatpush1.msra.mxu0 0.0
    %1493 = vmatprep.subr.mxu0 0.0
    %1494 = vmatpush1.msra.mxu0 0.0
    %1495 = vmatprep.subr.mxu0 0.0
    %1496 = vmatpush1.msra.mxu0 0.0
    %1497 = vmatprep.subr.mxu0 0.0
    %1498 = vmatpush1.msra.mxu0 0.0
    %1499 = vmatprep.subr.mxu0 0.0
    %1500 = vmatpush1.msra.mxu0 0.0
    %1501 = vmatprep.subr.mxu0 0.0
    %1502 = vmatpush1.msra.mxu0 0.0
    %1503 = vmatprep.mubr.f32.mxu0 0.0
    %1504 = vmatmul.mubr.f32.gmra.mrb[0].mxu0 %v1437
    %v1505 = vpop.f32.mrb[0].mxu0
    %v1506 = vadd.f32 %v804, %v1505
    %v1507 = vpop.f32.mrb[0].mxu0
    %1508 = vdwg.mxu0
    %v1509 = vadd.f32 %v686, %v1506
    %v1510 = vxor.u32 %v1509, 2147483648
    %v1511 = vmul.f32 %v1510, 1.442695
    %v1512 = vpow.pop %v1511
    %v1513 = vadd.f32 %v1512, 1.0
    %v1514 = vrcp.pop %v1513
    %v1515 = vmul.f32 1.0, %v1514
    %1517 = vrot.lane.b32.xlu0 %v1506, 96
    %v1518 = vpop.permute.xlu0 %1517
    %v1520 = vmul.f32 %v1515, %v1518
    %1522 = vrot.lane.b32.xlu0 %v1520, 32
    %v1523 = vpop.permute.xlu0 %1522
    %v1525 = vadd.f32 %v686, %v1523
    %v1526 = vtanh.pop %v1525
    %v1527 = vsub.f32 1.0, %v1515
    %1529 = vrot.lane.b32.xlu0 %v1526, 112
    %v1530 = vpop.permute.xlu0 %1529
    %v1532 = vmul.f32 %v1527, %v1530
    %v1534 = vmul.f32 %v1515, %v1434
    %v1535 = vadd.f32 %v1532, %v1534
    %v1537 = vrot.slane %v1432, 6
    %1538 = vrot.lane.b32.xlu0 %v1537, 112
    %v1539 = vpop.permute.xlu0 %1538
    %v1540 = vsel %vm523, %v1539, 0
    %1542 = vmatprep.subr.mxu0 0.0
    %1543 = vmatpush1.msra.mxu0 %v689
    %1544 = vmatprep.subr.mxu0 0.0
    %1545 = vmatpush1.msra.mxu0 %v690
    %1546 = vmatprep.subr.mxu0 0.0
    %1547 = vmatpush1.msra.mxu0 0.0
    %1548 = vmatprep.subr.mxu0 0.0
    %1549 = vmatpush1.msra.mxu0 0.0
    %1550 = vmatprep.subr.mxu0 0.0
    %1551 = vmatpush1.msra.mxu0 0.0
    %1552 = vmatprep.subr.mxu0 0.0
    %1553 = vmatpush1.msra.mxu0 0.0
    %1554 = vmatprep.subr.mxu0 0.0
    %1555 = vmatpush1.msra.mxu0 0.0
    %1556 = vmatprep.subr.mxu0 0.0
    %1557 = vmatpush1.msra.mxu0 0.0
    %1558 = vmatprep.subr.mxu0 0.0
    %1559 = vmatpush1.msra.mxu0 0.0
    %1560 = vmatprep.subr.mxu0 0.0
    %1561 = vmatpush1.msra.mxu0 0.0
    %1562 = vmatprep.subr.mxu0 0.0
    %1563 = vmatpush1.msra.mxu0 0.0
    %1564 = vmatprep.subr.mxu0 0.0
    %1565 = vmatpush1.msra.mxu0 0.0
    %1566 = vmatprep.subr.mxu0 0.0
    %1567 = vmatpush1.msra.mxu0 0.0
    %1568 = vmatprep.subr.mxu0 0.0
    %1569 = vmatpush1.msra.mxu0 0.0
    %1570 = vmatprep.subr.mxu0 0.0
    %1571 = vmatpush1.msra.mxu0 0.0
    %1572 = vmatprep.subr.mxu0 0.0
    %1573 = vmatpush1.msra.mxu0 0.0
    %1574 = vmatprep.subr.mxu0 0.0
    %1575 = vmatpush1.msra.mxu0 0.0
    %1576 = vmatprep.subr.mxu0 0.0
    %1577 = vmatpush1.msra.mxu0 0.0
    %1578 = vmatprep.subr.mxu0 0.0
    %1579 = vmatpush1.msra.mxu0 0.0
    %1580 = vmatprep.subr.mxu0 0.0
    %1581 = vmatpush1.msra.mxu0 0.0
    %1582 = vmatprep.subr.mxu0 0.0
    %1583 = vmatpush1.msra.mxu0 0.0
    %1584 = vmatprep.subr.mxu0 0.0
    %1585 = vmatpush1.msra.mxu0 0.0
    %1586 = vmatprep.subr.mxu0 0.0
    %1587 = vmatpush1.msra.mxu0 0.0
    %1588 = vmatprep.subr.mxu0 0.0
    %1589 = vmatpush1.msra.mxu0 0.0
    %1590 = vmatprep.subr.mxu0 0.0
    %1591 = vmatpush1.msra.mxu0 0.0
    %1592 = vmatprep.subr.mxu0 0.0
    %1593 = vmatpush1.msra.mxu0 0.0
    %1594 = vmatprep.subr.mxu0 0.0
    %1595 = vmatpush1.msra.mxu0 0.0
    %1596 = vmatprep.subr.mxu0 0.0
    %1597 = vmatpush1.msra.mxu0 0.0
    %1598 = vmatprep.subr.mxu0 0.0
    %1599 = vmatpush1.msra.mxu0 0.0
    %1600 = vmatprep.subr.mxu0 0.0
    %1601 = vmatpush1.msra.mxu0 0.0
    %1602 = vmatprep.subr.mxu0 0.0
    %1603 = vmatpush1.msra.mxu0 0.0
    %1604 = vmatprep.subr.mxu0 0.0
    %1605 = vmatpush1.msra.mxu0 0.0
    %1606 = vmatprep.mubr.f32.mxu0 0.0
    %1607 = vmatmul.mubr.f32.gmra.mrb[0].mxu0 %v1540
    %v1608 = vpop.f32.mrb[0].mxu0
    %v1609 = vadd.f32 %v699, %v1608
    %v1610 = vpop.f32.mrb[0].mxu0
    %1611 = vdwg.mxu0
    %v1612 = vadd.f32 %v602, %v1609
    %v1613 = vxor.u32 %v1612, 2147483648
    %v1614 = vmul.f32 %v1613, 1.442695
    %v1615 = vpow.pop %v1614
    %v1616 = vadd.f32 %v1615, 1.0
    %v1617 = vrcp.pop %v1616
    %v1618 = vmul.f32 1.0, %v1617
    %1620 = vrot.lane.b32.xlu0 %v1609, 96
    %v1621 = vpop.permute.xlu0 %1620
    %v1623 = vmul.f32 %v1618, %v1621
    %1625 = vrot.lane.b32.xlu0 %v1623, 32
    %v1626 = vpop.permute.xlu0 %1625
    %v1628 = vadd.f32 %v602, %v1626
    %v1629 = vtanh.pop %v1628
    %v1630 = vsub.f32 1.0, %v1618
    %1632 = vrot.lane.b32.xlu0 %v1629, 112
    %v1633 = vpop.permute.xlu0 %1632
    %v1635 = vmul.f32 %v1630, %v1633
    %v1637 = vmul.f32 %v1618, %v1537
    %v1638 = vadd.f32 %v1635, %v1637
    %1640 = vrot.lane.b32.xlu0 %v1535, 112
    %v1641 = vpop.permute.xlu0 %1640
    %v1642 = vsel %vm523, %v1641, 0
    %1644 = vmatprep.subr.mxu0 0.0
    %1645 = vmatpush1.msra.mxu0 %v692
    %1646 = vmatprep.subr.mxu0 0.0
    %1647 = vmatpush1.msra.mxu0 %v693
    %1648 = vmatprep.subr.mxu0 0.0
    %1649 = vmatpush1.msra.mxu0 0.0
    %1650 = vmatprep.subr.mxu0 0.0
    %1651 = vmatpush1.msra.mxu0 0.0
    %1652 = vmatprep.subr.mxu0 0.0
    %1653 = vmatpush1.msra.mxu0 0.0
    %1654 = vmatprep.subr.mxu0 0.0
    %1655 = vmatpush1.msra.mxu0 0.0
    %1656 = vmatprep.subr.mxu0 0.0
    %1657 = vmatpush1.msra.mxu0 0.0
    %1658 = vmatprep.subr.mxu0 0.0
    %1659 = vmatpush1.msra.mxu0 0.0
    %1660 = vmatprep.subr.mxu0 0.0
    %1661 = vmatpush1.msra.mxu0 0.0
    %1662 = vmatprep.subr.mxu0 0.0
    %1663 = vmatpush1.msra.mxu0 0.0
    %1664 = vmatprep.subr.mxu0 0.0
    %1665 = vmatpush1.msra.mxu0 0.0
    %1666 = vmatprep.subr.mxu0 0.0
    %1667 = vmatpush1.msra.mxu0 0.0
    %1668 = vmatprep.subr.mxu0 0.0
    %1669 = vmatpush1.msra.mxu0 0.0
    %1670 = vmatprep.subr.mxu0 0.0
    %1671 = vmatpush1.msra.mxu0 0.0
    %1672 = vmatprep.subr.mxu0 0.0
    %1673 = vmatpush1.msra.mxu0 0.0
    %1674 = vmatprep.subr.mxu0 0.0
    %1675 = vmatpush1.msra.mxu0 0.0
    %1676 = vmatprep.subr.mxu0 0.0
    %1677 = vmatpush1.msra.mxu0 0.0
    %1678 = vmatprep.subr.mxu0 0.0
    %1679 = vmatpush1.msra.mxu0 0.0
    %1680 = vmatprep.subr.mxu0 0.0
    %1681 = vmatpush1.msra.mxu0 0.0
    %1682 = vmatprep.subr.mxu0 0.0
    %1683 = vmatpush1.msra.mxu0 0.0
    %1684 = vmatprep.subr.mxu0 0.0
    %1685 = vmatpush1.msra.mxu0 0.0
    %1686 = vmatprep.subr.mxu0 0.0
    %1687 = vmatpush1.msra.mxu0 0.0
    %1688 = vmatprep.subr.mxu0 0.0
    %1689 = vmatpush1.msra.mxu0 0.0
    %1690 = vmatprep.subr.mxu0 0.0
    %1691 = vmatpush1.msra.mxu0 0.0
    %1692 = vmatprep.subr.mxu0 0.0
    %1693 = vmatpush1.msra.mxu0 0.0
    %1694 = vmatprep.subr.mxu0 0.0
    %1695 = vmatpush1.msra.mxu0 0.0
    %1696 = vmatprep.subr.mxu0 0.0
    %1697 = vmatpush1.msra.mxu0 0.0
    %1698 = vmatprep.subr.mxu0 0.0
    %1699 = vmatpush1.msra.mxu0 0.0
    %1700 = vmatprep.subr.mxu0 0.0
    %1701 = vmatpush1.msra.mxu0 0.0
    %1702 = vmatprep.subr.mxu0 0.0
    %1703 = vmatpush1.msra.mxu0 0.0
    %1704 = vmatprep.subr.mxu0 0.0
    %1705 = vmatpush1.msra.mxu0 0.0
    %1706 = vmatprep.subr.mxu0 0.0
    %1707 = vmatpush1.msra.mxu0 0.0
    %1708 = vmatprep.mubr.f32.mxu0 0.0
    %1709 = vmatmul.mubr.f32.gmra.mrb[0].mxu0 %v1642
    %v1710 = vpop.f32.mrb[0].mxu0
    %v1711 = vadd.f32 %v804, %v1710
    %v1712 = vpop.f32.mrb[0].mxu0
    %1713 = vdwg.mxu0
    %v1715 = vrot.slane %v1711, 2
    %v1717 = vadd.f32 %v681, %v1715
    %v1718 = vxor.u32 %v1717, 2147483648
    %v1719 = vmul.f32 %v1718, 1.442695
    %v1720 = vpow.pop %v1719
    %v1721 = vadd.f32 %v1720, 1.0
    %v1722 = vrcp.pop %v1721
    %v1723 = vmul.f32 1.0, %v1722
    %1724 = vrot.lane.b32.xlu0 %v1715, 96
    %v1725 = vpop.permute.xlu0 %1724
    %v1727 = vmul.f32 %v1723, %v1725
    %1729 = vrot.lane.b32.xlu0 %v1727, 32
    %v1730 = vpop.permute.xlu0 %1729
    %v1732 = vadd.f32 %v681, %v1730
    %v1733 = vtanh.pop %v1732
    %v1734 = vsub.f32 1.0, %v1723
    %1736 = vrot.lane.b32.xlu0 %v1733, 112
    %v1737 = vpop.permute.xlu0 %1736
    %v1739 = vmul.f32 %v1734, %v1737
    %v1740 = vrot.slane %v1535, 2
    %v1742 = vmul.f32 %v1723, %v1740
    %v1743 = vadd.f32 %v1739, %v1742
    %1745 = vrot.lane.b32.xlu0 %v1638, 112
    %v1746 = vpop.permute.xlu0 %1745
    %v1747 = vsel %vm523, %v1746, 0
    %1749 = vmatprep.subr.mxu0 0.0
    %1750 = vmatpush1.msra.mxu0 %v689
    %1751 = vmatprep.subr.mxu0 0.0
    %1752 = vmatpush1.msra.mxu0 %v690
    %1753 = vmatprep.subr.mxu0 0.0
    %1754 = vmatpush1.msra.mxu0 0.0
    %1755 = vmatprep.subr.mxu0 0.0
    %1756 = vmatpush1.msra.mxu0 0.0
    %1757 = vmatprep.subr.mxu0 0.0
    %1758 = vmatpush1.msra.mxu0 0.0
    %1759 = vmatprep.subr.mxu0 0.0
    %1760 = vmatpush1.msra.mxu0 0.0
    %1761 = vmatprep.subr.mxu0 0.0
    %1762 = vmatpush1.msra.mxu0 0.0
    %1763 = vmatprep.subr.mxu0 0.0
    %1764 = vmatpush1.msra.mxu0 0.0
    %1765 = vmatprep.subr.mxu0 0.0
    %1766 = vmatpush1.msra.mxu0 0.0
    %1767 = vmatprep.subr.mxu0 0.0
    %1768 = vmatpush1.msra.mxu0 0.0
    %1769 = vmatprep.subr.mxu0 0.0
    %1770 = vmatpush1.msra.mxu0 0.0
    %1771 = vmatprep.subr.mxu0 0.0
    %1772 = vmatpush1.msra.mxu0 0.0
    %1773 = vmatprep.subr.mxu0 0.0
    %1774 = vmatpush1.msra.mxu0 0.0
    %1775 = vmatprep.subr.mxu0 0.0
    %1776 = vmatpush1.msra.mxu0 0.0
    %1777 = vmatprep.subr.mxu0 0.0
    %1778 = vmatpush1.msra.mxu0 0.0
    %1779 = vmatprep.subr.mxu0 0.0
    %1780 = vmatpush1.msra.mxu0 0.0
    %1781 = vmatprep.subr.mxu0 0.0
    %1782 = vmatpush1.msra.mxu0 0.0
    %1783 = vmatprep.subr.mxu0 0.0
    %1784 = vmatpush1.msra.mxu0 0.0
    %1785 = vmatprep.subr.mxu0 0.0
    %1786 = vmatpush1.msra.mxu0 0.0
    %1787 = vmatprep.subr.mxu0 0.0
    %1788 = vmatpush1.msra.mxu0 0.0
    %1789 = vmatprep.subr.mxu0 0.0
    %1790 = vmatpush1.msra.mxu0 0.0
    %1791 = vmatprep.subr.mxu0 0.0
    %1792 = vmatpush1.msra.mxu0 0.0
    %1793 = vmatprep.subr.mxu0 0.0
    %1794 = vmatpush1.msra.mxu0 0.0
    %1795 = vmatprep.subr.mxu0 0.0
    %1796 = vmatpush1.msra.mxu0 0.0
    %1797 = vmatprep.subr.mxu0 0.0
    %1798 = vmatpush1.msra.mxu0 0.0
    %1799 = vmatprep.subr.mxu0 0.0
    %1800 = vmatpush1.msra.mxu0 0.0
    %1801 = vmatprep.subr.mxu0 0.0
    %1802 = vmatpush1.msra.mxu0 0.0
    %1803 = vmatprep.subr.mxu0 0.0
    %1804 = vmatpush1.msra.mxu0 0.0
    %1805 = vmatprep.subr.mxu0 0.0
    %1806 = vmatpush1.msra.mxu0 0.0
    %1807 = vmatprep.subr.mxu0 0.0
    %1808 = vmatpush1.msra.mxu0 0.0
    %1809 = vmatprep.subr.mxu0 0.0
    %1810 = vmatpush1.msra.mxu0 0.0
    %1811 = vmatprep.subr.mxu0 0.0
    %1812 = vmatpush1.msra.mxu0 0.0
    %1813 = vmatprep.mubr.f32.mxu0 0.0
    %1814 = vmatmul.mubr.f32.gmra.mrb[0].mxu0 %v1747
    %v1815 = vpop.f32.mrb[0].mxu0
    %v1816 = vadd.f32 %v699, %v1815
    %v1817 = vpop.f32.mrb[0].mxu0
    %1818 = vdwg.mxu0
    %v1820 = vrot.slane %v1816, 6
    %v1822 = vadd.f32 %v602, %v1820
    %v1823 = vxor.u32 %v1822, 2147483648
    %v1824 = vmul.f32 %v1823, 1.442695
    %v1825 = vpow.pop %v1824
    %v1826 = vadd.f32 %v1825, 1.0
    %v1827 = vrcp.pop %v1826
    %v1828 = vmul.f32 1.0, %v1827
    %1829 = vrot.lane.b32.xlu0 %v1820, 96
    %v1830 = vpop.permute.xlu0 %1829
    %v1832 = vmul.f32 %v1828, %v1830
    %1834 = vrot.lane.b32.xlu0 %v1832, 32
    %v1835 = vpop.permute.xlu0 %1834
    %v1837 = vadd.f32 %v602, %v1835
    %v1838 = vtanh.pop %v1837
    %v1839 = vsub.f32 1.0, %v1828
    %1841 = vrot.lane.b32.xlu0 %v1838, 112
    %v1842 = vpop.permute.xlu0 %1841
    %v1844 = vmul.f32 %v1839, %v1842
    %v1845 = vrot.slane %v1638, 6
    %v1847 = vmul.f32 %v1828, %v1845
    %v1848 = vadd.f32 %v1844, %v1847
    %v1850 = vrot.slane %v1743, 6
    %1851 = vrot.lane.b32.xlu0 %v1850, 112
    %v1852 = vpop.permute.xlu0 %1851
    %v1853 = vsel %vm523, %v1852, 0
    %1855 = vmatprep.subr.mxu0 0.0
    %1856 = vmatpush1.msra.mxu0 %v692
    %1857 = vmatprep.subr.mxu0 0.0
    %1858 = vmatpush1.msra.mxu0 %v693
    %1859 = vmatprep.subr.mxu0 0.0
    %1860 = vmatpush1.msra.mxu0 0.0
    %1861 = vmatprep.subr.mxu0 0.0
    %1862 = vmatpush1.msra.mxu0 0.0
    %1863 = vmatprep.subr.mxu0 0.0
    %1864 = vmatpush1.msra.mxu0 0.0
    %1865 = vmatprep.subr.mxu0 0.0
    %1866 = vmatpush1.msra.mxu0 0.0
    %1867 = vmatprep.subr.mxu0 0.0
    %1868 = vmatpush1.msra.mxu0 0.0
    %1869 = vmatprep.subr.mxu0 0.0
    %1870 = vmatpush1.msra.mxu0 0.0
    %1871 = vmatprep.subr.mxu0 0.0
    %1872 = vmatpush1.msra.mxu0 0.0
    %1873 = vmatprep.subr.mxu0 0.0
    %1874 = vmatpush1.msra.mxu0 0.0
    %1875 = vmatprep.subr.mxu0 0.0
    %1876 = vmatpush1.msra.mxu0 0.0
    %1877 = vmatprep.subr.mxu0 0.0
    %1878 = vmatpush1.msra.mxu0 0.0
    %1879 = vmatprep.subr.mxu0 0.0
    %1880 = vmatpush1.msra.mxu0 0.0
    %1881 = vmatprep.subr.mxu0 0.0
    %1882 = vmatpush1.msra.mxu0 0.0
    %1883 = vmatprep.subr.mxu0 0.0
    %1884 = vmatpush1.msra.mxu0 0.0
    %1885 = vmatprep.subr.mxu0 0.0
    %1886 = vmatpush1.msra.mxu0 0.0
    %1887 = vmatprep.subr.mxu0 0.0
    %1888 = vmatpush1.msra.mxu0 0.0
    %1889 = vmatprep.subr.mxu0 0.0
    %1890 = vmatpush1.msra.mxu0 0.0
    %1891 = vmatprep.subr.mxu0 0.0
    %1892 = vmatpush1.msra.mxu0 0.0
    %1893 = vmatprep.subr.mxu0 0.0
    %1894 = vmatpush1.msra.mxu0 0.0
    %1895 = vmatprep.subr.mxu0 0.0
    %1896 = vmatpush1.msra.mxu0 0.0
    %1897 = vmatprep.subr.mxu0 0.0
    %1898 = vmatpush1.msra.mxu0 0.0
    %1899 = vmatprep.subr.mxu0 0.0
    %1900 = vmatpush1.msra.mxu0 0.0
    %1901 = vmatprep.subr.mxu0 0.0
    %1902 = vmatpush1.msra.mxu0 0.0
    %1903 = vmatprep.subr.mxu0 0.0
    %1904 = vmatpush1.msra.mxu0 0.0
    %1905 = vmatprep.subr.mxu0 0.0
    %1906 = vmatpush1.msra.mxu0 0.0
    %1907 = vmatprep.subr.mxu0 0.0
    %1908 = vmatpush1.msra.mxu0 0.0
    %1909 = vmatprep.subr.mxu0 0.0
    %1910 = vmatpush1.msra.mxu0 0.0
    %1911 = vmatprep.subr.mxu0 0.0
    %1912 = vmatpush1.msra.mxu0 0.0
    %1913 = vmatprep.subr.mxu0 0.0
    %1914 = vmatpush1.msra.mxu0 0.0
    %1915 = vmatprep.subr.mxu0 0.0
    %1916 = vmatpush1.msra.mxu0 0.0
    %1917 = vmatprep.subr.mxu0 0.0
    %1918 = vmatpush1.msra.mxu0 0.0
    %1919 = vmatprep.mubr.f32.mxu0 0.0
    %1920 = vmatmul.mubr.f32.gmra.mrb[0].mxu0 %v1853
    %v1921 = vpop.f32.mrb[0].mxu0
    %v1922 = vadd.f32 %v804, %v1921
    %v1923 = vpop.f32.mrb[0].mxu0
    %1924 = vdwg.mxu0
    %v1926 = vrot.slane %v1922, 4
    %v1928 = vadd.f32 %v681, %v1926
    %v1929 = vxor.u32 %v1928, 2147483648
    %v1930 = vmul.f32 %v1929, 1.442695
    %v1931 = vpow.pop %v1930
    %v1932 = vadd.f32 %v1931, 1.0
    %v1933 = vrcp.pop %v1932
    %v1934 = vmul.f32 1.0, %v1933
    %1935 = vrot.lane.b32.xlu0 %v1926, 96
    %v1936 = vpop.permute.xlu0 %1935
    %v1938 = vmul.f32 %v1934, %v1936
    %1940 = vrot.lane.b32.xlu0 %v1938, 32
    %v1941 = vpop.permute.xlu0 %1940
    %v1943 = vadd.f32 %v681, %v1941
    %v1944 = vtanh.pop %v1943
    %v1945 = vsub.f32 1.0, %v1934
    %1947 = vrot.lane.b32.xlu0 %v1944, 112
    %v1948 = vpop.permute.xlu0 %1947
    %v1950 = vmul.f32 %v1945, %v1948
    %v1951 = vrot.slane %v1743, 2
    %v1953 = vmul.f32 %v1934, %v1951
    %v1954 = vadd.f32 %v1950, %v1953
    %v1956 = vrot.slane %v1848, 2
    %1957 = vrot.lane.b32.xlu0 %v1956, 112
    %v1958 = vpop.permute.xlu0 %1957
    %v1959 = vsel %vm523, %v1958, 0
    %1961 = vmatprep.subr.mxu0 0.0
    %1962 = vmatpush1.msra.mxu0 %v689
    %1963 = vmatprep.subr.mxu0 0.0
    %1964 = vmatpush1.msra.mxu0 %v690
    %1965 = vmatprep.subr.mxu0 0.0
    %1966 = vmatpush1.msra.mxu0 0.0
    %1967 = vmatprep.subr.mxu0 0.0
    %1968 = vmatpush1.msra.mxu0 0.0
    %1969 = vmatprep.subr.mxu0 0.0
    %1970 = vmatpush1.msra.mxu0 0.0
    %1971 = vmatprep.subr.mxu0 0.0
    %1972 = vmatpush1.msra.mxu0 0.0
    %1973 = vmatprep.subr.mxu0 0.0
    %1974 = vmatpush1.msra.mxu0 0.0
    %1975 = vmatprep.subr.mxu0 0.0
    %1976 = vmatpush1.msra.mxu0 0.0
    %1977 = vmatprep.subr.mxu0 0.0
    %1978 = vmatpush1.msra.mxu0 0.0
    %1979 = vmatprep.subr.mxu0 0.0
    %1980 = vmatpush1.msra.mxu0 0.0
    %1981 = vmatprep.subr.mxu0 0.0
    %1982 = vmatpush1.msra.mxu0 0.0
    %1983 = vmatprep.subr.mxu0 0.0
    %1984 = vmatpush1.msra.mxu0 0.0
    %1985 = vmatprep.subr.mxu0 0.0
    %1986 = vmatpush1.msra.mxu0 0.0
    %1987 = vmatprep.subr.mxu0 0.0
    %1988 = vmatpush1.msra.mxu0 0.0
    %1989 = vmatprep.subr.mxu0 0.0
    %1990 = vmatpush1.msra.mxu0 0.0
    %1991 = vmatprep.subr.mxu0 0.0
    %1992 = vmatpush1.msra.mxu0 0.0
    %1993 = vmatprep.subr.mxu0 0.0
    %1994 = vmatpush1.msra.mxu0 0.0
    %1995 = vmatprep.subr.mxu0 0.0
    %1996 = vmatpush1.msra.mxu0 0.0
    %1997 = vmatprep.subr.mxu0 0.0
    %1998 = vmatpush1.msra.mxu0 0.0
    %1999 = vmatprep.subr.mxu0 0.0
    %2000 = vmatpush1.msra.mxu0 0.0
    %2001 = vmatprep.subr.mxu0 0.0
    %2002 = vmatpush1.msra.mxu0 0.0
    %2003 = vmatprep.subr.mxu0 0.0
    %2004 = vmatpush1.msra.mxu0 0.0
    %2005 = vmatprep.subr.mxu0 0.0
    %2006 = vmatpush1.msra.mxu0 0.0
    %2007 = vmatprep.subr.mxu0 0.0
    %2008 = vmatpush1.msra.mxu0 0.0
    %2009 = vmatprep.subr.mxu0 0.0
    %2010 = vmatpush1.msra.mxu0 0.0
    %2011 = vmatprep.subr.mxu0 0.0
    %2012 = vmatpush1.msra.mxu0 0.0
    %2013 = vmatprep.subr.mxu0 0.0
    %2014 = vmatpush1.msra.mxu0 0.0
    %2015 = vmatprep.subr.mxu0 0.0
    %2016 = vmatpush1.msra.mxu0 0.0
    %2017 = vmatprep.subr.mxu0 0.0
    %2018 = vmatpush1.msra.mxu0 0.0
    %2019 = vmatprep.subr.mxu0 0.0
    %2020 = vmatpush1.msra.mxu0 0.0
    %2021 = vmatprep.subr.mxu0 0.0
    %2022 = vmatpush1.msra.mxu0 0.0
    %2023 = vmatprep.subr.mxu0 0.0
    %2024 = vmatpush1.msra.mxu0 0.0
    %2025 = vmatprep.mubr.f32.mxu0 0.0
    %2026 = vmatmul.mubr.f32.gmra.mrb[0].mxu0 %v1959
    %v2027 = vpop.f32.mrb[0].mxu0
    %v2028 = vadd.f32 %v699, %v2027
    %v2029 = vpop.f32.mrb[0].mxu0
    %2030 = vdwg.mxu0
    %v2032 = vrot.slane %v2028, 4
    %v2034 = vadd.f32 %v602, %v2032
    %v2035 = vxor.u32 %v2034, 2147483648
    %v2036 = vmul.f32 %v2035, 1.442695
    %v2037 = vpow.pop %v2036
    %v2038 = vadd.f32 %v2037, 1.0
    %v2039 = vrcp.pop %v2038
    %v2040 = vmul.f32 1.0, %v2039
    %2041 = vrot.lane.b32.xlu0 %v2032, 96
    %v2042 = vpop.permute.xlu0 %2041
    %v2044 = vmul.f32 %v2040, %v2042
    %2046 = vrot.lane.b32.xlu0 %v2044, 32
    %v2047 = vpop.permute.xlu0 %2046
    %v2049 = vadd.f32 %v602, %v2047
    %v2050 = vtanh.pop %v2049
    %v2051 = vsub.f32 1.0, %v2040
    %2053 = vrot.lane.b32.xlu0 %v2050, 112
    %v2054 = vpop.permute.xlu0 %2053
    %v2056 = vmul.f32 %v2051, %v2054
    %v2057 = vrot.slane %v1848, 6
    %v2059 = vmul.f32 %v2040, %v2057
    %v2060 = vadd.f32 %v2056, %v2059
    %v2062 = vrot.slane %v1954, 4
    %2063 = vrot.lane.b32.xlu0 %v2062, 112
    %v2064 = vpop.permute.xlu0 %2063
    %v2065 = vsel %vm523, %v2064, 0
    %2067 = vmatprep.subr.mxu0 0.0
    %2068 = vmatpush1.msra.mxu0 %v692
    %2069 = vmatprep.subr.mxu0 0.0
    %2070 = vmatpush1.msra.mxu0 %v693
    %2071 = vmatprep.subr.mxu0 0.0
    %2072 = vmatpush1.msra.mxu0 0.0
    %2073 = vmatprep.subr.mxu0 0.0
    %2074 = vmatpush1.msra.mxu0 0.0
    %2075 = vmatprep.subr.mxu0 0.0
    %2076 = vmatpush1.msra.mxu0 0.0
    %2077 = vmatprep.subr.mxu0 0.0
    %2078 = vmatpush1.msra.mxu0 0.0
    %2079 = vmatprep.subr.mxu0 0.0
    %2080 = vmatpush1.msra.mxu0 0.0
    %2081 = vmatprep.subr.mxu0 0.0
    %2082 = vmatpush1.msra.mxu0 0.0
    %2083 = vmatprep.subr.mxu0 0.0
    %2084 = vmatpush1.msra.mxu0 0.0
    %2085 = vmatprep.subr.mxu0 0.0
    %2086 = vmatpush1.msra.mxu0 0.0
    %2087 = vmatprep.subr.mxu0 0.0
    %2088 = vmatpush1.msra.mxu0 0.0
    %2089 = vmatprep.subr.mxu0 0.0
    %2090 = vmatpush1.msra.mxu0 0.0
    %2091 = vmatprep.subr.mxu0 0.0
    %2092 = vmatpush1.msra.mxu0 0.0
    %2093 = vmatprep.subr.mxu0 0.0
    %2094 = vmatpush1.msra.mxu0 0.0
    %2095 = vmatprep.subr.mxu0 0.0
    %2096 = vmatpush1.msra.mxu0 0.0
    %2097 = vmatprep.subr.mxu0 0.0
    %2098 = vmatpush1.msra.mxu0 0.0
    %2099 = vmatprep.subr.mxu0 0.0
    %2100 = vmatpush1.msra.mxu0 0.0
    %2101 = vmatprep.subr.mxu0 0.0
    %2102 = vmatpush1.msra.mxu0 0.0
    %2103 = vmatprep.subr.mxu0 0.0
    %2104 = vmatpush1.msra.mxu0 0.0
    %2105 = vmatprep.subr.mxu0 0.0
    %2106 = vmatpush1.msra.mxu0 0.0
    %2107 = vmatprep.subr.mxu0 0.0
    %2108 = vmatpush1.msra.mxu0 0.0
    %2109 = vmatprep.subr.mxu0 0.0
    %2110 = vmatpush1.msra.mxu0 0.0
    %2111 = vmatprep.subr.mxu0 0.0
    %2112 = vmatpush1.msra.mxu0 0.0
    %2113 = vmatprep.subr.mxu0 0.0
    %2114 = vmatpush1.msra.mxu0 0.0
    %2115 = vmatprep.subr.mxu0 0.0
    %2116 = vmatpush1.msra.mxu0 0.0
    %2117 = vmatprep.subr.mxu0 0.0
    %2118 = vmatpush1.msra.mxu0 0.0
    %2119 = vmatprep.subr.mxu0 0.0
    %2120 = vmatpush1.msra.mxu0 0.0
    %2121 = vmatprep.subr.mxu0 0.0
    %2122 = vmatpush1.msra.mxu0 0.0
    %2123 = vmatprep.subr.mxu0 0.0
    %2124 = vmatpush1.msra.mxu0 0.0
    %2125 = vmatprep.subr.mxu0 0.0
    %2126 = vmatpush1.msra.mxu0 0.0
    %2127 = vmatprep.subr.mxu0 0.0
    %2128 = vmatpush1.msra.mxu0 0.0
    %2129 = vmatprep.subr.mxu0 0.0
    %2130 = vmatpush1.msra.mxu0 0.0
    %2131 = vmatprep.mubr.f32.mxu0 0.0
    %2132 = vmatmul.mubr.f32.gmra.mrb[0].mxu0 %v2065
    %v2133 = vpop.f32.mrb[0].mxu0
    %v2134 = vadd.f32 %v804, %v2133
    %v2135 = vpop.f32.mrb[0].mxu0
    %2136 = vdwg.mxu0
    %v2138 = vrot.slane %v2134, 6
    %v2140 = vadd.f32 %v681, %v2138
    %v2141 = vxor.u32 %v2140, 2147483648
    %v2142 = vmul.f32 %v2141, 1.442695
    %v2143 = vpow.pop %v2142
    %v2144 = vadd.f32 %v2143, 1.0
    %v2145 = vrcp.pop %v2144
    %v2146 = vmul.f32 1.0, %v2145
    %2147 = vrot.lane.b32.xlu0 %v2138, 96
    %v2148 = vpop.permute.xlu0 %2147
    %v2150 = vmul.f32 %v2146, %v2148
    %2152 = vrot.lane.b32.xlu0 %v2150, 32
    %v2153 = vpop.permute.xlu0 %2152
    %v2155 = vadd.f32 %v681, %v2153
    %v2156 = vtanh.pop %v2155
    %v2157 = vsub.f32 1.0, %v2146
    %2159 = vrot.lane.b32.xlu0 %v2156, 112
    %v2160 = vpop.permute.xlu0 %2159
    %v2162 = vmul.f32 %v2157, %v2160
    %v2163 = vrot.slane %v1954, 2
    %v2165 = vmul.f32 %v2146, %v2163
    %v2166 = vadd.f32 %v2162, %v2165
    %v2168 = vrot.slane %v2060, 4
    %2169 = vrot.lane.b32.xlu0 %v2168, 112
    %v2170 = vpop.permute.xlu0 %2169
    %v2171 = vsel %vm523, %v2170, 0
    %2173 = vmatprep.subr.mxu0 0.0
    %2174 = vmatpush1.msra.mxu0 %v689
    %2175 = vmatprep.subr.mxu0 0.0
    %2176 = vmatpush1.msra.mxu0 %v690
    %2177 = vmatprep.subr.mxu0 0.0
    %2178 = vmatpush1.msra.mxu0 0.0
    %2179 = vmatprep.subr.mxu0 0.0
    %2180 = vmatpush1.msra.mxu0 0.0
    %2181 = vmatprep.subr.mxu0 0.0
    %2182 = vmatpush1.msra.mxu0 0.0
    %2183 = vmatprep.subr.mxu0 0.0
    %2184 = vmatpush1.msra.mxu0 0.0
    %2185 = vmatprep.subr.mxu0 0.0
    %2186 = vmatpush1.msra.mxu0 0.0
    %2187 = vmatprep.subr.mxu0 0.0
    %2188 = vmatpush1.msra.mxu0 0.0
    %2189 = vmatprep.subr.mxu0 0.0
    %2190 = vmatpush1.msra.mxu0 0.0
    %2191 = vmatprep.subr.mxu0 0.0
    %2192 = vmatpush1.msra.mxu0 0.0
    %2193 = vmatprep.subr.mxu0 0.0
    %2194 = vmatpush1.msra.mxu0 0.0
    %2195 = vmatprep.subr.mxu0 0.0
    %2196 = vmatpush1.msra.mxu0 0.0
    %2197 = vmatprep.subr.mxu0 0.0
    %2198 = vmatpush1.msra.mxu0 0.0
    %2199 = vmatprep.subr.mxu0 0.0
    %2200 = vmatpush1.msra.mxu0 0.0
    %2201 = vmatprep.subr.mxu0 0.0
    %2202 = vmatpush1.msra.mxu0 0.0
    %2203 = vmatprep.subr.mxu0 0.0
    %2204 = vmatpush1.msra.mxu0 0.0
    %2205 = vmatprep.subr.mxu0 0.0
    %2206 = vmatpush1.msra.mxu0 0.0
    %2207 = vmatprep.subr.mxu0 0.0
    %2208 = vmatpush1.msra.mxu0 0.0
    %2209 = vmatprep.subr.mxu0 0.0
    %2210 = vmatpush1.msra.mxu0 0.0
    %2211 = vmatprep.subr.mxu0 0.0
    %2212 = vmatpush1.msra.mxu0 0.0
    %2213 = vmatprep.subr.mxu0 0.0
    %2214 = vmatpush1.msra.mxu0 0.0
    %2215 = vmatprep.subr.mxu0 0.0
    %2216 = vmatpush1.msra.mxu0 0.0
    %2217 = vmatprep.subr.mxu0 0.0
    %2218 = vmatpush1.msra.mxu0 0.0
    %2219 = vmatprep.subr.mxu0 0.0
    %2220 = vmatpush1.msra.mxu0 0.0
    %2221 = vmatprep.subr.mxu0 0.0
    %2222 = vmatpush1.msra.mxu0 0.0
    %2223 = vmatprep.subr.mxu0 0.0
    %2224 = vmatpush1.msra.mxu0 0.0
    %2225 = vmatprep.subr.mxu0 0.0
    %2226 = vmatpush1.msra.mxu0 0.0
    %2227 = vmatprep.subr.mxu0 0.0
    %2228 = vmatpush1.msra.mxu0 0.0
    %2229 = vmatprep.subr.mxu0 0.0
    %2230 = vmatpush1.msra.mxu0 0.0
    %2231 = vmatprep.subr.mxu0 0.0
    %2232 = vmatpush1.msra.mxu0 0.0
    %2233 = vmatprep.subr.mxu0 0.0
    %2234 = vmatpush1.msra.mxu0 0.0
    %2235 = vmatprep.subr.mxu0 0.0
    %2236 = vmatpush1.msra.mxu0 0.0
    %2237 = vmatprep.mubr.f32.mxu0 0.0
    %2238 = vmatmul.mubr.f32.gmra.mrb[0].mxu0 %v2171
    %v2239 = vpop.f32.mrb[0].mxu0
    %v2240 = vadd.f32 %v699, %v2239
    %v2241 = vpop.f32.mrb[0].mxu0
    %2242 = vdwg.mxu0
    %v2244 = vrot.slane %v2240, 2
    %v2246 = vadd.f32 %v602, %v2244
    %v2247 = vxor.u32 %v2246, 2147483648
    %v2248 = vmul.f32 %v2247, 1.442695
    %v2249 = vpow.pop %v2248
    %v2250 = vadd.f32 %v2249, 1.0
    %v2251 = vrcp.pop %v2250
    %v2252 = vmul.f32 1.0, %v2251
    %2253 = vrot.lane.b32.xlu0 %v2244, 96
    %v2254 = vpop.permute.xlu0 %2253
    %v2256 = vmul.f32 %v2252, %v2254
    %2258 = vrot.lane.b32.xlu0 %v2256, 32
    %v2259 = vpop.permute.xlu0 %2258
    %v2261 = vadd.f32 %v602, %v2259
    %v2262 = vtanh.pop %v2261
    %v2263 = vsub.f32 1.0, %v2252
    %2265 = vrot.lane.b32.xlu0 %v2262, 112
    %v2266 = vpop.permute.xlu0 %2265
    %v2268 = vmul.f32 %v2263, %v2266
    %v2269 = vrot.slane %v2060, 6
    %v2271 = vmul.f32 %v2252, %v2269
    %v2272 = vadd.f32 %v2268, %v2271
    %v2274 = vrot.slane %v2166, 2
    %2275 = vrot.lane.b32.xlu0 %v2274, 112
    %v2276 = vpop.permute.xlu0 %2275
    %v2277 = vsel %vm523, %v2276, 0
    %2279 = vmatprep.subr.mxu0 0.0
    %2280 = vmatpush1.msra.mxu0 %v692
    %2281 = vmatprep.subr.mxu0 0.0
    %2282 = vmatpush1.msra.mxu0 %v693
    %2283 = vmatprep.subr.mxu0 0.0
    %2284 = vmatpush1.msra.mxu0 0.0
    %2285 = vmatprep.subr.mxu0 0.0
    %2286 = vmatpush1.msra.mxu0 0.0
    %2287 = vmatprep.subr.mxu0 0.0
    %2288 = vmatpush1.msra.mxu0 0.0
    %2289 = vmatprep.subr.mxu0 0.0
    %2290 = vmatpush1.msra.mxu0 0.0
    %2291 = vmatprep.subr.mxu0 0.0
    %2292 = vmatpush1.msra.mxu0 0.0
    %2293 = vmatprep.subr.mxu0 0.0
    %2294 = vmatpush1.msra.mxu0 0.0
    %2295 = vmatprep.subr.mxu0 0.0
    %2296 = vmatpush1.msra.mxu0 0.0
    %2297 = vmatprep.subr.mxu0 0.0
    %2298 = vmatpush1.msra.mxu0 0.0
    %2299 = vmatprep.subr.mxu0 0.0
    %2300 = vmatpush1.msra.mxu0 0.0
    %2301 = vmatprep.subr.mxu0 0.0
    %2302 = vmatpush1.msra.mxu0 0.0
    %2303 = vmatprep.subr.mxu0 0.0
    %2304 = vmatpush1.msra.mxu0 0.0
    %2305 = vmatprep.subr.mxu0 0.0
    %2306 = vmatpush1.msra.mxu0 0.0
    %2307 = vmatprep.subr.mxu0 0.0
    %2308 = vmatpush1.msra.mxu0 0.0
    %2309 = vmatprep.subr.mxu0 0.0
    %2310 = vmatpush1.msra.mxu0 0.0
    %2311 = vmatprep.subr.mxu0 0.0
    %2312 = vmatpush1.msra.mxu0 0.0
    %2313 = vmatprep.subr.mxu0 0.0
    %2314 = vmatpush1.msra.mxu0 0.0
    %2315 = vmatprep.subr.mxu0 0.0
    %2316 = vmatpush1.msra.mxu0 0.0
    %2317 = vmatprep.subr.mxu0 0.0
    %2318 = vmatpush1.msra.mxu0 0.0
    %2319 = vmatprep.subr.mxu0 0.0
    %2320 = vmatpush1.msra.mxu0 0.0
    %2321 = vmatprep.subr.mxu0 0.0
    %2322 = vmatpush1.msra.mxu0 0.0
    %2323 = vmatprep.subr.mxu0 0.0
    %2324 = vmatpush1.msra.mxu0 0.0
    %2325 = vmatprep.subr.mxu0 0.0
    %2326 = vmatpush1.msra.mxu0 0.0
    %2327 = vmatprep.subr.mxu0 0.0
    %2328 = vmatpush1.msra.mxu0 0.0
    %2329 = vmatprep.subr.mxu0 0.0
    %2330 = vmatpush1.msra.mxu0 0.0
    %2331 = vmatprep.subr.mxu0 0.0
    %2332 = vmatpush1.msra.mxu0 0.0
    %2333 = vmatprep.subr.mxu0 0.0
    %2334 = vmatpush1.msra.mxu0 0.0
    %2335 = vmatprep.subr.mxu0 0.0
    %2336 = vmatpush1.msra.mxu0 0.0
    %2337 = vmatprep.subr.mxu0 0.0
    %2338 = vmatpush1.msra.mxu0 0.0
    %2339 = vmatprep.subr.mxu0 0.0
    %2340 = vmatpush1.msra.mxu0 0.0
    %2341 = vmatprep.subr.mxu0 0.0
    %2342 = vmatpush1.msra.mxu0 0.0
    %2343 = vmatprep.mubr.f32.mxu0 0.0
    %2344 = vmatmul.mubr.f32.gmra.mrb[0].mxu0 %v2277
    %v2345 = vpop.f32.mrb[0].mxu0
    %v2346 = vadd.f32 %v804, %v2345
    %v2347 = vpop.f32.mrb[0].mxu0
    %2348 = vdwg.mxu0
    %v2349 = vadd.f32 %v681, %v2346
    %v2350 = vxor.u32 %v2349, 2147483648
    %v2351 = vmul.f32 %v2350, 1.442695
    %v2352 = vpow.pop %v2351
    %v2353 = vadd.f32 %v2352, 1.0
    %v2354 = vrcp.pop %v2353
    %v2355 = vmul.f32 1.0, %v2354
    %2357 = vrot.lane.b32.xlu0 %v2346, 96
    %v2358 = vpop.permute.xlu0 %2357
    %v2360 = vmul.f32 %v2355, %v2358
    %2362 = vrot.lane.b32.xlu0 %v2360, 32
    %v2363 = vpop.permute.xlu0 %2362
    %v2365 = vadd.f32 %v681, %v2363
    %v2366 = vtanh.pop %v2365
    %v2367 = vsub.f32 1.0, %v2355
    %2369 = vrot.lane.b32.xlu0 %v2366, 112
    %v2370 = vpop.permute.xlu0 %2369
    %v2372 = vmul.f32 %v2367, %v2370
    %v2374 = vmul.f32 %v2355, %v2274
    %v2375 = vadd.f32 %v2372, %v2374
    %v2377 = vrot.slane %v2272, 6
    %2382 = vrot.lane.b32.xlu0 %v2377, 112
    %v2383 = vpop.permute.xlu0 %2382
    %v2392 = vsel %vm523, %v906, %v2375
    %v2393 = vsel %vm523, %v1118, %v2274
    %v2394 = vsel %vm523, %v1330, %v2062
    %v2395 = vsel %vm523, %v1539, %v1850
    %v2396 = vsel %vm523, %v1746, %v1535
    %v2397 = vsel %vm523, %v1958, %v1434
    %v2398 = vsel %vm523, %v2170, %v1222
    %v2399 = vsel %vm523, %v2383, %v1010
    %v2400 = vld [vmem:[#allocation16] sm:$0xff]
    %v2401 = vld [vmem:[#allocation16 + $0x8] sm:$0xff]
    %v2402 = vld [vmem:[#allocation17] sm:$0xff]
    %v2403 = vld [vmem:[#allocation17 + $0x8] sm:$0xff]
    %2405 = vrot.lane.b32.xlu0 %v2375, 112
    %v2406 = vpop.permute.xlu0 %2405
    %v2407 = vsel %vm523, %v2406, 0
    %2409 = vmatprep.subr.mxu0 0.0
    %2410 = vmatpush1.msra.mxu0 %v2402
    %2411 = vmatprep.subr.mxu0 0.0
    %2412 = vmatpush1.msra.mxu0 %v2403
    %2413 = vmatprep.subr.mxu0 0.0
    %2414 = vmatpush1.msra.mxu0 0.0
    %2415 = vmatprep.subr.mxu0 0.0
    %2416 = vmatpush1.msra.mxu0 0.0
    %2417 = vmatprep.subr.mxu0 0.0
    %2418 = vmatpush1.msra.mxu0 0.0
    %2419 = vmatprep.subr.mxu0 0.0
    %2420 = vmatpush1.msra.mxu0 0.0
    %2421 = vmatprep.subr.mxu0 0.0
    %2422 = vmatpush1.msra.mxu0 0.0
    %2423 = vmatprep.subr.mxu0 0.0
    %2424 = vmatpush1.msra.mxu0 0.0
    %2425 = vmatprep.subr.mxu0 0.0
    %2426 = vmatpush1.msra.mxu0 0.0
    %2427 = vmatprep.subr.mxu0 0.0
    %2428 = vmatpush1.msra.mxu0 0.0
    %2429 = vmatprep.subr.mxu0 0.0
    %2430 = vmatpush1.msra.mxu0 0.0
    %2431 = vmatprep.subr.mxu0 0.0
    %2432 = vmatpush1.msra.mxu0 0.0
    %2433 = vmatprep.subr.mxu0 0.0
    %2434 = vmatpush1.msra.mxu0 0.0
    %2435 = vmatprep.subr.mxu0 0.0
    %2436 = vmatpush1.msra.mxu0 0.0
    %2437 = vmatprep.subr.mxu0 0.0
    %2438 = vmatpush1.msra.mxu0 0.0
    %2439 = vmatprep.subr.mxu0 0.0
    %2440 = vmatpush1.msra.mxu0 0.0
    %2441 = vmatprep.subr.mxu0 0.0
    %2442 = vmatpush1.msra.mxu0 0.0
    %2443 = vmatprep.subr.mxu0 0.0
    %2444 = vmatpush1.msra.mxu0 0.0
    %2445 = vmatprep.subr.mxu0 0.0
    %2446 = vmatpush1.msra.mxu0 0.0
    %2447 = vmatprep.subr.mxu0 0.0
    %2448 = vmatpush1.msra.mxu0 0.0
    %2449 = vmatprep.subr.mxu0 0.0
    %2450 = vmatpush1.msra.mxu0 0.0
    %2451 = vmatprep.subr.mxu0 0.0
    %2452 = vmatpush1.msra.mxu0 0.0
    %2453 = vmatprep.subr.mxu0 0.0
    %2454 = vmatpush1.msra.mxu0 0.0
    %2455 = vmatprep.subr.mxu0 0.0
    %2456 = vmatpush1.msra.mxu0 0.0
    %2457 = vmatprep.subr.mxu0 0.0
    %2458 = vmatpush1.msra.mxu0 0.0
    %2459 = vmatprep.subr.mxu0 0.0
    %2460 = vmatpush1.msra.mxu0 0.0
    %2461 = vmatprep.subr.mxu0 0.0
    %2462 = vmatpush1.msra.mxu0 0.0
    %2463 = vmatprep.subr.mxu0 0.0
    %2464 = vmatpush1.msra.mxu0 0.0
    %2465 = vmatprep.subr.mxu0 0.0
    %2466 = vmatpush1.msra.mxu0 0.0
    %2467 = vmatprep.subr.mxu0 0.0
    %2468 = vmatpush1.msra.mxu0 0.0
    %2469 = vmatprep.subr.mxu0 0.0
    %2470 = vmatpush1.msra.mxu0 0.0
    %2471 = vmatprep.subr.mxu0 0.0
    %2472 = vmatpush1.msra.mxu0 0.0
    %2473 = vmatprep.mubr.f32.mxu0 0.0
    %2474 = vmatmul.mubr.f32.gmra.mrb[0].mxu0 %v2407
    %v2475 = vpop.f32.mrb[0].mxu0
    %v2476 = vadd.f32 0.0, %v2475
    %v2477 = vpop.f32.mrb[0].mxu0
    %2478 = vdwg.mxu0
    %v2479 = vsel %vm523, %v2383, 0
    %2481 = vmatprep.subr.mxu0 0.0
    %2482 = vmatpush1.msra.mxu0 %v2400
    %2483 = vmatprep.subr.mxu0 0.0
    %2484 = vmatpush1.msra.mxu0 %v2401
    %2485 = vmatprep.subr.mxu0 0.0
    %2486 = vmatpush1.msra.mxu0 0.0
    %2487 = vmatprep.subr.mxu0 0.0
    %2488 = vmatpush1.msra.mxu0 0.0
    %2489 = vmatprep.subr.mxu0 0.0
    %2490 = vmatpush1.msra.mxu0 0.0
    %2491 = vmatprep.subr.mxu0 0.0
    %2492 = vmatpush1.msra.mxu0 0.0
    %2493 = vmatprep.subr.mxu0 0.0
    %2494 = vmatpush1.msra.mxu0 0.0
    %2495 = vmatprep.subr.mxu0 0.0
    %2496 = vmatpush1.msra.mxu0 0.0
    %2497 = vmatprep.subr.mxu0 0.0
    %2498 = vmatpush1.msra.mxu0 0.0
    %2499 = vmatprep.subr.mxu0 0.0
    %2500 = vmatpush1.msra.mxu0 0.0
    %2501 = vmatprep.subr.mxu0 0.0
    %2502 = vmatpush1.msra.mxu0 0.0
    %2503 = vmatprep.subr.mxu0 0.0
    %2504 = vmatpush1.msra.mxu0 0.0
    %2505 = vmatprep.subr.mxu0 0.0
    %2506 = vmatpush1.msra.mxu0 0.0
    %2507 = vmatprep.subr.mxu0 0.0
    %2508 = vmatpush1.msra.mxu0 0.0
    %2509 = vmatprep.subr.mxu0 0.0
    %2510 = vmatpush1.msra.mxu0 0.0
    %2511 = vmatprep.subr.mxu0 0.0
    %2512 = vmatpush1.msra.mxu0 0.0
    %2513 = vmatprep.subr.mxu0 0.0
    %2514 = vmatpush1.msra.mxu0 0.0
    %2515 = vmatprep.subr.mxu0 0.0
    %2516 = vmatpush1.msra.mxu0 0.0
    %2517 = vmatprep.subr.mxu0 0.0
    %2518 = vmatpush1.msra.mxu0 0.0
    %2519 = vmatprep.subr.mxu0 0.0
    %2520 = vmatpush1.msra.mxu0 0.0
    %2521 = vmatprep.subr.mxu0 0.0
    %2522 = vmatpush1.msra.mxu0 0.0
    %2523 = vmatprep.subr.mxu0 0.0
    %2524 = vmatpush1.msra.mxu0 0.0
    %2525 = vmatprep.subr.mxu0 0.0
    %2526 = vmatpush1.msra.mxu0 0.0
    %2527 = vmatprep.subr.mxu0 0.0
    %2528 = vmatpush1.msra.mxu0 0.0
    %2529 = vmatprep.subr.mxu0 0.0
    %2530 = vmatpush1.msra.mxu0 0.0
    %2531 = vmatprep.subr.mxu0 0.0
    %2532 = vmatpush1.msra.mxu0 0.0
    %2533 = vmatprep.subr.mxu0 0.0
    %2534 = vmatpush1.msra.mxu0 0.0
    %2535 = vmatprep.subr.mxu0 0.0
    %2536 = vmatpush1.msra.mxu0 0.0
    %2537 = vmatprep.subr.mxu0 0.0
    %2538 = vmatpush1.msra.mxu0 0.0
    %2539 = vmatprep.subr.mxu0 0.0
    %2540 = vmatpush1.msra.mxu0 0.0
    %2541 = vmatprep.subr.mxu0 0.0
    %2542 = vmatpush1.msra.mxu0 0.0
    %2543 = vmatprep.subr.mxu0 0.0
    %2544 = vmatpush1.msra.mxu0 0.0
    %2545 = vmatprep.mubr.f32.mxu0 0.0
    %2546 = vmatmul.mubr.f32.gmra.mrb[0].mxu0 %v2479
    %v2547 = vpop.f32.mrb[0].mxu0
    %v2548 = vadd.f32 %v2476, %v2547
    %v2549 = vpop.f32.mrb[0].mxu0
    %2550 = vdwg.mxu0
    %v2551 = vld [vmem:[#allocation19] sm:$0x1]
    %v2553 = vlaneseq
    %v2554 = vshrl.u32 %v2553, 7
    %v2555 = vsub.s32 0, %v2554
    %v2556 = vrot.slane %v2551, %v2555
    %v2558 = vadd.f32 %v2548, %v2556
    %v2559 = vtanh.pop %v2558
    %v2560 = vld [vmem:[%s1] sm:$0x3f]
    %v2561 = vlaneseq
    %v2562 = vshrl.u32 %v2561, 7
    %v2563 = vsub.s32 0, %v2562
    %v2564 = vrot.slane %v2560, %v2563
    %2566 = vbcast.lane.b32.xlu0 %v2564, 256
    %v2567 = vpop.permute.xlu0 %2566
    %v2568 = vlaneseq
    %v2569 = vshrl.u32 %v2568, 7
    %v2570 = vsub.s32 1, %v2569
    %v2571 = vrot.slane %v2560, %v2570
    %2573 = vbcast.lane.b32.xlu0 %v2571, 256
    %v2574 = vpop.permute.xlu0 %2573
    %v2575 = vlaneseq
    %v2576 = vshrl.u32 %v2575, 7
    %v2577 = vsub.s32 2, %v2576
    %v2578 = vrot.slane %v2560, %v2577
    %2580 = vbcast.lane.b32.xlu0 %v2578, 256
    %v2581 = vpop.permute.xlu0 %2580
    %v2582 = vlaneseq
    %v2583 = vshrl.u32 %v2582, 7
    %v2584 = vsub.s32 3, %v2583
    %v2585 = vrot.slane %v2560, %v2584
    %2587 = vbcast.lane.b32.xlu0 %v2585, 256
    %v2588 = vpop.permute.xlu0 %2587
    %v2589 = vlaneseq
    %v2590 = vshrl.u32 %v2589, 7
    %v2591 = vsub.s32 4, %v2590
    %v2592 = vrot.slane %v2560, %v2591
    %2594 = vbcast.lane.b32.xlu0 %v2592, 256
    %v2595 = vpop.permute.xlu0 %2594
    %vm2596 = vcmp.eq.s32.totalorder %v2567, %v304
    %vm2597 = vcmp.eq.s32.totalorder %v2574, %v304
    %vm2598 = vcmp.eq.s32.totalorder %v2581, %v304
    %vm2599 = vcmp.eq.s32.totalorder %v2588, %v304
    %vm2600 = vcmp.eq.s32.totalorder %v2595, %v304
    %v2601 = vsel %vm2596, 1, 0
    %v2602 = vsel %vm2597, 1, 0
    %v2603 = vsel %vm2598, 1, 0
    %v2604 = vsel %vm2599, 1, 0
    %v2605 = vsel %vm2600, 1, 0
    %v2606 = vcvt.s32.f32 %v2601
    %v2607 = vcvt.s32.f32 %v2602
    %v2608 = vcvt.s32.f32 %v2603
    %v2609 = vcvt.s32.f32 %v2604
    %v2610 = vcvt.s32.f32 %v2605
    %v2611 = vld [vmem:[%s3] sm:$0xff]
    %v2612 = vld [vmem:[%s3 + $0x8] sm:$0xff]
    %v2613 = vld [vmem:[%s3 + $0x10] sm:$0xff]
    %v2619 = vcombine.low %v2606, %v2607
    %v2620 = vcombine.low %v2608, %v2609
    %v2622 = vunpack.c.l.s4 1983009808
    %v2623 = vunpack.c.0.s8 %v2622
    %v2624 = vlaneseq
    %v2625 = vshrl.u32 %v2624, 7
    %v2626 = vsub.s32 %v2623, %v2625
    %v2627 = vrot.slane %v2619, %v2626
    %v2629 = vunpack.c.l.s4 1983009808
    %v2630 = vunpack.c.0.s8 %v2629
    %v2631 = vlaneseq
    %v2632 = vshrl.u32 %v2631, 7
    %v2633 = vsub.s32 %v2630, %v2632
    %v2634 = vrot.slane %v2620, %v2633
    %v2635 = vcombine.low %v2627, %v2634
    %v2637 = vunpack.c.l.s4 1983009808
    %v2638 = vunpack.c.0.s8 %v2637
    %v2639 = vlaneseq
    %v2640 = vshrl.u32 %v2639, 7
    %v2641 = vsub.s32 %v2638, %v2640
    %v2642 = vrot.slane %v2610, %v2641
    %vm2643 = vcmask 195584
    %v2644 = vsel %vm2643, %v2635, 0
    %v2646 = vsel %vm2643, %v2642, 0
    %2648 = vmatprep.subr.mxu0 0.0
    %2649 = vmatpush1.msra.mxu0 %v2611
    %2650 = vmatprep.subr.mxu0 0.0
    %2651 = vmatpush1.msra.mxu0 %v2612
    %2652 = vmatprep.subr.mxu0 0.0
    %2653 = vmatpush1.msra.mxu0 %v2613
    %2654 = vmatprep.subr.mxu0 0.0
    %2655 = vmatpush1.msra.mxu0 0.0
    %2656 = vmatprep.subr.mxu0 0.0
    %2657 = vmatpush1.msra.mxu0 0.0
    %2658 = vmatprep.subr.mxu0 0.0
    %2659 = vmatpush1.msra.mxu0 0.0
    %2660 = vmatprep.subr.mxu0 0.0
    %2661 = vmatpush1.msra.mxu0 0.0
    %2662 = vmatprep.subr.mxu0 0.0
    %2663 = vmatpush1.msra.mxu0 0.0
    %2664 = vmatprep.subr.mxu0 0.0
    %2665 = vmatpush1.msra.mxu0 0.0
    %2666 = vmatprep.subr.mxu0 0.0
    %2667 = vmatpush1.msra.mxu0 0.0
    %2668 = vmatprep.subr.mxu0 0.0
    %2669 = vmatpush1.msra.mxu0 0.0
    %2670 = vmatprep.subr.mxu0 0.0
    %2671 = vmatpush1.msra.mxu0 0.0
    %2672 = vmatprep.subr.mxu0 0.0
    %2673 = vmatpush1.msra.mxu0 0.0
    %2674 = vmatprep.subr.mxu0 0.0
    %2675 = vmatpush1.msra.mxu0 0.0
    %2676 = vmatprep.subr.mxu0 0.0
    %2677 = vmatpush1.msra.mxu0 0.0
    %2678 = vmatprep.subr.mxu0 0.0
    %2679 = vmatpush1.msra.mxu0 0.0
    %2680 = vmatprep.subr.mxu0 0.0
    %2681 = vmatpush1.msra.mxu0 0.0
    %2682 = vmatprep.subr.mxu0 0.0
    %2683 = vmatpush1.msra.mxu0 0.0
    %2684 = vmatprep.subr.mxu0 0.0
    %2685 = vmatpush1.msra.mxu0 0.0
    %2686 = vmatprep.subr.mxu0 0.0
    %2687 = vmatpush1.msra.mxu0 0.0
    %2688 = vmatprep.subr.mxu0 0.0
    %2689 = vmatpush1.msra.mxu0 0.0
    %2690 = vmatprep.subr.mxu0 0.0
    %2691 = vmatpush1.msra.mxu0 0.0
    %2692 = vmatprep.subr.mxu0 0.0
    %2693 = vmatpush1.msra.mxu0 0.0
    %2694 = vmatprep.subr.mxu0 0.0
    %2695 = vmatpush1.msra.mxu0 0.0
    %2696 = vmatprep.subr.mxu0 0.0
    %2697 = vmatpush1.msra.mxu0 0.0
    %2698 = vmatprep.subr.mxu0 0.0
    %2699 = vmatpush1.msra.mxu0 0.0
    %2700 = vmatprep.subr.mxu0 0.0
    %2701 = vmatpush1.msra.mxu0 0.0
    %2702 = vmatprep.subr.mxu0 0.0
    %2703 = vmatpush1.msra.mxu0 0.0
    %2704 = vmatprep.subr.mxu0 0.0
    %2705 = vmatpush1.msra.mxu0 0.0
    %2706 = vmatprep.subr.mxu0 0.0
    %2707 = vmatpush1.msra.mxu0 0.0
    %2708 = vmatprep.subr.mxu0 0.0
    %2709 = vmatpush1.msra.mxu0 0.0
    %2710 = vmatprep.subr.mxu0 0.0
    %2711 = vmatpush1.msra.mxu0 0.0
    %2712 = vmatprep.mubr.f32.mxu0 0.0
    %2713 = vmatmul.mubr.f32.gmra.mrb[0].mxu0 %v2644
    %v2714 = vpop.f32.mrb[0].mxu0
    %v2715 = vadd.f32 0.0, %v2714
    %v2716 = vpop.f32.mrb[0].mxu0
    %2717 = vmatprep.mubr.f32.mxu0 0.0
    %2718 = vmatmul.mubr.f32.gmra.mrb[0].mxu0 %v2646
    %v2719 = vpop.f32.mrb[0].mxu0
    %v2720 = vadd.f32 0.0, %v2719
    %v2721 = vpop.f32.mrb[0].mxu0
    %2722 = vdwg.mxu0
    %v2723 = vld [vmem:[%s19] sm:$0xff]
    %v2724 = vld [vmem:[%s19 + $0x8] sm:$0xff]
    %v2726 = vsel %vm523, %v2715, 0
    %v2729 = vsel %vm523, %v2720, 0
    %2731 = vmatprep.subr.mxu0 0.0
    %2732 = vmatpush1.msra.mxu0 %v2723
    %2733 = vmatprep.subr.mxu0 0.0
    %2734 = vmatpush1.msra.mxu0 %v2724
    %2735 = vmatprep.subr.mxu0 0.0
    %2736 = vmatpush1.msra.mxu0 0.0
    %2737 = vmatprep.subr.mxu0 0.0
    %2738 = vmatpush1.msra.mxu0 0.0
    %2739 = vmatprep.subr.mxu0 0.0
    %2740 = vmatpush1.msra.mxu0 0.0
    %2741 = vmatprep.subr.mxu0 0.0
    %2742 = vmatpush1.msra.mxu0 0.0
    %2743 = vmatprep.subr.mxu0 0.0
    %2744 = vmatpush1.msra.mxu0 0.0
    %2745 = vmatprep.subr.mxu0 0.0
    %2746 = vmatpush1.msra.mxu0 0.0
    %2747 = vmatprep.subr.mxu0 0.0
    %2748 = vmatpush1.msra.mxu0 0.0
    %2749 = vmatprep.subr.mxu0 0.0
    %2750 = vmatpush1.msra.mxu0 0.0
    %2751 = vmatprep.subr.mxu0 0.0
    %2752 = vmatpush1.msra.mxu0 0.0
    %2753 = vmatprep.subr.mxu0 0.0
    %2754 = vmatpush1.msra.mxu0 0.0
    %2755 = vmatprep.subr.mxu0 0.0
    %2756 = vmatpush1.msra.mxu0 0.0
    %2757 = vmatprep.subr.mxu0 0.0
    %2758 = vmatpush1.msra.mxu0 0.0
    %2759 = vmatprep.subr.mxu0 0.0
    %2760 = vmatpush1.msra.mxu0 0.0
    %2761 = vmatprep.subr.mxu0 0.0
    %2762 = vmatpush1.msra.mxu0 0.0
    %2763 = vmatprep.subr.mxu0 0.0
    %2764 = vmatpush1.msra.mxu0 0.0
    %2765 = vmatprep.subr.mxu0 0.0
    %2766 = vmatpush1.msra.mxu0 0.0
    %2767 = vmatprep.subr.mxu0 0.0
    %2768 = vmatpush1.msra.mxu0 0.0
    %2769 = vmatprep.subr.mxu0 0.0
    %2770 = vmatpush1.msra.mxu0 0.0
    %2771 = vmatprep.subr.mxu0 0.0
    %2772 = vmatpush1.msra.mxu0 0.0
    %2773 = vmatprep.subr.mxu0 0.0
    %2774 = vmatpush1.msra.mxu0 0.0
    %2775 = vmatprep.subr.mxu0 0.0
    %2776 = vmatpush1.msra.mxu0 0.0
    %2777 = vmatprep.subr.mxu0 0.0
    %2778 = vmatpush1.msra.mxu0 0.0
    %2779 = vmatprep.subr.mxu0 0.0
    %2780 = vmatpush1.msra.mxu0 0.0
    %2781 = vmatprep.subr.mxu0 0.0
    %2782 = vmatpush1.msra.mxu0 0.0
    %2783 = vmatprep.subr.mxu0 0.0
    %2784 = vmatpush1.msra.mxu0 0.0
    %2785 = vmatprep.subr.mxu0 0.0
    %2786 = vmatpush1.msra.mxu0 0.0
    %2787 = vmatprep.subr.mxu0 0.0
    %2788 = vmatpush1.msra.mxu0 0.0
    %2789 = vmatprep.subr.mxu0 0.0
    %2790 = vmatpush1.msra.mxu0 0.0
    %2791 = vmatprep.subr.mxu0 0.0
    %2792 = vmatpush1.msra.mxu0 0.0
    %2793 = vmatprep.subr.mxu0 0.0
    %2794 = vmatpush1.msra.mxu0 0.0
    %2795 = vmatprep.mubr.f32.mxu0 0.0
    %2796 = vmatmul.mubr.f32.gmra.mrb[0].mxu0 %v2726
    %v2797 = vpop.f32.mrb[0].mxu0
    %v2798 = vadd.f32 0.0, %v2797
    %v2799 = vpop.f32.mrb[0].mxu0
    %2800 = vmatprep.mubr.f32.mxu0 0.0
    %2801 = vmatmul.mubr.f32.gmra.mrb[0].mxu0 %v2729
    %v2802 = vpop.f32.mrb[0].mxu0
    %v2803 = vadd.f32 0.0, %v2802
    %v2804 = vpop.f32.mrb[0].mxu0
    %2805 = vdwg.mxu0
    %v2806 = vld [vmem:[%s16] sm:$0xff]
    %v2807 = vld [vmem:[%s16 + $0x8] sm:$0xff]
    %v2808 = vld [vmem:[%s16 + $0x10] sm:$0xff]
    %v2809 = vld [vmem:[%s16 + $0x18] sm:$0xff]
    %v2818 = vcombine.low %v2392, %v2393
    %v2819 = vcombine.low %v2394, %v2395
    %v2821 = vunpack.c.l.s4 1983009808
    %v2822 = vunpack.c.0.s8 %v2821
    %v2823 = vlaneseq
    %v2824 = vshrl.u32 %v2823, 7
    %v2825 = vsub.s32 %v2822, %v2824
    %v2826 = vrot.slane %v2818, %v2825
    %v2828 = vunpack.c.l.s4 1983009808
    %v2829 = vunpack.c.0.s8 %v2828
    %v2830 = vlaneseq
    %v2831 = vshrl.u32 %v2830, 7
    %v2832 = vsub.s32 %v2829, %v2831
    %v2833 = vrot.slane %v2819, %v2832
    %v2834 = vcombine.low %v2826, %v2833
    %v2835 = vcombine.low %v2396, %v2397
    %v2836 = vcombine.low %v2398, %v2399
    %v2838 = vunpack.c.l.s4 1983009808
    %v2839 = vunpack.c.0.s8 %v2838
    %v2840 = vlaneseq
    %v2841 = vshrl.u32 %v2840, 7
    %v2842 = vsub.s32 %v2839, %v2841
    %v2843 = vrot.slane %v2835, %v2842
    %v2845 = vunpack.c.l.s4 1983009808
    %v2846 = vunpack.c.0.s8 %v2845
    %v2847 = vlaneseq
    %v2848 = vshrl.u32 %v2847, 7
    %v2849 = vsub.s32 %v2846, %v2848
    %v2850 = vrot.slane %v2836, %v2849
    %v2851 = vcombine.low %v2843, %v2850
    %vm2852 = vcmask 261120
    %v2853 = vsel %vm2852, %v2834, 0
    %v2855 = vsel %vm2852, %v2851, 0
    %2857 = vmatprep.subr.mxu0 0.0
    %2858 = vmatpush1.msra.mxu0 %v2806
    %2859 = vmatprep.subr.mxu0 0.0
    %2860 = vmatpush1.msra.mxu0 %v2807
    %2861 = vmatprep.subr.mxu0 0.0
    %2862 = vmatpush1.msra.mxu0 %v2808
    %2863 = vmatprep.subr.mxu0 0.0
    %2864 = vmatpush1.msra.mxu0 %v2809
    %2865 = vmatprep.subr.mxu0 0.0
    %2866 = vmatpush1.msra.mxu0 0.0
    %2867 = vmatprep.subr.mxu0 0.0
    %2868 = vmatpush1.msra.mxu0 0.0
    %2869 = vmatprep.subr.mxu0 0.0
    %2870 = vmatpush1.msra.mxu0 0.0
    %2871 = vmatprep.subr.mxu0 0.0
    %2872 = vmatpush1.msra.mxu0 0.0
    %2873 = vmatprep.subr.mxu0 0.0
    %2874 = vmatpush1.msra.mxu0 0.0
    %2875 = vmatprep.subr.mxu0 0.0
    %2876 = vmatpush1.msra.mxu0 0.0
    %2877 = vmatprep.subr.mxu0 0.0
    %2878 = vmatpush1.msra.mxu0 0.0
    %2879 = vmatprep.subr.mxu0 0.0
    %2880 = vmatpush1.msra.mxu0 0.0
    %2881 = vmatprep.subr.mxu0 0.0
    %2882 = vmatpush1.msra.mxu0 0.0
    %2883 = vmatprep.subr.mxu0 0.0
    %2884 = vmatpush1.msra.mxu0 0.0
    %2885 = vmatprep.subr.mxu0 0.0
    %2886 = vmatpush1.msra.mxu0 0.0
    %2887 = vmatprep.subr.mxu0 0.0
    %2888 = vmatpush1.msra.mxu0 0.0
    %2889 = vmatprep.subr.mxu0 0.0
    %2890 = vmatpush1.msra.mxu0 0.0
    %2891 = vmatprep.subr.mxu0 0.0
    %2892 = vmatpush1.msra.mxu0 0.0
    %2893 = vmatprep.subr.mxu0 0.0
    %2894 = vmatpush1.msra.mxu0 0.0
    %2895 = vmatprep.subr.mxu0 0.0
    %2896 = vmatpush1.msra.mxu0 0.0
    %2897 = vmatprep.subr.mxu0 0.0
    %2898 = vmatpush1.msra.mxu0 0.0
    %2899 = vmatprep.subr.mxu0 0.0
    %2900 = vmatpush1.msra.mxu0 0.0
    %2901 = vmatprep.subr.mxu0 0.0
    %2902 = vmatpush1.msra.mxu0 0.0
    %2903 = vmatprep.subr.mxu0 0.0
    %2904 = vmatpush1.msra.mxu0 0.0
    %2905 = vmatprep.subr.mxu0 0.0
    %2906 = vmatpush1.msra.mxu0 0.0
    %2907 = vmatprep.subr.mxu0 0.0
    %2908 = vmatpush1.msra.mxu0 0.0
    %2909 = vmatprep.subr.mxu0 0.0
    %2910 = vmatpush1.msra.mxu0 0.0
    %2911 = vmatprep.subr.mxu0 0.0
    %2912 = vmatpush1.msra.mxu0 0.0
    %2913 = vmatprep.subr.mxu0 0.0
    %2914 = vmatpush1.msra.mxu0 0.0
    %2915 = vmatprep.subr.mxu0 0.0
    %2916 = vmatpush1.msra.mxu0 0.0
    %2917 = vmatprep.subr.mxu0 0.0
    %2918 = vmatpush1.msra.mxu0 0.0
    %2919 = vmatprep.subr.mxu0 0.0
    %2920 = vmatpush1.msra.mxu0 0.0
    %2921 = vmatprep.mubr.f32.mxu0 0.0
    %2922 = vmatmul.mubr.f32.gmra.mrb[0].mxu0 %v2853
    %v2923 = vpop.f32.mrb[0].mxu0
    %v2924 = vadd.f32 0.0, %v2923
    %v2925 = vpop.f32.mrb[0].mxu0
    %2926 = vmatprep.mubr.f32.mxu0 0.0
    %2927 = vmatmul.mubr.f32.gmra.mrb[0].mxu0 %v2855
    %v2928 = vpop.f32.mrb[0].mxu0
    %v2929 = vadd.f32 0.0, %v2928
    %v2930 = vpop.f32.mrb[0].mxu0
    %2931 = vdwg.mxu0
    %v2934 = vcombine.high %v2924, %v2924
    %v2936 = vunpack.c.l.s4 1983009808
    %v2937 = vunpack.c.0.s8 %v2936
    %v2938 = vlaneseq
    %v2939 = vshrl.u32 %v2938, 7
    %v2940 = vsub.s32 %v2937, %v2939
    %v2941 = vrot.slane %v2924, %v2940
    %v2943 = vunpack.c.l.s4 1983009808
    %v2944 = vunpack.c.0.s8 %v2943
    %v2945 = vlaneseq
    %v2946 = vshrl.u32 %v2945, 7
    %v2947 = vsub.s32 %v2944, %v2946
    %v2948 = vrot.slane %v2934, %v2947
    %v2949 = vcombine.high %v2941, %v2941
    %v2950 = vcombine.high %v2948, %v2948
    %v2951 = vcombine.high %v2929, %v2929
    %v2953 = vunpack.c.l.s4 1983009808
    %v2954 = vunpack.c.0.s8 %v2953
    %v2955 = vlaneseq
    %v2956 = vshrl.u32 %v2955, 7
    %v2957 = vsub.s32 %v2954, %v2956
    %v2958 = vrot.slane %v2929, %v2957
    %v2960 = vunpack.c.l.s4 1983009808
    %v2961 = vunpack.c.0.s8 %v2960
    %v2962 = vlaneseq
    %v2963 = vshrl.u32 %v2962, 7
    %v2964 = vsub.s32 %v2961, %v2963
    %v2965 = vrot.slane %v2951, %v2964
    %v2966 = vcombine.high %v2958, %v2958
    %v2967 = vcombine.high %v2965, %v2965
    %v2976 = vld [vmem:[#allocation20] sm:$0x1]
    %v2978 = vlaneseq
    %v2979 = vshrl.u32 %v2978, 7
    %v2980 = vsub.s32 0, %v2979
    %v2981 = vrot.slane %v2976, %v2980
    %v2983 = vadd.f32 %v2941, %v2981
    %v2984 = vadd.f32 %v2949, %v2981
    %v2985 = vadd.f32 %v2948, %v2981
    %v2986 = vadd.f32 %v2950, %v2981
    %v2987 = vadd.f32 %v2958, %v2981
    %v2988 = vadd.f32 %v2966, %v2981
    %v2989 = vadd.f32 %v2965, %v2981
    %v2990 = vadd.f32 %v2967, %v2981
    %vm2991 = vcmp.ne.s32.totalorder %v302, 0
    %v2992 = vsel %vm2991, 1, 0
    %v2993 = vcvt.s32.f32 %v2992
    %v2994 = vld [vmem:[%s15] sm:$0xff]
    %v2995 = vld [vmem:[%s15 + $0x8] sm:$0xff]
    %v2996 = vld [vmem:[%s15 + $0x10] sm:$0xff]
    %v2997 = vld [vmem:[%s15 + $0x18] sm:$0xff]
    %v2998 = vld [vmem:[%s18] sm:$0x1]
    %v2999 = vld [vmem:[%s20] sm:$0xff]
    %v3000 = vld [vmem:[%s20 + $0x8] sm:$0xff]
    %v3001 = vld [vmem:[%s20 + $0x10] sm:$0xff]
    %v3002 = vld [vmem:[%s20 + $0x18] sm:$0xff]
    %v3003 = vld [vmem:[#allocation22] sm:$0xff]
    %v3004 = vld [vmem:[#allocation22 + $0x8] sm:$0xff]
    %v3005 = vld [vmem:[#allocation22 + $0x10] sm:$0xff]
    %v3006 = vld [vmem:[#allocation22 + $0x18] sm:$0xff]
    %v3007 = vld [vmem:[#allocation23] sm:$0x1]
    %v3008 = vld [vmem:[#allocation25] sm:$0x1]
    %v3010 = vsel %vm2852, %v2559, 0
    %3012 = vmatprep.subr.mxu0 0.0
    %3013 = vmatpush1.msra.mxu0 %v2994
    %3014 = vmatprep.subr.mxu0 0.0
    %3015 = vmatpush1.msra.mxu0 %v2995
    %3016 = vmatprep.subr.mxu0 0.0
    %3017 = vmatpush1.msra.mxu0 %v2996
    %3018 = vmatprep.subr.mxu0 0.0
    %3019 = vmatpush1.msra.mxu0 %v2997
    %3020 = vmatprep.subr.mxu0 0.0
    %3021 = vmatpush1.msra.mxu0 0.0
    %3022 = vmatprep.subr.mxu0 0.0
    %3023 = vmatpush1.msra.mxu0 0.0
    %3024 = vmatprep.subr.mxu0 0.0
    %3025 = vmatpush1.msra.mxu0 0.0
    %3026 = vmatprep.subr.mxu0 0.0
    %3027 = vmatpush1.msra.mxu0 0.0
    %3028 = vmatprep.subr.mxu0 0.0
    %3029 = vmatpush1.msra.mxu0 0.0
    %3030 = vmatprep.subr.mxu0 0.0
    %3031 = vmatpush1.msra.mxu0 0.0
    %3032 = vmatprep.subr.mxu0 0.0
    %3033 = vmatpush1.msra.mxu0 0.0
    %3034 = vmatprep.subr.mxu0 0.0
    %3035 = vmatpush1.msra.mxu0 0.0
    %3036 = vmatprep.subr.mxu0 0.0
    %3037 = vmatpush1.msra.mxu0 0.0
    %3038 = vmatprep.subr.mxu0 0.0
    %3039 = vmatpush1.msra.mxu0 0.0
    %3040 = vmatprep.subr.mxu0 0.0
    %3041 = vmatpush1.msra.mxu0 0.0
    %3042 = vmatprep.subr.mxu0 0.0
    %3043 = vmatpush1.msra.mxu0 0.0
    %3044 = vmatprep.subr.mxu0 0.0
    %3045 = vmatpush1.msra.mxu0 0.0
    %3046 = vmatprep.subr.mxu0 0.0
    %3047 = vmatpush1.msra.mxu0 0.0
    %3048 = vmatprep.subr.mxu0 0.0
    %3049 = vmatpush1.msra.mxu0 0.0
    %3050 = vmatprep.subr.mxu0 0.0
    %3051 = vmatpush1.msra.mxu0 0.0
    %3052 = vmatprep.subr.mxu0 0.0
    %3053 = vmatpush1.msra.mxu0 0.0
    %3054 = vmatprep.subr.mxu0 0.0
    %3055 = vmatpush1.msra.mxu0 0.0
    %3056 = vmatprep.subr.mxu0 0.0
    %3057 = vmatpush1.msra.mxu0 0.0
    %3058 = vmatprep.subr.mxu0 0.0
    %3059 = vmatpush1.msra.mxu0 0.0
    %3060 = vmatprep.subr.mxu0 0.0
    %3061 = vmatpush1.msra.mxu0 0.0
    %3062 = vmatprep.subr.mxu0 0.0
    %3063 = vmatpush1.msra.mxu0 0.0
    %3064 = vmatprep.subr.mxu0 0.0
    %3065 = vmatpush1.msra.mxu0 0.0
    %3066 = vmatprep.subr.mxu0 0.0
    %3067 = vmatpush1.msra.mxu0 0.0
    %3068 = vmatprep.subr.mxu0 0.0
    %3069 = vmatpush1.msra.mxu0 0.0
    %3070 = vmatprep.subr.mxu0 0.0
    %3071 = vmatpush1.msra.mxu0 0.0
    %3072 = vmatprep.subr.mxu0 0.0
    %3073 = vmatpush1.msra.mxu0 0.0
    %3074 = vmatprep.subr.mxu0 0.0
    %3075 = vmatpush1.msra.mxu0 0.0
    %3076 = vmatprep.mubr.f32.mxu0 0.0
    %3077 = vmatmul.mubr.f32.gmra.mrb[0].mxu0 %v3010
    %v3078 = vpop.f32.mrb[0].mxu0
    %v3079 = vadd.f32 0.0, %v3078
    %v3080 = vpop.f32.mrb[0].mxu0
    %3081 = vdwg.mxu0
    %v3082 = vadd.f32 %v2983, %v3079
    %v3083 = vadd.f32 %v2984, %v3079
    %v3084 = vadd.f32 %v2985, %v3079
    %v3085 = vadd.f32 %v2986, %v3079
    %v3086 = vadd.f32 %v2987, %v3079
    %v3087 = vadd.f32 %v2988, %v3079
    %v3088 = vadd.f32 %v2989, %v3079
    %v3089 = vadd.f32 %v2990, %v3079
    %v3090 = vtanh.pop %v3082
    %v3091 = vtanh.pop %v3083
    %v3092 = vtanh.pop %v3084
    %v3093 = vtanh.pop %v3085
    %v3094 = vtanh.pop %v3086
    %v3095 = vtanh.pop %v3087
    %v3096 = vtanh.pop %v3088
    %v3097 = vtanh.pop %v3089
    %v3099 = vlaneseq
    %v3100 = vshrl.u32 %v3099, 7
    %v3101 = vsub.s32 0, %v3100
    %v3102 = vrot.slane %v2998, %v3101
    %v3104 = vmul.f32 %v3090, %v3102
    %v3105 = vmul.f32 %v3091, %v3102
    %v3106 = vmul.f32 %v3092, %v3102
    %v3107 = vmul.f32 %v3093, %v3102
    %v3108 = vmul.f32 %v3094, %v3102
    %v3109 = vmul.f32 %v3095, %v3102
    %v3110 = vmul.f32 %v3096, %v3102
    %v3111 = vmul.f32 %v3097, %v3102
    %vm3112 = vcmask 254976
    %v3113 = vsel %vm3112, %v3104, 0.0
    %3114 = vadd.xlane.f32.xlu0 %v3113
    %v3115 = vpop.xlane.xlu0 %3114
    %v3116 = vsel %vm3112, %v3105, 0.0
    %3117 = vadd.xlane.f32.xlu0 %v3116
    %v3118 = vpop.xlane.xlu0 %3117
    %v3119 = vsel %vm3112, %v3106, 0.0
    %3120 = vadd.xlane.f32.xlu0 %v3119
    %v3121 = vpop.xlane.xlu0 %3120
    %v3122 = vsel %vm3112, %v3107, 0.0
    %3123 = vadd.xlane.f32.xlu0 %v3122
    %v3124 = vpop.xlane.xlu0 %3123
    %v3125 = vsel %vm3112, %v3108, 0.0
    %3126 = vadd.xlane.f32.xlu0 %v3125
    %v3127 = vpop.xlane.xlu0 %3126
    %v3128 = vsel %vm3112, %v3109, 0.0
    %3129 = vadd.xlane.f32.xlu0 %v3128
    %v3130 = vpop.xlane.xlu0 %3129
    %v3131 = vsel %vm3112, %v3110, 0.0
    %3132 = vadd.xlane.f32.xlu0 %v3131
    %v3133 = vpop.xlane.xlu0 %3132
    %v3134 = vsel %vm3112, %v3111, 0.0
    %3135 = vadd.xlane.f32.xlu0 %v3134
    %v3136 = vpop.xlane.xlu0 %3135
    %vm3137 = vcmp.gt.f32.partialorder %v2993, 0.0
    %v3146 = vlaneseq
    %v3147 = vshrl.u32 %v3146, 7
    %v3148 = vsub.s32 %v304, %v3147
    %v3149 = vrot.slane %v3115, %v3148
    %v3150 = vlaneseq
    %v3151 = vshrl.u32 %v3150, 7
    %v3152 = vsub.s32 %v304, %v3151
    %v3153 = vrot.slane %v3118, %v3152
    %v3154 = vlaneseq
    %v3155 = vshrl.u32 %v3154, 7
    %v3156 = vsub.s32 %v304, %v3155
    %v3157 = vrot.slane %v3121, %v3156
    %v3158 = vlaneseq
    %v3159 = vshrl.u32 %v3158, 7
    %v3160 = vsub.s32 %v304, %v3159
    %v3161 = vrot.slane %v3124, %v3160
    %v3162 = vlaneseq
    %v3163 = vshrl.u32 %v3162, 7
    %v3164 = vsub.s32 %v304, %v3163
    %v3165 = vrot.slane %v3127, %v3164
    %v3166 = vlaneseq
    %v3167 = vshrl.u32 %v3166, 7
    %v3168 = vsub.s32 %v304, %v3167
    %v3169 = vrot.slane %v3130, %v3168
    %v3170 = vlaneseq
    %v3171 = vshrl.u32 %v3170, 7
    %v3172 = vsub.s32 %v304, %v3171
    %v3173 = vrot.slane %v3133, %v3172
    %v3174 = vlaneseq
    %v3175 = vshrl.u32 %v3174, 7
    %v3176 = vsub.s32 %v304, %v3175
    %v3177 = vrot.slane %v3136, %v3176
    %vm3178 = vcmask 1041409
    %v3179 = vsel %vm3178, %v3153, %v3149
    %vm3180 = vcmask 1042434
    %v3181 = vsel %vm3180, %v3157, %v3179
    %vm3182 = vcmask 1043459
    %v3183 = vsel %vm3182, %v3161, %v3181
    %vm3184 = vcmask 1044484
    %v3185 = vsel %vm3184, %v3165, %v3183
    %vm3186 = vcmask 1045509
    %v3187 = vsel %vm3186, %v3169, %v3185
    %vm3188 = vcmask 1046534
    %v3189 = vsel %vm3188, %v3173, %v3187
    %vm3190 = vcmask 1047559
    %v3191 = vsel %vm3190, %v3177, %v3189
    %v3193 = vsel %vm3137, %v3191, -1e+10
    %vm3194 = vcmask 15360
    %v3195 = vsel %vm3194, %v3193, -inf
    %v3196 = vrot.slane %v3195, 4
    %v3197 = vmax.f32 %v3195, %v3196
    %v3198 = vrot.slane %v3197, 2
    %v3199 = vmax.f32 %v3197, %v3198
    %v3200 = vrot.slane %v3199, 1
    %v3201 = vmax.f32 %v3199, %v3200
    %v3202 = vsub.f32 %v3193, %v3201
    %v3203 = vmul.f32 %v3202, 1.442695
    %v3204 = vpow.pop %v3203
    %v3205 = vsel %vm3194, %v3204, 0.0
    %v3206 = vrot.slane %v3205, 4
    %v3207 = vadd.f32 %v3205, %v3206
    %v3208 = vrot.slane %v3207, 2
    %v3209 = vadd.f32 %v3207, %v3208
    %v3210 = vrot.slane %v3209, 1
    %v3211 = vadd.f32 %v3209, %v3210
    %v3212 = vrcp.pop %v3211
    %v3213 = vmul.f32 %v3204, %v3212
    %v3214 = vlaneseq
    %v3215 = vshrl.u32 %v3214, 7
    %v3216 = vsub.s32 0, %v3215
    %v3217 = vrot.slane %v3213, %v3216
    %3219 = vbcast.lane.b32.xlu0 %v3217, 256
    %v3220 = vpop.permute.xlu0 %3219
    %v3221 = vlaneseq
    %v3222 = vshrl.u32 %v3221, 7
    %v3223 = vsub.s32 1, %v3222
    %v3224 = vrot.slane %v3213, %v3223
    %3226 = vbcast.lane.b32.xlu0 %v3224, 256
    %v3227 = vpop.permute.xlu0 %3226
    %v3228 = vlaneseq
    %v3229 = vshrl.u32 %v3228, 7
    %v3230 = vsub.s32 2, %v3229
    %v3231 = vrot.slane %v3213, %v3230
    %3233 = vbcast.lane.b32.xlu0 %v3231, 256
    %v3234 = vpop.permute.xlu0 %3233
    %v3235 = vlaneseq
    %v3236 = vshrl.u32 %v3235, 7
    %v3237 = vsub.s32 3, %v3236
    %v3238 = vrot.slane %v3213, %v3237
    %3240 = vbcast.lane.b32.xlu0 %v3238, 256
    %v3241 = vpop.permute.xlu0 %3240
    %v3242 = vlaneseq
    %v3243 = vshrl.u32 %v3242, 7
    %v3244 = vsub.s32 4, %v3243
    %v3245 = vrot.slane %v3213, %v3244
    %3247 = vbcast.lane.b32.xlu0 %v3245, 256
    %v3248 = vpop.permute.xlu0 %3247
    %v3249 = vlaneseq
    %v3250 = vshrl.u32 %v3249, 7
    %v3251 = vsub.s32 5, %v3250
    %v3252 = vrot.slane %v3213, %v3251
    %3254 = vbcast.lane.b32.xlu0 %v3252, 256
    %v3255 = vpop.permute.xlu0 %3254
    %v3256 = vlaneseq
    %v3257 = vshrl.u32 %v3256, 7
    %v3258 = vsub.s32 6, %v3257
    %v3259 = vrot.slane %v3213, %v3258
    %3261 = vbcast.lane.b32.xlu0 %v3259, 256
    %v3262 = vpop.permute.xlu0 %3261
    %v3263 = vlaneseq
    %v3264 = vshrl.u32 %v3263, 7
    %v3265 = vsub.s32 7, %v3264
    %v3266 = vrot.slane %v3213, %v3265
    %3268 = vbcast.lane.b32.xlu0 %v3266, 256
    %v3269 = vpop.permute.xlu0 %3268
    %v3270 = vmul.f32 %v3220, %v2392
    %v3271 = vmul.f32 %v3227, %v2393
    %v3272 = vmul.f32 %v3234, %v2394
    %v3273 = vmul.f32 %v3241, %v2395
    %v3274 = vmul.f32 %v3248, %v2396
    %v3275 = vmul.f32 %v3255, %v2397
    %v3276 = vmul.f32 %v3262, %v2398
    %v3277 = vmul.f32 %v3269, %v2399
    %v3278 = vsel %vm3112, %v3270, 0.0
    %v3279 = vsel %vm3112, %v3271, 0.0
    %v3280 = vadd.f32 %v3278, %v3279
    %v3281 = vsel %vm3112, %v3272, 0.0
    %v3282 = vadd.f32 %v3280, %v3281
    %v3283 = vsel %vm3112, %v3273, 0.0
    %v3284 = vadd.f32 %v3282, %v3283
    %v3285 = vsel %vm3112, %v3274, 0.0
    %v3286 = vadd.f32 %v3284, %v3285
    %v3287 = vsel %vm3112, %v3275, 0.0
    %v3288 = vadd.f32 %v3286, %v3287
    %v3289 = vsel %vm3112, %v3276, 0.0
    %v3290 = vadd.f32 %v3288, %v3289
    %v3291 = vsel %vm3112, %v3277, 0.0
    %v3292 = vadd.f32 %v3290, %v3291
    %v3294 = vsel %vm2852, %v3292, 0
    %3296 = vmatprep.subr.mxu0 0.0
    %3297 = vmatpush1.msra.mxu0 %v2999
    %3298 = vmatprep.subr.mxu0 0.0
    %3299 = vmatpush1.msra.mxu0 %v3000
    %3300 = vmatprep.subr.mxu0 0.0
    %3301 = vmatpush1.msra.mxu0 %v3001
    %3302 = vmatprep.subr.mxu0 0.0
    %3303 = vmatpush1.msra.mxu0 %v3002
    %3304 = vmatprep.subr.mxu0 0.0
    %3305 = vmatpush1.msra.mxu0 0.0
    %3306 = vmatprep.subr.mxu0 0.0
    %3307 = vmatpush1.msra.mxu0 0.0
    %3308 = vmatprep.subr.mxu0 0.0
    %3309 = vmatpush1.msra.mxu0 0.0
    %3310 = vmatprep.subr.mxu0 0.0
    %3311 = vmatpush1.msra.mxu0 0.0
    %3312 = vmatprep.subr.mxu0 0.0
    %3313 = vmatpush1.msra.mxu0 0.0
    %3314 = vmatprep.subr.mxu0 0.0
    %3315 = vmatpush1.msra.mxu0 0.0
    %3316 = vmatprep.subr.mxu0 0.0
    %3317 = vmatpush1.msra.mxu0 0.0
    %3318 = vmatprep.subr.mxu0 0.0
    %3319 = vmatpush1.msra.mxu0 0.0
    %3320 = vmatprep.subr.mxu0 0.0
    %3321 = vmatpush1.msra.mxu0 0.0
    %3322 = vmatprep.subr.mxu0 0.0
    %3323 = vmatpush1.msra.mxu0 0.0
    %3324 = vmatprep.subr.mxu0 0.0
    %3325 = vmatpush1.msra.mxu0 0.0
    %3326 = vmatprep.subr.mxu0 0.0
    %3327 = vmatpush1.msra.mxu0 0.0
    %3328 = vmatprep.subr.mxu0 0.0
    %3329 = vmatpush1.msra.mxu0 0.0
    %3330 = vmatprep.subr.mxu0 0.0
    %3331 = vmatpush1.msra.mxu0 0.0
    %3332 = vmatprep.subr.mxu0 0.0
    %3333 = vmatpush1.msra.mxu0 0.0
    %3334 = vmatprep.subr.mxu0 0.0
    %3335 = vmatpush1.msra.mxu0 0.0
    %3336 = vmatprep.subr.mxu0 0.0
    %3337 = vmatpush1.msra.mxu0 0.0
    %3338 = vmatprep.subr.mxu0 0.0
    %3339 = vmatpush1.msra.mxu0 0.0
    %3340 = vmatprep.subr.mxu0 0.0
    %3341 = vmatpush1.msra.mxu0 0.0
    %3342 = vmatprep.subr.mxu0 0.0
    %3343 = vmatpush1.msra.mxu0 0.0
    %3344 = vmatprep.subr.mxu0 0.0
    %3345 = vmatpush1.msra.mxu0 0.0
    %3346 = vmatprep.subr.mxu0 0.0
    %3347 = vmatpush1.msra.mxu0 0.0
    %3348 = vmatprep.subr.mxu0 0.0
    %3349 = vmatpush1.msra.mxu0 0.0
    %3350 = vmatprep.subr.mxu0 0.0
    %3351 = vmatpush1.msra.mxu0 0.0
    %3352 = vmatprep.subr.mxu0 0.0
    %3353 = vmatpush1.msra.mxu0 0.0
    %3354 = vmatprep.subr.mxu0 0.0
    %3355 = vmatpush1.msra.mxu0 0.0
    %3356 = vmatprep.subr.mxu0 0.0
    %3357 = vmatpush1.msra.mxu0 0.0
    %3358 = vmatprep.subr.mxu0 0.0
    %3359 = vmatpush1.msra.mxu0 0.0
    %3360 = vmatprep.mubr.f32.mxu0 0.0
    %3361 = vmatmul.mubr.f32.gmra.mrb[0].mxu0 %v3294
    %v3362 = vpop.f32.mrb[0].mxu0
    %v3363 = vadd.f32 0.0, %v3362
    %v3364 = vpop.f32.mrb[0].mxu0
    %3365 = vdwg.mxu0
    %v3366 = vadd.f32 %v2798, %v3363
    %v3368 = vlaneseq
    %v3369 = vshrl.u32 %v3368, 7
    %v3370 = vsub.s32 0, %v3369
    %v3371 = vrot.slane %v3007, %v3370
    %v3373 = vadd.f32 %v3366, %v3371
    %v3375 = vlaneseq
    %v3376 = vshrl.u32 %v3375, 7
    %v3377 = vsub.s32 0, %v3376
    %v3378 = vrot.slane %v3008, %v3377
    %3380 = vmatprep.subr.mxu0 0.0
    %3381 = vmatpush1.msra.mxu0 %v3003
    %3382 = vmatprep.subr.mxu0 0.0
    %3383 = vmatpush1.msra.mxu0 %v3004
    %3384 = vmatprep.subr.mxu0 0.0
    %3385 = vmatpush1.msra.mxu0 %v3005
    %3386 = vmatprep.subr.mxu0 0.0
    %3387 = vmatpush1.msra.mxu0 %v3006
    %3388 = vmatprep.subr.mxu0 0.0
    %3389 = vmatpush1.msra.mxu0 0.0
    %3390 = vmatprep.subr.mxu0 0.0
    %3391 = vmatpush1.msra.mxu0 0.0
    %3392 = vmatprep.subr.mxu0 0.0
    %3393 = vmatpush1.msra.mxu0 0.0
    %3394 = vmatprep.subr.mxu0 0.0
    %3395 = vmatpush1.msra.mxu0 0.0
    %3396 = vmatprep.subr.mxu0 0.0
    %3397 = vmatpush1.msra.mxu0 0.0
    %3398 = vmatprep.subr.mxu0 0.0
    %3399 = vmatpush1.msra.mxu0 0.0
    %3400 = vmatprep.subr.mxu0 0.0
    %3401 = vmatpush1.msra.mxu0 0.0
    %3402 = vmatprep.subr.mxu0 0.0
    %3403 = vmatpush1.msra.mxu0 0.0
    %3404 = vmatprep.subr.mxu0 0.0
    %3405 = vmatpush1.msra.mxu0 0.0
    %3406 = vmatprep.subr.mxu0 0.0
    %3407 = vmatpush1.msra.mxu0 0.0
    %3408 = vmatprep.subr.mxu0 0.0
    %3409 = vmatpush1.msra.mxu0 0.0
    %3410 = vmatprep.subr.mxu0 0.0
    %3411 = vmatpush1.msra.mxu0 0.0
    %3412 = vmatprep.subr.mxu0 0.0
    %3413 = vmatpush1.msra.mxu0 0.0
    %3414 = vmatprep.subr.mxu0 0.0
    %3415 = vmatpush1.msra.mxu0 0.0
    %3416 = vmatprep.subr.mxu0 0.0
    %3417 = vmatpush1.msra.mxu0 0.0
    %3418 = vmatprep.subr.mxu0 0.0
    %3419 = vmatpush1.msra.mxu0 0.0
    %3420 = vmatprep.subr.mxu0 0.0
    %3421 = vmatpush1.msra.mxu0 0.0
    %3422 = vmatprep.subr.mxu0 0.0
    %3423 = vmatpush1.msra.mxu0 0.0
    %3424 = vmatprep.subr.mxu0 0.0
    %3425 = vmatpush1.msra.mxu0 0.0
    %3426 = vmatprep.subr.mxu0 0.0
    %3427 = vmatpush1.msra.mxu0 0.0
    %3428 = vmatprep.subr.mxu0 0.0
    %3429 = vmatpush1.msra.mxu0 0.0
    %3430 = vmatprep.subr.mxu0 0.0
    %3431 = vmatpush1.msra.mxu0 0.0
    %3432 = vmatprep.subr.mxu0 0.0
    %3433 = vmatpush1.msra.mxu0 0.0
    %3434 = vmatprep.subr.mxu0 0.0
    %3435 = vmatpush1.msra.mxu0 0.0
    %3436 = vmatprep.subr.mxu0 0.0
    %3437 = vmatpush1.msra.mxu0 0.0
    %3438 = vmatprep.subr.mxu0 0.0
    %3439 = vmatpush1.msra.mxu0 0.0
    %3440 = vmatprep.subr.mxu0 0.0
    %3441 = vmatpush1.msra.mxu0 0.0
    %3442 = vmatprep.subr.mxu0 0.0
    %3443 = vmatpush1.msra.mxu0 0.0
    %3444 = vmatprep.mubr.f32.mxu0 0.0
    %3445 = vmatmul.mubr.f32.gmra.mrb[0].mxu0 %v3010
    %v3446 = vpop.f32.mrb[0].mxu0
    %v3447 = vadd.f32 %v3378, %v3446
    %v3448 = vpop.f32.mrb[0].mxu0
    %3449 = vdwg.mxu0
    %v3450 = vadd.f32 %v3373, %v3447
    %v3451 = vxor.u32 %v3450, 2147483648
    %v3452 = vmul.f32 %v3451, 1.442695
    %v3453 = vpow.pop %v3452
    %v3454 = vadd.f32 %v3453, 1.0
    %v3455 = vrcp.pop %v3454
    %v3456 = vmul.f32 1.0, %v3455
    %3458 = vrot.lane.b32.xlu0 %v3447, 64
    %v3459 = vpop.permute.xlu0 %3458
    %v3461 = vmul.f32 %v3456, %v3459
    %3463 = vrot.lane.b32.xlu0 %v3461, 64
    %v3464 = vpop.permute.xlu0 %3463
    %v3466 = vadd.f32 %v3373, %v3464
    %v3467 = vtanh.pop %v3466
    %v3468 = vsub.f32 1.0, %v3456
    %3470 = vrot.lane.b32.xlu0 %v3467, 96
    %v3471 = vpop.permute.xlu0 %3470
    %v3473 = vmul.f32 %v3468, %v3471
    %3474 = vrot.lane.b32.xlu0 %v2559, 32
    %v3475 = vpop.permute.xlu0 %3474
    %v3477 = vmul.f32 %v3456, %v3475
    %v3478 = vadd.f32 %v3473, %v3477
    %3480 = vrot.lane.b32.xlu0 %v3478, 96
    %v3481 = vpop.permute.xlu0 %3480
    %v3482 = vsel %vm2852, %v3481, 0
    %3484 = vmatprep.subr.mxu0 0.0
    %3485 = vmatpush1.msra.mxu0 %v2994
    %3486 = vmatprep.subr.mxu0 0.0
    %3487 = vmatpush1.msra.mxu0 %v2995
    %3488 = vmatprep.subr.mxu0 0.0
    %3489 = vmatpush1.msra.mxu0 %v2996
    %3490 = vmatprep.subr.mxu0 0.0
    %3491 = vmatpush1.msra.mxu0 %v2997
    %3492 = vmatprep.subr.mxu0 0.0
    %3493 = vmatpush1.msra.mxu0 0.0
    %3494 = vmatprep.subr.mxu0 0.0
    %3495 = vmatpush1.msra.mxu0 0.0
    %3496 = vmatprep.subr.mxu0 0.0
    %3497 = vmatpush1.msra.mxu0 0.0
    %3498 = vmatprep.subr.mxu0 0.0
    %3499 = vmatpush1.msra.mxu0 0.0
    %3500 = vmatprep.subr.mxu0 0.0
    %3501 = vmatpush1.msra.mxu0 0.0
    %3502 = vmatprep.subr.mxu0 0.0
    %3503 = vmatpush1.msra.mxu0 0.0
    %3504 = vmatprep.subr.mxu0 0.0
    %3505 = vmatpush1.msra.mxu0 0.0
    %3506 = vmatprep.subr.mxu0 0.0
    %3507 = vmatpush1.msra.mxu0 0.0
    %3508 = vmatprep.subr.mxu0 0.0
    %3509 = vmatpush1.msra.mxu0 0.0
    %3510 = vmatprep.subr.mxu0 0.0
    %3511 = vmatpush1.msra.mxu0 0.0
    %3512 = vmatprep.subr.mxu0 0.0
    %3513 = vmatpush1.msra.mxu0 0.0
    %3514 = vmatprep.subr.mxu0 0.0
    %3515 = vmatpush1.msra.mxu0 0.0
    %3516 = vmatprep.subr.mxu0 0.0
    %3517 = vmatpush1.msra.mxu0 0.0
    %3518 = vmatprep.subr.mxu0 0.0
    %3519 = vmatpush1.msra.mxu0 0.0
    %3520 = vmatprep.subr.mxu0 0.0
    %3521 = vmatpush1.msra.mxu0 0.0
    %3522 = vmatprep.subr.mxu0 0.0
    %3523 = vmatpush1.msra.mxu0 0.0
    %3524 = vmatprep.subr.mxu0 0.0
    %3525 = vmatpush1.msra.mxu0 0.0
    %3526 = vmatprep.subr.mxu0 0.0
    %3527 = vmatpush1.msra.mxu0 0.0
    %3528 = vmatprep.subr.mxu0 0.0
    %3529 = vmatpush1.msra.mxu0 0.0
    %3530 = vmatprep.subr.mxu0 0.0
    %3531 = vmatpush1.msra.mxu0 0.0
    %3532 = vmatprep.subr.mxu0 0.0
    %3533 = vmatpush1.msra.mxu0 0.0
    %3534 = vmatprep.subr.mxu0 0.0
    %3535 = vmatpush1.msra.mxu0 0.0
    %3536 = vmatprep.subr.mxu0 0.0
    %3537 = vmatpush1.msra.mxu0 0.0
    %3538 = vmatprep.subr.mxu0 0.0
    %3539 = vmatpush1.msra.mxu0 0.0
    %3540 = vmatprep.subr.mxu0 0.0
    %3541 = vmatpush1.msra.mxu0 0.0
    %3542 = vmatprep.subr.mxu0 0.0
    %3543 = vmatpush1.msra.mxu0 0.0
    %3544 = vmatprep.subr.mxu0 0.0
    %3545 = vmatpush1.msra.mxu0 0.0
    %3546 = vmatprep.subr.mxu0 0.0
    %3547 = vmatpush1.msra.mxu0 0.0
    %3548 = vmatprep.mubr.f32.mxu0 0.0
    %3549 = vmatmul.mubr.f32.gmra.mrb[0].mxu0 %v3482
    %v3550 = vpop.f32.mrb[0].mxu0
    %v3551 = vadd.f32 0.0, %v3550
    %v3552 = vpop.f32.mrb[0].mxu0
    %3553 = vdwg.mxu0
    %v3554 = vadd.f32 %v2983, %v3551
    %v3555 = vadd.f32 %v2984, %v3551
    %v3556 = vadd.f32 %v2985, %v3551
    %v3557 = vadd.f32 %v2986, %v3551
    %v3558 = vadd.f32 %v2987, %v3551
    %v3559 = vadd.f32 %v2988, %v3551
    %v3560 = vadd.f32 %v2989, %v3551
    %v3561 = vadd.f32 %v2990, %v3551
    %v3562 = vtanh.pop %v3554
    %v3563 = vtanh.pop %v3555
    %v3564 = vtanh.pop %v3556
    %v3565 = vtanh.pop %v3557
    %v3566 = vtanh.pop %v3558
    %v3567 = vtanh.pop %v3559
    %v3568 = vtanh.pop %v3560
    %v3569 = vtanh.pop %v3561
    %v3570 = vmul.f32 %v3562, %v3102
    %v3571 = vmul.f32 %v3563, %v3102
    %v3572 = vmul.f32 %v3564, %v3102
    %v3573 = vmul.f32 %v3565, %v3102
    %v3574 = vmul.f32 %v3566, %v3102
    %v3575 = vmul.f32 %v3567, %v3102
    %v3576 = vmul.f32 %v3568, %v3102
    %v3577 = vmul.f32 %v3569, %v3102
    %v3578 = vsel %vm3112, %v3570, 0.0
    %3579 = vadd.xlane.f32.xlu0 %v3578
    %v3580 = vpop.xlane.xlu0 %3579
    %v3581 = vsel %vm3112, %v3571, 0.0
    %3582 = vadd.xlane.f32.xlu0 %v3581
    %v3583 = vpop.xlane.xlu0 %3582
    %v3584 = vsel %vm3112, %v3572, 0.0
    %3585 = vadd.xlane.f32.xlu0 %v3584
    %v3586 = vpop.xlane.xlu0 %3585
    %v3587 = vsel %vm3112, %v3573, 0.0
    %3588 = vadd.xlane.f32.xlu0 %v3587
    %v3589 = vpop.xlane.xlu0 %3588
    %v3590 = vsel %vm3112, %v3574, 0.0
    %3591 = vadd.xlane.f32.xlu0 %v3590
    %v3592 = vpop.xlane.xlu0 %3591
    %v3593 = vsel %vm3112, %v3575, 0.0
    %3594 = vadd.xlane.f32.xlu0 %v3593
    %v3595 = vpop.xlane.xlu0 %3594
    %v3596 = vsel %vm3112, %v3576, 0.0
    %3597 = vadd.xlane.f32.xlu0 %v3596
    %v3598 = vpop.xlane.xlu0 %3597
    %v3599 = vsel %vm3112, %v3577, 0.0
    %3600 = vadd.xlane.f32.xlu0 %v3599
    %v3601 = vpop.xlane.xlu0 %3600
    %v3610 = vlaneseq
    %v3611 = vshrl.u32 %v3610, 7
    %v3612 = vsub.s32 %v304, %v3611
    %v3613 = vrot.slane %v3580, %v3612
    %v3614 = vlaneseq
    %v3615 = vshrl.u32 %v3614, 7
    %v3616 = vsub.s32 %v304, %v3615
    %v3617 = vrot.slane %v3583, %v3616
    %v3618 = vlaneseq
    %v3619 = vshrl.u32 %v3618, 7
    %v3620 = vsub.s32 %v304, %v3619
    %v3621 = vrot.slane %v3586, %v3620
    %v3622 = vlaneseq
    %v3623 = vshrl.u32 %v3622, 7
    %v3624 = vsub.s32 %v304, %v3623
    %v3625 = vrot.slane %v3589, %v3624
    %v3626 = vlaneseq
    %v3627 = vshrl.u32 %v3626, 7
    %v3628 = vsub.s32 %v304, %v3627
    %v3629 = vrot.slane %v3592, %v3628
    %v3630 = vlaneseq
    %v3631 = vshrl.u32 %v3630, 7
    %v3632 = vsub.s32 %v304, %v3631
    %v3633 = vrot.slane %v3595, %v3632
    %v3634 = vlaneseq
    %v3635 = vshrl.u32 %v3634, 7
    %v3636 = vsub.s32 %v304, %v3635
    %v3637 = vrot.slane %v3598, %v3636
    %v3638 = vlaneseq
    %v3639 = vshrl.u32 %v3638, 7
    %v3640 = vsub.s32 %v304, %v3639
    %v3641 = vrot.slane %v3601, %v3640
    %v3642 = vsel %vm3178, %v3617, %v3613
    %v3643 = vsel %vm3180, %v3621, %v3642
    %v3644 = vsel %vm3182, %v3625, %v3643
    %v3645 = vsel %vm3184, %v3629, %v3644
    %v3646 = vsel %vm3186, %v3633, %v3645
    %v3647 = vsel %vm3188, %v3637, %v3646
    %v3648 = vsel %vm3190, %v3641, %v3647
    %v3650 = vsel %vm3137, %v3648, -1e+10
    %v3651 = vsel %vm3194, %v3650, -inf
    %v3652 = vrot.slane %v3651, 4
    %v3653 = vmax.f32 %v3651, %v3652
    %v3654 = vrot.slane %v3653, 2
    %v3655 = vmax.f32 %v3653, %v3654
    %v3656 = vrot.slane %v3655, 1
    %v3657 = vmax.f32 %v3655, %v3656
    %v3658 = vsub.f32 %v3650, %v3657
    %v3659 = vmul.f32 %v3658, 1.442695
    %v3660 = vpow.pop %v3659
    %v3661 = vsel %vm3194, %v3660, 0.0
    %v3662 = vrot.slane %v3661, 4
    %v3663 = vadd.f32 %v3661, %v3662
    %v3664 = vrot.slane %v3663, 2
    %v3665 = vadd.f32 %v3663, %v3664
    %v3666 = vrot.slane %v3665, 1
    %v3667 = vadd.f32 %v3665, %v3666
    %v3668 = vrcp.pop %v3667
    %v3669 = vmul.f32 %v3660, %v3668
    %v3670 = vlaneseq
    %v3671 = vshrl.u32 %v3670, 7
    %v3672 = vsub.s32 0, %v3671
    %v3673 = vrot.slane %v3669, %v3672
    %3675 = vbcast.lane.b32.xlu0 %v3673, 256
    %v3676 = vpop.permute.xlu0 %3675
    %v3677 = vlaneseq
    %v3678 = vshrl.u32 %v3677, 7
    %v3679 = vsub.s32 1, %v3678
    %v3680 = vrot.slane %v3669, %v3679
    %3682 = vbcast.lane.b32.xlu0 %v3680, 256
    %v3683 = vpop.permute.xlu0 %3682
    %v3684 = vlaneseq
    %v3685 = vshrl.u32 %v3684, 7
    %v3686 = vsub.s32 2, %v3685
    %v3687 = vrot.slane %v3669, %v3686
    %3689 = vbcast.lane.b32.xlu0 %v3687, 256
    %v3690 = vpop.permute.xlu0 %3689
    %v3691 = vlaneseq
    %v3692 = vshrl.u32 %v3691, 7
    %v3693 = vsub.s32 3, %v3692
    %v3694 = vrot.slane %v3669, %v3693
    %3696 = vbcast.lane.b32.xlu0 %v3694, 256
    %v3697 = vpop.permute.xlu0 %3696
    %v3698 = vlaneseq
    %v3699 = vshrl.u32 %v3698, 7
    %v3700 = vsub.s32 4, %v3699
    %v3701 = vrot.slane %v3669, %v3700
    %3703 = vbcast.lane.b32.xlu0 %v3701, 256
    %v3704 = vpop.permute.xlu0 %3703
    %v3705 = vlaneseq
    %v3706 = vshrl.u32 %v3705, 7
    %v3707 = vsub.s32 5, %v3706
    %v3708 = vrot.slane %v3669, %v3707
    %3710 = vbcast.lane.b32.xlu0 %v3708, 256
    %v3711 = vpop.permute.xlu0 %3710
    %v3712 = vlaneseq
    %v3713 = vshrl.u32 %v3712, 7
    %v3714 = vsub.s32 6, %v3713
    %v3715 = vrot.slane %v3669, %v3714
    %3717 = vbcast.lane.b32.xlu0 %v3715, 256
    %v3718 = vpop.permute.xlu0 %3717
    %v3719 = vlaneseq
    %v3720 = vshrl.u32 %v3719, 7
    %v3721 = vsub.s32 7, %v3720
    %v3722 = vrot.slane %v3669, %v3721
    %3724 = vbcast.lane.b32.xlu0 %v3722, 256
    %v3725 = vpop.permute.xlu0 %3724
    %v3726 = vmul.f32 %v3676, %v2392
    %v3727 = vmul.f32 %v3683, %v2393
    %v3728 = vmul.f32 %v3690, %v2394
    %v3729 = vmul.f32 %v3697, %v2395
    %v3730 = vmul.f32 %v3704, %v2396
    %v3731 = vmul.f32 %v3711, %v2397
    %v3732 = vmul.f32 %v3718, %v2398
    %v3733 = vmul.f32 %v3725, %v2399
    %v3734 = vsel %vm3112, %v3726, 0.0
    %v3735 = vsel %vm3112, %v3727, 0.0
    %v3736 = vadd.f32 %v3734, %v3735
    %v3737 = vsel %vm3112, %v3728, 0.0
    %v3738 = vadd.f32 %v3736, %v3737
    %v3739 = vsel %vm3112, %v3729, 0.0
    %v3740 = vadd.f32 %v3738, %v3739
    %v3741 = vsel %vm3112, %v3730, 0.0
    %v3742 = vadd.f32 %v3740, %v3741
    %v3743 = vsel %vm3112, %v3731, 0.0
    %v3744 = vadd.f32 %v3742, %v3743
    %v3745 = vsel %vm3112, %v3732, 0.0
    %v3746 = vadd.f32 %v3744, %v3745
    %v3747 = vsel %vm3112, %v3733, 0.0
    %v3748 = vadd.f32 %v3746, %v3747
    %v3750 = vsel %vm2852, %v3748, 0
    %3752 = vmatprep.subr.mxu0 0.0
    %3753 = vmatpush1.msra.mxu0 %v2999
    %3754 = vmatprep.subr.mxu0 0.0
    %3755 = vmatpush1.msra.mxu0 %v3000
    %3756 = vmatprep.subr.mxu0 0.0
    %3757 = vmatpush1.msra.mxu0 %v3001
    %3758 = vmatprep.subr.mxu0 0.0
    %3759 = vmatpush1.msra.mxu0 %v3002
    %3760 = vmatprep.subr.mxu0 0.0
    %3761 = vmatpush1.msra.mxu0 0.0
    %3762 = vmatprep.subr.mxu0 0.0
    %3763 = vmatpush1.msra.mxu0 0.0
    %3764 = vmatprep.subr.mxu0 0.0
    %3765 = vmatpush1.msra.mxu0 0.0
    %3766 = vmatprep.subr.mxu0 0.0
    %3767 = vmatpush1.msra.mxu0 0.0
    %3768 = vmatprep.subr.mxu0 0.0
    %3769 = vmatpush1.msra.mxu0 0.0
    %3770 = vmatprep.subr.mxu0 0.0
    %3771 = vmatpush1.msra.mxu0 0.0
    %3772 = vmatprep.subr.mxu0 0.0
    %3773 = vmatpush1.msra.mxu0 0.0
    %3774 = vmatprep.subr.mxu0 0.0
    %3775 = vmatpush1.msra.mxu0 0.0
    %3776 = vmatprep.subr.mxu0 0.0
    %3777 = vmatpush1.msra.mxu0 0.0
    %3778 = vmatprep.subr.mxu0 0.0
    %3779 = vmatpush1.msra.mxu0 0.0
    %3780 = vmatprep.subr.mxu0 0.0
    %3781 = vmatpush1.msra.mxu0 0.0
    %3782 = vmatprep.subr.mxu0 0.0
    %3783 = vmatpush1.msra.mxu0 0.0
    %3784 = vmatprep.subr.mxu0 0.0
    %3785 = vmatpush1.msra.mxu0 0.0
    %3786 = vmatprep.subr.mxu0 0.0
    %3787 = vmatpush1.msra.mxu0 0.0
    %3788 = vmatprep.subr.mxu0 0.0
    %3789 = vmatpush1.msra.mxu0 0.0
    %3790 = vmatprep.subr.mxu0 0.0
    %3791 = vmatpush1.msra.mxu0 0.0
    %3792 = vmatprep.subr.mxu0 0.0
    %3793 = vmatpush1.msra.mxu0 0.0
    %3794 = vmatprep.subr.mxu0 0.0
    %3795 = vmatpush1.msra.mxu0 0.0
    %3796 = vmatprep.subr.mxu0 0.0
    %3797 = vmatpush1.msra.mxu0 0.0
    %3798 = vmatprep.subr.mxu0 0.0
    %3799 = vmatpush1.msra.mxu0 0.0
    %3800 = vmatprep.subr.mxu0 0.0
    %3801 = vmatpush1.msra.mxu0 0.0
    %3802 = vmatprep.subr.mxu0 0.0
    %3803 = vmatpush1.msra.mxu0 0.0
    %3804 = vmatprep.subr.mxu0 0.0
    %3805 = vmatpush1.msra.mxu0 0.0
    %3806 = vmatprep.subr.mxu0 0.0
    %3807 = vmatpush1.msra.mxu0 0.0
    %3808 = vmatprep.subr.mxu0 0.0
    %3809 = vmatpush1.msra.mxu0 0.0
    %3810 = vmatprep.subr.mxu0 0.0
    %3811 = vmatpush1.msra.mxu0 0.0
    %3812 = vmatprep.subr.mxu0 0.0
    %3813 = vmatpush1.msra.mxu0 0.0
    %3814 = vmatprep.subr.mxu0 0.0
    %3815 = vmatpush1.msra.mxu0 0.0
    %3816 = vmatprep.mubr.f32.mxu0 0.0
    %3817 = vmatmul.mubr.f32.gmra.mrb[0].mxu0 %v3750
    %v3818 = vpop.f32.mrb[0].mxu0
    %v3819 = vadd.f32 0.0, %v3818
    %v3820 = vpop.f32.mrb[0].mxu0
    %3821 = vdwg.mxu0
    %v3823 = vrot.slane %v3819, 6
    %v3825 = vadd.f32 %v2798, %v3823
    %v3826 = vadd.f32 %v3825, %v3371
    %3827 = vmatprep.subr.mxu0 0.0
    %3828 = vmatpush1.msra.mxu0 %v3003
    %3829 = vmatprep.subr.mxu0 0.0
    %3830 = vmatpush1.msra.mxu0 %v3004
    %3831 = vmatprep.subr.mxu0 0.0
    %3832 = vmatpush1.msra.mxu0 %v3005
    %3833 = vmatprep.subr.mxu0 0.0
    %3834 = vmatpush1.msra.mxu0 %v3006
    %3835 = vmatprep.subr.mxu0 0.0
    %3836 = vmatpush1.msra.mxu0 0.0
    %3837 = vmatprep.subr.mxu0 0.0
    %3838 = vmatpush1.msra.mxu0 0.0
    %3839 = vmatprep.subr.mxu0 0.0
    %3840 = vmatpush1.msra.mxu0 0.0
    %3841 = vmatprep.subr.mxu0 0.0
    %3842 = vmatpush1.msra.mxu0 0.0
    %3843 = vmatprep.subr.mxu0 0.0
    %3844 = vmatpush1.msra.mxu0 0.0
    %3845 = vmatprep.subr.mxu0 0.0
    %3846 = vmatpush1.msra.mxu0 0.0
    %3847 = vmatprep.subr.mxu0 0.0
    %3848 = vmatpush1.msra.mxu0 0.0
    %3849 = vmatprep.subr.mxu0 0.0
    %3850 = vmatpush1.msra.mxu0 0.0
    %3851 = vmatprep.subr.mxu0 0.0
    %3852 = vmatpush1.msra.mxu0 0.0
    %3853 = vmatprep.subr.mxu0 0.0
    %3854 = vmatpush1.msra.mxu0 0.0
    %3855 = vmatprep.subr.mxu0 0.0
    %3856 = vmatpush1.msra.mxu0 0.0
    %3857 = vmatprep.subr.mxu0 0.0
    %3858 = vmatpush1.msra.mxu0 0.0
    %3859 = vmatprep.subr.mxu0 0.0
    %3860 = vmatpush1.msra.mxu0 0.0
    %3861 = vmatprep.subr.mxu0 0.0
    %3862 = vmatpush1.msra.mxu0 0.0
    %3863 = vmatprep.subr.mxu0 0.0
    %3864 = vmatpush1.msra.mxu0 0.0
    %3865 = vmatprep.subr.mxu0 0.0
    %3866 = vmatpush1.msra.mxu0 0.0
    %3867 = vmatprep.subr.mxu0 0.0
    %3868 = vmatpush1.msra.mxu0 0.0
    %3869 = vmatprep.subr.mxu0 0.0
    %3870 = vmatpush1.msra.mxu0 0.0
    %3871 = vmatprep.subr.mxu0 0.0
    %3872 = vmatpush1.msra.mxu0 0.0
    %3873 = vmatprep.subr.mxu0 0.0
    %3874 = vmatpush1.msra.mxu0 0.0
    %3875 = vmatprep.subr.mxu0 0.0
    %3876 = vmatpush1.msra.mxu0 0.0
    %3877 = vmatprep.subr.mxu0 0.0
    %3878 = vmatpush1.msra.mxu0 0.0
    %3879 = vmatprep.subr.mxu0 0.0
    %3880 = vmatpush1.msra.mxu0 0.0
    %3881 = vmatprep.subr.mxu0 0.0
    %3882 = vmatpush1.msra.mxu0 0.0
    %3883 = vmatprep.subr.mxu0 0.0
    %3884 = vmatpush1.msra.mxu0 0.0
    %3885 = vmatprep.subr.mxu0 0.0
    %3886 = vmatpush1.msra.mxu0 0.0
    %3887 = vmatprep.subr.mxu0 0.0
    %3888 = vmatpush1.msra.mxu0 0.0
    %3889 = vmatprep.subr.mxu0 0.0
    %3890 = vmatpush1.msra.mxu0 0.0
    %3891 = vmatprep.mubr.f32.mxu0 0.0
    %3892 = vmatmul.mubr.f32.gmra.mrb[0].mxu0 %v3482
    %v3893 = vpop.f32.mrb[0].mxu0
    %v3894 = vadd.f32 %v3378, %v3893
    %v3895 = vpop.f32.mrb[0].mxu0
    %3896 = vdwg.mxu0
    %v3898 = vrot.slane %v3894, 6
    %v3900 = vadd.f32 %v3826, %v3898
    %v3901 = vxor.u32 %v3900, 2147483648
    %v3902 = vmul.f32 %v3901, 1.442695
    %v3903 = vpow.pop %v3902
    %v3904 = vadd.f32 %v3903, 1.0
    %v3905 = vrcp.pop %v3904
    %v3906 = vmul.f32 1.0, %v3905
    %3907 = vrot.lane.b32.xlu0 %v3898, 64
    %v3908 = vpop.permute.xlu0 %3907
    %v3910 = vmul.f32 %v3906, %v3908
    %3912 = vrot.lane.b32.xlu0 %v3910, 64
    %v3913 = vpop.permute.xlu0 %3912
    %v3915 = vadd.f32 %v3826, %v3913
    %v3916 = vtanh.pop %v3915
    %v3917 = vsub.f32 1.0, %v3906
    %3919 = vrot.lane.b32.xlu0 %v3916, 96
    %v3920 = vpop.permute.xlu0 %3919
    %v3922 = vmul.f32 %v3917, %v3920
    %v3923 = vrot.slane %v3478, 6
    %v3925 = vmul.f32 %v3906, %v3923
    %v3926 = vadd.f32 %v3922, %v3925
    %v3928 = vrot.slane %v3926, 2
    %3929 = vrot.lane.b32.xlu0 %v3928, 96
    %v3930 = vpop.permute.xlu0 %3929
    %v3931 = vsel %vm2852, %v3930, 0
    %3933 = vmatprep.subr.mxu0 0.0
    %3934 = vmatpush1.msra.mxu0 %v2994
    %3935 = vmatprep.subr.mxu0 0.0
    %3936 = vmatpush1.msra.mxu0 %v2995
    %3937 = vmatprep.subr.mxu0 0.0
    %3938 = vmatpush1.msra.mxu0 %v2996
    %3939 = vmatprep.subr.mxu0 0.0
    %3940 = vmatpush1.msra.mxu0 %v2997
    %3941 = vmatprep.subr.mxu0 0.0
    %3942 = vmatpush1.msra.mxu0 0.0
    %3943 = vmatprep.subr.mxu0 0.0
    %3944 = vmatpush1.msra.mxu0 0.0
    %3945 = vmatprep.subr.mxu0 0.0
    %3946 = vmatpush1.msra.mxu0 0.0
    %3947 = vmatprep.subr.mxu0 0.0
    %3948 = vmatpush1.msra.mxu0 0.0
    %3949 = vmatprep.subr.mxu0 0.0
    %3950 = vmatpush1.msra.mxu0 0.0
    %3951 = vmatprep.subr.mxu0 0.0
    %3952 = vmatpush1.msra.mxu0 0.0
    %3953 = vmatprep.subr.mxu0 0.0
    %3954 = vmatpush1.msra.mxu0 0.0
    %3955 = vmatprep.subr.mxu0 0.0
    %3956 = vmatpush1.msra.mxu0 0.0
    %3957 = vmatprep.subr.mxu0 0.0
    %3958 = vmatpush1.msra.mxu0 0.0
    %3959 = vmatprep.subr.mxu0 0.0
    %3960 = vmatpush1.msra.mxu0 0.0
    %3961 = vmatprep.subr.mxu0 0.0
    %3962 = vmatpush1.msra.mxu0 0.0
    %3963 = vmatprep.subr.mxu0 0.0
    %3964 = vmatpush1.msra.mxu0 0.0
    %3965 = vmatprep.subr.mxu0 0.0
    %3966 = vmatpush1.msra.mxu0 0.0
    %3967 = vmatprep.subr.mxu0 0.0
    %3968 = vmatpush1.msra.mxu0 0.0
    %3969 = vmatprep.subr.mxu0 0.0
    %3970 = vmatpush1.msra.mxu0 0.0
    %3971 = vmatprep.subr.mxu0 0.0
    %3972 = vmatpush1.msra.mxu0 0.0
    %3973 = vmatprep.subr.mxu0 0.0
    %3974 = vmatpush1.msra.mxu0 0.0
    %3975 = vmatprep.subr.mxu0 0.0
    %3976 = vmatpush1.msra.mxu0 0.0
    %3977 = vmatprep.subr.mxu0 0.0
    %3978 = vmatpush1.msra.mxu0 0.0
    %3979 = vmatprep.subr.mxu0 0.0
    %3980 = vmatpush1.msra.mxu0 0.0
    %3981 = vmatprep.subr.mxu0 0.0
    %3982 = vmatpush1.msra.mxu0 0.0
    %3983 = vmatprep.subr.mxu0 0.0
    %3984 = vmatpush1.msra.mxu0 0.0
    %3985 = vmatprep.subr.mxu0 0.0
    %3986 = vmatpush1.msra.mxu0 0.0
    %3987 = vmatprep.subr.mxu0 0.0
    %3988 = vmatpush1.msra.mxu0 0.0
    %3989 = vmatprep.subr.mxu0 0.0
    %3990 = vmatpush1.msra.mxu0 0.0
    %3991 = vmatprep.subr.mxu0 0.0
    %3992 = vmatpush1.msra.mxu0 0.0
    %3993 = vmatprep.subr.mxu0 0.0
    %3994 = vmatpush1.msra.mxu0 0.0
    %3995 = vmatprep.subr.mxu0 0.0
    %3996 = vmatpush1.msra.mxu0 0.0
    %3997 = vmatprep.mubr.f32.mxu0 0.0
    %3998 = vmatmul.mubr.f32.gmra.mrb[0].mxu0 %v3931
    %v3999 = vpop.f32.mrb[0].mxu0
    %v4000 = vadd.f32 0.0, %v3999
    %v4001 = vpop.f32.mrb[0].mxu0
    %4002 = vdwg.mxu0
    %v4003 = vadd.f32 %v2983, %v4000
    %v4004 = vadd.f32 %v2984, %v4000
    %v4005 = vadd.f32 %v2985, %v4000
    %v4006 = vadd.f32 %v2986, %v4000
    %v4007 = vadd.f32 %v2987, %v4000
    %v4008 = vadd.f32 %v2988, %v4000
    %v4009 = vadd.f32 %v2989, %v4000
    %v4010 = vadd.f32 %v2990, %v4000
    %v4011 = vtanh.pop %v4003
    %v4012 = vtanh.pop %v4004
    %v4013 = vtanh.pop %v4005
    %v4014 = vtanh.pop %v4006
    %v4015 = vtanh.pop %v4007
    %v4016 = vtanh.pop %v4008
    %v4017 = vtanh.pop %v4009
    %v4018 = vtanh.pop %v4010
    %v4019 = vmul.f32 %v4011, %v3102
    %v4020 = vmul.f32 %v4012, %v3102
    %v4021 = vmul.f32 %v4013, %v3102
    %v4022 = vmul.f32 %v4014, %v3102
    %v4023 = vmul.f32 %v4015, %v3102
    %v4024 = vmul.f32 %v4016, %v3102
    %v4025 = vmul.f32 %v4017, %v3102
    %v4026 = vmul.f32 %v4018, %v3102
    %v4027 = vsel %vm3112, %v4019, 0.0
    %4028 = vadd.xlane.f32.xlu0 %v4027
    %v4029 = vpop.xlane.xlu0 %4028
    %v4030 = vsel %vm3112, %v4020, 0.0
    %4031 = vadd.xlane.f32.xlu0 %v4030
    %v4032 = vpop.xlane.xlu0 %4031
    %v4033 = vsel %vm3112, %v4021, 0.0
    %4034 = vadd.xlane.f32.xlu0 %v4033
    %v4035 = vpop.xlane.xlu0 %4034
    %v4036 = vsel %vm3112, %v4022, 0.0
    %4037 = vadd.xlane.f32.xlu0 %v4036
    %v4038 = vpop.xlane.xlu0 %4037
    %v4039 = vsel %vm3112, %v4023, 0.0
    %4040 = vadd.xlane.f32.xlu0 %v4039
    %v4041 = vpop.xlane.xlu0 %4040
    %v4042 = vsel %vm3112, %v4024, 0.0
    %4043 = vadd.xlane.f32.xlu0 %v4042
    %v4044 = vpop.xlane.xlu0 %4043
    %v4045 = vsel %vm3112, %v4025, 0.0
    %4046 = vadd.xlane.f32.xlu0 %v4045
    %v4047 = vpop.xlane.xlu0 %4046
    %v4048 = vsel %vm3112, %v4026, 0.0
    %4049 = vadd.xlane.f32.xlu0 %v4048
    %v4050 = vpop.xlane.xlu0 %4049
    %v4059 = vlaneseq
    %v4060 = vshrl.u32 %v4059, 7
    %v4061 = vsub.s32 %v304, %v4060
    %v4062 = vrot.slane %v4029, %v4061
    %v4063 = vlaneseq
    %v4064 = vshrl.u32 %v4063, 7
    %v4065 = vsub.s32 %v304, %v4064
    %v4066 = vrot.slane %v4032, %v4065
    %v4067 = vlaneseq
    %v4068 = vshrl.u32 %v4067, 7
    %v4069 = vsub.s32 %v304, %v4068
    %v4070 = vrot.slane %v4035, %v4069
    %v4071 = vlaneseq
    %v4072 = vshrl.u32 %v4071, 7
    %v4073 = vsub.s32 %v304, %v4072
    %v4074 = vrot.slane %v4038, %v4073
    %v4075 = vlaneseq
    %v4076 = vshrl.u32 %v4075, 7
    %v4077 = vsub.s32 %v304, %v4076
    %v4078 = vrot.slane %v4041, %v4077
    %v4079 = vlaneseq
    %v4080 = vshrl.u32 %v4079, 7
    %v4081 = vsub.s32 %v304, %v4080
    %v4082 = vrot.slane %v4044, %v4081
    %v4083 = vlaneseq
    %v4084 = vshrl.u32 %v4083, 7
    %v4085 = vsub.s32 %v304, %v4084
    %v4086 = vrot.slane %v4047, %v4085
    %v4087 = vlaneseq
    %v4088 = vshrl.u32 %v4087, 7
    %v4089 = vsub.s32 %v304, %v4088
    %v4090 = vrot.slane %v4050, %v4089
    %v4091 = vsel %vm3178, %v4066, %v4062
    %v4092 = vsel %vm3180, %v4070, %v4091
    %v4093 = vsel %vm3182, %v4074, %v4092
    %v4094 = vsel %vm3184, %v4078, %v4093
    %v4095 = vsel %vm3186, %v4082, %v4094
    %v4096 = vsel %vm3188, %v4086, %v4095
    %v4097 = vsel %vm3190, %v4090, %v4096
    %v4099 = vsel %vm3137, %v4097, -1e+10
    %v4100 = vsel %vm3194, %v4099, -inf
    %v4101 = vrot.slane %v4100, 4
    %v4102 = vmax.f32 %v4100, %v4101
    %v4103 = vrot.slane %v4102, 2
    %v4104 = vmax.f32 %v4102, %v4103
    %v4105 = vrot.slane %v4104, 1
    %v4106 = vmax.f32 %v4104, %v4105
    %v4107 = vsub.f32 %v4099, %v4106
    %v4108 = vmul.f32 %v4107, 1.442695
    %v4109 = vpow.pop %v4108
    %v4110 = vsel %vm3194, %v4109, 0.0
    %v4111 = vrot.slane %v4110, 4
    %v4112 = vadd.f32 %v4110, %v4111
    %v4113 = vrot.slane %v4112, 2
    %v4114 = vadd.f32 %v4112, %v4113
    %v4115 = vrot.slane %v4114, 1
    %v4116 = vadd.f32 %v4114, %v4115
    %v4117 = vrcp.pop %v4116
    %v4118 = vmul.f32 %v4109, %v4117
    %v4119 = vlaneseq
    %v4120 = vshrl.u32 %v4119, 7
    %v4121 = vsub.s32 0, %v4120
    %v4122 = vrot.slane %v4118, %v4121
    %4124 = vbcast.lane.b32.xlu0 %v4122, 256
    %v4125 = vpop.permute.xlu0 %4124
    %v4126 = vlaneseq
    %v4127 = vshrl.u32 %v4126, 7
    %v4128 = vsub.s32 1, %v4127
    %v4129 = vrot.slane %v4118, %v4128
    %4131 = vbcast.lane.b32.xlu0 %v4129, 256
    %v4132 = vpop.permute.xlu0 %4131
    %v4133 = vlaneseq
    %v4134 = vshrl.u32 %v4133, 7
    %v4135 = vsub.s32 2, %v4134
    %v4136 = vrot.slane %v4118, %v4135
    %4138 = vbcast.lane.b32.xlu0 %v4136, 256
    %v4139 = vpop.permute.xlu0 %4138
    %v4140 = vlaneseq
    %v4141 = vshrl.u32 %v4140, 7
    %v4142 = vsub.s32 3, %v4141
    %v4143 = vrot.slane %v4118, %v4142
    %4145 = vbcast.lane.b32.xlu0 %v4143, 256
    %v4146 = vpop.permute.xlu0 %4145
    %v4147 = vlaneseq
    %v4148 = vshrl.u32 %v4147, 7
    %v4149 = vsub.s32 4, %v4148
    %v4150 = vrot.slane %v4118, %v4149
    %4152 = vbcast.lane.b32.xlu0 %v4150, 256
    %v4153 = vpop.permute.xlu0 %4152
    %v4154 = vlaneseq
    %v4155 = vshrl.u32 %v4154, 7
    %v4156 = vsub.s32 5, %v4155
    %v4157 = vrot.slane %v4118, %v4156
    %4159 = vbcast.lane.b32.xlu0 %v4157, 256
    %v4160 = vpop.permute.xlu0 %4159
    %v4161 = vlaneseq
    %v4162 = vshrl.u32 %v4161, 7
    %v4163 = vsub.s32 6, %v4162
    %v4164 = vrot.slane %v4118, %v4163
    %4166 = vbcast.lane.b32.xlu0 %v4164, 256
    %v4167 = vpop.permute.xlu0 %4166
    %v4168 = vlaneseq
    %v4169 = vshrl.u32 %v4168, 7
    %v4170 = vsub.s32 7, %v4169
    %v4171 = vrot.slane %v4118, %v4170
    %4173 = vbcast.lane.b32.xlu0 %v4171, 256
    %v4174 = vpop.permute.xlu0 %4173
    %v4175 = vmul.f32 %v4125, %v2392
    %v4176 = vmul.f32 %v4132, %v2393
    %v4177 = vmul.f32 %v4139, %v2394
    %v4178 = vmul.f32 %v4146, %v2395
    %v4179 = vmul.f32 %v4153, %v2396
    %v4180 = vmul.f32 %v4160, %v2397
    %v4181 = vmul.f32 %v4167, %v2398
    %v4182 = vmul.f32 %v4174, %v2399
    %v4183 = vsel %vm3112, %v4175, 0.0
    %v4184 = vsel %vm3112, %v4176, 0.0
    %v4185 = vadd.f32 %v4183, %v4184
    %v4186 = vsel %vm3112, %v4177, 0.0
    %v4187 = vadd.f32 %v4185, %v4186
    %v4188 = vsel %vm3112, %v4178, 0.0
    %v4189 = vadd.f32 %v4187, %v4188
    %v4190 = vsel %vm3112, %v4179, 0.0
    %v4191 = vadd.f32 %v4189, %v4190
    %v4192 = vsel %vm3112, %v4180, 0.0
    %v4193 = vadd.f32 %v4191, %v4192
    %v4194 = vsel %vm3112, %v4181, 0.0
    %v4195 = vadd.f32 %v4193, %v4194
    %v4196 = vsel %vm3112, %v4182, 0.0
    %v4197 = vadd.f32 %v4195, %v4196
    %v4199 = vsel %vm2852, %v4197, 0
    %4201 = vmatprep.subr.mxu0 0.0
    %4202 = vmatpush1.msra.mxu0 %v2999
    %4203 = vmatprep.subr.mxu0 0.0
    %4204 = vmatpush1.msra.mxu0 %v3000
    %4205 = vmatprep.subr.mxu0 0.0
    %4206 = vmatpush1.msra.mxu0 %v3001
    %4207 = vmatprep.subr.mxu0 0.0
    %4208 = vmatpush1.msra.mxu0 %v3002
    %4209 = vmatprep.subr.mxu0 0.0
    %4210 = vmatpush1.msra.mxu0 0.0
    %4211 = vmatprep.subr.mxu0 0.0
    %4212 = vmatpush1.msra.mxu0 0.0
    %4213 = vmatprep.subr.mxu0 0.0
    %4214 = vmatpush1.msra.mxu0 0.0
    %4215 = vmatprep.subr.mxu0 0.0
    %4216 = vmatpush1.msra.mxu0 0.0
    %4217 = vmatprep.subr.mxu0 0.0
    %4218 = vmatpush1.msra.mxu0 0.0
    %4219 = vmatprep.subr.mxu0 0.0
    %4220 = vmatpush1.msra.mxu0 0.0
    %4221 = vmatprep.subr.mxu0 0.0
    %4222 = vmatpush1.msra.mxu0 0.0
    %4223 = vmatprep.subr.mxu0 0.0
    %4224 = vmatpush1.msra.mxu0 0.0
    %4225 = vmatprep.subr.mxu0 0.0
    %4226 = vmatpush1.msra.mxu0 0.0
    %4227 = vmatprep.subr.mxu0 0.0
    %4228 = vmatpush1.msra.mxu0 0.0
    %4229 = vmatprep.subr.mxu0 0.0
    %4230 = vmatpush1.msra.mxu0 0.0
    %4231 = vmatprep.subr.mxu0 0.0
    %4232 = vmatpush1.msra.mxu0 0.0
    %4233 = vmatprep.subr.mxu0 0.0
    %4234 = vmatpush1.msra.mxu0 0.0
    %4235 = vmatprep.subr.mxu0 0.0
    %4236 = vmatpush1.msra.mxu0 0.0
    %4237 = vmatprep.subr.mxu0 0.0
    %4238 = vmatpush1.msra.mxu0 0.0
    %4239 = vmatprep.subr.mxu0 0.0
    %4240 = vmatpush1.msra.mxu0 0.0
    %4241 = vmatprep.subr.mxu0 0.0
    %4242 = vmatpush1.msra.mxu0 0.0
    %4243 = vmatprep.subr.mxu0 0.0
    %4244 = vmatpush1.msra.mxu0 0.0
    %4245 = vmatprep.subr.mxu0 0.0
    %4246 = vmatpush1.msra.mxu0 0.0
    %4247 = vmatprep.subr.mxu0 0.0
    %4248 = vmatpush1.msra.mxu0 0.0
    %4249 = vmatprep.subr.mxu0 0.0
    %4250 = vmatpush1.msra.mxu0 0.0
    %4251 = vmatprep.subr.mxu0 0.0
    %4252 = vmatpush1.msra.mxu0 0.0
    %4253 = vmatprep.subr.mxu0 0.0
    %4254 = vmatpush1.msra.mxu0 0.0
    %4255 = vmatprep.subr.mxu0 0.0
    %4256 = vmatpush1.msra.mxu0 0.0
    %4257 = vmatprep.subr.mxu0 0.0
    %4258 = vmatpush1.msra.mxu0 0.0
    %4259 = vmatprep.subr.mxu0 0.0
    %4260 = vmatpush1.msra.mxu0 0.0
    %4261 = vmatprep.subr.mxu0 0.0
    %4262 = vmatpush1.msra.mxu0 0.0
    %4263 = vmatprep.subr.mxu0 0.0
    %4264 = vmatpush1.msra.mxu0 0.0
    %4265 = vmatprep.mubr.f32.mxu0 0.0
    %4266 = vmatmul.mubr.f32.gmra.mrb[0].mxu0 %v4199
    %v4267 = vpop.f32.mrb[0].mxu0
    %v4268 = vadd.f32 0.0, %v4267
    %v4269 = vpop.f32.mrb[0].mxu0
    %4270 = vdwg.mxu0
    %v4272 = vrot.slane %v4268, 4
    %v4274 = vadd.f32 %v2798, %v4272
    %v4275 = vadd.f32 %v4274, %v3371
    %4276 = vmatprep.subr.mxu0 0.0
    %4277 = vmatpush1.msra.mxu0 %v3003
    %4278 = vmatprep.subr.mxu0 0.0
    %4279 = vmatpush1.msra.mxu0 %v3004
    %4280 = vmatprep.subr.mxu0 0.0
    %4281 = vmatpush1.msra.mxu0 %v3005
    %4282 = vmatprep.subr.mxu0 0.0
    %4283 = vmatpush1.msra.mxu0 %v3006
    %4284 = vmatprep.subr.mxu0 0.0
    %4285 = vmatpush1.msra.mxu0 0.0
    %4286 = vmatprep.subr.mxu0 0.0
    %4287 = vmatpush1.msra.mxu0 0.0
    %4288 = vmatprep.subr.mxu0 0.0
    %4289 = vmatpush1.msra.mxu0 0.0
    %4290 = vmatprep.subr.mxu0 0.0
    %4291 = vmatpush1.msra.mxu0 0.0
    %4292 = vmatprep.subr.mxu0 0.0
    %4293 = vmatpush1.msra.mxu0 0.0
    %4294 = vmatprep.subr.mxu0 0.0
    %4295 = vmatpush1.msra.mxu0 0.0
    %4296 = vmatprep.subr.mxu0 0.0
    %4297 = vmatpush1.msra.mxu0 0.0
    %4298 = vmatprep.subr.mxu0 0.0
    %4299 = vmatpush1.msra.mxu0 0.0
    %4300 = vmatprep.subr.mxu0 0.0
    %4301 = vmatpush1.msra.mxu0 0.0
    %4302 = vmatprep.subr.mxu0 0.0
    %4303 = vmatpush1.msra.mxu0 0.0
    %4304 = vmatprep.subr.mxu0 0.0
    %4305 = vmatpush1.msra.mxu0 0.0
    %4306 = vmatprep.subr.mxu0 0.0
    %4307 = vmatpush1.msra.mxu0 0.0
    %4308 = vmatprep.subr.mxu0 0.0
    %4309 = vmatpush1.msra.mxu0 0.0
    %4310 = vmatprep.subr.mxu0 0.0
    %4311 = vmatpush1.msra.mxu0 0.0
    %4312 = vmatprep.subr.mxu0 0.0
    %4313 = vmatpush1.msra.mxu0 0.0
    %4314 = vmatprep.subr.mxu0 0.0
    %4315 = vmatpush1.msra.mxu0 0.0
    %4316 = vmatprep.subr.mxu0 0.0
    %4317 = vmatpush1.msra.mxu0 0.0
    %4318 = vmatprep.subr.mxu0 0.0
    %4319 = vmatpush1.msra.mxu0 0.0
    %4320 = vmatprep.subr.mxu0 0.0
    %4321 = vmatpush1.msra.mxu0 0.0
    %4322 = vmatprep.subr.mxu0 0.0
    %4323 = vmatpush1.msra.mxu0 0.0
    %4324 = vmatprep.subr.mxu0 0.0
    %4325 = vmatpush1.msra.mxu0 0.0
    %4326 = vmatprep.subr.mxu0 0.0
    %4327 = vmatpush1.msra.mxu0 0.0
    %4328 = vmatprep.subr.mxu0 0.0
    %4329 = vmatpush1.msra.mxu0 0.0
    %4330 = vmatprep.subr.mxu0 0.0
    %4331 = vmatpush1.msra.mxu0 0.0
    %4332 = vmatprep.subr.mxu0 0.0
    %4333 = vmatpush1.msra.mxu0 0.0
    %4334 = vmatprep.subr.mxu0 0.0
    %4335 = vmatpush1.msra.mxu0 0.0
    %4336 = vmatprep.subr.mxu0 0.0
    %4337 = vmatpush1.msra.mxu0 0.0
    %4338 = vmatprep.subr.mxu0 0.0
    %4339 = vmatpush1.msra.mxu0 0.0
    %4340 = vmatprep.mubr.f32.mxu0 0.0
    %4341 = vmatmul.mubr.f32.gmra.mrb[0].mxu0 %v3931
    %v4342 = vpop.f32.mrb[0].mxu0
    %v4343 = vadd.f32 %v3378, %v4342
    %v4344 = vpop.f32.mrb[0].mxu0
    %4345 = vdwg.mxu0
    %v4347 = vrot.slane %v4343, 4
    %v4349 = vadd.f32 %v4275, %v4347
    %v4350 = vxor.u32 %v4349, 2147483648
    %v4351 = vmul.f32 %v4350, 1.442695
    %v4352 = vpow.pop %v4351
    %v4353 = vadd.f32 %v4352, 1.0
    %v4354 = vrcp.pop %v4353
    %v4355 = vmul.f32 1.0, %v4354
    %4356 = vrot.lane.b32.xlu0 %v4347, 64
    %v4357 = vpop.permute.xlu0 %4356
    %v4359 = vmul.f32 %v4355, %v4357
    %4361 = vrot.lane.b32.xlu0 %v4359, 64
    %v4362 = vpop.permute.xlu0 %4361
    %v4364 = vadd.f32 %v4275, %v4362
    %v4365 = vtanh.pop %v4364
    %v4366 = vsub.f32 1.0, %v4355
    %4368 = vrot.lane.b32.xlu0 %v4365, 96
    %v4369 = vpop.permute.xlu0 %4368
    %v4371 = vmul.f32 %v4366, %v4369
    %v4372 = vrot.slane %v3926, 6
    %v4374 = vmul.f32 %v4355, %v4372
    %v4375 = vadd.f32 %v4371, %v4374
    %v4377 = vrot.slane %v4375, 4
    %4378 = vrot.lane.b32.xlu0 %v4377, 96
    %v4379 = vpop.permute.xlu0 %4378
    %v4380 = vsel %vm2852, %v4379, 0
    %4382 = vmatprep.subr.mxu0 0.0
    %4383 = vmatpush1.msra.mxu0 %v2994
    %4384 = vmatprep.subr.mxu0 0.0
    %4385 = vmatpush1.msra.mxu0 %v2995
    %4386 = vmatprep.subr.mxu0 0.0
    %4387 = vmatpush1.msra.mxu0 %v2996
    %4388 = vmatprep.subr.mxu0 0.0
    %4389 = vmatpush1.msra.mxu0 %v2997
    %4390 = vmatprep.subr.mxu0 0.0
    %4391 = vmatpush1.msra.mxu0 0.0
    %4392 = vmatprep.subr.mxu0 0.0
    %4393 = vmatpush1.msra.mxu0 0.0
    %4394 = vmatprep.subr.mxu0 0.0
    %4395 = vmatpush1.msra.mxu0 0.0
    %4396 = vmatprep.subr.mxu0 0.0
    %4397 = vmatpush1.msra.mxu0 0.0
    %4398 = vmatprep.subr.mxu0 0.0
    %4399 = vmatpush1.msra.mxu0 0.0
    %4400 = vmatprep.subr.mxu0 0.0
    %4401 = vmatpush1.msra.mxu0 0.0
    %4402 = vmatprep.subr.mxu0 0.0
    %4403 = vmatpush1.msra.mxu0 0.0
    %4404 = vmatprep.subr.mxu0 0.0
    %4405 = vmatpush1.msra.mxu0 0.0
    %4406 = vmatprep.subr.mxu0 0.0
    %4407 = vmatpush1.msra.mxu0 0.0
    %4408 = vmatprep.subr.mxu0 0.0
    %4409 = vmatpush1.msra.mxu0 0.0
    %4410 = vmatprep.subr.mxu0 0.0
    %4411 = vmatpush1.msra.mxu0 0.0
    %4412 = vmatprep.subr.mxu0 0.0
    %4413 = vmatpush1.msra.mxu0 0.0
    %4414 = vmatprep.subr.mxu0 0.0
    %4415 = vmatpush1.msra.mxu0 0.0
    %4416 = vmatprep.subr.mxu0 0.0
    %4417 = vmatpush1.msra.mxu0 0.0
    %4418 = vmatprep.subr.mxu0 0.0
    %4419 = vmatpush1.msra.mxu0 0.0
    %4420 = vmatprep.subr.mxu0 0.0
    %4421 = vmatpush1.msra.mxu0 0.0
    %4422 = vmatprep.subr.mxu0 0.0
    %4423 = vmatpush1.msra.mxu0 0.0
    %4424 = vmatprep.subr.mxu0 0.0
    %4425 = vmatpush1.msra.mxu0 0.0
    %4426 = vmatprep.subr.mxu0 0.0
    %4427 = vmatpush1.msra.mxu0 0.0
    %4428 = vmatprep.subr.mxu0 0.0
    %4429 = vmatpush1.msra.mxu0 0.0
    %4430 = vmatprep.subr.mxu0 0.0
    %4431 = vmatpush1.msra.mxu0 0.0
    %4432 = vmatprep.subr.mxu0 0.0
    %4433 = vmatpush1.msra.mxu0 0.0
    %4434 = vmatprep.subr.mxu0 0.0
    %4435 = vmatpush1.msra.mxu0 0.0
    %4436 = vmatprep.subr.mxu0 0.0
    %4437 = vmatpush1.msra.mxu0 0.0
    %4438 = vmatprep.subr.mxu0 0.0
    %4439 = vmatpush1.msra.mxu0 0.0
    %4440 = vmatprep.subr.mxu0 0.0
    %4441 = vmatpush1.msra.mxu0 0.0
    %4442 = vmatprep.subr.mxu0 0.0
    %4443 = vmatpush1.msra.mxu0 0.0
    %4444 = vmatprep.subr.mxu0 0.0
    %4445 = vmatpush1.msra.mxu0 0.0
    %4446 = vmatprep.mubr.f32.mxu0 0.0
    %4447 = vmatmul.mubr.f32.gmra.mrb[0].mxu0 %v4380
    %v4448 = vpop.f32.mrb[0].mxu0
    %v4449 = vadd.f32 0.0, %v4448
    %v4450 = vpop.f32.mrb[0].mxu0
    %4451 = vdwg.mxu0
    %v4452 = vadd.f32 %v2983, %v4449
    %v4453 = vadd.f32 %v2984, %v4449
    %v4454 = vadd.f32 %v2985, %v4449
    %v4455 = vadd.f32 %v2986, %v4449
    %v4456 = vadd.f32 %v2987, %v4449
    %v4457 = vadd.f32 %v2988, %v4449
    %v4458 = vadd.f32 %v2989, %v4449
    %v4459 = vadd.f32 %v2990, %v4449
    %v4460 = vtanh.pop %v4452
    %v4461 = vtanh.pop %v4453
    %v4462 = vtanh.pop %v4454
    %v4463 = vtanh.pop %v4455
    %v4464 = vtanh.pop %v4456
    %v4465 = vtanh.pop %v4457
    %v4466 = vtanh.pop %v4458
    %v4467 = vtanh.pop %v4459
    %v4468 = vmul.f32 %v4460, %v3102
    %v4469 = vmul.f32 %v4461, %v3102
    %v4470 = vmul.f32 %v4462, %v3102
    %v4471 = vmul.f32 %v4463, %v3102
    %v4472 = vmul.f32 %v4464, %v3102
    %v4473 = vmul.f32 %v4465, %v3102
    %v4474 = vmul.f32 %v4466, %v3102
    %v4475 = vmul.f32 %v4467, %v3102
    %v4476 = vsel %vm3112, %v4468, 0.0
    %4477 = vadd.xlane.f32.xlu0 %v4476
    %v4478 = vpop.xlane.xlu0 %4477
    %v4479 = vsel %vm3112, %v4469, 0.0
    %4480 = vadd.xlane.f32.xlu0 %v4479
    %v4481 = vpop.xlane.xlu0 %4480
    %v4482 = vsel %vm3112, %v4470, 0.0
    %4483 = vadd.xlane.f32.xlu0 %v4482
    %v4484 = vpop.xlane.xlu0 %4483
    %v4485 = vsel %vm3112, %v4471, 0.0
    %4486 = vadd.xlane.f32.xlu0 %v4485
    %v4487 = vpop.xlane.xlu0 %4486
    %v4488 = vsel %vm3112, %v4472, 0.0
    %4489 = vadd.xlane.f32.xlu0 %v4488
    %v4490 = vpop.xlane.xlu0 %4489
    %v4491 = vsel %vm3112, %v4473, 0.0
    %4492 = vadd.xlane.f32.xlu0 %v4491
    %v4493 = vpop.xlane.xlu0 %4492
    %v4494 = vsel %vm3112, %v4474, 0.0
    %4495 = vadd.xlane.f32.xlu0 %v4494
    %v4496 = vpop.xlane.xlu0 %4495
    %v4497 = vsel %vm3112, %v4475, 0.0
    %4498 = vadd.xlane.f32.xlu0 %v4497
    %v4499 = vpop.xlane.xlu0 %4498
    %v4508 = vlaneseq
    %v4509 = vshrl.u32 %v4508, 7
    %v4510 = vsub.s32 %v304, %v4509
    %v4511 = vrot.slane %v4478, %v4510
    %v4512 = vlaneseq
    %v4513 = vshrl.u32 %v4512, 7
    %v4514 = vsub.s32 %v304, %v4513
    %v4515 = vrot.slane %v4481, %v4514
    %v4516 = vlaneseq
    %v4517 = vshrl.u32 %v4516, 7
    %v4518 = vsub.s32 %v304, %v4517
    %v4519 = vrot.slane %v4484, %v4518
    %v4520 = vlaneseq
    %v4521 = vshrl.u32 %v4520, 7
    %v4522 = vsub.s32 %v304, %v4521
    %v4523 = vrot.slane %v4487, %v4522
    %v4524 = vlaneseq
    %v4525 = vshrl.u32 %v4524, 7
    %v4526 = vsub.s32 %v304, %v4525
    %v4527 = vrot.slane %v4490, %v4526
    %v4528 = vlaneseq
    %v4529 = vshrl.u32 %v4528, 7
    %v4530 = vsub.s32 %v304, %v4529
    %v4531 = vrot.slane %v4493, %v4530
    %v4532 = vlaneseq
    %v4533 = vshrl.u32 %v4532, 7
    %v4534 = vsub.s32 %v304, %v4533
    %v4535 = vrot.slane %v4496, %v4534
    %v4536 = vlaneseq
    %v4537 = vshrl.u32 %v4536, 7
    %v4538 = vsub.s32 %v304, %v4537
    %v4539 = vrot.slane %v4499, %v4538
    %v4540 = vsel %vm3178, %v4515, %v4511
    %v4541 = vsel %vm3180, %v4519, %v4540
    %v4542 = vsel %vm3182, %v4523, %v4541
    %v4543 = vsel %vm3184, %v4527, %v4542
    %v4544 = vsel %vm3186, %v4531, %v4543
    %v4545 = vsel %vm3188, %v4535, %v4544
    %v4546 = vsel %vm3190, %v4539, %v4545
    %v4548 = vsel %vm3137, %v4546, -1e+10
    %v4549 = vsel %vm3194, %v4548, -inf
    %v4550 = vrot.slane %v4549, 4
    %v4551 = vmax.f32 %v4549, %v4550
    %v4552 = vrot.slane %v4551, 2
    %v4553 = vmax.f32 %v4551, %v4552
    %v4554 = vrot.slane %v4553, 1
    %v4555 = vmax.f32 %v4553, %v4554
    %v4556 = vsub.f32 %v4548, %v4555
    %v4557 = vmul.f32 %v4556, 1.442695
    %v4558 = vpow.pop %v4557
    %v4559 = vsel %vm3194, %v4558, 0.0
    %v4560 = vrot.slane %v4559, 4
    %v4561 = vadd.f32 %v4559, %v4560
    %v4562 = vrot.slane %v4561, 2
    %v4563 = vadd.f32 %v4561, %v4562
    %v4564 = vrot.slane %v4563, 1
    %v4565 = vadd.f32 %v4563, %v4564
    %v4566 = vrcp.pop %v4565
    %v4567 = vmul.f32 %v4558, %v4566
    %v4568 = vlaneseq
    %v4569 = vshrl.u32 %v4568, 7
    %v4570 = vsub.s32 0, %v4569
    %v4571 = vrot.slane %v4567, %v4570
    %4573 = vbcast.lane.b32.xlu0 %v4571, 256
    %v4574 = vpop.permute.xlu0 %4573
    %v4575 = vlaneseq
    %v4576 = vshrl.u32 %v4575, 7
    %v4577 = vsub.s32 1, %v4576
    %v4578 = vrot.slane %v4567, %v4577
    %4580 = vbcast.lane.b32.xlu0 %v4578, 256
    %v4581 = vpop.permute.xlu0 %4580
    %v4582 = vlaneseq
    %v4583 = vshrl.u32 %v4582, 7
    %v4584 = vsub.s32 2, %v4583
    %v4585 = vrot.slane %v4567, %v4584
    %4587 = vbcast.lane.b32.xlu0 %v4585, 256
    %v4588 = vpop.permute.xlu0 %4587
    %v4589 = vlaneseq
    %v4590 = vshrl.u32 %v4589, 7
    %v4591 = vsub.s32 3, %v4590
    %v4592 = vrot.slane %v4567, %v4591
    %4594 = vbcast.lane.b32.xlu0 %v4592, 256
    %v4595 = vpop.permute.xlu0 %4594
    %v4596 = vlaneseq
    %v4597 = vshrl.u32 %v4596, 7
    %v4598 = vsub.s32 4, %v4597
    %v4599 = vrot.slane %v4567, %v4598
    %4601 = vbcast.lane.b32.xlu0 %v4599, 256
    %v4602 = vpop.permute.xlu0 %4601
    %v4603 = vlaneseq
    %v4604 = vshrl.u32 %v4603, 7
    %v4605 = vsub.s32 5, %v4604
    %v4606 = vrot.slane %v4567, %v4605
    %4608 = vbcast.lane.b32.xlu0 %v4606, 256
    %v4609 = vpop.permute.xlu0 %4608
    %v4610 = vlaneseq
    %v4611 = vshrl.u32 %v4610, 7
    %v4612 = vsub.s32 6, %v4611
    %v4613 = vrot.slane %v4567, %v4612
    %4615 = vbcast.lane.b32.xlu0 %v4613, 256
    %v4616 = vpop.permute.xlu0 %4615
    %v4617 = vlaneseq
    %v4618 = vshrl.u32 %v4617, 7
    %v4619 = vsub.s32 7, %v4618
    %v4620 = vrot.slane %v4567, %v4619
    %4622 = vbcast.lane.b32.xlu0 %v4620, 256
    %v4623 = vpop.permute.xlu0 %4622
    %v4624 = vmul.f32 %v4574, %v2392
    %v4625 = vmul.f32 %v4581, %v2393
    %v4626 = vmul.f32 %v4588, %v2394
    %v4627 = vmul.f32 %v4595, %v2395
    %v4628 = vmul.f32 %v4602, %v2396
    %v4629 = vmul.f32 %v4609, %v2397
    %v4630 = vmul.f32 %v4616, %v2398
    %v4631 = vmul.f32 %v4623, %v2399
    %v4632 = vsel %vm3112, %v4624, 0.0
    %v4633 = vsel %vm3112, %v4625, 0.0
    %v4634 = vadd.f32 %v4632, %v4633
    %v4635 = vsel %vm3112, %v4626, 0.0
    %v4636 = vadd.f32 %v4634, %v4635
    %v4637 = vsel %vm3112, %v4627, 0.0
    %v4638 = vadd.f32 %v4636, %v4637
    %v4639 = vsel %vm3112, %v4628, 0.0
    %v4640 = vadd.f32 %v4638, %v4639
    %v4641 = vsel %vm3112, %v4629, 0.0
    %v4642 = vadd.f32 %v4640, %v4641
    %v4643 = vsel %vm3112, %v4630, 0.0
    %v4644 = vadd.f32 %v4642, %v4643
    %v4645 = vsel %vm3112, %v4631, 0.0
    %v4646 = vadd.f32 %v4644, %v4645
    %v4648 = vsel %vm2852, %v4646, 0
    %4650 = vmatprep.subr.mxu0 0.0
    %4651 = vmatpush1.msra.mxu0 %v2999
    %4652 = vmatprep.subr.mxu0 0.0
    %4653 = vmatpush1.msra.mxu0 %v3000
    %4654 = vmatprep.subr.mxu0 0.0
    %4655 = vmatpush1.msra.mxu0 %v3001
    %4656 = vmatprep.subr.mxu0 0.0
    %4657 = vmatpush1.msra.mxu0 %v3002
    %4658 = vmatprep.subr.mxu0 0.0
    %4659 = vmatpush1.msra.mxu0 0.0
    %4660 = vmatprep.subr.mxu0 0.0
    %4661 = vmatpush1.msra.mxu0 0.0
    %4662 = vmatprep.subr.mxu0 0.0
    %4663 = vmatpush1.msra.mxu0 0.0
    %4664 = vmatprep.subr.mxu0 0.0
    %4665 = vmatpush1.msra.mxu0 0.0
    %4666 = vmatprep.subr.mxu0 0.0
    %4667 = vmatpush1.msra.mxu0 0.0
    %4668 = vmatprep.subr.mxu0 0.0
    %4669 = vmatpush1.msra.mxu0 0.0
    %4670 = vmatprep.subr.mxu0 0.0
    %4671 = vmatpush1.msra.mxu0 0.0
    %4672 = vmatprep.subr.mxu0 0.0
    %4673 = vmatpush1.msra.mxu0 0.0
    %4674 = vmatprep.subr.mxu0 0.0
    %4675 = vmatpush1.msra.mxu0 0.0
    %4676 = vmatprep.subr.mxu0 0.0
    %4677 = vmatpush1.msra.mxu0 0.0
    %4678 = vmatprep.subr.mxu0 0.0
    %4679 = vmatpush1.msra.mxu0 0.0
    %4680 = vmatprep.subr.mxu0 0.0
    %4681 = vmatpush1.msra.mxu0 0.0
    %4682 = vmatprep.subr.mxu0 0.0
    %4683 = vmatpush1.msra.mxu0 0.0
    %4684 = vmatprep.subr.mxu0 0.0
    %4685 = vmatpush1.msra.mxu0 0.0
    %4686 = vmatprep.subr.mxu0 0.0
    %4687 = vmatpush1.msra.mxu0 0.0
    %4688 = vmatprep.subr.mxu0 0.0
    %4689 = vmatpush1.msra.mxu0 0.0
    %4690 = vmatprep.subr.mxu0 0.0
    %4691 = vmatpush1.msra.mxu0 0.0
    %4692 = vmatprep.subr.mxu0 0.0
    %4693 = vmatpush1.msra.mxu0 0.0
    %4694 = vmatprep.subr.mxu0 0.0
    %4695 = vmatpush1.msra.mxu0 0.0
    %4696 = vmatprep.subr.mxu0 0.0
    %4697 = vmatpush1.msra.mxu0 0.0
    %4698 = vmatprep.subr.mxu0 0.0
    %4699 = vmatpush1.msra.mxu0 0.0
    %4700 = vmatprep.subr.mxu0 0.0
    %4701 = vmatpush1.msra.mxu0 0.0
    %4702 = vmatprep.subr.mxu0 0.0
    %4703 = vmatpush1.msra.mxu0 0.0
    %4704 = vmatprep.subr.mxu0 0.0
    %4705 = vmatpush1.msra.mxu0 0.0
    %4706 = vmatprep.subr.mxu0 0.0
    %4707 = vmatpush1.msra.mxu0 0.0
    %4708 = vmatprep.subr.mxu0 0.0
    %4709 = vmatpush1.msra.mxu0 0.0
    %4710 = vmatprep.subr.mxu0 0.0
    %4711 = vmatpush1.msra.mxu0 0.0
    %4712 = vmatprep.subr.mxu0 0.0
    %4713 = vmatpush1.msra.mxu0 0.0
    %4714 = vmatprep.mubr.f32.mxu0 0.0
    %4715 = vmatmul.mubr.f32.gmra.mrb[0].mxu0 %v4648
    %v4716 = vpop.f32.mrb[0].mxu0
    %v4717 = vadd.f32 0.0, %v4716
    %v4718 = vpop.f32.mrb[0].mxu0
    %4719 = vdwg.mxu0
    %v4721 = vrot.slane %v4717, 2
    %v4723 = vadd.f32 %v2798, %v4721
    %v4724 = vadd.f32 %v4723, %v3371
    %4725 = vmatprep.subr.mxu0 0.0
    %4726 = vmatpush1.msra.mxu0 %v3003
    %4727 = vmatprep.subr.mxu0 0.0
    %4728 = vmatpush1.msra.mxu0 %v3004
    %4729 = vmatprep.subr.mxu0 0.0
    %4730 = vmatpush1.msra.mxu0 %v3005
    %4731 = vmatprep.subr.mxu0 0.0
    %4732 = vmatpush1.msra.mxu0 %v3006
    %4733 = vmatprep.subr.mxu0 0.0
    %4734 = vmatpush1.msra.mxu0 0.0
    %4735 = vmatprep.subr.mxu0 0.0
    %4736 = vmatpush1.msra.mxu0 0.0
    %4737 = vmatprep.subr.mxu0 0.0
    %4738 = vmatpush1.msra.mxu0 0.0
    %4739 = vmatprep.subr.mxu0 0.0
    %4740 = vmatpush1.msra.mxu0 0.0
    %4741 = vmatprep.subr.mxu0 0.0
    %4742 = vmatpush1.msra.mxu0 0.0
    %4743 = vmatprep.subr.mxu0 0.0
    %4744 = vmatpush1.msra.mxu0 0.0
    %4745 = vmatprep.subr.mxu0 0.0
    %4746 = vmatpush1.msra.mxu0 0.0
    %4747 = vmatprep.subr.mxu0 0.0
    %4748 = vmatpush1.msra.mxu0 0.0
    %4749 = vmatprep.subr.mxu0 0.0
    %4750 = vmatpush1.msra.mxu0 0.0
    %4751 = vmatprep.subr.mxu0 0.0
    %4752 = vmatpush1.msra.mxu0 0.0
    %4753 = vmatprep.subr.mxu0 0.0
    %4754 = vmatpush1.msra.mxu0 0.0
    %4755 = vmatprep.subr.mxu0 0.0
    %4756 = vmatpush1.msra.mxu0 0.0
    %4757 = vmatprep.subr.mxu0 0.0
    %4758 = vmatpush1.msra.mxu0 0.0
    %4759 = vmatprep.subr.mxu0 0.0
    %4760 = vmatpush1.msra.mxu0 0.0
    %4761 = vmatprep.subr.mxu0 0.0
    %4762 = vmatpush1.msra.mxu0 0.0
    %4763 = vmatprep.subr.mxu0 0.0
    %4764 = vmatpush1.msra.mxu0 0.0
    %4765 = vmatprep.subr.mxu0 0.0
    %4766 = vmatpush1.msra.mxu0 0.0
    %4767 = vmatprep.subr.mxu0 0.0
    %4768 = vmatpush1.msra.mxu0 0.0
    %4769 = vmatprep.subr.mxu0 0.0
    %4770 = vmatpush1.msra.mxu0 0.0
    %4771 = vmatprep.subr.mxu0 0.0
    %4772 = vmatpush1.msra.mxu0 0.0
    %4773 = vmatprep.subr.mxu0 0.0
    %4774 = vmatpush1.msra.mxu0 0.0
    %4775 = vmatprep.subr.mxu0 0.0
    %4776 = vmatpush1.msra.mxu0 0.0
    %4777 = vmatprep.subr.mxu0 0.0
    %4778 = vmatpush1.msra.mxu0 0.0
    %4779 = vmatprep.subr.mxu0 0.0
    %4780 = vmatpush1.msra.mxu0 0.0
    %4781 = vmatprep.subr.mxu0 0.0
    %4782 = vmatpush1.msra.mxu0 0.0
    %4783 = vmatprep.subr.mxu0 0.0
    %4784 = vmatpush1.msra.mxu0 0.0
    %4785 = vmatprep.subr.mxu0 0.0
    %4786 = vmatpush1.msra.mxu0 0.0
    %4787 = vmatprep.subr.mxu0 0.0
    %4788 = vmatpush1.msra.mxu0 0.0
    %4789 = vmatprep.mubr.f32.mxu0 0.0
    %4790 = vmatmul.mubr.f32.gmra.mrb[0].mxu0 %v4380
    %v4791 = vpop.f32.mrb[0].mxu0
    %v4792 = vadd.f32 %v3378, %v4791
    %v4793 = vpop.f32.mrb[0].mxu0
    %4794 = vdwg.mxu0
    %v4796 = vrot.slane %v4792, 2
    %v4798 = vadd.f32 %v4724, %v4796
    %v4799 = vxor.u32 %v4798, 2147483648
    %v4800 = vmul.f32 %v4799, 1.442695
    %v4801 = vpow.pop %v4800
    %v4802 = vadd.f32 %v4801, 1.0
    %v4803 = vrcp.pop %v4802
    %v4804 = vmul.f32 1.0, %v4803
    %4805 = vrot.lane.b32.xlu0 %v4796, 64
    %v4806 = vpop.permute.xlu0 %4805
    %v4808 = vmul.f32 %v4804, %v4806
    %4810 = vrot.lane.b32.xlu0 %v4808, 64
    %v4811 = vpop.permute.xlu0 %4810
    %v4813 = vadd.f32 %v4724, %v4811
    %v4814 = vtanh.pop %v4813
    %v4815 = vsub.f32 1.0, %v4804
    %4817 = vrot.lane.b32.xlu0 %v4814, 96
    %v4818 = vpop.permute.xlu0 %4817
    %v4820 = vmul.f32 %v4815, %v4818
    %v4821 = vrot.slane %v4375, 6
    %v4823 = vmul.f32 %v4804, %v4821
    %v4824 = vadd.f32 %v4820, %v4823
    %v4826 = vrot.slane %v4824, 6
    %4827 = vrot.lane.b32.xlu0 %v4826, 96
    %v4828 = vpop.permute.xlu0 %4827
    %v4829 = vsel %vm2852, %v4828, 0
    %4831 = vmatprep.subr.mxu0 0.0
    %4832 = vmatpush1.msra.mxu0 %v2994
    %4833 = vmatprep.subr.mxu0 0.0
    %4834 = vmatpush1.msra.mxu0 %v2995
    %4835 = vmatprep.subr.mxu0 0.0
    %4836 = vmatpush1.msra.mxu0 %v2996
    %4837 = vmatprep.subr.mxu0 0.0
    %4838 = vmatpush1.msra.mxu0 %v2997
    %4839 = vmatprep.subr.mxu0 0.0
    %4840 = vmatpush1.msra.mxu0 0.0
    %4841 = vmatprep.subr.mxu0 0.0
    %4842 = vmatpush1.msra.mxu0 0.0
    %4843 = vmatprep.subr.mxu0 0.0
    %4844 = vmatpush1.msra.mxu0 0.0
    %4845 = vmatprep.subr.mxu0 0.0
    %4846 = vmatpush1.msra.mxu0 0.0
    %4847 = vmatprep.subr.mxu0 0.0
    %4848 = vmatpush1.msra.mxu0 0.0
    %4849 = vmatprep.subr.mxu0 0.0
    %4850 = vmatpush1.msra.mxu0 0.0
    %4851 = vmatprep.subr.mxu0 0.0
    %4852 = vmatpush1.msra.mxu0 0.0
    %4853 = vmatprep.subr.mxu0 0.0
    %4854 = vmatpush1.msra.mxu0 0.0
    %4855 = vmatprep.subr.mxu0 0.0
    %4856 = vmatpush1.msra.mxu0 0.0
    %4857 = vmatprep.subr.mxu0 0.0
    %4858 = vmatpush1.msra.mxu0 0.0
    %4859 = vmatprep.subr.mxu0 0.0
    %4860 = vmatpush1.msra.mxu0 0.0
    %4861 = vmatprep.subr.mxu0 0.0
    %4862 = vmatpush1.msra.mxu0 0.0
    %4863 = vmatprep.subr.mxu0 0.0
    %4864 = vmatpush1.msra.mxu0 0.0
    %4865 = vmatprep.subr.mxu0 0.0
    %4866 = vmatpush1.msra.mxu0 0.0
    %4867 = vmatprep.subr.mxu0 0.0
    %4868 = vmatpush1.msra.mxu0 0.0
    %4869 = vmatprep.subr.mxu0 0.0
    %4870 = vmatpush1.msra.mxu0 0.0
    %4871 = vmatprep.subr.mxu0 0.0
    %4872 = vmatpush1.msra.mxu0 0.0
    %4873 = vmatprep.subr.mxu0 0.0
    %4874 = vmatpush1.msra.mxu0 0.0
    %4875 = vmatprep.subr.mxu0 0.0
    %4876 = vmatpush1.msra.mxu0 0.0
    %4877 = vmatprep.subr.mxu0 0.0
    %4878 = vmatpush1.msra.mxu0 0.0
    %4879 = vmatprep.subr.mxu0 0.0
    %4880 = vmatpush1.msra.mxu0 0.0
    %4881 = vmatprep.subr.mxu0 0.0
    %4882 = vmatpush1.msra.mxu0 0.0
    %4883 = vmatprep.subr.mxu0 0.0
    %4884 = vmatpush1.msra.mxu0 0.0
    %4885 = vmatprep.subr.mxu0 0.0
    %4886 = vmatpush1.msra.mxu0 0.0
    %4887 = vmatprep.subr.mxu0 0.0
    %4888 = vmatpush1.msra.mxu0 0.0
    %4889 = vmatprep.subr.mxu0 0.0
    %4890 = vmatpush1.msra.mxu0 0.0
    %4891 = vmatprep.subr.mxu0 0.0
    %4892 = vmatpush1.msra.mxu0 0.0
    %4893 = vmatprep.subr.mxu0 0.0
    %4894 = vmatpush1.msra.mxu0 0.0
    %4895 = vmatprep.mubr.f32.mxu0 0.0
    %4896 = vmatmul.mubr.f32.gmra.mrb[0].mxu0 %v4829
    %v4897 = vpop.f32.mrb[0].mxu0
    %v4898 = vadd.f32 0.0, %v4897
    %v4899 = vpop.f32.mrb[0].mxu0
    %4900 = vdwg.mxu0
    %v4901 = vadd.f32 %v2983, %v4898
    %v4902 = vadd.f32 %v2984, %v4898
    %v4903 = vadd.f32 %v2985, %v4898
    %v4904 = vadd.f32 %v2986, %v4898
    %v4905 = vadd.f32 %v2987, %v4898
    %v4906 = vadd.f32 %v2988, %v4898
    %v4907 = vadd.f32 %v2989, %v4898
    %v4908 = vadd.f32 %v2990, %v4898
    %v4909 = vtanh.pop %v4901
    %v4910 = vtanh.pop %v4902
    %v4911 = vtanh.pop %v4903
    %v4912 = vtanh.pop %v4904
    %v4913 = vtanh.pop %v4905
    %v4914 = vtanh.pop %v4906
    %v4915 = vtanh.pop %v4907
    %v4916 = vtanh.pop %v4908
    %v4917 = vmul.f32 %v4909, %v3102
    %v4918 = vmul.f32 %v4910, %v3102
    %v4919 = vmul.f32 %v4911, %v3102
    %v4920 = vmul.f32 %v4912, %v3102
    %v4921 = vmul.f32 %v4913, %v3102
    %v4922 = vmul.f32 %v4914, %v3102
    %v4923 = vmul.f32 %v4915, %v3102
    %v4924 = vmul.f32 %v4916, %v3102
    %v4925 = vsel %vm3112, %v4917, 0.0
    %4926 = vadd.xlane.f32.xlu0 %v4925
    %v4927 = vpop.xlane.xlu0 %4926
    %v4928 = vsel %vm3112, %v4918, 0.0
    %4929 = vadd.xlane.f32.xlu0 %v4928
    %v4930 = vpop.xlane.xlu0 %4929
    %v4931 = vsel %vm3112, %v4919, 0.0
    %4932 = vadd.xlane.f32.xlu0 %v4931
    %v4933 = vpop.xlane.xlu0 %4932
    %v4934 = vsel %vm3112, %v4920, 0.0
    %4935 = vadd.xlane.f32.xlu0 %v4934
    %v4936 = vpop.xlane.xlu0 %4935
    %v4937 = vsel %vm3112, %v4921, 0.0
    %4938 = vadd.xlane.f32.xlu0 %v4937
    %v4939 = vpop.xlane.xlu0 %4938
    %v4940 = vsel %vm3112, %v4922, 0.0
    %4941 = vadd.xlane.f32.xlu0 %v4940
    %v4942 = vpop.xlane.xlu0 %4941
    %v4943 = vsel %vm3112, %v4923, 0.0
    %4944 = vadd.xlane.f32.xlu0 %v4943
    %v4945 = vpop.xlane.xlu0 %4944
    %v4946 = vsel %vm3112, %v4924, 0.0
    %4947 = vadd.xlane.f32.xlu0 %v4946
    %v4948 = vpop.xlane.xlu0 %4947
    %v4957 = vlaneseq
    %v4958 = vshrl.u32 %v4957, 7
    %v4959 = vsub.s32 %v304, %v4958
    %v4960 = vrot.slane %v4927, %v4959
    %v4961 = vlaneseq
    %v4962 = vshrl.u32 %v4961, 7
    %v4963 = vsub.s32 %v304, %v4962
    %v4964 = vrot.slane %v4930, %v4963
    %v4965 = vlaneseq
    %v4966 = vshrl.u32 %v4965, 7
    %v4967 = vsub.s32 %v304, %v4966
    %v4968 = vrot.slane %v4933, %v4967
    %v4969 = vlaneseq
    %v4970 = vshrl.u32 %v4969, 7
    %v4971 = vsub.s32 %v304, %v4970
    %v4972 = vrot.slane %v4936, %v4971
    %v4973 = vlaneseq
    %v4974 = vshrl.u32 %v4973, 7
    %v4975 = vsub.s32 %v304, %v4974
    %v4976 = vrot.slane %v4939, %v4975
    %v4977 = vlaneseq
    %v4978 = vshrl.u32 %v4977, 7
    %v4979 = vsub.s32 %v304, %v4978
    %v4980 = vrot.slane %v4942, %v4979
    %v4981 = vlaneseq
    %v4982 = vshrl.u32 %v4981, 7
    %v4983 = vsub.s32 %v304, %v4982
    %v4984 = vrot.slane %v4945, %v4983
    %v4985 = vlaneseq
    %v4986 = vshrl.u32 %v4985, 7
    %v4987 = vsub.s32 %v304, %v4986
    %v4988 = vrot.slane %v4948, %v4987
    %v4989 = vsel %vm3178, %v4964, %v4960
    %v4990 = vsel %vm3180, %v4968, %v4989
    %v4991 = vsel %vm3182, %v4972, %v4990
    %v4992 = vsel %vm3184, %v4976, %v4991
    %v4993 = vsel %vm3186, %v4980, %v4992
    %v4994 = vsel %vm3188, %v4984, %v4993
    %v4995 = vsel %vm3190, %v4988, %v4994
    %v4997 = vsel %vm3137, %v4995, -1e+10
    %v4998 = vsel %vm3194, %v4997, -inf
    %v4999 = vrot.slane %v4998, 4
    %v5000 = vmax.f32 %v4998, %v4999
    %v5001 = vrot.slane %v5000, 2
    %v5002 = vmax.f32 %v5000, %v5001
    %v5003 = vrot.slane %v5002, 1
    %v5004 = vmax.f32 %v5002, %v5003
    %v5005 = vsub.f32 %v4997, %v5004
    %v5006 = vmul.f32 %v5005, 1.442695
    %v5007 = vpow.pop %v5006
    %v5008 = vsel %vm3194, %v5007, 0.0
    %v5009 = vrot.slane %v5008, 4
    %v5010 = vadd.f32 %v5008, %v5009
    %v5011 = vrot.slane %v5010, 2
    %v5012 = vadd.f32 %v5010, %v5011
    %v5013 = vrot.slane %v5012, 1
    %v5014 = vadd.f32 %v5012, %v5013
    %v5015 = vrcp.pop %v5014
    %v5016 = vmul.f32 %v5007, %v5015
    %v5017 = vlaneseq
    %v5018 = vshrl.u32 %v5017, 7
    %v5019 = vsub.s32 0, %v5018
    %v5020 = vrot.slane %v5016, %v5019
    %5022 = vbcast.lane.b32.xlu0 %v5020, 256
    %v5023 = vpop.permute.xlu0 %5022
    %v5024 = vlaneseq
    %v5025 = vshrl.u32 %v5024, 7
    %v5026 = vsub.s32 1, %v5025
    %v5027 = vrot.slane %v5016, %v5026
    %5029 = vbcast.lane.b32.xlu0 %v5027, 256
    %v5030 = vpop.permute.xlu0 %5029
    %v5031 = vlaneseq
    %v5032 = vshrl.u32 %v5031, 7
    %v5033 = vsub.s32 2, %v5032
    %v5034 = vrot.slane %v5016, %v5033
    %5036 = vbcast.lane.b32.xlu0 %v5034, 256
    %v5037 = vpop.permute.xlu0 %5036
    %v5038 = vlaneseq
    %v5039 = vshrl.u32 %v5038, 7
    %v5040 = vsub.s32 3, %v5039
    %v5041 = vrot.slane %v5016, %v5040
    %5043 = vbcast.lane.b32.xlu0 %v5041, 256
    %v5044 = vpop.permute.xlu0 %5043
    %v5045 = vlaneseq
    %v5046 = vshrl.u32 %v5045, 7
    %v5047 = vsub.s32 4, %v5046
    %v5048 = vrot.slane %v5016, %v5047
    %5050 = vbcast.lane.b32.xlu0 %v5048, 256
    %v5051 = vpop.permute.xlu0 %5050
    %v5052 = vlaneseq
    %v5053 = vshrl.u32 %v5052, 7
    %v5054 = vsub.s32 5, %v5053
    %v5055 = vrot.slane %v5016, %v5054
    %5057 = vbcast.lane.b32.xlu0 %v5055, 256
    %v5058 = vpop.permute.xlu0 %5057
    %v5059 = vlaneseq
    %v5060 = vshrl.u32 %v5059, 7
    %v5061 = vsub.s32 6, %v5060
    %v5062 = vrot.slane %v5016, %v5061
    %5064 = vbcast.lane.b32.xlu0 %v5062, 256
    %v5065 = vpop.permute.xlu0 %5064
    %v5066 = vlaneseq
    %v5067 = vshrl.u32 %v5066, 7
    %v5068 = vsub.s32 7, %v5067
    %v5069 = vrot.slane %v5016, %v5068
    %5071 = vbcast.lane.b32.xlu0 %v5069, 256
    %v5072 = vpop.permute.xlu0 %5071
    %v5073 = vmul.f32 %v5023, %v2392
    %v5074 = vmul.f32 %v5030, %v2393
    %v5075 = vmul.f32 %v5037, %v2394
    %v5076 = vmul.f32 %v5044, %v2395
    %v5077 = vmul.f32 %v5051, %v2396
    %v5078 = vmul.f32 %v5058, %v2397
    %v5079 = vmul.f32 %v5065, %v2398
    %v5080 = vmul.f32 %v5072, %v2399
    %v5081 = vsel %vm3112, %v5073, 0.0
    %v5082 = vsel %vm3112, %v5074, 0.0
    %v5083 = vadd.f32 %v5081, %v5082
    %v5084 = vsel %vm3112, %v5075, 0.0
    %v5085 = vadd.f32 %v5083, %v5084
    %v5086 = vsel %vm3112, %v5076, 0.0
    %v5087 = vadd.f32 %v5085, %v5086
    %v5088 = vsel %vm3112, %v5077, 0.0
    %v5089 = vadd.f32 %v5087, %v5088
    %v5090 = vsel %vm3112, %v5078, 0.0
    %v5091 = vadd.f32 %v5089, %v5090
    %v5092 = vsel %vm3112, %v5079, 0.0
    %v5093 = vadd.f32 %v5091, %v5092
    %v5094 = vsel %vm3112, %v5080, 0.0
    %v5095 = vadd.f32 %v5093, %v5094
    %v5097 = vsel %vm2852, %v5095, 0
    %5099 = vmatprep.subr.mxu0 0.0
    %5100 = vmatpush1.msra.mxu0 %v2999
    %5101 = vmatprep.subr.mxu0 0.0
    %5102 = vmatpush1.msra.mxu0 %v3000
    %5103 = vmatprep.subr.mxu0 0.0
    %5104 = vmatpush1.msra.mxu0 %v3001
    %5105 = vmatprep.subr.mxu0 0.0
    %5106 = vmatpush1.msra.mxu0 %v3002
    %5107 = vmatprep.subr.mxu0 0.0
    %5108 = vmatpush1.msra.mxu0 0.0
    %5109 = vmatprep.subr.mxu0 0.0
    %5110 = vmatpush1.msra.mxu0 0.0
    %5111 = vmatprep.subr.mxu0 0.0
    %5112 = vmatpush1.msra.mxu0 0.0
    %5113 = vmatprep.subr.mxu0 0.0
    %5114 = vmatpush1.msra.mxu0 0.0
    %5115 = vmatprep.subr.mxu0 0.0
    %5116 = vmatpush1.msra.mxu0 0.0
    %5117 = vmatprep.subr.mxu0 0.0
    %5118 = vmatpush1.msra.mxu0 0.0
    %5119 = vmatprep.subr.mxu0 0.0
    %5120 = vmatpush1.msra.mxu0 0.0
    %5121 = vmatprep.subr.mxu0 0.0
    %5122 = vmatpush1.msra.mxu0 0.0
    %5123 = vmatprep.subr.mxu0 0.0
    %5124 = vmatpush1.msra.mxu0 0.0
    %5125 = vmatprep.subr.mxu0 0.0
    %5126 = vmatpush1.msra.mxu0 0.0
    %5127 = vmatprep.subr.mxu0 0.0
    %5128 = vmatpush1.msra.mxu0 0.0
    %5129 = vmatprep.subr.mxu0 0.0
    %5130 = vmatpush1.msra.mxu0 0.0
    %5131 = vmatprep.subr.mxu0 0.0
    %5132 = vmatpush1.msra.mxu0 0.0
    %5133 = vmatprep.subr.mxu0 0.0
    %5134 = vmatpush1.msra.mxu0 0.0
    %5135 = vmatprep.subr.mxu0 0.0
    %5136 = vmatpush1.msra.mxu0 0.0
    %5137 = vmatprep.subr.mxu0 0.0
    %5138 = vmatpush1.msra.mxu0 0.0
    %5139 = vmatprep.subr.mxu0 0.0
    %5140 = vmatpush1.msra.mxu0 0.0
    %5141 = vmatprep.subr.mxu0 0.0
    %5142 = vmatpush1.msra.mxu0 0.0
    %5143 = vmatprep.subr.mxu0 0.0
    %5144 = vmatpush1.msra.mxu0 0.0
    %5145 = vmatprep.subr.mxu0 0.0
    %5146 = vmatpush1.msra.mxu0 0.0
    %5147 = vmatprep.subr.mxu0 0.0
    %5148 = vmatpush1.msra.mxu0 0.0
    %5149 = vmatprep.subr.mxu0 0.0
    %5150 = vmatpush1.msra.mxu0 0.0
    %5151 = vmatprep.subr.mxu0 0.0
    %5152 = vmatpush1.msra.mxu0 0.0
    %5153 = vmatprep.subr.mxu0 0.0
    %5154 = vmatpush1.msra.mxu0 0.0
    %5155 = vmatprep.subr.mxu0 0.0
    %5156 = vmatpush1.msra.mxu0 0.0
    %5157 = vmatprep.subr.mxu0 0.0
    %5158 = vmatpush1.msra.mxu0 0.0
    %5159 = vmatprep.subr.mxu0 0.0
    %5160 = vmatpush1.msra.mxu0 0.0
    %5161 = vmatprep.subr.mxu0 0.0
    %5162 = vmatpush1.msra.mxu0 0.0
    %5163 = vmatprep.mubr.f32.mxu0 0.0
    %5164 = vmatmul.mubr.f32.gmra.mrb[0].mxu0 %v5097
    %v5165 = vpop.f32.mrb[0].mxu0
    %v5166 = vadd.f32 0.0, %v5165
    %v5167 = vpop.f32.mrb[0].mxu0
    %5168 = vdwg.mxu0
    %v5169 = vadd.f32 %v2803, %v5166
    %v5170 = vadd.f32 %v5169, %v3371
    %5171 = vmatprep.subr.mxu0 0.0
    %5172 = vmatpush1.msra.mxu0 %v3003
    %5173 = vmatprep.subr.mxu0 0.0
    %5174 = vmatpush1.msra.mxu0 %v3004
    %5175 = vmatprep.subr.mxu0 0.0
    %5176 = vmatpush1.msra.mxu0 %v3005
    %5177 = vmatprep.subr.mxu0 0.0
    %5178 = vmatpush1.msra.mxu0 %v3006
    %5179 = vmatprep.subr.mxu0 0.0
    %5180 = vmatpush1.msra.mxu0 0.0
    %5181 = vmatprep.subr.mxu0 0.0
    %5182 = vmatpush1.msra.mxu0 0.0
    %5183 = vmatprep.subr.mxu0 0.0
    %5184 = vmatpush1.msra.mxu0 0.0
    %5185 = vmatprep.subr.mxu0 0.0
    %5186 = vmatpush1.msra.mxu0 0.0
    %5187 = vmatprep.subr.mxu0 0.0
    %5188 = vmatpush1.msra.mxu0 0.0
    %5189 = vmatprep.subr.mxu0 0.0
    %5190 = vmatpush1.msra.mxu0 0.0
    %5191 = vmatprep.subr.mxu0 0.0
    %5192 = vmatpush1.msra.mxu0 0.0
    %5193 = vmatprep.subr.mxu0 0.0
    %5194 = vmatpush1.msra.mxu0 0.0
    %5195 = vmatprep.subr.mxu0 0.0
    %5196 = vmatpush1.msra.mxu0 0.0
    %5197 = vmatprep.subr.mxu0 0.0
    %5198 = vmatpush1.msra.mxu0 0.0
    %5199 = vmatprep.subr.mxu0 0.0
    %5200 = vmatpush1.msra.mxu0 0.0
    %5201 = vmatprep.subr.mxu0 0.0
    %5202 = vmatpush1.msra.mxu0 0.0
    %5203 = vmatprep.subr.mxu0 0.0
    %5204 = vmatpush1.msra.mxu0 0.0
    %5205 = vmatprep.subr.mxu0 0.0
    %5206 = vmatpush1.msra.mxu0 0.0
    %5207 = vmatprep.subr.mxu0 0.0
    %5208 = vmatpush1.msra.mxu0 0.0
    %5209 = vmatprep.subr.mxu0 0.0
    %5210 = vmatpush1.msra.mxu0 0.0
    %5211 = vmatprep.subr.mxu0 0.0
    %5212 = vmatpush1.msra.mxu0 0.0
    %5213 = vmatprep.subr.mxu0 0.0
    %5214 = vmatpush1.msra.mxu0 0.0
    %5215 = vmatprep.subr.mxu0 0.0
    %5216 = vmatpush1.msra.mxu0 0.0
    %5217 = vmatprep.subr.mxu0 0.0
    %5218 = vmatpush1.msra.mxu0 0.0
    %5219 = vmatprep.subr.mxu0 0.0
    %5220 = vmatpush1.msra.mxu0 0.0
    %5221 = vmatprep.subr.mxu0 0.0
    %5222 = vmatpush1.msra.mxu0 0.0
    %5223 = vmatprep.subr.mxu0 0.0
    %5224 = vmatpush1.msra.mxu0 0.0
    %5225 = vmatprep.subr.mxu0 0.0
    %5226 = vmatpush1.msra.mxu0 0.0
    %5227 = vmatprep.subr.mxu0 0.0
    %5228 = vmatpush1.msra.mxu0 0.0
    %5229 = vmatprep.subr.mxu0 0.0
    %5230 = vmatpush1.msra.mxu0 0.0
    %5231 = vmatprep.subr.mxu0 0.0
    %5232 = vmatpush1.msra.mxu0 0.0
    %5233 = vmatprep.subr.mxu0 0.0
    %5234 = vmatpush1.msra.mxu0 0.0
    %5235 = vmatprep.mubr.f32.mxu0 0.0
    %5236 = vmatmul.mubr.f32.gmra.mrb[0].mxu0 %v4829
    %v5237 = vpop.f32.mrb[0].mxu0
    %v5238 = vadd.f32 %v3378, %v5237
    %v5239 = vpop.f32.mrb[0].mxu0
    %5240 = vdwg.mxu0
    %v5241 = vadd.f32 %v5170, %v5238
    %v5242 = vxor.u32 %v5241, 2147483648
    %v5243 = vmul.f32 %v5242, 1.442695
    %v5244 = vpow.pop %v5243
    %v5245 = vadd.f32 %v5244, 1.0
    %v5246 = vrcp.pop %v5245
    %v5247 = vmul.f32 1.0, %v5246
    %5249 = vrot.lane.b32.xlu0 %v5238, 64
    %v5250 = vpop.permute.xlu0 %5249
    %v5252 = vmul.f32 %v5247, %v5250
    %5254 = vrot.lane.b32.xlu0 %v5252, 64
    %v5255 = vpop.permute.xlu0 %5254
    %v5257 = vadd.f32 %v5170, %v5255
    %v5258 = vtanh.pop %v5257
    %v5259 = vsub.f32 1.0, %v5247
    %5261 = vrot.lane.b32.xlu0 %v5258, 96
    %v5262 = vpop.permute.xlu0 %5261
    %v5264 = vmul.f32 %v5259, %v5262
    %v5266 = vmul.f32 %v5247, %v4826
    %v5267 = vadd.f32 %v5264, %v5266
    %vm5268 = vcmask 1041408
    %v5269 = vsel %vm5268, %v3478, %v3926
    %v5270 = vsel %vm435, %v5269, %v4375
    %vm5271 = vcmask 1045504
    %v5272 = vsel %vm5271, %v5270, %v4824
    %v5273 = vrot.slane %v3748, 6
    %v5275 = vrot.slane %v4197, 4
    %v5277 = vrot.slane %v4646, 2
    %v5279 = vsel %vm5268, %v3292, %v5273
    %v5280 = vsel %vm435, %v5279, %v5275
    %v5281 = vsel %vm5271, %v5280, %v5277
    %v5282 = vld [vmem:[%s24] sm:$0xff]
    %v5283 = vld [vmem:[%s24 + $0x8] sm:$0xff]
    %v5284 = vld [vmem:[%s24 + $0x10] sm:$0xff]
    %v5285 = vld [vmem:[%s24 + $0x18] sm:$0xff]
    %v5286 = vld [vmem:[%s25] sm:$0xff]
    %v5287 = vld [vmem:[%s25 + $0x8] sm:$0xff]
    %v5288 = vld [vmem:[%s25 + $0x10] sm:$0xff]
    %v5289 = vld [vmem:[%s25 + $0x18] sm:$0xff]
    %v5291 = vsel %vm2852, %v5281, 0
    %5293 = vmatprep.subr.mxu0 0.0
    %5294 = vmatpush1.msra.mxu0 %v5286
    %5295 = vmatprep.subr.mxu0 0.0
    %5296 = vmatpush1.msra.mxu0 %v5287
    %5297 = vmatprep.subr.mxu0 0.0
    %5298 = vmatpush1.msra.mxu0 %v5288
    %5299 = vmatprep.subr.mxu0 0.0
    %5300 = vmatpush1.msra.mxu0 %v5289
    %5301 = vmatprep.subr.mxu0 0.0
    %5302 = vmatpush1.msra.mxu0 0.0
    %5303 = vmatprep.subr.mxu0 0.0
    %5304 = vmatpush1.msra.mxu0 0.0
    %5305 = vmatprep.subr.mxu0 0.0
    %5306 = vmatpush1.msra.mxu0 0.0
    %5307 = vmatprep.subr.mxu0 0.0
    %5308 = vmatpush1.msra.mxu0 0.0
    %5309 = vmatprep.subr.mxu0 0.0
    %5310 = vmatpush1.msra.mxu0 0.0
    %5311 = vmatprep.subr.mxu0 0.0
    %5312 = vmatpush1.msra.mxu0 0.0
    %5313 = vmatprep.subr.mxu0 0.0
    %5314 = vmatpush1.msra.mxu0 0.0
    %5315 = vmatprep.subr.mxu0 0.0
    %5316 = vmatpush1.msra.mxu0 0.0
    %5317 = vmatprep.subr.mxu0 0.0
    %5318 = vmatpush1.msra.mxu0 0.0
    %5319 = vmatprep.subr.mxu0 0.0
    %5320 = vmatpush1.msra.mxu0 0.0
    %5321 = vmatprep.subr.mxu0 0.0
    %5322 = vmatpush1.msra.mxu0 0.0
    %5323 = vmatprep.subr.mxu0 0.0
    %5324 = vmatpush1.msra.mxu0 0.0
    %5325 = vmatprep.subr.mxu0 0.0
    %5326 = vmatpush1.msra.mxu0 0.0
    %5327 = vmatprep.subr.mxu0 0.0
    %5328 = vmatpush1.msra.mxu0 0.0
    %5329 = vmatprep.subr.mxu0 0.0
    %5330 = vmatpush1.msra.mxu0 0.0
    %5331 = vmatprep.subr.mxu0 0.0
    %5332 = vmatpush1.msra.mxu0 0.0
    %5333 = vmatprep.subr.mxu0 0.0
    %5334 = vmatpush1.msra.mxu0 0.0
    %5335 = vmatprep.subr.mxu0 0.0
    %5336 = vmatpush1.msra.mxu0 0.0
    %5337 = vmatprep.subr.mxu0 0.0
    %5338 = vmatpush1.msra.mxu0 0.0
    %5339 = vmatprep.subr.mxu0 0.0
    %5340 = vmatpush1.msra.mxu0 0.0
    %5341 = vmatprep.subr.mxu0 0.0
    %5342 = vmatpush1.msra.mxu0 0.0
    %5343 = vmatprep.subr.mxu0 0.0
    %5344 = vmatpush1.msra.mxu0 0.0
    %5345 = vmatprep.subr.mxu0 0.0
    %5346 = vmatpush1.msra.mxu0 0.0
    %5347 = vmatprep.subr.mxu0 0.0
    %5348 = vmatpush1.msra.mxu0 0.0
    %5349 = vmatprep.subr.mxu0 0.0
    %5350 = vmatpush1.msra.mxu0 0.0
    %5351 = vmatprep.subr.mxu0 0.0
    %5352 = vmatpush1.msra.mxu0 0.0
    %5353 = vmatprep.subr.mxu0 0.0
    %5354 = vmatpush1.msra.mxu0 0.0
    %5355 = vmatprep.subr.mxu0 0.0
    %5356 = vmatpush1.msra.mxu0 0.0
    %5357 = vmatprep.mubr.f32.mxu0 0.0
    %5358 = vmatmul.mubr.f32.gmra.mrb[0].mxu0 %v5291
    %v5359 = vpop.f32.mrb[0].mxu0
    %v5360 = vadd.f32 0.0, %v5359
    %v5361 = vpop.f32.mrb[0].mxu0
    %5362 = vmatprep.mubr.f32.mxu0 0.0
    %5363 = vmatmul.mubr.f32.gmra.mrb[0].mxu0 %v5097
    %v5364 = vpop.f32.mrb[0].mxu0
    %v5365 = vadd.f32 0.0, %v5364
    %v5366 = vpop.f32.mrb[0].mxu0
    %5367 = vdwg.mxu0
    %5370 = vrot.lane.b32.xlu0 %v5272, 96
    %v5371 = vpop.permute.xlu0 %5370
    %5372 = vrot.lane.b32.xlu0 %v5267, 96
    %v5373 = vpop.permute.xlu0 %5372
    %v5374 = vsel %vm2852, %v5371, 0
    %v5376 = vsel %vm2852, %v5373, 0
    %5378 = vmatprep.subr.mxu0 0.0
    %5379 = vmatpush1.msra.mxu0 %v5282
    %5380 = vmatprep.subr.mxu0 0.0
    %5381 = vmatpush1.msra.mxu0 %v5283
    %5382 = vmatprep.subr.mxu0 0.0
    %5383 = vmatpush1.msra.mxu0 %v5284
    %5384 = vmatprep.subr.mxu0 0.0
    %5385 = vmatpush1.msra.mxu0 %v5285
    %5386 = vmatprep.subr.mxu0 0.0
    %5387 = vmatpush1.msra.mxu0 0.0
    %5388 = vmatprep.subr.mxu0 0.0
    %5389 = vmatpush1.msra.mxu0 0.0
    %5390 = vmatprep.subr.mxu0 0.0
    %5391 = vmatpush1.msra.mxu0 0.0
    %5392 = vmatprep.subr.mxu0 0.0
    %5393 = vmatpush1.msra.mxu0 0.0
    %5394 = vmatprep.subr.mxu0 0.0
    %5395 = vmatpush1.msra.mxu0 0.0
    %5396 = vmatprep.subr.mxu0 0.0
    %5397 = vmatpush1.msra.mxu0 0.0
    %5398 = vmatprep.subr.mxu0 0.0
    %5399 = vmatpush1.msra.mxu0 0.0
    %5400 = vmatprep.subr.mxu0 0.0
    %5401 = vmatpush1.msra.mxu0 0.0
    %5402 = vmatprep.subr.mxu0 0.0
    %5403 = vmatpush1.msra.mxu0 0.0
    %5404 = vmatprep.subr.mxu0 0.0
    %5405 = vmatpush1.msra.mxu0 0.0
    %5406 = vmatprep.subr.mxu0 0.0
    %5407 = vmatpush1.msra.mxu0 0.0
    %5408 = vmatprep.subr.mxu0 0.0
    %5409 = vmatpush1.msra.mxu0 0.0
    %5410 = vmatprep.subr.mxu0 0.0
    %5411 = vmatpush1.msra.mxu0 0.0
    %5412 = vmatprep.subr.mxu0 0.0
    %5413 = vmatpush1.msra.mxu0 0.0
    %5414 = vmatprep.subr.mxu0 0.0
    %5415 = vmatpush1.msra.mxu0 0.0
    %5416 = vmatprep.subr.mxu0 0.0
    %5417 = vmatpush1.msra.mxu0 0.0
    %5418 = vmatprep.subr.mxu0 0.0
    %5419 = vmatpush1.msra.mxu0 0.0
    %5420 = vmatprep.subr.mxu0 0.0
    %5421 = vmatpush1.msra.mxu0 0.0
    %5422 = vmatprep.subr.mxu0 0.0
    %5423 = vmatpush1.msra.mxu0 0.0
    %5424 = vmatprep.subr.mxu0 0.0
    %5425 = vmatpush1.msra.mxu0 0.0
    %5426 = vmatprep.subr.mxu0 0.0
    %5427 = vmatpush1.msra.mxu0 0.0
    %5428 = vmatprep.subr.mxu0 0.0
    %5429 = vmatpush1.msra.mxu0 0.0
    %5430 = vmatprep.subr.mxu0 0.0
    %5431 = vmatpush1.msra.mxu0 0.0
    %5432 = vmatprep.subr.mxu0 0.0
    %5433 = vmatpush1.msra.mxu0 0.0
    %5434 = vmatprep.subr.mxu0 0.0
    %5435 = vmatpush1.msra.mxu0 0.0
    %5436 = vmatprep.subr.mxu0 0.0
    %5437 = vmatpush1.msra.mxu0 0.0
    %5438 = vmatprep.subr.mxu0 0.0
    %5439 = vmatpush1.msra.mxu0 0.0
    %5440 = vmatprep.subr.mxu0 0.0
    %5441 = vmatpush1.msra.mxu0 0.0
    %5442 = vmatprep.mubr.f32.mxu0 0.0
    %5443 = vmatmul.mubr.f32.gmra.mrb[0].mxu0 %v5374
    %v5444 = vpop.f32.mrb[0].mxu0
    %v5445 = vadd.f32 %v5360, %v5444
    %v5446 = vpop.f32.mrb[0].mxu0
    %5447 = vmatprep.mubr.f32.mxu0 0.0
    %5448 = vmatmul.mubr.f32.gmra.mrb[0].mxu0 %v5376
    %v5449 = vpop.f32.mrb[0].mxu0
    %v5450 = vadd.f32 %v5365, %v5449
    %v5451 = vpop.f32.mrb[0].mxu0
    %5452 = vdwg.mxu0
    %v5453 = vld [vmem:[#allocation26] sm:$0xff]
    %v5454 = vld [vmem:[#allocation26 + $0x8] sm:$0xff]
    %5455 = vmatprep.subr.mxu0 0.0
    %5456 = vmatpush1.msra.mxu0 %v5453
    %5457 = vmatprep.subr.mxu0 0.0
    %5458 = vmatpush1.msra.mxu0 %v5454
    %5459 = vmatprep.subr.mxu0 0.0
    %5460 = vmatpush1.msra.mxu0 0.0
    %5461 = vmatprep.subr.mxu0 0.0
    %5462 = vmatpush1.msra.mxu0 0.0
    %5463 = vmatprep.subr.mxu0 0.0
    %5464 = vmatpush1.msra.mxu0 0.0
    %5465 = vmatprep.subr.mxu0 0.0
    %5466 = vmatpush1.msra.mxu0 0.0
    %5467 = vmatprep.subr.mxu0 0.0
    %5468 = vmatpush1.msra.mxu0 0.0
    %5469 = vmatprep.subr.mxu0 0.0
    %5470 = vmatpush1.msra.mxu0 0.0
    %5471 = vmatprep.subr.mxu0 0.0
    %5472 = vmatpush1.msra.mxu0 0.0
    %5473 = vmatprep.subr.mxu0 0.0
    %5474 = vmatpush1.msra.mxu0 0.0
    %5475 = vmatprep.subr.mxu0 0.0
    %5476 = vmatpush1.msra.mxu0 0.0
    %5477 = vmatprep.subr.mxu0 0.0
    %5478 = vmatpush1.msra.mxu0 0.0
    %5479 = vmatprep.subr.mxu0 0.0
    %5480 = vmatpush1.msra.mxu0 0.0
    %5481 = vmatprep.subr.mxu0 0.0
    %5482 = vmatpush1.msra.mxu0 0.0
    %5483 = vmatprep.subr.mxu0 0.0
    %5484 = vmatpush1.msra.mxu0 0.0
    %5485 = vmatprep.subr.mxu0 0.0
    %5486 = vmatpush1.msra.mxu0 0.0
    %5487 = vmatprep.subr.mxu0 0.0
    %5488 = vmatpush1.msra.mxu0 0.0
    %5489 = vmatprep.subr.mxu0 0.0
    %5490 = vmatpush1.msra.mxu0 0.0
    %5491 = vmatprep.subr.mxu0 0.0
    %5492 = vmatpush1.msra.mxu0 0.0
    %5493 = vmatprep.subr.mxu0 0.0
    %5494 = vmatpush1.msra.mxu0 0.0
    %5495 = vmatprep.subr.mxu0 0.0
    %5496 = vmatpush1.msra.mxu0 0.0
    %5497 = vmatprep.subr.mxu0 0.0
    %5498 = vmatpush1.msra.mxu0 0.0
    %5499 = vmatprep.subr.mxu0 0.0
    %5500 = vmatpush1.msra.mxu0 0.0
    %5501 = vmatprep.subr.mxu0 0.0
    %5502 = vmatpush1.msra.mxu0 0.0
    %5503 = vmatprep.subr.mxu0 0.0
    %5504 = vmatpush1.msra.mxu0 0.0
    %5505 = vmatprep.subr.mxu0 0.0
    %5506 = vmatpush1.msra.mxu0 0.0
    %5507 = vmatprep.subr.mxu0 0.0
    %5508 = vmatpush1.msra.mxu0 0.0
    %5509 = vmatprep.subr.mxu0 0.0
    %5510 = vmatpush1.msra.mxu0 0.0
    %5511 = vmatprep.subr.mxu0 0.0
    %5512 = vmatpush1.msra.mxu0 0.0
    %5513 = vmatprep.subr.mxu0 0.0
    %5514 = vmatpush1.msra.mxu0 0.0
    %5515 = vmatprep.subr.mxu0 0.0
    %5516 = vmatpush1.msra.mxu0 0.0
    %5517 = vmatprep.subr.mxu0 0.0
    %5518 = vmatpush1.msra.mxu0 0.0
    %5519 = vmatprep.mubr.f32.mxu0 0.0
    %5520 = vmatmul.mubr.f32.gmra.mrb[0].mxu0 %v2726
    %v5521 = vpop.f32.mrb[0].mxu0
    %v5522 = vadd.f32 0.0, %v5521
    %v5523 = vpop.f32.mrb[0].mxu0
    %5524 = vmatprep.mubr.f32.mxu0 0.0
    %5525 = vmatmul.mubr.f32.gmra.mrb[0].mxu0 %v2729
    %v5526 = vpop.f32.mrb[0].mxu0
    %v5527 = vadd.f32 0.0, %v5526
    %v5528 = vpop.f32.mrb[0].mxu0
    %5529 = vdwg.mxu0
    %v5530 = vadd.f32 %v5445, %v5522
    %v5531 = vadd.f32 %v5450, %v5527
    %v5532 = vld [vmem:[#allocation28] sm:$0x1]
    %v5534 = vlaneseq
    %v5535 = vshrl.u32 %v5534, 7
    %v5536 = vsub.s32 0, %v5535
    %v5537 = vrot.slane %v5532, %v5536
    %v5539 = vadd.f32 %v5530, %v5537
    %v5540 = vadd.f32 %v5531, %v5537
    %v5543 = vrot.slane %v5539, 6
    %v5544 = vrot.slane %v5540, 6
    %v5545 = vsel %vm5268, %v5543, %v5544
    %v5547 = vsel %vm5268, 0.0, %v5543
    %v5549 = vcombine.high %v5547, %v5547
    %v5551 = vunpack.c.l.s4 1983009808
    %v5552 = vunpack.c.0.s8 %v5551
    %v5553 = vlaneseq
    %v5554 = vshrl.u32 %v5553, 7
    %v5555 = vsub.s32 %v5552, %v5554
    %v5556 = vrot.slane %v5547, %v5555
    %v5558 = vunpack.c.l.s4 1983009808
    %v5559 = vunpack.c.0.s8 %v5558
    %v5560 = vlaneseq
    %v5561 = vshrl.u32 %v5560, 7
    %v5562 = vsub.s32 %v5559, %v5561
    %v5563 = vrot.slane %v5549, %v5562
    %v5564 = vcombine.high %v5556, %v5556
    %v5565 = vcombine.high %v5563, %v5563
    %v5567 = vunpack.c.l.s4 1983009808
    %v5568 = vunpack.c.0.s8 %v5567
    %v5569 = vlaneseq
    %v5570 = vshrl.u32 %v5569, 7
    %v5571 = vsub.s32 %v5568, %v5570
    %v5572 = vrot.slane %v5545, %v5571
    %v5573 = vcombine.high %v5572, %v5572
    %5580 = vst [vmem:[#allocation29] sm:$0x3] %v5556
    %5581 = vst [vmem:[#allocation29 + $0x2] sm:$0x3] %v5564
    %5582 = vst [vmem:[#allocation29 + $0x4] sm:$0x3] %v5563
    %5583 = vst [vmem:[#allocation29 + $0x6] sm:$0x3] %v5565
    %5584 = vst [vmem:[#allocation29 + $0x8] sm:$0x3] %v5572
    %5585 = vst [vmem:[#allocation29 + $0xa] sm:$0x3] %v5573
    // Predicated region
    $region182: #{seq2seq_forward.1} parent=1 // pred_check
      _
    $region183: #{seq2seq_forward.1} parent=1 // pred_check_branch
      %5587 = sbr.rel (0) target = $region185
    $region184: #{seq2seq_forward.1} parent=1 // pred_region
      %s5589 = ssub.s32 192, 192
      %5590 = vsyncadd [#allocation4], %s5589
      %s5591 = sshll.u32 [#allocation29], 4
      %s5592 = int_to_ptr.vmem [resolvable:$true] %s5591
      %5597 = dma.vmem_to_hbm [thread:$0]  %s5592, 192, %s28, [#allocation4], 32, 32, 2
    $region185: #{seq2seq_forward.1} parent=1 // pred_fallthru
      _
    // Predicated region
    $region186: #{seq2seq_forward.1} parent=1 // pred_check
      _
    $region187: #{seq2seq_forward.1} parent=1 // pred_check_branch
      %5599 = sbr.rel (0) target = $region189
    $region188: #{seq2seq_forward.1} parent=1 // pred_region
      %5600 = dma.done [#allocation4], 192
    $region189: #{seq2seq_forward.1} parent=1 // pred_fallthru
      _
    %5601 = vsyncpa [#allocation3], 1
    %5602 = vsyncpa [#allocation6], 1
    %5603 = vsyncpa [#allocation9], 1
    %5604 = vsyncpa [#allocation12], 1
    %5605 = vsyncpa [#allocation15], 1
    %5606 = vsyncpa [#allocation18], 1
    %5607 = vsyncpa [#allocation21], 1
    %5608 = vsyncpa [#allocation24], 1
    %5609 = vsyncpa [#allocation27], 1
    %5610 = vsyncpa [#allocation4], 1

</llo_original>
